<compile_context>
chip_gen: v7x
topology: tpu7x:2x2x1
jax: 0.10.0
libtpu: 0.0.40
codegen_flags: <defaults>
</compile_context>

<pallas_src>
import functools
import math

import jax
import jax.numpy as jnp
from jax.experimental import pallas as pl
from jax.experimental.pallas import tpu as pltpu


# ----------------------------------------------------------------------------
# In-kernel helpers
# ----------------------------------------------------------------------------
def _layer_norm(x, gamma, beta, eps):
    # Annotated-Transformer LayerNorm:
    #   a_2 * (x - mean) / (std + eps) + b_2, unbiased std (torch default).
    # Exact reciprocal here (approx is reserved for the softmax denominator).
    d = x.shape[-1]
    mean = jnp.mean(x, axis=-1, keepdims=True)
    xc = x - mean
    var = jnp.sum(xc * xc, axis=-1, keepdims=True) * (1.0 / (d - 1))
    inv = 1.0 / (jnp.sqrt(var) + eps)
    return gamma * (xc * inv) + beta


# ----------------------------------------------------------------------------
# Encoder-layer kernel: one (batch, q-tile) grid point per invocation.
# K/V over the full sequence are computed once per batch (qi == 0) and kept in
# persistent VMEM scratch across the query tiles of that batch.
# ----------------------------------------------------------------------------
def encoder_layer_kernel(
    x_ref, bias_ref,
    ln1_g_ref, ln1_b_ref,
    wq_ref, bq_ref, wk_ref, bk_ref, wv_ref, bv_ref, wo_ref, bo_ref,
    ln2_g_ref, ln2_b_ref,
    w1_ref, b1_ref, w2_ref, b2_ref,
    fng_ref, fnb_ref,
    out_ref,
    k_scratch, v_scratch,
    *, num_heads, q_tile, eps, apply_final_norm,
):
    f32 = jnp.float32
    bf16 = jnp.bfloat16
    H = num_heads
    S, D = x_ref.shape[1], x_ref.shape[2]
    dk = D // H
    scale = 1.0 / math.sqrt(dk)

    qi = pl.program_id(1)

    ln1_g = ln1_g_ref[...]
    ln1_b = ln1_b_ref[...]

    # ---- K/V over the full sequence: once per batch, persisted in scratch ---
    @pl.when(qi == 0)
    def _fill_kv():
        xkv = x_ref[0].astype(f32)                                  # (S, D)
        xkv_n = _layer_norm(xkv, ln1_g, ln1_b, eps).astype(bf16)
        k = jnp.dot(xkv_n, wk_ref[...], preferred_element_type=f32) + bk_ref[...]
        v = jnp.dot(xkv_n, wv_ref[...], preferred_element_type=f32) + bv_ref[...]
        k_scratch[...] = k.astype(bf16)                             # (S, D) bf16
        v_scratch[...] = v.astype(bf16)

    # ---- self-attention sublayer (pre-norm residual) ------------------------
    row0 = pl.multiple_of(qi * q_tile, q_tile)
    xq = x_ref[0, pl.ds(row0, q_tile), :].astype(f32)               # (TQ, D)
    xq_n = _layer_norm(xq, ln1_g, ln1_b, eps)

    # Lane-dense query projection: (TQ, D) @ (D, D) -> (TQ, D).
    q = (jnp.dot(xq_n.astype(bf16), wq_ref[...], preferred_element_type=f32)
         + bq_ref[...]) * scale                                     # (TQ, D) f32
    q_bf = q.astype(bf16)

    k = k_scratch[...]                                              # (S, D) bf16
    v = v_scratch[...]                                              # (S, D) bf16
    bias = bias_ref[0]                                              # (1, S) additive mask

    # Per-head scores / softmax / PV via static dk slices (no H-fold broadcast,
    # no (H, TQ, D) intermediates).  Lane dims: scores -> S, ctx -> dk.
    ctx_heads = []
    for h in range(H):
        lo, hi = h * dk, (h + 1) * dk
        qh = q_bf[:, lo:hi]                                         # (TQ, dk)
        kh = k[:, lo:hi]                                            # (S, dk)
        vh = v[:, lo:hi]                                            # (S, dk)
        scores = jax.lax.dot_general(                               # (TQ, S) f32
            qh, kh, dimension_numbers=(((1,), (1,)), ((), ())),
            preferred_element_type=f32)
        scores = scores + bias
        m = jnp.max(scores, axis=-1, keepdims=True)
        p = jnp.exp(scores - m)
        denom = jnp.sum(p, axis=-1, keepdims=True)
        p = p * pl.reciprocal(denom, approx=True)                   # EUP slot
        ctx_heads.append(jnp.dot(p.astype(bf16), vh,
                                 preferred_element_type=f32))       # (TQ, dk)
    ctx = jnp.concatenate(ctx_heads, axis=-1)                       # (TQ, D) f32

    # Output projection contracts over the full D (single MXU matmul, K = D).
    attn = jnp.dot(ctx.astype(bf16), wo_ref[...],
                   preferred_element_type=f32) + bo_ref[...]
    x = xq + attn

    # ---- feed-forward sublayer (pre-norm residual) ---------------------------
    xn2 = _layer_norm(x, ln2_g_ref[...], ln2_b_ref[...], eps)
    h1 = jnp.dot(xn2.astype(bf16), w1_ref[...],
                 preferred_element_type=f32) + b1_ref[...]
    h1 = jnp.maximum(h1, 0.0)
    ff = jnp.dot(h1.astype(bf16), w2_ref[...],
                 preferred_element_type=f32) + b2_ref[...]
    x = x + ff

    # Final LayerNorm of the encoder stack, fused into the last layer.
    if apply_final_norm:
        x = _layer_norm(x, fng_ref[...], fnb_ref[...], eps)

    out_ref[0] = x.astype(out_ref.dtype)


# ----------------------------------------------------------------------------
# Wrappers
# ----------------------------------------------------------------------------
def _const_spec(shape):
    # Whole-array block, same block at every grid point; single-buffered since
    # the block index never changes (halves weight VMEM vs. default).
    return pl.BlockSpec(shape, lambda b, qi, _s=len(shape): (0,) * _s,
                        pipeline_mode=pl.Buffered(1))


def run_encoder_layer(x, attn_bias, p, *, num_heads, q_tile=128, eps=1e-6,
                      final_norm=None):
    """One encoder layer.  attn_bias: (B, 1, S) additive mask (0 / -1e9)."""
    B, S, D = x.shape
    H = num_heads
    assert D % H == 0
    d_ff = p["w1"].shape[-1]
    q_tile = min(q_tile, S)
    assert S % q_tile == 0, "sequence length must be a multiple of q_tile"

    f32 = jnp.float32
    bf16 = jnp.bfloat16

    # Cast weights to bf16 ONCE host-side (no per-tile in-kernel casts, half
    # the weight DMA bytes / VMEM).  Biases stay f32 (added post-accumulation).
    wq = p["wq"].astype(bf16)
    wk = p["wk"].astype(bf16)
    wv = p["wv"].astype(bf16)
    wo = p["wo"].astype(bf16)
    w1 = p["w1"].astype(bf16)
    w2 = p["w2"].astype(bf16)

    apply_final = final_norm is not None
    if apply_final:
        fin_g, fin_b = final_norm
    else:
        fin_g = jnp.ones((1, D), f32)
        fin_b = jnp.zeros((1, D), f32)

    kernel = functools.partial(
        encoder_layer_kernel, num_heads=H, q_tile=q_tile, eps=eps,
        apply_final_norm=apply_final,
    )

    in_specs = [
        # x DMA'd once per batch (block index constant across qi); query rows
        # are sliced out in-kernel, so x is not read twice.
        pl.BlockSpec((1, S, D), lambda b, qi: (b, 0, 0)),
        pl.BlockSpec((1, 1, S), lambda b, qi: (b, 0, 0)),      # additive mask bias
        _const_spec((1, D)), _const_spec((1, D)),              # ln1 gamma, beta
        _const_spec((D, D)), _const_spec((1, D)),              # wq, bq
        _const_spec((D, D)), _const_spec((1, D)),              # wk, bk
        _const_spec((D, D)), _const_spec((1, D)),              # wv, bv
        _const_spec((D, D)), _const_spec((1, D)),              # wo, bo
        _const_spec((1, D)), _const_spec((1, D)),              # ln2 gamma, beta
        _const_spec((D, d_ff)), _const_spec((1, d_ff)),        # w1, b1
        _const_spec((d_ff, D)), _const_spec((1, D)),           # w2, b2
        _const_spec((1, D)), _const_spec((1, D)),              # final-norm gamma, beta
    ]

    return pl.pallas_call(
        kernel,
        out_shape=jax.ShapeDtypeStruct((B, S, D), x.dtype),
        grid=(B, S // q_tile),
        in_specs=in_specs,
        out_specs=pl.BlockSpec((1, q_tile, D), lambda b, qi: (b, qi, 0)),
        scratch_shapes=[
            pltpu.VMEM((S, D), bf16),      # K, persistent across q-tiles
            pltpu.VMEM((S, D), bf16),      # V, persistent across q-tiles
        ],
        compiler_params=pltpu.CompilerParams(
            # qi must stay sequential ("arbitrary"): the K/V scratch is filled
            # at qi == 0 and reused by later q-tiles of the same batch.
            dimension_semantics=("parallel", "arbitrary"),
            vmem_limit_bytes=48 * 1024 * 1024,   # fits v7x's 64 MiB physical VMEM
        ),
    )(
        x, attn_bias,
        p["ln1_g"], p["ln1_b"],
        wq, p["bq"], wk, p["bk"], wv, p["bv"], wo, p["bo"],
        p["ln2_g"], p["ln2_b"],
        w1, p["b1"], w2, p["b2"],
        fin_g, fin_b,
    )


def transformer_encoder(x, key_mask, layer_params, final_g, final_b, *,
                        num_heads, q_tile=128):
    """Mirrors TransformerEncoder.forward: N layers then final LayerNorm.

    key_mask: (B, S) with 1.0 = attend, 0.0 = masked (the standard
    Annotated-Transformer src padding mask squeezed to 2-D).
    The final LayerNorm is fused into the last layer's kernel.
    """
    assert len(layer_params) >= 1
    B, S = key_mask.shape[0], key_mask.shape[-1]
    # Additive bias computed ONCE: 0 where attend, -1e9 where masked.
    attn_bias = ((key_mask.astype(jnp.float32) - 1.0) * 1e9).reshape(B, 1, S)
    n = len(layer_params)
    for i, p in enumerate(layer_params):
        fin = (final_g, final_b) if i == n - 1 else None
        x = run_encoder_layer(x, attn_bias, p, num_heads=num_heads,
                              q_tile=q_tile, final_norm=fin)
    return x


# ----------------------------------------------------------------------------
# Pure-JAX reference (for correctness check) and parameter init
# ----------------------------------------------------------------------------
def _ref_layer_norm(x, g, b, eps=1e-6):
    mean = x.mean(-1, keepdims=True)
    var = ((x - mean) ** 2).sum(-1, keepdims=True) / (x.shape[-1] - 1)
    return g * (x - mean) / (jnp.sqrt(var) + eps) + b


def _ref_encoder(x, key_mask, layer_params, fg, fb, num_heads, eps=1e-6):
    B, S, D = x.shape
    dk = D // num_heads
    mask = key_mask[:, None, None, :]                       # (B, 1, 1, S)
    for p in layer_params:
        xn = _ref_layer_norm(x, p["ln1_g"], p["ln1_b"], eps)
        q = xn @ p["wq"] + p["bq"]
        k = xn @ p["wk"] + p["bk"]
        v = xn @ p["wv"] + p["bv"]
        split = lambda t: t.reshape(B, S, num_heads, dk).transpose(0, 2, 1, 3)
        qh, kh, vh = split(q), split(k), split(v)
        scores = (qh @ kh.transpose(0, 1, 3, 2)) / math.sqrt(dk)
        scores = jnp.where(mask == 0.0, -1e9, scores)
        w = jax.nn.softmax(scores, axis=-1)
        ctx = (w @ vh).transpose(0, 2, 1, 3).reshape(B, S, D)
        x = x + (ctx @ p["wo"] + p["bo"])
        xn2 = _ref_layer_norm(x, p["ln2_g"], p["ln2_b"], eps)
        h = jnp.maximum(xn2 @ p["w1"] + p["b1"], 0.0)
        x = x + (h @ p["w2"] + p["b2"])
    return _ref_layer_norm(x, fg, fb, eps)


def init_layer_params(key, d_model, d_ff):
    ks = jax.random.split(key, 6)
    scale = 0.02
    f32 = jnp.float32
    return {
        "ln1_g": jnp.ones((1, d_model), f32),
        "ln1_b": jnp.zeros((1, d_model), f32),
        "wq": scale * jax.random.normal(ks[0], (d_model, d_model), f32),
        "bq": jnp.zeros((1, d_model), f32),
        "wk": scale * jax.random.normal(ks[1], (d_model, d_model), f32),
        "bk": jnp.zeros((1, d_model), f32),
        "wv": scale * jax.random.normal(ks[2], (d_model, d_model), f32),
        "bv": jnp.zeros((1, d_model), f32),
        "wo": scale * jax.random.normal(ks[3], (d_model, d_model), f32),
        "bo": jnp.zeros((1, d_model), f32),
        "ln2_g": jnp.ones((1, d_model), f32),
        "ln2_b": jnp.zeros((1, d_model), f32),
        "w1": scale * jax.random.normal(ks[4], (d_model, d_ff), f32),
        "b1": jnp.zeros((1, d_ff), f32),
        "w2": scale * jax.random.normal(ks[5], (d_ff, d_model), f32),
        "b2": jnp.zeros((1, d_model), f32),
    }


if __name__ == "__main__":
    # Small but lane-dense shapes (feature dims multiples of 128; seq tiled).
    B, S, D = 2, 256, 256
    NUM_HEADS = 4
    D_FF = 512
    N_LAYERS = 2          # TransformerEncoder default is N=6; 2 keeps demo fast
    Q_TILE = 128

    root = jax.random.PRNGKey(0)
    k_x, k_layers = jax.random.split(root)

    x = jax.random.normal(k_x, (B, S, D), jnp.float32)

    # key-padding mask: batch 0 attends to all positions, batch 1 to first 192
    lengths = jnp.array([S, 3 * S // 4])
    key_mask = (jnp.arange(S)[None, :] < lengths[:, None]).astype(jnp.float32)  # (B, S)

    layer_keys = jax.random.split(k_layers, N_LAYERS)
    layer_params = [init_layer_params(k, D, D_FF) for k in layer_keys]
    final_g = jnp.ones((1, D), jnp.float32)
    final_b = jnp.zeros((1, D), jnp.float32)

    out = transformer_encoder(
        x, key_mask, layer_params, final_g, final_b,
        num_heads=NUM_HEADS, q_tile=Q_TILE,
    )
    out = jax.block_until_ready(out)

    assert out.shape == (B, S, D)
    assert bool(jnp.all(jnp.isfinite(out)))

    # Correctness vs. a pure-JAX f32 reference (bf16 MXU operands + approx
    # softmax reciprocal in the kernel -> loose tolerance).
    with jax.default_matmul_precision("highest"):
        ref = _ref_encoder(x, key_mask, layer_params, final_g, final_b,
                           NUM_HEADS)
    ref = jax.block_until_ready(ref)
    max_err = float(jnp.max(jnp.abs(out - ref)))
    assert max_err < 5e-2, f"max |kernel - reference| = {max_err}"

    print("KERNEL_OK")
</pallas_src>

<mosaic_0001>
module attributes {stable_mosaic.version = 11 : i64} {
  func.func @encoder_layer_kernel(%arg0: i32, %arg1: i32, %arg2: memref<1x256x256xf32, #tpu.memory_space<vmem>>, %arg3: memref<1x1x256xf32, #tpu.memory_space<vmem>>, %arg4: memref<1x256xf32, #tpu.memory_space<vmem>>, %arg5: memref<1x256xf32, #tpu.memory_space<vmem>>, %arg6: memref<256x256xbf16, #tpu.memory_space<vmem>>, %arg7: memref<1x256xf32, #tpu.memory_space<vmem>>, %arg8: memref<256x256xbf16, #tpu.memory_space<vmem>>, %arg9: memref<1x256xf32, #tpu.memory_space<vmem>>, %arg10: memref<256x256xbf16, #tpu.memory_space<vmem>>, %arg11: memref<1x256xf32, #tpu.memory_space<vmem>>, %arg12: memref<256x256xbf16, #tpu.memory_space<vmem>>, %arg13: memref<1x256xf32, #tpu.memory_space<vmem>>, %arg14: memref<1x256xf32, #tpu.memory_space<vmem>>, %arg15: memref<1x256xf32, #tpu.memory_space<vmem>>, %arg16: memref<256x512xbf16, #tpu.memory_space<vmem>>, %arg17: memref<1x512xf32, #tpu.memory_space<vmem>>, %arg18: memref<512x256xbf16, #tpu.memory_space<vmem>>, %arg19: memref<1x256xf32, #tpu.memory_space<vmem>>, %arg20: memref<1x256xf32, #tpu.memory_space<vmem>>, %arg21: memref<1x256xf32, #tpu.memory_space<vmem>>, %arg22: memref<1x128x256xf32, #tpu.memory_space<vmem>>, %arg23: memref<256x256xbf16, #tpu.memory_space<vmem>>, %arg24: memref<256x256xbf16, #tpu.memory_space<vmem>>) attributes {dimension_semantics = [#tpu.dimension_semantics<parallel>, #tpu.dimension_semantics<arbitrary>], iteration_bounds = array<i64: 2, 2>, scalar_prefetch = 0 : i64, scratch_operands = 2 : i64, tpu.core_type = #tpu.core_type<tc>, window_params = [{transform_indices = @transform_0, window_bounds = array<i64: 1, 256, 256>}, {transform_indices = @transform_1, window_bounds = array<i64: 1, 1, 256>}, {pipeline_mode = #tpu.pipeline_mode<synchronous>, transform_indices = @transform_2, window_bounds = array<i64: 1, 256>}, {pipeline_mode = #tpu.pipeline_mode<synchronous>, transform_indices = @transform_3, window_bounds = array<i64: 1, 256>}, {pipeline_mode = #tpu.pipeline_mode<synchronous>, transform_indices = @transform_4, window_bounds = array<i64: 256, 256>}, {pipeline_mode = #tpu.pipeline_mode<synchronous>, transform_indices = @transform_5, window_bounds = array<i64: 1, 256>}, {pipeline_mode = #tpu.pipeline_mode<synchronous>, transform_indices = @transform_6, window_bounds = array<i64: 256, 256>}, {pipeline_mode = #tpu.pipeline_mode<synchronous>, transform_indices = @transform_7, window_bounds = array<i64: 1, 256>}, {pipeline_mode = #tpu.pipeline_mode<synchronous>, transform_indices = @transform_8, window_bounds = array<i64: 256, 256>}, {pipeline_mode = #tpu.pipeline_mode<synchronous>, transform_indices = @transform_9, window_bounds = array<i64: 1, 256>}, {pipeline_mode = #tpu.pipeline_mode<synchronous>, transform_indices = @transform_10, window_bounds = array<i64: 256, 256>}, {pipeline_mode = #tpu.pipeline_mode<synchronous>, transform_indices = @transform_11, window_bounds = array<i64: 1, 256>}, {pipeline_mode = #tpu.pipeline_mode<synchronous>, transform_indices = @transform_12, window_bounds = array<i64: 1, 256>}, {pipeline_mode = #tpu.pipeline_mode<synchronous>, transform_indices = @transform_13, window_bounds = array<i64: 1, 256>}, {pipeline_mode = #tpu.pipeline_mode<synchronous>, transform_indices = @transform_14, window_bounds = array<i64: 256, 512>}, {pipeline_mode = #tpu.pipeline_mode<synchronous>, transform_indices = @transform_15, window_bounds = array<i64: 1, 512>}, {pipeline_mode = #tpu.pipeline_mode<synchronous>, transform_indices = @transform_16, window_bounds = array<i64: 512, 256>}, {pipeline_mode = #tpu.pipeline_mode<synchronous>, transform_indices = @transform_17, window_bounds = array<i64: 1, 256>}, {pipeline_mode = #tpu.pipeline_mode<synchronous>, transform_indices = @transform_18, window_bounds = array<i64: 1, 256>}, {pipeline_mode = #tpu.pipeline_mode<synchronous>, transform_indices = @transform_19, window_bounds = array<i64: 1, 256>}, {transform_indices = @transform_20, window_bounds = array<i64: 1, 128, 256>}]} {
    %c0 = arith.constant 0 : index
    %c0_0 = arith.constant 0 : index
    %0 = vector.load %arg4[%c0, %c0_0] : memref<1x256xf32, #tpu.memory_space<vmem>>, vector<1x256xf32>
    %c0_1 = arith.constant 0 : index
    %c0_2 = arith.constant 0 : index
    %1 = vector.load %arg5[%c0_1, %c0_2] : memref<1x256xf32, #tpu.memory_space<vmem>>, vector<1x256xf32>
    %c0_i32 = arith.constant 0 : i32
    %2 = arith.cmpi eq, %arg1, %c0_i32 : i32
    %3 = arith.extui %2 : i1 to i32
    %c0_i32_3 = arith.constant 0 : i32
    %4 = arith.cmpi ne, %3, %c0_i32_3 : i32
    scf.if %4 {
      %c0_69 = arith.constant 0 : index
      %c0_70 = arith.constant 0 : index
      %c0_71 = arith.constant 0 : index
      %167 = vector.load %arg2[%c0_69, %c0_70, %c0_71] : memref<1x256x256xf32, #tpu.memory_space<vmem>>, vector<1x256x256xf32>
      %168 = vector.shape_cast %167 : vector<1x256x256xf32> to vector<256x256xf32>
      %cst_72 = arith.constant dense<0.000000e+00> : vector<256xf32>
      %169 = vector.multi_reduction <add>, %168, %cst_72 [1] : vector<256x256xf32> to vector<256xf32>
      %170 = vector.shape_cast %169 : vector<256xf32> to vector<256x1xf32>
      %cst_73 = arith.constant 2.560000e+02 : f32
      %171 = vector.broadcast %cst_73 : f32 to vector<256x1xf32>
      %172 = arith.divf %170, %171 : vector<256x1xf32>
      %173 = vector.broadcast %172 : vector<256x1xf32> to vector<256x256xf32>
      %174 = arith.subf %168, %173 : vector<256x256xf32>
      %175 = arith.mulf %174, %174 : vector<256x256xf32>
      %cst_74 = arith.constant dense<0.000000e+00> : vector<256xf32>
      %176 = vector.multi_reduction <add>, %175, %cst_74 [1] : vector<256x256xf32> to vector<256xf32>
      %177 = vector.shape_cast %176 : vector<256xf32> to vector<256x1xf32>
      %cst_75 = arith.constant 0.00392156886 : f32
      %178 = vector.broadcast %cst_75 : f32 to vector<256x1xf32>
      %179 = arith.mulf %177, %178 : vector<256x1xf32>
      %180 = math.sqrt %179 : vector<256x1xf32>
      %cst_76 = arith.constant 9.99999997E-7 : f32
      %181 = vector.broadcast %cst_76 : f32 to vector<256x1xf32>
      %182 = arith.addf %180, %181 : vector<256x1xf32>
      %cst_77 = arith.constant 1.000000e+00 : f32
      %183 = vector.broadcast %cst_77 : f32 to vector<256x1xf32>
      %184 = arith.divf %183, %182 : vector<256x1xf32>
      %185 = vector.broadcast %184 : vector<256x1xf32> to vector<256x256xf32>
      %186 = arith.mulf %174, %185 : vector<256x256xf32>
      %187 = vector.broadcast %0 : vector<1x256xf32> to vector<256x256xf32>
      %188 = arith.mulf %187, %186 : vector<256x256xf32>
      %189 = vector.broadcast %1 : vector<1x256xf32> to vector<256x256xf32>
      %190 = arith.addf %188, %189 : vector<256x256xf32>
      %191 = arith.truncf %190 : vector<256x256xf32> to vector<256x256xbf16>
      %c0_78 = arith.constant 0 : index
      %c0_79 = arith.constant 0 : index
      %192 = vector.load %arg8[%c0_78, %c0_79] : memref<256x256xbf16, #tpu.memory_space<vmem>>, vector<256x256xbf16>
      %cst_80 = arith.constant dense<0.000000e+00> : vector<256x256xf32>
      %193 = tpu.matmul %191, %192, %cst_80 {dimension_numbers = #tpu.dot_dimension_numbers<[1], [0], [0], [1], [0, 0, 1, 1], [], []>} : vector<256x256xbf16>, vector<256x256xbf16>, vector<256x256xf32> -> vector<256x256xf32>
      %c0_81 = arith.constant 0 : index
      %c0_82 = arith.constant 0 : index
      %194 = vector.load %arg9[%c0_81, %c0_82] : memref<1x256xf32, #tpu.memory_space<vmem>>, vector<1x256xf32>
      %195 = vector.broadcast %194 : vector<1x256xf32> to vector<256x256xf32>
      %196 = arith.addf %193, %195 : vector<256x256xf32>
      %c0_83 = arith.constant 0 : index
      %c0_84 = arith.constant 0 : index
      %197 = vector.load %arg10[%c0_83, %c0_84] : memref<256x256xbf16, #tpu.memory_space<vmem>>, vector<256x256xbf16>
      %cst_85 = arith.constant dense<0.000000e+00> : vector<256x256xf32>
      %198 = tpu.matmul %191, %197, %cst_85 {dimension_numbers = #tpu.dot_dimension_numbers<[1], [0], [0], [1], [0, 0, 1, 1], [], []>} : vector<256x256xbf16>, vector<256x256xbf16>, vector<256x256xf32> -> vector<256x256xf32>
      %c0_86 = arith.constant 0 : index
      %c0_87 = arith.constant 0 : index
      %199 = vector.load %arg11[%c0_86, %c0_87] : memref<1x256xf32, #tpu.memory_space<vmem>>, vector<1x256xf32>
      %200 = vector.broadcast %199 : vector<1x256xf32> to vector<256x256xf32>
      %201 = arith.addf %198, %200 : vector<256x256xf32>
      %202 = arith.truncf %196 : vector<256x256xf32> to vector<256x256xbf16>
      %c0_88 = arith.constant 0 : index
      %c0_89 = arith.constant 0 : index
      %203 = vector.load %arg23[%c0_88, %c0_89] : memref<256x256xbf16, #tpu.memory_space<vmem>>, vector<256x256xbf16>
      tpu.vector_store %arg23[%c0_88, %c0_89], %202 {strides = array<i32>} : memref<256x256xbf16, #tpu.memory_space<vmem>>, vector<256x256xbf16>,
      %204 = arith.truncf %201 : vector<256x256xf32> to vector<256x256xbf16>
      %c0_90 = arith.constant 0 : index
      %c0_91 = arith.constant 0 : index
      %205 = vector.load %arg24[%c0_90, %c0_91] : memref<256x256xbf16, #tpu.memory_space<vmem>>, vector<256x256xbf16>
      tpu.vector_store %arg24[%c0_90, %c0_91], %204 {strides = array<i32>} : memref<256x256xbf16, #tpu.memory_space<vmem>>, vector<256x256xbf16>,
    } else {
    }
    %c128_i32 = arith.constant 128 : i32
    %5 = arith.muli %arg1, %c128_i32 : i32
    %6 = tpu.assume_multiple %5, 128 : i32
    %c0_4 = arith.constant 0 : index
    %7 = arith.index_cast %6 : i32 to index
    %c0_5 = arith.constant 0 : index
    %8 = vector.load %arg2[%c0_4, %7, %c0_5] : memref<1x256x256xf32, #tpu.memory_space<vmem>>, vector<1x128x256xf32>
    %9 = vector.shape_cast %8 : vector<1x128x256xf32> to vector<128x256xf32>
    %cst = arith.constant dense<0.000000e+00> : vector<128xf32>
    %10 = vector.multi_reduction <add>, %9, %cst [1] : vector<128x256xf32> to vector<128xf32>
    %11 = vector.shape_cast %10 : vector<128xf32> to vector<128x1xf32>
    %cst_6 = arith.constant 2.560000e+02 : f32
    %12 = vector.broadcast %cst_6 : f32 to vector<128x1xf32>
    %13 = arith.divf %11, %12 : vector<128x1xf32>
    %14 = vector.broadcast %13 : vector<128x1xf32> to vector<128x256xf32>
    %15 = arith.subf %9, %14 : vector<128x256xf32>
    %16 = arith.mulf %15, %15 : vector<128x256xf32>
    %cst_7 = arith.constant dense<0.000000e+00> : vector<128xf32>
    %17 = vector.multi_reduction <add>, %16, %cst_7 [1] : vector<128x256xf32> to vector<128xf32>
    %18 = vector.shape_cast %17 : vector<128xf32> to vector<128x1xf32>
    %cst_8 = arith.constant 0.00392156886 : f32
    %19 = vector.broadcast %cst_8 : f32 to vector<128x1xf32>
    %20 = arith.mulf %18, %19 : vector<128x1xf32>
    %21 = math.sqrt %20 : vector<128x1xf32>
    %cst_9 = arith.constant 9.99999997E-7 : f32
    %22 = vector.broadcast %cst_9 : f32 to vector<128x1xf32>
    %23 = arith.addf %21, %22 : vector<128x1xf32>
    %cst_10 = arith.constant 1.000000e+00 : f32
    %24 = vector.broadcast %cst_10 : f32 to vector<128x1xf32>
    %25 = arith.divf %24, %23 : vector<128x1xf32>
    %26 = vector.broadcast %25 : vector<128x1xf32> to vector<128x256xf32>
    %27 = arith.mulf %15, %26 : vector<128x256xf32>
    %28 = vector.broadcast %0 : vector<1x256xf32> to vector<128x256xf32>
    %29 = arith.mulf %28, %27 : vector<128x256xf32>
    %30 = vector.broadcast %1 : vector<1x256xf32> to vector<128x256xf32>
    %31 = arith.addf %29, %30 : vector<128x256xf32>
    %32 = arith.truncf %31 : vector<128x256xf32> to vector<128x256xbf16>
    %c0_11 = arith.constant 0 : index
    %c0_12 = arith.constant 0 : index
    %33 = vector.load %arg6[%c0_11, %c0_12] : memref<256x256xbf16, #tpu.memory_space<vmem>>, vector<256x256xbf16>
    %cst_13 = arith.constant dense<0.000000e+00> : vector<128x256xf32>
    %34 = tpu.matmul %32, %33, %cst_13 {dimension_numbers = #tpu.dot_dimension_numbers<[1], [0], [0], [1], [0, 0, 1, 1], [], []>} : vector<128x256xbf16>, vector<256x256xbf16>, vector<128x256xf32> -> vector<128x256xf32>
    %c0_14 = arith.constant 0 : index
    %c0_15 = arith.constant 0 : index
    %35 = vector.load %arg7[%c0_14, %c0_15] : memref<1x256xf32, #tpu.memory_space<vmem>>, vector<1x256xf32>
    %36 = vector.broadcast %35 : vector<1x256xf32> to vector<128x256xf32>
    %37 = arith.addf %34, %36 : vector<128x256xf32>
    %cst_16 = arith.constant 1.250000e-01 : f32
    %38 = vector.broadcast %cst_16 : f32 to vector<128x256xf32>
    %39 = arith.mulf %37, %38 : vector<128x256xf32>
    %40 = arith.truncf %39 : vector<128x256xf32> to vector<128x256xbf16>
    %c0_17 = arith.constant 0 : index
    %c0_18 = arith.constant 0 : index
    %41 = vector.load %arg23[%c0_17, %c0_18] : memref<256x256xbf16, #tpu.memory_space<vmem>>, vector<256x256xbf16>
    %c0_19 = arith.constant 0 : index
    %c0_20 = arith.constant 0 : index
    %42 = vector.load %arg24[%c0_19, %c0_20] : memref<256x256xbf16, #tpu.memory_space<vmem>>, vector<256x256xbf16>
    %c0_21 = arith.constant 0 : index
    %c0_22 = arith.constant 0 : index
    %c0_23 = arith.constant 0 : index
    %43 = vector.load %arg3[%c0_21, %c0_22, %c0_23] : memref<1x1x256xf32, #tpu.memory_space<vmem>>, vector<1x1x256xf32>
    %44 = vector.shape_cast %43 : vector<1x1x256xf32> to vector<1x256xf32>
    %45 = vector.extract_strided_slice %40 {offsets = [0, 0], sizes = [128, 64], strides = [1, 1]} : vector<128x256xbf16> to vector<128x64xbf16>
    %46 = vector.extract_strided_slice %41 {offsets = [0, 0], sizes = [256, 64], strides = [1, 1]} : vector<256x256xbf16> to vector<256x64xbf16>
    %47 = vector.extract_strided_slice %42 {offsets = [0, 0], sizes = [256, 64], strides = [1, 1]} : vector<256x256xbf16> to vector<256x64xbf16>
    %cst_24 = arith.constant dense<0.000000e+00> : vector<128x256xf32>
    %48 = tpu.matmul %45, %46, %cst_24 {dimension_numbers = #tpu.dot_dimension_numbers<[1], [1], [0], [0], [0, 0, 1, 0], [], []>} : vector<128x64xbf16>, vector<256x64xbf16>, vector<128x256xf32> -> vector<128x256xf32>
    %49 = vector.broadcast %44 : vector<1x256xf32> to vector<128x256xf32>
    %50 = arith.addf %48, %49 : vector<128x256xf32>
    %cst_25 = arith.constant dense<0xFF800000> : vector<128xf32>
    %51 = vector.multi_reduction <maximumf>, %50, %cst_25 [1] : vector<128x256xf32> to vector<128xf32>
    %52 = vector.shape_cast %51 : vector<128xf32> to vector<128x1xf32>
    %53 = vector.broadcast %52 : vector<128x1xf32> to vector<128x256xf32>
    %54 = arith.subf %50, %53 : vector<128x256xf32>
    %55 = math.exp %54 : vector<128x256xf32>
    %cst_26 = arith.constant dense<0.000000e+00> : vector<128xf32>
    %56 = vector.multi_reduction <add>, %55, %cst_26 [1] : vector<128x256xf32> to vector<128xf32>
    %57 = vector.shape_cast %56 : vector<128xf32> to vector<128x1xf32>
    %58 = tpu.reciprocal %57 {approx = true} : vector<128x1xf32> -> vector<128x1xf32>
    %59 = vector.broadcast %58 : vector<128x1xf32> to vector<128x256xf32>
    %60 = arith.mulf %55, %59 : vector<128x256xf32>
    %61 = arith.truncf %60 : vector<128x256xf32> to vector<128x256xbf16>
    %cst_27 = arith.constant dense<0.000000e+00> : vector<128x64xf32>
    %62 = tpu.matmul %61, %47, %cst_27 {dimension_numbers = #tpu.dot_dimension_numbers<[1], [0], [0], [1], [0, 0, 1, 1], [], []>} : vector<128x256xbf16>, vector<256x64xbf16>, vector<128x64xf32> -> vector<128x64xf32>
    %63 = vector.extract_strided_slice %40 {offsets = [0, 64], sizes = [128, 64], strides = [1, 1]} : vector<128x256xbf16> to vector<128x64xbf16>
    %64 = vector.extract_strided_slice %41 {offsets = [0, 64], sizes = [256, 64], strides = [1, 1]} : vector<256x256xbf16> to vector<256x64xbf16>
    %65 = vector.extract_strided_slice %42 {offsets = [0, 64], sizes = [256, 64], strides = [1, 1]} : vector<256x256xbf16> to vector<256x64xbf16>
    %cst_28 = arith.constant dense<0.000000e+00> : vector<128x256xf32>
    %66 = tpu.matmul %63, %64, %cst_28 {dimension_numbers = #tpu.dot_dimension_numbers<[1], [1], [0], [0], [0, 0, 1, 0], [], []>} : vector<128x64xbf16>, vector<256x64xbf16>, vector<128x256xf32> -> vector<128x256xf32>
    %67 = vector.broadcast %44 : vector<1x256xf32> to vector<128x256xf32>
    %68 = arith.addf %66, %67 : vector<128x256xf32>
    %cst_29 = arith.constant dense<0xFF800000> : vector<128xf32>
    %69 = vector.multi_reduction <maximumf>, %68, %cst_29 [1] : vector<128x256xf32> to vector<128xf32>
    %70 = vector.shape_cast %69 : vector<128xf32> to vector<128x1xf32>
    %71 = vector.broadcast %70 : vector<128x1xf32> to vector<128x256xf32>
    %72 = arith.subf %68, %71 : vector<128x256xf32>
    %73 = math.exp %72 : vector<128x256xf32>
    %cst_30 = arith.constant dense<0.000000e+00> : vector<128xf32>
    %74 = vector.multi_reduction <add>, %73, %cst_30 [1] : vector<128x256xf32> to vector<128xf32>
    %75 = vector.shape_cast %74 : vector<128xf32> to vector<128x1xf32>
    %76 = tpu.reciprocal %75 {approx = true} : vector<128x1xf32> -> vector<128x1xf32>
    %77 = vector.broadcast %76 : vector<128x1xf32> to vector<128x256xf32>
    %78 = arith.mulf %73, %77 : vector<128x256xf32>
    %79 = arith.truncf %78 : vector<128x256xf32> to vector<128x256xbf16>
    %cst_31 = arith.constant dense<0.000000e+00> : vector<128x64xf32>
    %80 = tpu.matmul %79, %65, %cst_31 {dimension_numbers = #tpu.dot_dimension_numbers<[1], [0], [0], [1], [0, 0, 1, 1], [], []>} : vector<128x256xbf16>, vector<256x64xbf16>, vector<128x64xf32> -> vector<128x64xf32>
    %81 = vector.extract_strided_slice %40 {offsets = [0, 128], sizes = [128, 64], strides = [1, 1]} : vector<128x256xbf16> to vector<128x64xbf16>
    %82 = vector.extract_strided_slice %41 {offsets = [0, 128], sizes = [256, 64], strides = [1, 1]} : vector<256x256xbf16> to vector<256x64xbf16>
    %83 = vector.extract_strided_slice %42 {offsets = [0, 128], sizes = [256, 64], strides = [1, 1]} : vector<256x256xbf16> to vector<256x64xbf16>
    %cst_32 = arith.constant dense<0.000000e+00> : vector<128x256xf32>
    %84 = tpu.matmul %81, %82, %cst_32 {dimension_numbers = #tpu.dot_dimension_numbers<[1], [1], [0], [0], [0, 0, 1, 0], [], []>} : vector<128x64xbf16>, vector<256x64xbf16>, vector<128x256xf32> -> vector<128x256xf32>
    %85 = vector.broadcast %44 : vector<1x256xf32> to vector<128x256xf32>
    %86 = arith.addf %84, %85 : vector<128x256xf32>
    %cst_33 = arith.constant dense<0xFF800000> : vector<128xf32>
    %87 = vector.multi_reduction <maximumf>, %86, %cst_33 [1] : vector<128x256xf32> to vector<128xf32>
    %88 = vector.shape_cast %87 : vector<128xf32> to vector<128x1xf32>
    %89 = vector.broadcast %88 : vector<128x1xf32> to vector<128x256xf32>
    %90 = arith.subf %86, %89 : vector<128x256xf32>
    %91 = math.exp %90 : vector<128x256xf32>
    %cst_34 = arith.constant dense<0.000000e+00> : vector<128xf32>
    %92 = vector.multi_reduction <add>, %91, %cst_34 [1] : vector<128x256xf32> to vector<128xf32>
    %93 = vector.shape_cast %92 : vector<128xf32> to vector<128x1xf32>
    %94 = tpu.reciprocal %93 {approx = true} : vector<128x1xf32> -> vector<128x1xf32>
    %95 = vector.broadcast %94 : vector<128x1xf32> to vector<128x256xf32>
    %96 = arith.mulf %91, %95 : vector<128x256xf32>
    %97 = arith.truncf %96 : vector<128x256xf32> to vector<128x256xbf16>
    %cst_35 = arith.constant dense<0.000000e+00> : vector<128x64xf32>
    %98 = tpu.matmul %97, %83, %cst_35 {dimension_numbers = #tpu.dot_dimension_numbers<[1], [0], [0], [1], [0, 0, 1, 1], [], []>} : vector<128x256xbf16>, vector<256x64xbf16>, vector<128x64xf32> -> vector<128x64xf32>
    %99 = vector.extract_strided_slice %40 {offsets = [0, 192], sizes = [128, 64], strides = [1, 1]} : vector<128x256xbf16> to vector<128x64xbf16>
    %100 = vector.extract_strided_slice %41 {offsets = [0, 192], sizes = [256, 64], strides = [1, 1]} : vector<256x256xbf16> to vector<256x64xbf16>
    %101 = vector.extract_strided_slice %42 {offsets = [0, 192], sizes = [256, 64], strides = [1, 1]} : vector<256x256xbf16> to vector<256x64xbf16>
    %cst_36 = arith.constant dense<0.000000e+00> : vector<128x256xf32>
    %102 = tpu.matmul %99, %100, %cst_36 {dimension_numbers = #tpu.dot_dimension_numbers<[1], [1], [0], [0], [0, 0, 1, 0], [], []>} : vector<128x64xbf16>, vector<256x64xbf16>, vector<128x256xf32> -> vector<128x256xf32>
    %103 = vector.broadcast %44 : vector<1x256xf32> to vector<128x256xf32>
    %104 = arith.addf %102, %103 : vector<128x256xf32>
    %cst_37 = arith.constant dense<0xFF800000> : vector<128xf32>
    %105 = vector.multi_reduction <maximumf>, %104, %cst_37 [1] : vector<128x256xf32> to vector<128xf32>
    %106 = vector.shape_cast %105 : vector<128xf32> to vector<128x1xf32>
    %107 = vector.broadcast %106 : vector<128x1xf32> to vector<128x256xf32>
    %108 = arith.subf %104, %107 : vector<128x256xf32>
    %109 = math.exp %108 : vector<128x256xf32>
    %cst_38 = arith.constant dense<0.000000e+00> : vector<128xf32>
    %110 = vector.multi_reduction <add>, %109, %cst_38 [1] : vector<128x256xf32> to vector<128xf32>
    %111 = vector.shape_cast %110 : vector<128xf32> to vector<128x1xf32>
    %112 = tpu.reciprocal %111 {approx = true} : vector<128x1xf32> -> vector<128x1xf32>
    %113 = vector.broadcast %112 : vector<128x1xf32> to vector<128x256xf32>
    %114 = arith.mulf %109, %113 : vector<128x256xf32>
    %115 = arith.truncf %114 : vector<128x256xf32> to vector<128x256xbf16>
    %cst_39 = arith.constant dense<0.000000e+00> : vector<128x64xf32>
    %116 = tpu.matmul %115, %101, %cst_39 {dimension_numbers = #tpu.dot_dimension_numbers<[1], [0], [0], [1], [0, 0, 1, 1], [], []>} : vector<128x256xbf16>, vector<256x64xbf16>, vector<128x64xf32> -> vector<128x64xf32>
    %117 = tpu.concatenate %62, %80, %98, %116 in 1 : vector<128x64xf32>, vector<128x64xf32>, vector<128x64xf32>, vector<128x64xf32> -> vector<128x256xf32>
    %118 = arith.truncf %117 : vector<128x256xf32> to vector<128x256xbf16>
    %c0_40 = arith.constant 0 : index
    %c0_41 = arith.constant 0 : index
    %119 = vector.load %arg12[%c0_40, %c0_41] : memref<256x256xbf16, #tpu.memory_space<vmem>>, vector<256x256xbf16>
    %cst_42 = arith.constant dense<0.000000e+00> : vector<128x256xf32>
    %120 = tpu.matmul %118, %119, %cst_42 {dimension_numbers = #tpu.dot_dimension_numbers<[1], [0], [0], [1], [0, 0, 1, 1], [], []>} : vector<128x256xbf16>, vector<256x256xbf16>, vector<128x256xf32> -> vector<128x256xf32>
    %c0_43 = arith.constant 0 : index
    %c0_44 = arith.constant 0 : index
    %121 = vector.load %arg13[%c0_43, %c0_44] : memref<1x256xf32, #tpu.memory_space<vmem>>, vector<1x256xf32>
    %122 = vector.broadcast %121 : vector<1x256xf32> to vector<128x256xf32>
    %123 = arith.addf %120, %122 : vector<128x256xf32>
    %124 = arith.addf %9, %123 : vector<128x256xf32>
    %c0_45 = arith.constant 0 : index
    %c0_46 = arith.constant 0 : index
    %125 = vector.load %arg14[%c0_45, %c0_46] : memref<1x256xf32, #tpu.memory_space<vmem>>, vector<1x256xf32>
    %c0_47 = arith.constant 0 : index
    %c0_48 = arith.constant 0 : index
    %126 = vector.load %arg15[%c0_47, %c0_48] : memref<1x256xf32, #tpu.memory_space<vmem>>, vector<1x256xf32>
    %cst_49 = arith.constant dense<0.000000e+00> : vector<128xf32>
    %127 = vector.multi_reduction <add>, %124, %cst_49 [1] : vector<128x256xf32> to vector<128xf32>
    %128 = vector.shape_cast %127 : vector<128xf32> to vector<128x1xf32>
    %cst_50 = arith.constant 2.560000e+02 : f32
    %129 = vector.broadcast %cst_50 : f32 to vector<128x1xf32>
    %130 = arith.divf %128, %129 : vector<128x1xf32>
    %131 = vector.broadcast %130 : vector<128x1xf32> to vector<128x256xf32>
    %132 = arith.subf %124, %131 : vector<128x256xf32>
    %133 = arith.mulf %132, %132 : vector<128x256xf32>
    %cst_51 = arith.constant dense<0.000000e+00> : vector<128xf32>
    %134 = vector.multi_reduction <add>, %133, %cst_51 [1] : vector<128x256xf32> to vector<128xf32>
    %135 = vector.shape_cast %134 : vector<128xf32> to vector<128x1xf32>
    %cst_52 = arith.constant 0.00392156886 : f32
    %136 = vector.broadcast %cst_52 : f32 to vector<128x1xf32>
    %137 = arith.mulf %135, %136 : vector<128x1xf32>
    %138 = math.sqrt %137 : vector<128x1xf32>
    %cst_53 = arith.constant 9.99999997E-7 : f32
    %139 = vector.broadcast %cst_53 : f32 to vector<128x1xf32>
    %140 = arith.addf %138, %139 : vector<128x1xf32>
    %cst_54 = arith.constant 1.000000e+00 : f32
    %141 = vector.broadcast %cst_54 : f32 to vector<128x1xf32>
    %142 = arith.divf %141, %140 : vector<128x1xf32>
    %143 = vector.broadcast %142 : vector<128x1xf32> to vector<128x256xf32>
    %144 = arith.mulf %132, %143 : vector<128x256xf32>
    %145 = vector.broadcast %125 : vector<1x256xf32> to vector<128x256xf32>
    %146 = arith.mulf %145, %144 : vector<128x256xf32>
    %147 = vector.broadcast %126 : vector<1x256xf32> to vector<128x256xf32>
    %148 = arith.addf %146, %147 : vector<128x256xf32>
    %149 = arith.truncf %148 : vector<128x256xf32> to vector<128x256xbf16>
    %c0_55 = arith.constant 0 : index
    %c0_56 = arith.constant 0 : index
    %150 = vector.load %arg16[%c0_55, %c0_56] : memref<256x512xbf16, #tpu.memory_space<vmem>>, vector<256x512xbf16>
    %cst_57 = arith.constant dense<0.000000e+00> : vector<128x512xf32>
    %151 = tpu.matmul %149, %150, %cst_57 {dimension_numbers = #tpu.dot_dimension_numbers<[1], [0], [0], [1], [0, 0, 1, 1], [], []>} : vector<128x256xbf16>, vector<256x512xbf16>, vector<128x512xf32> -> vector<128x512xf32>
    %c0_58 = arith.constant 0 : index
    %c0_59 = arith.constant 0 : index
    %152 = vector.load %arg17[%c0_58, %c0_59] : memref<1x512xf32, #tpu.memory_space<vmem>>, vector<1x512xf32>
    %153 = vector.broadcast %152 : vector<1x512xf32> to vector<128x512xf32>
    %154 = arith.addf %151, %153 : vector<128x512xf32>
    %cst_60 = arith.constant 0.000000e+00 : f32
    %155 = vector.broadcast %cst_60 : f32 to vector<128x512xf32>
    %156 = arith.maximumf %154, %155 : vector<128x512xf32>
    %157 = arith.truncf %156 : vector<128x512xf32> to vector<128x512xbf16>
    %c0_61 = arith.constant 0 : index
    %c0_62 = arith.constant 0 : index
    %158 = vector.load %arg18[%c0_61, %c0_62] : memref<512x256xbf16, #tpu.memory_space<vmem>>, vector<512x256xbf16>
    %cst_63 = arith.constant dense<0.000000e+00> : vector<128x256xf32>
    %159 = tpu.matmul %157, %158, %cst_63 {dimension_numbers = #tpu.dot_dimension_numbers<[1], [0], [0], [1], [0, 0, 1, 1], [], []>} : vector<128x512xbf16>, vector<512x256xbf16>, vector<128x256xf32> -> vector<128x256xf32>
    %c0_64 = arith.constant 0 : index
    %c0_65 = arith.constant 0 : index
    %160 = vector.load %arg19[%c0_64, %c0_65] : memref<1x256xf32, #tpu.memory_space<vmem>>, vector<1x256xf32>
    %161 = vector.broadcast %160 : vector<1x256xf32> to vector<128x256xf32>
    %162 = arith.addf %159, %161 : vector<128x256xf32>
    %163 = arith.addf %124, %162 : vector<128x256xf32>
    %c0_66 = arith.constant 0 : index
    %c0_67 = arith.constant 0 : index
    %c0_68 = arith.constant 0 : index
    %164 = vector.load %arg22[%c0_66, %c0_67, %c0_68] : memref<1x128x256xf32, #tpu.memory_space<vmem>>, vector<1x128x256xf32>
    %165 = vector.shape_cast %164 : vector<1x128x256xf32> to vector<128x256xf32>
    %166 = vector.shape_cast %163 : vector<128x256xf32> to vector<1x128x256xf32>
    tpu.vector_store %arg22[%c0_66, %c0_67, %c0_68], %166 {strides = array<i32>} : memref<1x128x256xf32, #tpu.memory_space<vmem>>, vector<1x128x256xf32>,
    return
  }
  func.func @transform_0(%arg0: i32, %arg1: i32) -> (i32, i32, i32) {
    %c0_i32 = arith.constant 0 : i32
    %c0_i32_0 = arith.constant 0 : i32
    %c0_i32_1 = arith.constant 0 : i32
    return %arg0, %c0_i32, %c0_i32_0 : i32, i32, i32
  }
  func.func @transform_1(%arg0: i32, %arg1: i32) -> (i32, i32, i32) {
    %c0_i32 = arith.constant 0 : i32
    %c0_i32_0 = arith.constant 0 : i32
    %c0_i32_1 = arith.constant 0 : i32
    return %arg0, %c0_i32, %c0_i32_0 : i32, i32, i32
  }
  func.func @transform_2(%arg0: i32, %arg1: i32) -> (i32, i32) {
    %c0_i32 = arith.constant 0 : i32
    %c0_i32_0 = arith.constant 0 : i32
    %c0_i32_1 = arith.constant 0 : i32
    return %c0_i32, %c0_i32_0 : i32, i32
  }
  func.func @transform_3(%arg0: i32, %arg1: i32) -> (i32, i32) {
    %c0_i32 = arith.constant 0 : i32
    %c0_i32_0 = arith.constant 0 : i32
    %c0_i32_1 = arith.constant 0 : i32
    return %c0_i32, %c0_i32_0 : i32, i32
  }
  func.func @transform_4(%arg0: i32, %arg1: i32) -> (i32, i32) {
    %c0_i32 = arith.constant 0 : i32
    %c0_i32_0 = arith.constant 0 : i32
    %c0_i32_1 = arith.constant 0 : i32
    return %c0_i32, %c0_i32_0 : i32, i32
  }
  func.func @transform_5(%arg0: i32, %arg1: i32) -> (i32, i32) {
    %c0_i32 = arith.constant 0 : i32
    %c0_i32_0 = arith.constant 0 : i32
    %c0_i32_1 = arith.constant 0 : i32
    return %c0_i32, %c0_i32_0 : i32, i32
  }
  func.func @transform_6(%arg0: i32, %arg1: i32) -> (i32, i32) {
    %c0_i32 = arith.constant 0 : i32
    %c0_i32_0 = arith.constant 0 : i32
    %c0_i32_1 = arith.constant 0 : i32
    return %c0_i32, %c0_i32_0 : i32, i32
  }
  func.func @transform_7(%arg0: i32, %arg1: i32) -> (i32, i32) {
    %c0_i32 = arith.constant 0 : i32
    %c0_i32_0 = arith.constant 0 : i32
    %c0_i32_1 = arith.constant 0 : i32
    return %c0_i32, %c0_i32_0 : i32, i32
  }
  func.func @transform_8(%arg0: i32, %arg1: i32) -> (i32, i32) {
    %c0_i32 = arith.constant 0 : i32
    %c0_i32_0 = arith.constant 0 : i32
    %c0_i32_1 = arith.constant 0 : i32
    return %c0_i32, %c0_i32_0 : i32, i32
  }
  func.func @transform_9(%arg0: i32, %arg1: i32) -> (i32, i32) {
    %c0_i32 = arith.constant 0 : i32
    %c0_i32_0 = arith.constant 0 : i32
    %c0_i32_1 = arith.constant 0 : i32
    return %c0_i32, %c0_i32_0 : i32, i32
  }
  func.func @transform_10(%arg0: i32, %arg1: i32) -> (i32, i32) {
    %c0_i32 = arith.constant 0 : i32
    %c0_i32_0 = arith.constant 0 : i32
    %c0_i32_1 = arith.constant 0 : i32
    return %c0_i32, %c0_i32_0 : i32, i32
  }
  func.func @transform_11(%arg0: i32, %arg1: i32) -> (i32, i32) {
    %c0_i32 = arith.constant 0 : i32
    %c0_i32_0 = arith.constant 0 : i32
    %c0_i32_1 = arith.constant 0 : i32
    return %c0_i32, %c0_i32_0 : i32, i32
  }
  func.func @transform_12(%arg0: i32, %arg1: i32) -> (i32, i32) {
    %c0_i32 = arith.constant 0 : i32
    %c0_i32_0 = arith.constant 0 : i32
    %c0_i32_1 = arith.constant 0 : i32
    return %c0_i32, %c0_i32_0 : i32, i32
  }
  func.func @transform_13(%arg0: i32, %arg1: i32) -> (i32, i32) {
    %c0_i32 = arith.constant 0 : i32
    %c0_i32_0 = arith.constant 0 : i32
    %c0_i32_1 = arith.constant 0 : i32
    return %c0_i32, %c0_i32_0 : i32, i32
  }
  func.func @transform_14(%arg0: i32, %arg1: i32) -> (i32, i32) {
    %c0_i32 = arith.constant 0 : i32
    %c0_i32_0 = arith.constant 0 : i32
    %c0_i32_1 = arith.constant 0 : i32
    return %c0_i32, %c0_i32_0 : i32, i32
  }
  func.func @transform_15(%arg0: i32, %arg1: i32) -> (i32, i32) {
    %c0_i32 = arith.constant 0 : i32
    %c0_i32_0 = arith.constant 0 : i32
    %c0_i32_1 = arith.constant 0 : i32
    return %c0_i32, %c0_i32_0 : i32, i32
  }
  func.func @transform_16(%arg0: i32, %arg1: i32) -> (i32, i32) {
    %c0_i32 = arith.constant 0 : i32
    %c0_i32_0 = arith.constant 0 : i32
    %c0_i32_1 = arith.constant 0 : i32
    return %c0_i32, %c0_i32_0 : i32, i32
  }
  func.func @transform_17(%arg0: i32, %arg1: i32) -> (i32, i32) {
    %c0_i32 = arith.constant 0 : i32
    %c0_i32_0 = arith.constant 0 : i32
    %c0_i32_1 = arith.constant 0 : i32
    return %c0_i32, %c0_i32_0 : i32, i32
  }
  func.func @transform_18(%arg0: i32, %arg1: i32) -> (i32, i32) {
    %c0_i32 = arith.constant 0 : i32
    %c0_i32_0 = arith.constant 0 : i32
    %c0_i32_1 = arith.constant 0 : i32
    return %c0_i32, %c0_i32_0 : i32, i32
  }
  func.func @transform_19(%arg0: i32, %arg1: i32) -> (i32, i32) {
    %c0_i32 = arith.constant 0 : i32
    %c0_i32_0 = arith.constant 0 : i32
    %c0_i32_1 = arith.constant 0 : i32
    return %c0_i32, %c0_i32_0 : i32, i32
  }
  func.func @transform_20(%arg0: i32, %arg1: i32) -> (i32, i32, i32) {
    %c0_i32 = arith.constant 0 : i32
    %c0_i32_0 = arith.constant 0 : i32
    return %arg0, %arg1, %c0_i32 : i32, i32, i32
  }
}

</mosaic_0001>

<llo_original>
// kernel: tpu_custom_call.1
$region0: #{tpu_custom_call.1}
  #allocation0 [shape = 'u32[]', space=smem, size = 0x4, offset = 0x4, fixed_abs, tag = 'smem constant byte address 0x4 - core index']
  #allocation1 [shape = 'u32[144,128]{1,0:T(1,128)}', space=vmem, size = 0x12000, scoped, tag = 'internal scratch']
  #allocation2 [shape = 'bf16[256,256]{1,0:T(16,128)(2,1)}', space=vmem, size = 0x20000, scoped, tag = 'scratch operand']
  #allocation3 [shape = 'bf16[256,256]{1,0:T(16,128)(2,1)}', space=vmem, size = 0x20000, scoped, tag = 'scratch operand']
  %s0 = inlined_call_operand.hbm [shape: f32[2,256,256], index: 0, kind: input, shape index: {}]
  %s1 = inlined_call_operand.hbm [shape: f32[2,1,256], index: 1, kind: input, shape index: {}]
  %s2 = inlined_call_operand.vmem [shape: f32[1,256], index: 2, kind: input, shape index: {}]
  %s3 = inlined_call_operand.vmem [shape: f32[1,256], index: 3, kind: input, shape index: {}]
  %s4 = inlined_call_operand.hbm [shape: bf16[256,256], index: 4, kind: input, shape index: {}]
  %s5 = inlined_call_operand.vmem [shape: f32[1,256], index: 5, kind: input, shape index: {}]
  %s6 = inlined_call_operand.hbm [shape: bf16[256,256], index: 6, kind: input, shape index: {}]
  %s7 = inlined_call_operand.vmem [shape: f32[1,256], index: 7, kind: input, shape index: {}]
  %s8 = inlined_call_operand.hbm [shape: bf16[256,256], index: 8, kind: input, shape index: {}]
  %s9 = inlined_call_operand.vmem [shape: f32[1,256], index: 9, kind: input, shape index: {}]
  %s10 = inlined_call_operand.hbm [shape: bf16[256,256], index: 10, kind: input, shape index: {}]
  %s11 = inlined_call_operand.vmem [shape: f32[1,256], index: 11, kind: input, shape index: {}]
  %s12 = inlined_call_operand.vmem [shape: f32[1,256], index: 12, kind: input, shape index: {}]
  %s13 = inlined_call_operand.vmem [shape: f32[1,256], index: 13, kind: input, shape index: {}]
  %s14 = inlined_call_operand.hbm [shape: bf16[256,512], index: 14, kind: input, shape index: {}]
  %s15 = inlined_call_operand.vmem [shape: f32[1,512], index: 15, kind: input, shape index: {}]
  %s16 = inlined_call_operand.hbm [shape: bf16[512,256], index: 16, kind: input, shape index: {}]
  %s17 = inlined_call_operand.vmem [shape: f32[1,256], index: 17, kind: input, shape index: {}]
  %s18 = inlined_call_operand.vmem [shape: f32[1,256], index: 18, kind: input, shape index: {}]
  %s19 = inlined_call_operand.vmem [shape: f32[1,256], index: 19, kind: input, shape index: {}]
  %s20 = inlined_call_operand.hbm [shape: f32[2,256,256], index: 20, kind: output, shape index: {}]
  %s21 = sld [smem:[#allocation0]]
  $region149: #{tpu_custom_call.1} parent=0
    _
  %s23 = ssub.s32 1, %s21
  %s24 = scalar_select 0, %s23, %s21
  $region1: #{tpu_custom_call.1} parent=0
    #allocation4 [shape = 'u8[524288]{0}', space=vmem, size = 0x80000, scoped, tag = 'input window, operand 0']
    #allocation5 [shape = 's32[2]{0}', space=sflag, size = 0x8, scoped, tag = 'scoped memory for tpu_custom_call.1']
    #allocation6 [shape = 's32[2]{0}', space=sflag, size = 0x8, scoped, tag = 'scoped memory for tpu_custom_call.1']
    #allocation7 [shape = 'u8[2048]{0}', space=vmem, size = 0x800, scoped, tag = 'input window, operand 1']
    #allocation8 [shape = 's32[2]{0}', space=sflag, size = 0x8, scoped, tag = 'scoped memory for tpu_custom_call.1']
    #allocation9 [shape = 'u8[131072]{0}', space=vmem, size = 0x20000, scoped, tag = 'input window, operand 4, single buffered']
    #allocation10 [shape = 'u8[131072]{0}', space=vmem, size = 0x20000, scoped, tag = 'input window, operand 6, single buffered']
    #allocation11 [shape = 's32[1]{0}', space=sflag, size = 0x4, scoped, tag = 'scoped memory for tpu_custom_call.1']
    #allocation12 [shape = 'u8[131072]{0}', space=vmem, size = 0x20000, scoped, tag = 'input window, operand 8, single buffered']
    #allocation13 [shape = 'u8[131072]{0}', space=vmem, size = 0x20000, scoped, tag = 'input window, operand 10, single buffered']
    #allocation14 [shape = 's32[1]{0}', space=sflag, size = 0x4, scoped, tag = 'scoped memory for tpu_custom_call.1']
    #allocation15 [shape = 'u8[262144]{0}', space=vmem, size = 0x40000, scoped, tag = 'input window, operand 14, single buffered']
    #allocation16 [shape = 'u8[262144]{0}', space=vmem, size = 0x40000, scoped, tag = 'input window, operand 16, single buffered']
    #allocation17 [shape = 's32[1]{0}', space=sflag, size = 0x4, scoped, tag = 'scoped memory for tpu_custom_call.1']
    #allocation18 [shape = 'u8[262144]{0}', space=vmem, size = 0x40000, scoped, tag = 'output window, operand 0']
    %25 = vsyncpa [#allocation5], 0
    %s26 = scalar_lea.sflag [#allocation5], 1
    %27 = vsyncpa %s26, 0
    %28 = vsyncpa [#allocation8], 0
    %s29 = scalar_lea.sflag [#allocation8], 1
    %30 = vsyncpa %s29, 0
    %31 = vsyncpa [#allocation11], 0
    %32 = vsyncpa [#allocation14], 0
    %33 = vsyncpa [#allocation17], 0
    %34 = vsyncpa [#allocation6], 0
    %s35 = scalar_lea.sflag [#allocation6], 1
    %36 = vsyncpa %s35, 0
    loop: start=0, step=1, limit=6
    $region2: #{tpu_custom_call.1} parent=1 // loop_pre_header
      _
    $region3: #{tpu_custom_call.1} parent=1 // loop_header
      %s38 = sphi 0, %s42
      %p39 = scmp.ge.s32.totalorder %s38, 6
      %s45 = sphi 0, %s57
      %s46 = sphi 0, %s53
      %s47 = sphi 0, %s45
      %s48 = sphi 0, %s46
      %s49 = sphi 0, %s47
      %s50 = sphi 0, %s48
      %s60 = sphi 0, %s62
      %s63 = sphi 0, %s60
      %s64 = sphi 0, %s63
      %s80 = sphi 0, %s64
      %s86 = sphi 0, %s88
      %s89 = sphi 0, %s86
      %s90 = sphi 0, %s89
      %s106 = sphi 0, %s90
      %s110 = sphi 0, %s110
      %s112 = sphi 0, %s110
      %s113 = sphi 0, %s112
      %s127 = sphi 0, %s113
      %s131 = sphi 0, %s131
      %s133 = sphi 0, %s131
      %s134 = sphi 0, %s133
      %s148 = sphi 0, %s134
      %s152 = sphi 0, %s152
      %s154 = sphi 0, %s152
      %s155 = sphi 0, %s154
      %s169 = sphi 0, %s155
      %s173 = sphi 0, %s173
      %s175 = sphi 0, %s173
      %s176 = sphi 0, %s175
      %s190 = sphi 0, %s176
      %s194 = sphi 0, %s194
      %s196 = sphi 0, %s194
      %s197 = sphi 0, %s196
      %s211 = sphi 0, %s197
      %s215 = sphi 0, %s215
      %s217 = sphi 0, %s215
      %s218 = sphi 0, %s217
      %s232 = sphi 0, %s218
      %s236 = sphi 0, %s236
      %s238 = sphi 0, %s236
      %s239 = sphi 0, %s238
      %s253 = sphi 0, %s239
      %s257 = sphi 0, %s257
      %s259 = sphi 0, %s257
      %s260 = sphi 0, %s259
      %s274 = sphi 0, %s260
      %s278 = sphi 0, %s278
      %s280 = sphi 0, %s278
      %s281 = sphi 0, %s280
      %s295 = sphi 0, %s281
      %s299 = sphi 0, %s299
      %s301 = sphi 0, %s299
      %s302 = sphi 0, %s301
      %s316 = sphi 0, %s302
      %s320 = sphi 0, %s320
      %s322 = sphi 0, %s320
      %s323 = sphi 0, %s322
      %s337 = sphi 0, %s323
      %s341 = sphi 0, %s341
      %s343 = sphi 0, %s341
      %s344 = sphi 0, %s343
      %s358 = sphi 0, %s344
      %s362 = sphi 0, %s362
      %s364 = sphi 0, %s362
      %s365 = sphi 0, %s364
      %s379 = sphi 0, %s365
      %s383 = sphi 0, %s383
      %s385 = sphi 0, %s383
      %s386 = sphi 0, %s385
      %s400 = sphi 0, %s386
      %s404 = sphi 0, %s404
      %s406 = sphi 0, %s404
      %s407 = sphi 0, %s406
      %s421 = sphi 0, %s407
      %s425 = sphi 0, %s425
      %s427 = sphi 0, %s425
      %s428 = sphi 0, %s427
      %s442 = sphi 0, %s428
      %s446 = sphi 0, %s446
      %s448 = sphi 0, %s446
      %s449 = sphi 0, %s448
      %s463 = sphi 0, %s449
      %s467 = sphi 0, %s467
      %s469 = sphi 0, %s467
      %s470 = sphi 0, %s469
      %s484 = sphi 0, %s470
      %s492 = sphi 0, %s494
      %s495 = sphi 0, %s492
      %s496 = sphi 0, %s495
      %s512 = sphi 0, %s496
    $region4: #{tpu_custom_call.1} parent=1 // loop_header_branch
      %41 = sbr.rel (%p39) target = $region8
    $region5: #{tpu_custom_call.1} parent=1 // loop_body
      %s43 = ssub.s32 %s38, 1
      %s44 = ssub.s32 %s38, 2
      %s51 = sadd.s32 1, %s46
      %p52 = scmp.ge.s32.totalorder %s51, 2
      %s53 = scalar_select %p52, 0, %s51
      %s54 = sadd.s32 1, %s45
      %s55 = scalar_select %p52, %s54, %s45
      %p56 = scmp.ge.s32.totalorder %s55, 2
      %s57 = scalar_select %p56, 0, %s55
      %s58 = ssub.s32 %s45, %s57
      %p59 = scmp.eq.s32.totalorder %s58, 0
      %s61 = sadd.s32 %s60, 1
      %s62 = scalar_select %p59, %s60, %s61
      %p65 = pneg %p59
      %p66 = scmp.eq.s32.totalorder %s38, 3
      %p67 = por %p65, %p66
      %p68 = scmp.ne.s32.totalorder %s60, %s63
      %p69 = scmp.eq.s32.totalorder %s38, 0
      %p70 = por %p68, %p69
      %p71 = scmp.ne.s32.totalorder %s60, %s63
      %p72 = scmp.eq.s32.totalorder %s43, 3
      %p73 = por %p71, %p72
      %p74 = scmp.ne.s32.totalorder %s63, %s64
      %p75 = scmp.eq.s32.totalorder %s43, 0
      %p76 = por %p74, %p75
      %p77 = scmp.ne.s32.totalorder %s63, %s64
      %p78 = scmp.eq.s32.totalorder %s44, 3
      %p79 = por %p77, %p78
      %p81 = scmp.ne.s32.totalorder %s64, %s80
      %p82 = scmp.eq.s32.totalorder %s44, 0
      %p83 = por %p81, %p82
      %s84 = ssub.s32 %s45, %s57
      %p85 = scmp.eq.s32.totalorder %s84, 0
      %s87 = sadd.s32 %s86, 1
      %s88 = scalar_select %p85, %s86, %s87
      %p91 = pneg %p85
      %p92 = scmp.eq.s32.totalorder %s38, 3
      %p93 = por %p91, %p92
      %p94 = scmp.ne.s32.totalorder %s86, %s89
      %p95 = scmp.eq.s32.totalorder %s38, 0
      %p96 = por %p94, %p95
      %p97 = scmp.ne.s32.totalorder %s86, %s89
      %p98 = scmp.eq.s32.totalorder %s43, 3
      %p99 = por %p97, %p98
      %p100 = scmp.ne.s32.totalorder %s89, %s90
      %p101 = scmp.eq.s32.totalorder %s43, 0
      %p102 = por %p100, %p101
      %p103 = scmp.ne.s32.totalorder %s89, %s90
      %p104 = scmp.eq.s32.totalorder %s44, 3
      %p105 = por %p103, %p104
      %p107 = scmp.ne.s32.totalorder %s90, %s106
      %p108 = scmp.eq.s32.totalorder %s44, 0
      %p109 = por %p107, %p108
      %s111 = sadd.s32 %s110, 1
      %p114 = scmp.eq.s32.totalorder %s38, 3
      %p115 = scmp.ne.s32.totalorder %s110, %s112
      %p116 = scmp.eq.s32.totalorder %s38, 0
      %p117 = por %p115, %p116
      %p118 = scmp.ne.s32.totalorder %s110, %s112
      %p119 = scmp.eq.s32.totalorder %s43, 3
      %p120 = por %p118, %p119
      %p121 = scmp.ne.s32.totalorder %s112, %s113
      %p122 = scmp.eq.s32.totalorder %s43, 0
      %p123 = por %p121, %p122
      %p124 = scmp.ne.s32.totalorder %s112, %s113
      %p125 = scmp.eq.s32.totalorder %s44, 3
      %p126 = por %p124, %p125
      %p128 = scmp.ne.s32.totalorder %s113, %s127
      %p129 = scmp.eq.s32.totalorder %s44, 0
      %p130 = por %p128, %p129
      %s132 = sadd.s32 %s131, 1
      %p135 = scmp.eq.s32.totalorder %s38, 3
      %p136 = scmp.ne.s32.totalorder %s131, %s133
      %p137 = scmp.eq.s32.totalorder %s38, 0
      %p138 = por %p136, %p137
      %p139 = scmp.ne.s32.totalorder %s131, %s133
      %p140 = scmp.eq.s32.totalorder %s43, 3
      %p141 = por %p139, %p140
      %p142 = scmp.ne.s32.totalorder %s133, %s134
      %p143 = scmp.eq.s32.totalorder %s43, 0
      %p144 = por %p142, %p143
      %p145 = scmp.ne.s32.totalorder %s133, %s134
      %p146 = scmp.eq.s32.totalorder %s44, 3
      %p147 = por %p145, %p146
      %p149 = scmp.ne.s32.totalorder %s134, %s148
      %p150 = scmp.eq.s32.totalorder %s44, 0
      %p151 = por %p149, %p150
      %s153 = sadd.s32 %s152, 1
      %p156 = scmp.eq.s32.totalorder %s38, 3
      %p157 = scmp.ne.s32.totalorder %s152, %s154
      %p158 = scmp.eq.s32.totalorder %s38, 0
      %p159 = por %p157, %p158
      %p160 = scmp.ne.s32.totalorder %s152, %s154
      %p161 = scmp.eq.s32.totalorder %s43, 3
      %p162 = por %p160, %p161
      %p163 = scmp.ne.s32.totalorder %s154, %s155
      %p164 = scmp.eq.s32.totalorder %s43, 0
      %p165 = por %p163, %p164
      %p166 = scmp.ne.s32.totalorder %s154, %s155
      %p167 = scmp.eq.s32.totalorder %s44, 3
      %p168 = por %p166, %p167
      %p170 = scmp.ne.s32.totalorder %s155, %s169
      %p171 = scmp.eq.s32.totalorder %s44, 0
      %p172 = por %p170, %p171
      %s174 = sadd.s32 %s173, 1
      %p177 = scmp.eq.s32.totalorder %s38, 3
      %p178 = scmp.ne.s32.totalorder %s173, %s175
      %p179 = scmp.eq.s32.totalorder %s38, 0
      %p180 = por %p178, %p179
      %p181 = scmp.ne.s32.totalorder %s173, %s175
      %p182 = scmp.eq.s32.totalorder %s43, 3
      %p183 = por %p181, %p182
      %p184 = scmp.ne.s32.totalorder %s175, %s176
      %p185 = scmp.eq.s32.totalorder %s43, 0
      %p186 = por %p184, %p185
      %p187 = scmp.ne.s32.totalorder %s175, %s176
      %p188 = scmp.eq.s32.totalorder %s44, 3
      %p189 = por %p187, %p188
      %p191 = scmp.ne.s32.totalorder %s176, %s190
      %p192 = scmp.eq.s32.totalorder %s44, 0
      %p193 = por %p191, %p192
      %s195 = sadd.s32 %s194, 1
      %p198 = scmp.eq.s32.totalorder %s38, 3
      %p199 = scmp.ne.s32.totalorder %s194, %s196
      %p200 = scmp.eq.s32.totalorder %s38, 0
      %p201 = por %p199, %p200
      %p202 = scmp.ne.s32.totalorder %s194, %s196
      %p203 = scmp.eq.s32.totalorder %s43, 3
      %p204 = por %p202, %p203
      %p205 = scmp.ne.s32.totalorder %s196, %s197
      %p206 = scmp.eq.s32.totalorder %s43, 0
      %p207 = por %p205, %p206
      %p208 = scmp.ne.s32.totalorder %s196, %s197
      %p209 = scmp.eq.s32.totalorder %s44, 3
      %p210 = por %p208, %p209
      %p212 = scmp.ne.s32.totalorder %s197, %s211
      %p213 = scmp.eq.s32.totalorder %s44, 0
      %p214 = por %p212, %p213
      %s216 = sadd.s32 %s215, 1
      %p219 = scmp.eq.s32.totalorder %s38, 3
      %p220 = scmp.ne.s32.totalorder %s215, %s217
      %p221 = scmp.eq.s32.totalorder %s38, 0
      %p222 = por %p220, %p221
      %p223 = scmp.ne.s32.totalorder %s215, %s217
      %p224 = scmp.eq.s32.totalorder %s43, 3
      %p225 = por %p223, %p224
      %p226 = scmp.ne.s32.totalorder %s217, %s218
      %p227 = scmp.eq.s32.totalorder %s43, 0
      %p228 = por %p226, %p227
      %p229 = scmp.ne.s32.totalorder %s217, %s218
      %p230 = scmp.eq.s32.totalorder %s44, 3
      %p231 = por %p229, %p230
      %p233 = scmp.ne.s32.totalorder %s218, %s232
      %p234 = scmp.eq.s32.totalorder %s44, 0
      %p235 = por %p233, %p234
      %s237 = sadd.s32 %s236, 1
      %p240 = scmp.eq.s32.totalorder %s38, 3
      %p241 = scmp.ne.s32.totalorder %s236, %s238
      %p242 = scmp.eq.s32.totalorder %s38, 0
      %p243 = por %p241, %p242
      %p244 = scmp.ne.s32.totalorder %s236, %s238
      %p245 = scmp.eq.s32.totalorder %s43, 3
      %p246 = por %p244, %p245
      %p247 = scmp.ne.s32.totalorder %s238, %s239
      %p248 = scmp.eq.s32.totalorder %s43, 0
      %p249 = por %p247, %p248
      %p250 = scmp.ne.s32.totalorder %s238, %s239
      %p251 = scmp.eq.s32.totalorder %s44, 3
      %p252 = por %p250, %p251
      %p254 = scmp.ne.s32.totalorder %s239, %s253
      %p255 = scmp.eq.s32.totalorder %s44, 0
      %p256 = por %p254, %p255
      %s258 = sadd.s32 %s257, 1
      %p261 = scmp.eq.s32.totalorder %s38, 3
      %p262 = scmp.ne.s32.totalorder %s257, %s259
      %p263 = scmp.eq.s32.totalorder %s38, 0
      %p264 = por %p262, %p263
      %p265 = scmp.ne.s32.totalorder %s257, %s259
      %p266 = scmp.eq.s32.totalorder %s43, 3
      %p267 = por %p265, %p266
      %p268 = scmp.ne.s32.totalorder %s259, %s260
      %p269 = scmp.eq.s32.totalorder %s43, 0
      %p270 = por %p268, %p269
      %p271 = scmp.ne.s32.totalorder %s259, %s260
      %p272 = scmp.eq.s32.totalorder %s44, 3
      %p273 = por %p271, %p272
      %p275 = scmp.ne.s32.totalorder %s260, %s274
      %p276 = scmp.eq.s32.totalorder %s44, 0
      %p277 = por %p275, %p276
      %s279 = sadd.s32 %s278, 1
      %p282 = scmp.eq.s32.totalorder %s38, 3
      %p283 = scmp.ne.s32.totalorder %s278, %s280
      %p284 = scmp.eq.s32.totalorder %s38, 0
      %p285 = por %p283, %p284
      %p286 = scmp.ne.s32.totalorder %s278, %s280
      %p287 = scmp.eq.s32.totalorder %s43, 3
      %p288 = por %p286, %p287
      %p289 = scmp.ne.s32.totalorder %s280, %s281
      %p290 = scmp.eq.s32.totalorder %s43, 0
      %p291 = por %p289, %p290
      %p292 = scmp.ne.s32.totalorder %s280, %s281
      %p293 = scmp.eq.s32.totalorder %s44, 3
      %p294 = por %p292, %p293
      %p296 = scmp.ne.s32.totalorder %s281, %s295
      %p297 = scmp.eq.s32.totalorder %s44, 0
      %p298 = por %p296, %p297
      %s300 = sadd.s32 %s299, 1
      %p303 = scmp.eq.s32.totalorder %s38, 3
      %p304 = scmp.ne.s32.totalorder %s299, %s301
      %p305 = scmp.eq.s32.totalorder %s38, 0
      %p306 = por %p304, %p305
      %p307 = scmp.ne.s32.totalorder %s299, %s301
      %p308 = scmp.eq.s32.totalorder %s43, 3
      %p309 = por %p307, %p308
      %p310 = scmp.ne.s32.totalorder %s301, %s302
      %p311 = scmp.eq.s32.totalorder %s43, 0
      %p312 = por %p310, %p311
      %p313 = scmp.ne.s32.totalorder %s301, %s302
      %p314 = scmp.eq.s32.totalorder %s44, 3
      %p315 = por %p313, %p314
      %p317 = scmp.ne.s32.totalorder %s302, %s316
      %p318 = scmp.eq.s32.totalorder %s44, 0
      %p319 = por %p317, %p318
      %s321 = sadd.s32 %s320, 1
      %p324 = scmp.eq.s32.totalorder %s38, 3
      %p325 = scmp.ne.s32.totalorder %s320, %s322
      %p326 = scmp.eq.s32.totalorder %s38, 0
      %p327 = por %p325, %p326
      %p328 = scmp.ne.s32.totalorder %s320, %s322
      %p329 = scmp.eq.s32.totalorder %s43, 3
      %p330 = por %p328, %p329
      %p331 = scmp.ne.s32.totalorder %s322, %s323
      %p332 = scmp.eq.s32.totalorder %s43, 0
      %p333 = por %p331, %p332
      %p334 = scmp.ne.s32.totalorder %s322, %s323
      %p335 = scmp.eq.s32.totalorder %s44, 3
      %p336 = por %p334, %p335
      %p338 = scmp.ne.s32.totalorder %s323, %s337
      %p339 = scmp.eq.s32.totalorder %s44, 0
      %p340 = por %p338, %p339
      %s342 = sadd.s32 %s341, 1
      %p345 = scmp.eq.s32.totalorder %s38, 3
      %p346 = scmp.ne.s32.totalorder %s341, %s343
      %p347 = scmp.eq.s32.totalorder %s38, 0
      %p348 = por %p346, %p347
      %p349 = scmp.ne.s32.totalorder %s341, %s343
      %p350 = scmp.eq.s32.totalorder %s43, 3
      %p351 = por %p349, %p350
      %p352 = scmp.ne.s32.totalorder %s343, %s344
      %p353 = scmp.eq.s32.totalorder %s43, 0
      %p354 = por %p352, %p353
      %p355 = scmp.ne.s32.totalorder %s343, %s344
      %p356 = scmp.eq.s32.totalorder %s44, 3
      %p357 = por %p355, %p356
      %p359 = scmp.ne.s32.totalorder %s344, %s358
      %p360 = scmp.eq.s32.totalorder %s44, 0
      %p361 = por %p359, %p360
      %s363 = sadd.s32 %s362, 1
      %p366 = scmp.eq.s32.totalorder %s38, 3
      %p367 = scmp.ne.s32.totalorder %s362, %s364
      %p368 = scmp.eq.s32.totalorder %s38, 0
      %p369 = por %p367, %p368
      %p370 = scmp.ne.s32.totalorder %s362, %s364
      %p371 = scmp.eq.s32.totalorder %s43, 3
      %p372 = por %p370, %p371
      %p373 = scmp.ne.s32.totalorder %s364, %s365
      %p374 = scmp.eq.s32.totalorder %s43, 0
      %p375 = por %p373, %p374
      %p376 = scmp.ne.s32.totalorder %s364, %s365
      %p377 = scmp.eq.s32.totalorder %s44, 3
      %p378 = por %p376, %p377
      %p380 = scmp.ne.s32.totalorder %s365, %s379
      %p381 = scmp.eq.s32.totalorder %s44, 0
      %p382 = por %p380, %p381
      %s384 = sadd.s32 %s383, 1
      %p387 = scmp.eq.s32.totalorder %s38, 3
      %p388 = scmp.ne.s32.totalorder %s383, %s385
      %p389 = scmp.eq.s32.totalorder %s38, 0
      %p390 = por %p388, %p389
      %p391 = scmp.ne.s32.totalorder %s383, %s385
      %p392 = scmp.eq.s32.totalorder %s43, 3
      %p393 = por %p391, %p392
      %p394 = scmp.ne.s32.totalorder %s385, %s386
      %p395 = scmp.eq.s32.totalorder %s43, 0
      %p396 = por %p394, %p395
      %p397 = scmp.ne.s32.totalorder %s385, %s386
      %p398 = scmp.eq.s32.totalorder %s44, 3
      %p399 = por %p397, %p398
      %p401 = scmp.ne.s32.totalorder %s386, %s400
      %p402 = scmp.eq.s32.totalorder %s44, 0
      %p403 = por %p401, %p402
      %s405 = sadd.s32 %s404, 1
      %p408 = scmp.eq.s32.totalorder %s38, 3
      %p409 = scmp.ne.s32.totalorder %s404, %s406
      %p410 = scmp.eq.s32.totalorder %s38, 0
      %p411 = por %p409, %p410
      %p412 = scmp.ne.s32.totalorder %s404, %s406
      %p413 = scmp.eq.s32.totalorder %s43, 3
      %p414 = por %p412, %p413
      %p415 = scmp.ne.s32.totalorder %s406, %s407
      %p416 = scmp.eq.s32.totalorder %s43, 0
      %p417 = por %p415, %p416
      %p418 = scmp.ne.s32.totalorder %s406, %s407
      %p419 = scmp.eq.s32.totalorder %s44, 3
      %p420 = por %p418, %p419
      %p422 = scmp.ne.s32.totalorder %s407, %s421
      %p423 = scmp.eq.s32.totalorder %s44, 0
      %p424 = por %p422, %p423
      %s426 = sadd.s32 %s425, 1
      %p429 = scmp.eq.s32.totalorder %s38, 3
      %p430 = scmp.ne.s32.totalorder %s425, %s427
      %p431 = scmp.eq.s32.totalorder %s38, 0
      %p432 = por %p430, %p431
      %p433 = scmp.ne.s32.totalorder %s425, %s427
      %p434 = scmp.eq.s32.totalorder %s43, 3
      %p435 = por %p433, %p434
      %p436 = scmp.ne.s32.totalorder %s427, %s428
      %p437 = scmp.eq.s32.totalorder %s43, 0
      %p438 = por %p436, %p437
      %p439 = scmp.ne.s32.totalorder %s427, %s428
      %p440 = scmp.eq.s32.totalorder %s44, 3
      %p441 = por %p439, %p440
      %p443 = scmp.ne.s32.totalorder %s428, %s442
      %p444 = scmp.eq.s32.totalorder %s44, 0
      %p445 = por %p443, %p444
      %s447 = sadd.s32 %s446, 1
      %p450 = scmp.eq.s32.totalorder %s38, 3
      %p451 = scmp.ne.s32.totalorder %s446, %s448
      %p452 = scmp.eq.s32.totalorder %s38, 0
      %p453 = por %p451, %p452
      %p454 = scmp.ne.s32.totalorder %s446, %s448
      %p455 = scmp.eq.s32.totalorder %s43, 3
      %p456 = por %p454, %p455
      %p457 = scmp.ne.s32.totalorder %s448, %s449
      %p458 = scmp.eq.s32.totalorder %s43, 0
      %p459 = por %p457, %p458
      %p460 = scmp.ne.s32.totalorder %s448, %s449
      %p461 = scmp.eq.s32.totalorder %s44, 3
      %p462 = por %p460, %p461
      %p464 = scmp.ne.s32.totalorder %s449, %s463
      %p465 = scmp.eq.s32.totalorder %s44, 0
      %p466 = por %p464, %p465
      %s468 = sadd.s32 %s467, 1
      %p471 = scmp.eq.s32.totalorder %s38, 3
      %p472 = scmp.ne.s32.totalorder %s467, %s469
      %p473 = scmp.eq.s32.totalorder %s38, 0
      %p474 = por %p472, %p473
      %p475 = scmp.ne.s32.totalorder %s467, %s469
      %p476 = scmp.eq.s32.totalorder %s43, 3
      %p477 = por %p475, %p476
      %p478 = scmp.ne.s32.totalorder %s469, %s470
      %p479 = scmp.eq.s32.totalorder %s43, 0
      %p480 = por %p478, %p479
      %p481 = scmp.ne.s32.totalorder %s469, %s470
      %p482 = scmp.eq.s32.totalorder %s44, 3
      %p483 = por %p481, %p482
      %p485 = scmp.ne.s32.totalorder %s470, %s484
      %p486 = scmp.eq.s32.totalorder %s44, 0
      %p487 = por %p485, %p486
      %s488 = ssub.s32 %s45, %s57
      %s489 = ssub.s32 %s46, %s53
      %s490 = sor.u32 %s488, %s489
      %p491 = scmp.eq.s32.totalorder %s490, 0
      %s493 = sadd.s32 %s492, 1
      %s494 = scalar_select %p491, %s492, %s493
      %p497 = pneg %p491
      %p498 = scmp.eq.s32.totalorder %s38, 3
      %p499 = por %p497, %p498
      %p500 = scmp.ne.s32.totalorder %s492, %s495
      %p501 = scmp.eq.s32.totalorder %s38, 0
      %p502 = por %p500, %p501
      %p503 = scmp.ne.s32.totalorder %s492, %s495
      %p504 = scmp.eq.s32.totalorder %s43, 3
      %p505 = por %p503, %p504
      %p506 = scmp.ne.s32.totalorder %s495, %s496
      %p507 = scmp.eq.s32.totalorder %s43, 0
      %p508 = por %p506, %p507
      %p509 = scmp.ne.s32.totalorder %s495, %s496
      %p510 = scmp.eq.s32.totalorder %s44, 3
      %p511 = por %p509, %p510
      %p513 = scmp.ne.s32.totalorder %s496, %s512
      %p514 = scmp.eq.s32.totalorder %s44, 0
      %p515 = por %p513, %p514
      %p516 = scmp.le.s32.totalorder 1, %s38
      %p517 = scmp.lt.s32.totalorder %s38, 5
      %p518 = pnand %p516, %p517
      %p519 = pneg %p518
      // Predicated region
      $region9: #{tpu_custom_call.1} parent=5 // pred_check
        _
      $region10: #{tpu_custom_call.1} parent=5 // pred_check_branch
        %521 = sbr.rel (%p518) target = $region12
      $region11: #{tpu_custom_call.1} parent=5 // pred_region
        %s522 = ssub.s32 %s38, 1
        // Predicated region
        $region13: #{tpu_custom_call.1} parent=11 // pred_check
          %p523 = pneg %p123
        $region14: #{tpu_custom_call.1} parent=11 // pred_check_branch
          %525 = sbr.rel (%p523) target = $region16
        $region15: #{tpu_custom_call.1} parent=11 // pred_region
          _
        $region16: #{tpu_custom_call.1} parent=11 // pred_fallthru
          _
        // Predicated region
        $region17: #{tpu_custom_call.1} parent=11 // pred_check
          %p526 = pneg %p144
        $region18: #{tpu_custom_call.1} parent=11 // pred_check_branch
          %528 = sbr.rel (%p526) target = $region20
        $region19: #{tpu_custom_call.1} parent=11 // pred_region
          _
        $region20: #{tpu_custom_call.1} parent=11 // pred_fallthru
          _
        // Predicated region
        $region21: #{tpu_custom_call.1} parent=11 // pred_check
          %p529 = pneg %p165
        $region22: #{tpu_custom_call.1} parent=11 // pred_check_branch
          %531 = sbr.rel (%p529) target = $region24
        $region23: #{tpu_custom_call.1} parent=11 // pred_region
          %s533 = ssub.s32 4096, 4096
          %534 = vsyncadd [#allocation8], %s533
          %s535 = sshll.u32 [#allocation9], 4
          %s536 = int_to_ptr.vmem [resolvable:$true] %s535
          %541 = dma.hbm_to_vmem [thread:$0]  %s4, 4096, %s536, [#allocation8], 128, 128, 8
        $region24: #{tpu_custom_call.1} parent=11 // pred_fallthru
          _
        // Predicated region
        $region25: #{tpu_custom_call.1} parent=11 // pred_check
          %p542 = pneg %p186
        $region26: #{tpu_custom_call.1} parent=11 // pred_check_branch
          %544 = sbr.rel (%p542) target = $region28
        $region27: #{tpu_custom_call.1} parent=11 // pred_region
          _
        $region28: #{tpu_custom_call.1} parent=11 // pred_fallthru
          _
        // Predicated region
        $region29: #{tpu_custom_call.1} parent=11 // pred_check
          %p545 = pneg %p207
        $region30: #{tpu_custom_call.1} parent=11 // pred_check_branch
          %547 = sbr.rel (%p545) target = $region32
        $region31: #{tpu_custom_call.1} parent=11 // pred_region
          %s549 = ssub.s32 4096, 4096
          %550 = vsyncadd [#allocation11], %s549
          %s551 = sshll.u32 [#allocation10], 4
          %s552 = int_to_ptr.vmem [resolvable:$true] %s551
          %557 = dma.hbm_to_vmem [thread:$0]  %s6, 4096, %s552, [#allocation11], 128, 128, 8
        $region32: #{tpu_custom_call.1} parent=11 // pred_fallthru
          _
        // Predicated region
        $region33: #{tpu_custom_call.1} parent=11 // pred_check
          %p558 = pneg %p228
        $region34: #{tpu_custom_call.1} parent=11 // pred_check_branch
          %560 = sbr.rel (%p558) target = $region36
        $region35: #{tpu_custom_call.1} parent=11 // pred_region
          _
        $region36: #{tpu_custom_call.1} parent=11 // pred_fallthru
          _
        // Predicated region
        $region37: #{tpu_custom_call.1} parent=11 // pred_check
          %p561 = pneg %p249
        $region38: #{tpu_custom_call.1} parent=11 // pred_check_branch
          %563 = sbr.rel (%p561) target = $region40
        $region39: #{tpu_custom_call.1} parent=11 // pred_region
          %s565 = ssub.s32 4096, 4096
          %566 = vsyncadd [#allocation11], %s565
          %s567 = sshll.u32 [#allocation12], 4
          %s568 = int_to_ptr.vmem [resolvable:$true] %s567
          %573 = dma.hbm_to_vmem [thread:$0]  %s8, 4096, %s568, [#allocation11], 128, 128, 8
        $region40: #{tpu_custom_call.1} parent=11 // pred_fallthru
          _
        // Predicated region
        $region41: #{tpu_custom_call.1} parent=11 // pred_check
          %p574 = pneg %p270
        $region42: #{tpu_custom_call.1} parent=11 // pred_check_branch
          %576 = sbr.rel (%p574) target = $region44
        $region43: #{tpu_custom_call.1} parent=11 // pred_region
          _
        $region44: #{tpu_custom_call.1} parent=11 // pred_fallthru
          _
        // Predicated region
        $region45: #{tpu_custom_call.1} parent=11 // pred_check
          %p577 = pneg %p291
        $region46: #{tpu_custom_call.1} parent=11 // pred_check_branch
          %579 = sbr.rel (%p577) target = $region48
        $region47: #{tpu_custom_call.1} parent=11 // pred_region
          %s581 = ssub.s32 4096, 4096
          %582 = vsyncadd [#allocation14], %s581
          %s583 = sshll.u32 [#allocation13], 4
          %s584 = int_to_ptr.vmem [resolvable:$true] %s583
          %589 = dma.hbm_to_vmem [thread:$0]  %s10, 4096, %s584, [#allocation14], 128, 128, 8
        $region48: #{tpu_custom_call.1} parent=11 // pred_fallthru
          _
        // Predicated region
        $region49: #{tpu_custom_call.1} parent=11 // pred_check
          %p590 = pneg %p312
        $region50: #{tpu_custom_call.1} parent=11 // pred_check_branch
          %592 = sbr.rel (%p590) target = $region52
        $region51: #{tpu_custom_call.1} parent=11 // pred_region
          _
        $region52: #{tpu_custom_call.1} parent=11 // pred_fallthru
          _
        // Predicated region
        $region53: #{tpu_custom_call.1} parent=11 // pred_check
          %p593 = pneg %p333
        $region54: #{tpu_custom_call.1} parent=11 // pred_check_branch
          %595 = sbr.rel (%p593) target = $region56
        $region55: #{tpu_custom_call.1} parent=11 // pred_region
          _
        $region56: #{tpu_custom_call.1} parent=11 // pred_fallthru
          _
        // Predicated region
        $region57: #{tpu_custom_call.1} parent=11 // pred_check
          %p596 = pneg %p354
        $region58: #{tpu_custom_call.1} parent=11 // pred_check_branch
          %598 = sbr.rel (%p596) target = $region60
        $region59: #{tpu_custom_call.1} parent=11 // pred_region
          _
        $region60: #{tpu_custom_call.1} parent=11 // pred_fallthru
          _
        // Predicated region
        $region61: #{tpu_custom_call.1} parent=11 // pred_check
          %p599 = pneg %p375
        $region62: #{tpu_custom_call.1} parent=11 // pred_check_branch
          %601 = sbr.rel (%p599) target = $region64
        $region63: #{tpu_custom_call.1} parent=11 // pred_region
          %s603 = ssub.s32 8192, 8192
          %604 = vsyncadd [#allocation14], %s603
          %s605 = sshll.u32 [#allocation15], 4
          %s606 = int_to_ptr.vmem [resolvable:$true] %s605
          %611 = dma.hbm_to_vmem [thread:$0]  %s14, 8192, %s606, [#allocation14], 256, 256, 16
        $region64: #{tpu_custom_call.1} parent=11 // pred_fallthru
          _
        // Predicated region
        $region65: #{tpu_custom_call.1} parent=11 // pred_check
          %p612 = pneg %p396
        $region66: #{tpu_custom_call.1} parent=11 // pred_check_branch
          %614 = sbr.rel (%p612) target = $region68
        $region67: #{tpu_custom_call.1} parent=11 // pred_region
          _
        $region68: #{tpu_custom_call.1} parent=11 // pred_fallthru
          _
        // Predicated region
        $region69: #{tpu_custom_call.1} parent=11 // pred_check
          %p615 = pneg %p417
        $region70: #{tpu_custom_call.1} parent=11 // pred_check_branch
          %617 = sbr.rel (%p615) target = $region72
        $region71: #{tpu_custom_call.1} parent=11 // pred_region
          %s619 = ssub.s32 8192, 8192
          %620 = vsyncadd [#allocation17], %s619
          %s621 = sshll.u32 [#allocation16], 4
          %s622 = int_to_ptr.vmem [resolvable:$true] %s621
          %627 = dma.hbm_to_vmem [thread:$0]  %s16, 8192, %s622, [#allocation17], 128, 128, 8
        $region72: #{tpu_custom_call.1} parent=11 // pred_fallthru
          _
        // Predicated region
        $region73: #{tpu_custom_call.1} parent=11 // pred_check
          %p628 = pneg %p438
        $region74: #{tpu_custom_call.1} parent=11 // pred_check_branch
          %630 = sbr.rel (%p628) target = $region76
        $region75: #{tpu_custom_call.1} parent=11 // pred_region
          _
        $region76: #{tpu_custom_call.1} parent=11 // pred_fallthru
          _
        // Predicated region
        $region77: #{tpu_custom_call.1} parent=11 // pred_check
          %p631 = pneg %p459
        $region78: #{tpu_custom_call.1} parent=11 // pred_check_branch
          %633 = sbr.rel (%p631) target = $region80
        $region79: #{tpu_custom_call.1} parent=11 // pred_region
          _
        $region80: #{tpu_custom_call.1} parent=11 // pred_fallthru
          _
        // Predicated region
        $region81: #{tpu_custom_call.1} parent=11 // pred_check
          %p634 = pneg %p480
        $region82: #{tpu_custom_call.1} parent=11 // pred_check_branch
          %636 = sbr.rel (%p634) target = $region84
        $region83: #{tpu_custom_call.1} parent=11 // pred_region
          _
        $region84: #{tpu_custom_call.1} parent=11 // pred_fallthru
          _
      $region12: #{tpu_custom_call.1} parent=5 // pred_fallthru
        _
      %p637 = scmp.lt.s32.totalorder %s38, 4
      // Predicated region
      $region85: #{tpu_custom_call.1} parent=5 // pred_check
        %p638 = pneg %p637
      $region86: #{tpu_custom_call.1} parent=5 // pred_check_branch
        %640 = sbr.rel (%p638) target = $region88
      $region87: #{tpu_custom_call.1} parent=5 // pred_region
        // Predicated region
        $region89: #{tpu_custom_call.1} parent=87 // pred_check
          %p641 = pneg %p70
        $region90: #{tpu_custom_call.1} parent=87 // pred_check_branch
          %643 = sbr.rel (%p641) target = $region92
        $region91: #{tpu_custom_call.1} parent=87 // pred_region
          %s644 = sand.u32 %s60, 1
          %s645 = scalar_lea.sflag [#allocation5], %s644
          %s646 = sand.u32 %s60, 1
          %s647 = smul.addr %s646, 512
          %s648 = scalar_lea.vmem [#allocation4], %s647
          %s650 = ssub.s32 8192, 8192
          %651 = vsyncadd %s645, %s650
          %s652 = smul.addr %s45, 64
          %s653 = smul.addr %s652, 128
          %s654 = scalar_lea.hbm %s0, %s653
          %s655 = sshll.u32 %s648, 4
          %s656 = int_to_ptr.vmem [resolvable:$true] %s655
          %661 = dma.hbm_to_vmem [thread:$0]  %s654, 8192, %s656, %s645, 256, 256, 16
        $region92: #{tpu_custom_call.1} parent=87 // pred_fallthru
          _
        // Predicated region
        $region93: #{tpu_custom_call.1} parent=87 // pred_check
          %p662 = pneg %p96
        $region94: #{tpu_custom_call.1} parent=87 // pred_check_branch
          %664 = sbr.rel (%p662) target = $region96
        $region95: #{tpu_custom_call.1} parent=87 // pred_region
          %s665 = sand.u32 %s38, 1
          %s666 = scalar_lea.sflag [#allocation8], %s665
          %s667 = sand.u32 %s86, 1
          %s668 = smul.addr %s667, 2
          %s669 = scalar_lea.vmem [#allocation7], %s668
          %s671 = ssub.s32 32, 32
          %672 = vsyncadd %s666, %s671
          %s673 = smul.addr %s45, 2
          %s674 = smul.addr %s673, 16
          %s675 = scalar_lea.hbm %s1, %s674
          %s677 = sshll.u32 %s669, 4
          %s678 = int_to_ptr.vmem [resolvable:$true] %s677
          %680 = dma.hbm_to_vmem [thread:$0]  %s675, 32, %s678, %s666
        $region96: #{tpu_custom_call.1} parent=87 // pred_fallthru
          _
      $region88: #{tpu_custom_call.1} parent=5 // pred_fallthru
        _
      %p681 = scmp.le.s32.totalorder 1, %s38
      %p682 = scmp.lt.s32.totalorder %s38, 5
      %p683 = pnand %p681, %p682
      %p684 = pneg %p683
      // Predicated region
      $region97: #{tpu_custom_call.1} parent=5 // pred_check
        _
      $region98: #{tpu_custom_call.1} parent=5 // pred_check_branch
        %686 = sbr.rel (%p683) target = $region100
      $region99: #{tpu_custom_call.1} parent=5 // pred_region
        %s687 = ssub.s32 %s38, 1
        %s688 = sand.u32 %s63, 1
        %s689 = scalar_lea.sflag [#allocation5], %s688
        %s690 = sand.u32 %s63, 1
        %s691 = smul.addr %s690, 512
        %s692 = scalar_lea.vmem [#allocation4], %s691
        // Predicated region
        $region101: #{tpu_custom_call.1} parent=99 // pred_check
          %p693 = pneg %p76
        $region102: #{tpu_custom_call.1} parent=99 // pred_check_branch
          %695 = sbr.rel (%p693) target = $region104
        $region103: #{tpu_custom_call.1} parent=99 // pred_region
          %696 = dma.done %s689, 8192
        $region104: #{tpu_custom_call.1} parent=99 // pred_fallthru
          _
        %s697 = sand.u32 %s43, 1
        %s698 = scalar_lea.sflag [#allocation8], %s697
        %s699 = sand.u32 %s89, 1
        %s700 = smul.addr %s699, 2
        %s701 = scalar_lea.vmem [#allocation7], %s700
        // Predicated region
        $region105: #{tpu_custom_call.1} parent=99 // pred_check
          %p702 = pneg %p102
        $region106: #{tpu_custom_call.1} parent=99 // pred_check_branch
          %704 = sbr.rel (%p702) target = $region108
        $region107: #{tpu_custom_call.1} parent=99 // pred_region
          %705 = dma.done %s698, 32
        $region108: #{tpu_custom_call.1} parent=99 // pred_fallthru
          _
        // Predicated region
        $region109: #{tpu_custom_call.1} parent=99 // pred_check
          %p706 = pneg %p165
        $region110: #{tpu_custom_call.1} parent=99 // pred_check_branch
          %708 = sbr.rel (%p706) target = $region112
        $region111: #{tpu_custom_call.1} parent=99 // pred_region
          %709 = dma.done [#allocation8], 4096
        $region112: #{tpu_custom_call.1} parent=99 // pred_fallthru
          _
        // Predicated region
        $region113: #{tpu_custom_call.1} parent=99 // pred_check
          %p710 = pneg %p207
        $region114: #{tpu_custom_call.1} parent=99 // pred_check_branch
          %712 = sbr.rel (%p710) target = $region116
        $region115: #{tpu_custom_call.1} parent=99 // pred_region
          %713 = dma.done [#allocation11], 4096
        $region116: #{tpu_custom_call.1} parent=99 // pred_fallthru
          _
        // Predicated region
        $region117: #{tpu_custom_call.1} parent=99 // pred_check
          %p714 = pneg %p249
        $region118: #{tpu_custom_call.1} parent=99 // pred_check_branch
          %716 = sbr.rel (%p714) target = $region120
        $region119: #{tpu_custom_call.1} parent=99 // pred_region
          %717 = dma.done [#allocation11], 4096
        $region120: #{tpu_custom_call.1} parent=99 // pred_fallthru
          _
        // Predicated region
        $region121: #{tpu_custom_call.1} parent=99 // pred_check
          %p718 = pneg %p291
        $region122: #{tpu_custom_call.1} parent=99 // pred_check_branch
          %720 = sbr.rel (%p718) target = $region124
        $region123: #{tpu_custom_call.1} parent=99 // pred_region
          %721 = dma.done [#allocation14], 4096
        $region124: #{tpu_custom_call.1} parent=99 // pred_fallthru
          _
        // Predicated region
        $region125: #{tpu_custom_call.1} parent=99 // pred_check
          %p722 = pneg %p375
        $region126: #{tpu_custom_call.1} parent=99 // pred_check_branch
          %724 = sbr.rel (%p722) target = $region128
        $region127: #{tpu_custom_call.1} parent=99 // pred_region
          %725 = dma.done [#allocation14], 8192
        $region128: #{tpu_custom_call.1} parent=99 // pred_fallthru
          _
        // Predicated region
        $region129: #{tpu_custom_call.1} parent=99 // pred_check
          %p726 = pneg %p417
        $region130: #{tpu_custom_call.1} parent=99 // pred_check_branch
          %728 = sbr.rel (%p726) target = $region132
        $region131: #{tpu_custom_call.1} parent=99 // pred_region
          %729 = dma.done [#allocation17], 8192
        $region132: #{tpu_custom_call.1} parent=99 // pred_fallthru
          _
        %s730 = sand.u32 %s63, 1
        %s731 = scalar_lea.sflag [#allocation5], %s730
        %s732 = sand.u32 %s63, 1
        %s733 = smul.addr %s732, 512
        %s734 = scalar_lea.vmem [#allocation4], %s733
        %p735 = pneg %p76
        %p736 = pneg %p73
        %s737 = sand.u32 %s43, 1
        %s738 = scalar_lea.sflag [#allocation8], %s737
        %s739 = sand.u32 %s89, 1
        %s740 = smul.addr %s739, 2
        %s741 = scalar_lea.vmem [#allocation7], %s740
        %p742 = pneg %p102
        %p743 = pneg %p99
        %p744 = pneg %p123
        %p745 = pneg %p120
        %p746 = pneg %p144
        %p747 = pneg %p141
        %p748 = pneg %p165
        %p749 = pneg %p162
        %p750 = pneg %p186
        %p751 = pneg %p183
        %p752 = pneg %p207
        %p753 = pneg %p204
        %p754 = pneg %p228
        %p755 = pneg %p225
        %p756 = pneg %p249
        %p757 = pneg %p246
        %p758 = pneg %p270
        %p759 = pneg %p267
        %p760 = pneg %p291
        %p761 = pneg %p288
        %p762 = pneg %p312
        %p763 = pneg %p309
        %p764 = pneg %p333
        %p765 = pneg %p330
        %p766 = pneg %p354
        %p767 = pneg %p351
        %p768 = pneg %p375
        %p769 = pneg %p372
        %p770 = pneg %p396
        %p771 = pneg %p393
        %p772 = pneg %p417
        %p773 = pneg %p414
        %p774 = pneg %p438
        %p775 = pneg %p435
        %p776 = pneg %p459
        %p777 = pneg %p456
        %p778 = pneg %p480
        %p779 = pneg %p477
        %p780 = pneg %p508
        %p781 = pneg %p505
        %s782 = sand.u32 %s495, 1
        %s783 = scalar_lea.sflag [#allocation6], %s782
        %s784 = sand.u32 %s495, 1
        %s785 = smul.addr %s784, 256
        %s786 = scalar_lea.vmem [#allocation18], %s785
        %s787 = smul.u32 16, %s48
        %v789 = vld [vmem:[%s2] sm:$0x3]
        %v790 = vld [vmem:[%s3] sm:$0x3]
        %p791 = scmp.eq.s32.totalorder %s48, 0
        // Predicated region
        $region133: #{tpu_custom_call.1} parent=99 // pred_check
          %p792 = pneg %p791
        $region134: #{tpu_custom_call.1} parent=99 // pred_check_branch
          %794 = sbr.rel (%p792) target = $region136
        $region135: #{tpu_custom_call.1} parent=99 // pred_region
          %v795 = vld [vmem:[%s692] sm:$0xff]
          %v796 = vld [vmem:[%s692 + $0x8] sm:$0xff]
          %v797 = vld [vmem:[%s692 + $0x10] sm:$0xff]
          %v798 = vld [vmem:[%s692 + $0x18] sm:$0xff]
          %v799 = vld [vmem:[%s692 + $0x20] sm:$0xff]
          %v800 = vld [vmem:[%s692 + $0x28] sm:$0xff]
          %v801 = vld [vmem:[%s692 + $0x30] sm:$0xff]
          %v802 = vld [vmem:[%s692 + $0x38] sm:$0xff]
          %v803 = vld [vmem:[%s692 + $0x40] sm:$0xff]
          %v804 = vld [vmem:[%s692 + $0x48] sm:$0xff]
          %v805 = vld [vmem:[%s692 + $0x50] sm:$0xff]
          %v806 = vld [vmem:[%s692 + $0x58] sm:$0xff]
          %v807 = vld [vmem:[%s692 + $0x60] sm:$0xff]
          %v808 = vld [vmem:[%s692 + $0x68] sm:$0xff]
          %v809 = vld [vmem:[%s692 + $0x70] sm:$0xff]
          %v810 = vld [vmem:[%s692 + $0x78] sm:$0xff]
          %v811 = vld [vmem:[%s692 + $0x80] sm:$0xff]
          %v812 = vld [vmem:[%s692 + $0x88] sm:$0xff]
          %v813 = vld [vmem:[%s692 + $0x90] sm:$0xff]
          %v814 = vld [vmem:[%s692 + $0x98] sm:$0xff]
          %v815 = vld [vmem:[%s692 + $0xa0] sm:$0xff]
          %v816 = vld [vmem:[%s692 + $0xa8] sm:$0xff]
          %v817 = vld [vmem:[%s692 + $0xb0] sm:$0xff]
          %v818 = vld [vmem:[%s692 + $0xb8] sm:$0xff]
          %v819 = vld [vmem:[%s692 + $0xc0] sm:$0xff]
          %v820 = vld [vmem:[%s692 + $0xc8] sm:$0xff]
          %v821 = vld [vmem:[%s692 + $0xd0] sm:$0xff]
          %v822 = vld [vmem:[%s692 + $0xd8] sm:$0xff]
          %v823 = vld [vmem:[%s692 + $0xe0] sm:$0xff]
          %v824 = vld [vmem:[%s692 + $0xe8] sm:$0xff]
          %v825 = vld [vmem:[%s692 + $0xf0] sm:$0xff]
          %v826 = vld [vmem:[%s692 + $0xf8] sm:$0xff]
          %v827 = vld [vmem:[%s692 + $0x100] sm:$0xff]
          %v828 = vld [vmem:[%s692 + $0x108] sm:$0xff]
          %v829 = vld [vmem:[%s692 + $0x110] sm:$0xff]
          %v830 = vld [vmem:[%s692 + $0x118] sm:$0xff]
          %v831 = vld [vmem:[%s692 + $0x120] sm:$0xff]
          %v832 = vld [vmem:[%s692 + $0x128] sm:$0xff]
          %v833 = vld [vmem:[%s692 + $0x130] sm:$0xff]
          %v834 = vld [vmem:[%s692 + $0x138] sm:$0xff]
          %v835 = vld [vmem:[%s692 + $0x140] sm:$0xff]
          %v836 = vld [vmem:[%s692 + $0x148] sm:$0xff]
          %v837 = vld [vmem:[%s692 + $0x150] sm:$0xff]
          %v838 = vld [vmem:[%s692 + $0x158] sm:$0xff]
          %v839 = vld [vmem:[%s692 + $0x160] sm:$0xff]
          %v840 = vld [vmem:[%s692 + $0x168] sm:$0xff]
          %v841 = vld [vmem:[%s692 + $0x170] sm:$0xff]
          %v842 = vld [vmem:[%s692 + $0x178] sm:$0xff]
          %v843 = vld [vmem:[%s692 + $0x180] sm:$0xff]
          %v844 = vld [vmem:[%s692 + $0x188] sm:$0xff]
          %v845 = vld [vmem:[%s692 + $0x190] sm:$0xff]
          %v846 = vld [vmem:[%s692 + $0x198] sm:$0xff]
          %v847 = vld [vmem:[%s692 + $0x1a0] sm:$0xff]
          %v848 = vld [vmem:[%s692 + $0x1a8] sm:$0xff]
          %v849 = vld [vmem:[%s692 + $0x1b0] sm:$0xff]
          %v850 = vld [vmem:[%s692 + $0x1b8] sm:$0xff]
          %v851 = vld [vmem:[%s692 + $0x1c0] sm:$0xff]
          %v852 = vld [vmem:[%s692 + $0x1c8] sm:$0xff]
          %v853 = vld [vmem:[%s692 + $0x1d0] sm:$0xff]
          %v854 = vld [vmem:[%s692 + $0x1d8] sm:$0xff]
          %v855 = vld [vmem:[%s692 + $0x1e0] sm:$0xff]
          %v856 = vld [vmem:[%s692 + $0x1e8] sm:$0xff]
          %v857 = vld [vmem:[%s692 + $0x1f0] sm:$0xff]
          %v858 = vld [vmem:[%s692 + $0x1f8] sm:$0xff]
          %v859 = vadd.f32 %v795, %v796
          %860 = vadd.xlane.f32.xlu0 %v859
          %v861 = vpop.xlane.xlu0 %860
          %v862 = vadd.f32 %v797, %v798
          %863 = vadd.xlane.f32.xlu0 %v862
          %v864 = vpop.xlane.xlu0 %863
          %v865 = vadd.f32 %v799, %v800
          %866 = vadd.xlane.f32.xlu0 %v865
          %v867 = vpop.xlane.xlu0 %866
          %v868 = vadd.f32 %v801, %v802
          %869 = vadd.xlane.f32.xlu0 %v868
          %v870 = vpop.xlane.xlu0 %869
          %v871 = vadd.f32 %v803, %v804
          %872 = vadd.xlane.f32.xlu0 %v871
          %v873 = vpop.xlane.xlu0 %872
          %v874 = vadd.f32 %v805, %v806
          %875 = vadd.xlane.f32.xlu0 %v874
          %v876 = vpop.xlane.xlu0 %875
          %v877 = vadd.f32 %v807, %v808
          %878 = vadd.xlane.f32.xlu0 %v877
          %v879 = vpop.xlane.xlu0 %878
          %v880 = vadd.f32 %v809, %v810
          %881 = vadd.xlane.f32.xlu0 %v880
          %v882 = vpop.xlane.xlu0 %881
          %v883 = vadd.f32 %v811, %v812
          %884 = vadd.xlane.f32.xlu0 %v883
          %v885 = vpop.xlane.xlu0 %884
          %v886 = vadd.f32 %v813, %v814
          %887 = vadd.xlane.f32.xlu0 %v886
          %v888 = vpop.xlane.xlu0 %887
          %v889 = vadd.f32 %v815, %v816
          %890 = vadd.xlane.f32.xlu0 %v889
          %v891 = vpop.xlane.xlu0 %890
          %v892 = vadd.f32 %v817, %v818
          %893 = vadd.xlane.f32.xlu0 %v892
          %v894 = vpop.xlane.xlu0 %893
          %v895 = vadd.f32 %v819, %v820
          %896 = vadd.xlane.f32.xlu0 %v895
          %v897 = vpop.xlane.xlu0 %896
          %v898 = vadd.f32 %v821, %v822
          %899 = vadd.xlane.f32.xlu0 %v898
          %v900 = vpop.xlane.xlu0 %899
          %v901 = vadd.f32 %v823, %v824
          %902 = vadd.xlane.f32.xlu0 %v901
          %v903 = vpop.xlane.xlu0 %902
          %v904 = vadd.f32 %v825, %v826
          %905 = vadd.xlane.f32.xlu0 %v904
          %v906 = vpop.xlane.xlu0 %905
          %v907 = vadd.f32 %v827, %v828
          %908 = vadd.xlane.f32.xlu0 %v907
          %v909 = vpop.xlane.xlu0 %908
          %v910 = vadd.f32 %v829, %v830
          %911 = vadd.xlane.f32.xlu0 %v910
          %v912 = vpop.xlane.xlu0 %911
          %v913 = vadd.f32 %v831, %v832
          %914 = vadd.xlane.f32.xlu0 %v913
          %v915 = vpop.xlane.xlu0 %914
          %v916 = vadd.f32 %v833, %v834
          %917 = vadd.xlane.f32.xlu0 %v916
          %v918 = vpop.xlane.xlu0 %917
          %v919 = vadd.f32 %v835, %v836
          %920 = vadd.xlane.f32.xlu0 %v919
          %v921 = vpop.xlane.xlu0 %920
          %v922 = vadd.f32 %v837, %v838
          %923 = vadd.xlane.f32.xlu0 %v922
          %v924 = vpop.xlane.xlu0 %923
          %v925 = vadd.f32 %v839, %v840
          %926 = vadd.xlane.f32.xlu0 %v925
          %v927 = vpop.xlane.xlu0 %926
          %v928 = vadd.f32 %v841, %v842
          %929 = vadd.xlane.f32.xlu0 %v928
          %v930 = vpop.xlane.xlu0 %929
          %v931 = vadd.f32 %v843, %v844
          %932 = vadd.xlane.f32.xlu0 %v931
          %v933 = vpop.xlane.xlu0 %932
          %v934 = vadd.f32 %v845, %v846
          %935 = vadd.xlane.f32.xlu0 %v934
          %v936 = vpop.xlane.xlu0 %935
          %v937 = vadd.f32 %v847, %v848
          %938 = vadd.xlane.f32.xlu0 %v937
          %v939 = vpop.xlane.xlu0 %938
          %v940 = vadd.f32 %v849, %v850
          %941 = vadd.xlane.f32.xlu0 %v940
          %v942 = vpop.xlane.xlu0 %941
          %v943 = vadd.f32 %v851, %v852
          %944 = vadd.xlane.f32.xlu0 %v943
          %v945 = vpop.xlane.xlu0 %944
          %v946 = vadd.f32 %v853, %v854
          %947 = vadd.xlane.f32.xlu0 %v946
          %v948 = vpop.xlane.xlu0 %947
          %v949 = vadd.f32 %v855, %v856
          %950 = vadd.xlane.f32.xlu0 %v949
          %v951 = vpop.xlane.xlu0 %950
          %v952 = vadd.f32 %v857, %v858
          %953 = vadd.xlane.f32.xlu0 %v952
          %v954 = vpop.xlane.xlu0 %953
          %v955 = vrcp.pop 256.0
          %v956 = vmul.f32 %v861, %v955
          %v957 = vmul.f32 %v864, %v955
          %v958 = vmul.f32 %v867, %v955
          %v959 = vmul.f32 %v870, %v955
          %v960 = vmul.f32 %v873, %v955
          %v961 = vmul.f32 %v876, %v955
          %v962 = vmul.f32 %v879, %v955
          %v963 = vmul.f32 %v882, %v955
          %v964 = vmul.f32 %v885, %v955
          %v965 = vmul.f32 %v888, %v955
          %v966 = vmul.f32 %v891, %v955
          %v967 = vmul.f32 %v894, %v955
          %v968 = vmul.f32 %v897, %v955
          %v969 = vmul.f32 %v900, %v955
          %v970 = vmul.f32 %v903, %v955
          %v971 = vmul.f32 %v906, %v955
          %v972 = vmul.f32 %v909, %v955
          %v973 = vmul.f32 %v912, %v955
          %v974 = vmul.f32 %v915, %v955
          %v975 = vmul.f32 %v918, %v955
          %v976 = vmul.f32 %v921, %v955
          %v977 = vmul.f32 %v924, %v955
          %v978 = vmul.f32 %v927, %v955
          %v979 = vmul.f32 %v930, %v955
          %v980 = vmul.f32 %v933, %v955
          %v981 = vmul.f32 %v936, %v955
          %v982 = vmul.f32 %v939, %v955
          %v983 = vmul.f32 %v942, %v955
          %v984 = vmul.f32 %v945, %v955
          %v985 = vmul.f32 %v948, %v955
          %v986 = vmul.f32 %v951, %v955
          %v987 = vmul.f32 %v954, %v955
          %v988 = vsub.f32 %v795, %v956
          %v989 = vsub.f32 %v796, %v956
          %v990 = vsub.f32 %v797, %v957
          %v991 = vsub.f32 %v798, %v957
          %v992 = vsub.f32 %v799, %v958
          %v993 = vsub.f32 %v800, %v958
          %v994 = vsub.f32 %v801, %v959
          %v995 = vsub.f32 %v802, %v959
          %v996 = vsub.f32 %v803, %v960
          %v997 = vsub.f32 %v804, %v960
          %v998 = vsub.f32 %v805, %v961
          %v999 = vsub.f32 %v806, %v961
          %v1000 = vsub.f32 %v807, %v962
          %v1001 = vsub.f32 %v808, %v962
          %v1002 = vsub.f32 %v809, %v963
          %v1003 = vsub.f32 %v810, %v963
          %v1004 = vsub.f32 %v811, %v964
          %v1005 = vsub.f32 %v812, %v964
          %v1006 = vsub.f32 %v813, %v965
          %v1007 = vsub.f32 %v814, %v965
          %v1008 = vsub.f32 %v815, %v966
          %v1009 = vsub.f32 %v816, %v966
          %v1010 = vsub.f32 %v817, %v967
          %v1011 = vsub.f32 %v818, %v967
          %v1012 = vsub.f32 %v819, %v968
          %v1013 = vsub.f32 %v820, %v968
          %v1014 = vsub.f32 %v821, %v969
          %v1015 = vsub.f32 %v822, %v969
          %v1016 = vsub.f32 %v823, %v970
          %v1017 = vsub.f32 %v824, %v970
          %v1018 = vsub.f32 %v825, %v971
          %v1019 = vsub.f32 %v826, %v971
          %v1020 = vsub.f32 %v827, %v972
          %v1021 = vsub.f32 %v828, %v972
          %v1022 = vsub.f32 %v829, %v973
          %v1023 = vsub.f32 %v830, %v973
          %v1024 = vsub.f32 %v831, %v974
          %v1025 = vsub.f32 %v832, %v974
          %v1026 = vsub.f32 %v833, %v975
          %v1027 = vsub.f32 %v834, %v975
          %v1028 = vsub.f32 %v835, %v976
          %v1029 = vsub.f32 %v836, %v976
          %v1030 = vsub.f32 %v837, %v977
          %v1031 = vsub.f32 %v838, %v977
          %v1032 = vsub.f32 %v839, %v978
          %v1033 = vsub.f32 %v840, %v978
          %v1034 = vsub.f32 %v841, %v979
          %v1035 = vsub.f32 %v842, %v979
          %v1036 = vsub.f32 %v843, %v980
          %v1037 = vsub.f32 %v844, %v980
          %v1038 = vsub.f32 %v845, %v981
          %v1039 = vsub.f32 %v846, %v981
          %v1040 = vsub.f32 %v847, %v982
          %v1041 = vsub.f32 %v848, %v982
          %v1042 = vsub.f32 %v849, %v983
          %v1043 = vsub.f32 %v850, %v983
          %v1044 = vsub.f32 %v851, %v984
          %v1045 = vsub.f32 %v852, %v984
          %v1046 = vsub.f32 %v853, %v985
          %v1047 = vsub.f32 %v854, %v985
          %v1048 = vsub.f32 %v855, %v986
          %v1049 = vsub.f32 %v856, %v986
          %v1050 = vsub.f32 %v857, %v987
          %v1051 = vsub.f32 %v858, %v987
          %v1052 = vmul.f32 %v988, %v988
          %v1053 = vmul.f32 %v989, %v989
          %v1054 = vmul.f32 %v990, %v990
          %v1055 = vmul.f32 %v991, %v991
          %v1056 = vmul.f32 %v992, %v992
          %v1057 = vmul.f32 %v993, %v993
          %v1058 = vmul.f32 %v994, %v994
          %v1059 = vmul.f32 %v995, %v995
          %v1060 = vmul.f32 %v996, %v996
          %v1061 = vmul.f32 %v997, %v997
          %v1062 = vmul.f32 %v998, %v998
          %v1063 = vmul.f32 %v999, %v999
          %v1064 = vmul.f32 %v1000, %v1000
          %v1065 = vmul.f32 %v1001, %v1001
          %v1066 = vmul.f32 %v1002, %v1002
          %v1067 = vmul.f32 %v1003, %v1003
          %v1068 = vmul.f32 %v1004, %v1004
          %v1069 = vmul.f32 %v1005, %v1005
          %v1070 = vmul.f32 %v1006, %v1006
          %v1071 = vmul.f32 %v1007, %v1007
          %v1072 = vmul.f32 %v1008, %v1008
          %v1073 = vmul.f32 %v1009, %v1009
          %v1074 = vmul.f32 %v1010, %v1010
          %v1075 = vmul.f32 %v1011, %v1011
          %v1076 = vmul.f32 %v1012, %v1012
          %v1077 = vmul.f32 %v1013, %v1013
          %v1078 = vmul.f32 %v1014, %v1014
          %v1079 = vmul.f32 %v1015, %v1015
          %v1080 = vmul.f32 %v1016, %v1016
          %v1081 = vmul.f32 %v1017, %v1017
          %v1082 = vmul.f32 %v1018, %v1018
          %v1083 = vmul.f32 %v1019, %v1019
          %v1084 = vmul.f32 %v1020, %v1020
          %v1085 = vmul.f32 %v1021, %v1021
          %v1086 = vmul.f32 %v1022, %v1022
          %v1087 = vmul.f32 %v1023, %v1023
          %v1088 = vmul.f32 %v1024, %v1024
          %v1089 = vmul.f32 %v1025, %v1025
          %v1090 = vmul.f32 %v1026, %v1026
          %v1091 = vmul.f32 %v1027, %v1027
          %v1092 = vmul.f32 %v1028, %v1028
          %v1093 = vmul.f32 %v1029, %v1029
          %v1094 = vmul.f32 %v1030, %v1030
          %v1095 = vmul.f32 %v1031, %v1031
          %v1096 = vmul.f32 %v1032, %v1032
          %v1097 = vmul.f32 %v1033, %v1033
          %v1098 = vmul.f32 %v1034, %v1034
          %v1099 = vmul.f32 %v1035, %v1035
          %v1100 = vmul.f32 %v1036, %v1036
          %v1101 = vmul.f32 %v1037, %v1037
          %v1102 = vmul.f32 %v1038, %v1038
          %v1103 = vmul.f32 %v1039, %v1039
          %v1104 = vmul.f32 %v1040, %v1040
          %v1105 = vmul.f32 %v1041, %v1041
          %v1106 = vmul.f32 %v1042, %v1042
          %v1107 = vmul.f32 %v1043, %v1043
          %v1108 = vmul.f32 %v1044, %v1044
          %v1109 = vmul.f32 %v1045, %v1045
          %v1110 = vmul.f32 %v1046, %v1046
          %v1111 = vmul.f32 %v1047, %v1047
          %v1112 = vmul.f32 %v1048, %v1048
          %v1113 = vmul.f32 %v1049, %v1049
          %v1114 = vmul.f32 %v1050, %v1050
          %v1115 = vmul.f32 %v1051, %v1051
          %v1116 = vadd.f32 %v1052, %v1053
          %1117 = vadd.xlane.f32.xlu0 %v1116
          %v1118 = vpop.xlane.xlu0 %1117
          %v1119 = vadd.f32 %v1054, %v1055
          %1120 = vadd.xlane.f32.xlu0 %v1119
          %v1121 = vpop.xlane.xlu0 %1120
          %v1122 = vadd.f32 %v1056, %v1057
          %1123 = vadd.xlane.f32.xlu0 %v1122
          %v1124 = vpop.xlane.xlu0 %1123
          %v1125 = vadd.f32 %v1058, %v1059
          %1126 = vadd.xlane.f32.xlu0 %v1125
          %v1127 = vpop.xlane.xlu0 %1126
          %v1128 = vadd.f32 %v1060, %v1061
          %1129 = vadd.xlane.f32.xlu0 %v1128
          %v1130 = vpop.xlane.xlu0 %1129
          %v1131 = vadd.f32 %v1062, %v1063
          %1132 = vadd.xlane.f32.xlu0 %v1131
          %v1133 = vpop.xlane.xlu0 %1132
          %v1134 = vadd.f32 %v1064, %v1065
          %1135 = vadd.xlane.f32.xlu0 %v1134
          %v1136 = vpop.xlane.xlu0 %1135
          %v1137 = vadd.f32 %v1066, %v1067
          %1138 = vadd.xlane.f32.xlu0 %v1137
          %v1139 = vpop.xlane.xlu0 %1138
          %v1140 = vadd.f32 %v1068, %v1069
          %1141 = vadd.xlane.f32.xlu0 %v1140
          %v1142 = vpop.xlane.xlu0 %1141
          %v1143 = vadd.f32 %v1070, %v1071
          %1144 = vadd.xlane.f32.xlu0 %v1143
          %v1145 = vpop.xlane.xlu0 %1144
          %v1146 = vadd.f32 %v1072, %v1073
          %1147 = vadd.xlane.f32.xlu0 %v1146
          %v1148 = vpop.xlane.xlu0 %1147
          %v1149 = vadd.f32 %v1074, %v1075
          %1150 = vadd.xlane.f32.xlu0 %v1149
          %v1151 = vpop.xlane.xlu0 %1150
          %v1152 = vadd.f32 %v1076, %v1077
          %1153 = vadd.xlane.f32.xlu0 %v1152
          %v1154 = vpop.xlane.xlu0 %1153
          %v1155 = vadd.f32 %v1078, %v1079
          %1156 = vadd.xlane.f32.xlu0 %v1155
          %v1157 = vpop.xlane.xlu0 %1156
          %v1158 = vadd.f32 %v1080, %v1081
          %1159 = vadd.xlane.f32.xlu0 %v1158
          %v1160 = vpop.xlane.xlu0 %1159
          %v1161 = vadd.f32 %v1082, %v1083
          %1162 = vadd.xlane.f32.xlu0 %v1161
          %v1163 = vpop.xlane.xlu0 %1162
          %v1164 = vadd.f32 %v1084, %v1085
          %1165 = vadd.xlane.f32.xlu0 %v1164
          %v1166 = vpop.xlane.xlu0 %1165
          %v1167 = vadd.f32 %v1086, %v1087
          %1168 = vadd.xlane.f32.xlu0 %v1167
          %v1169 = vpop.xlane.xlu0 %1168
          %v1170 = vadd.f32 %v1088, %v1089
          %1171 = vadd.xlane.f32.xlu0 %v1170
          %v1172 = vpop.xlane.xlu0 %1171
          %v1173 = vadd.f32 %v1090, %v1091
          %1174 = vadd.xlane.f32.xlu0 %v1173
          %v1175 = vpop.xlane.xlu0 %1174
          %v1176 = vadd.f32 %v1092, %v1093
          %1177 = vadd.xlane.f32.xlu0 %v1176
          %v1178 = vpop.xlane.xlu0 %1177
          %v1179 = vadd.f32 %v1094, %v1095
          %1180 = vadd.xlane.f32.xlu0 %v1179
          %v1181 = vpop.xlane.xlu0 %1180
          %v1182 = vadd.f32 %v1096, %v1097
          %1183 = vadd.xlane.f32.xlu0 %v1182
          %v1184 = vpop.xlane.xlu0 %1183
          %v1185 = vadd.f32 %v1098, %v1099
          %1186 = vadd.xlane.f32.xlu0 %v1185
          %v1187 = vpop.xlane.xlu0 %1186
          %v1188 = vadd.f32 %v1100, %v1101
          %1189 = vadd.xlane.f32.xlu0 %v1188
          %v1190 = vpop.xlane.xlu0 %1189
          %v1191 = vadd.f32 %v1102, %v1103
          %1192 = vadd.xlane.f32.xlu0 %v1191
          %v1193 = vpop.xlane.xlu0 %1192
          %v1194 = vadd.f32 %v1104, %v1105
          %1195 = vadd.xlane.f32.xlu0 %v1194
          %v1196 = vpop.xlane.xlu0 %1195
          %v1197 = vadd.f32 %v1106, %v1107
          %1198 = vadd.xlane.f32.xlu0 %v1197
          %v1199 = vpop.xlane.xlu0 %1198
          %v1200 = vadd.f32 %v1108, %v1109
          %1201 = vadd.xlane.f32.xlu0 %v1200
          %v1202 = vpop.xlane.xlu0 %1201
          %v1203 = vadd.f32 %v1110, %v1111
          %1204 = vadd.xlane.f32.xlu0 %v1203
          %v1205 = vpop.xlane.xlu0 %1204
          %v1206 = vadd.f32 %v1112, %v1113
          %1207 = vadd.xlane.f32.xlu0 %v1206
          %v1208 = vpop.xlane.xlu0 %1207
          %v1209 = vadd.f32 %v1114, %v1115
          %1210 = vadd.xlane.f32.xlu0 %v1209
          %v1211 = vpop.xlane.xlu0 %1210
          %v1212 = vmul.f32 %v1118, 0.003921569
          %v1213 = vmul.f32 %v1121, 0.003921569
          %v1214 = vmul.f32 %v1124, 0.003921569
          %v1215 = vmul.f32 %v1127, 0.003921569
          %v1216 = vmul.f32 %v1130, 0.003921569
          %v1217 = vmul.f32 %v1133, 0.003921569
          %v1218 = vmul.f32 %v1136, 0.003921569
          %v1219 = vmul.f32 %v1139, 0.003921569
          %v1220 = vmul.f32 %v1142, 0.003921569
          %v1221 = vmul.f32 %v1145, 0.003921569
          %v1222 = vmul.f32 %v1148, 0.003921569
          %v1223 = vmul.f32 %v1151, 0.003921569
          %v1224 = vmul.f32 %v1154, 0.003921569
          %v1225 = vmul.f32 %v1157, 0.003921569
          %v1226 = vmul.f32 %v1160, 0.003921569
          %v1227 = vmul.f32 %v1163, 0.003921569
          %v1228 = vmul.f32 %v1166, 0.003921569
          %v1229 = vmul.f32 %v1169, 0.003921569
          %v1230 = vmul.f32 %v1172, 0.003921569
          %v1231 = vmul.f32 %v1175, 0.003921569
          %v1232 = vmul.f32 %v1178, 0.003921569
          %v1233 = vmul.f32 %v1181, 0.003921569
          %v1234 = vmul.f32 %v1184, 0.003921569
          %v1235 = vmul.f32 %v1187, 0.003921569
          %v1236 = vmul.f32 %v1190, 0.003921569
          %v1237 = vmul.f32 %v1193, 0.003921569
          %v1238 = vmul.f32 %v1196, 0.003921569
          %v1239 = vmul.f32 %v1199, 0.003921569
          %v1240 = vmul.f32 %v1202, 0.003921569
          %v1241 = vmul.f32 %v1205, 0.003921569
          %v1242 = vmul.f32 %v1208, 0.003921569
          %v1243 = vmul.f32 %v1211, 0.003921569
          %v1244 = vrsqrt.pop %v1212
          %v1245 = vmul.f32 %v1212, %v1244
          %vm1246 = vcmp.eq.f32.partialorder %v1212, inf
          %v1247 = vsel %vm1246, %v1212, %v1245
          %vm1248 = vcmp.eq.f32.partialorder %v1212, 0.0
          %v1249 = vand.u32 %v1212, 2147483648
          %v1250 = vsel %vm1248, %v1249, %v1247
          %v1251 = vrsqrt.pop %v1213
          %v1252 = vmul.f32 %v1213, %v1251
          %vm1253 = vcmp.eq.f32.partialorder %v1213, inf
          %v1254 = vsel %vm1253, %v1213, %v1252
          %vm1255 = vcmp.eq.f32.partialorder %v1213, 0.0
          %v1256 = vand.u32 %v1213, 2147483648
          %v1257 = vsel %vm1255, %v1256, %v1254
          %v1258 = vrsqrt.pop %v1214
          %v1259 = vmul.f32 %v1214, %v1258
          %vm1260 = vcmp.eq.f32.partialorder %v1214, inf
          %v1261 = vsel %vm1260, %v1214, %v1259
          %vm1262 = vcmp.eq.f32.partialorder %v1214, 0.0
          %v1263 = vand.u32 %v1214, 2147483648
          %v1264 = vsel %vm1262, %v1263, %v1261
          %v1265 = vrsqrt.pop %v1215
          %v1266 = vmul.f32 %v1215, %v1265
          %vm1267 = vcmp.eq.f32.partialorder %v1215, inf
          %v1268 = vsel %vm1267, %v1215, %v1266
          %vm1269 = vcmp.eq.f32.partialorder %v1215, 0.0
          %v1270 = vand.u32 %v1215, 2147483648
          %v1271 = vsel %vm1269, %v1270, %v1268
          %v1272 = vrsqrt.pop %v1216
          %v1273 = vmul.f32 %v1216, %v1272
          %vm1274 = vcmp.eq.f32.partialorder %v1216, inf
          %v1275 = vsel %vm1274, %v1216, %v1273
          %vm1276 = vcmp.eq.f32.partialorder %v1216, 0.0
          %v1277 = vand.u32 %v1216, 2147483648
          %v1278 = vsel %vm1276, %v1277, %v1275
          %v1279 = vrsqrt.pop %v1217
          %v1280 = vmul.f32 %v1217, %v1279
          %vm1281 = vcmp.eq.f32.partialorder %v1217, inf
          %v1282 = vsel %vm1281, %v1217, %v1280
          %vm1283 = vcmp.eq.f32.partialorder %v1217, 0.0
          %v1284 = vand.u32 %v1217, 2147483648
          %v1285 = vsel %vm1283, %v1284, %v1282
          %v1286 = vrsqrt.pop %v1218
          %v1287 = vmul.f32 %v1218, %v1286
          %vm1288 = vcmp.eq.f32.partialorder %v1218, inf
          %v1289 = vsel %vm1288, %v1218, %v1287
          %vm1290 = vcmp.eq.f32.partialorder %v1218, 0.0
          %v1291 = vand.u32 %v1218, 2147483648
          %v1292 = vsel %vm1290, %v1291, %v1289
          %v1293 = vrsqrt.pop %v1219
          %v1294 = vmul.f32 %v1219, %v1293
          %vm1295 = vcmp.eq.f32.partialorder %v1219, inf
          %v1296 = vsel %vm1295, %v1219, %v1294
          %vm1297 = vcmp.eq.f32.partialorder %v1219, 0.0
          %v1298 = vand.u32 %v1219, 2147483648
          %v1299 = vsel %vm1297, %v1298, %v1296
          %v1300 = vrsqrt.pop %v1220
          %v1301 = vmul.f32 %v1220, %v1300
          %vm1302 = vcmp.eq.f32.partialorder %v1220, inf
          %v1303 = vsel %vm1302, %v1220, %v1301
          %vm1304 = vcmp.eq.f32.partialorder %v1220, 0.0
          %v1305 = vand.u32 %v1220, 2147483648
          %v1306 = vsel %vm1304, %v1305, %v1303
          %v1307 = vrsqrt.pop %v1221
          %v1308 = vmul.f32 %v1221, %v1307
          %vm1309 = vcmp.eq.f32.partialorder %v1221, inf
          %v1310 = vsel %vm1309, %v1221, %v1308
          %vm1311 = vcmp.eq.f32.partialorder %v1221, 0.0
          %v1312 = vand.u32 %v1221, 2147483648
          %v1313 = vsel %vm1311, %v1312, %v1310
          %v1314 = vrsqrt.pop %v1222
          %v1315 = vmul.f32 %v1222, %v1314
          %vm1316 = vcmp.eq.f32.partialorder %v1222, inf
          %v1317 = vsel %vm1316, %v1222, %v1315
          %vm1318 = vcmp.eq.f32.partialorder %v1222, 0.0
          %v1319 = vand.u32 %v1222, 2147483648
          %v1320 = vsel %vm1318, %v1319, %v1317
          %v1321 = vrsqrt.pop %v1223
          %v1322 = vmul.f32 %v1223, %v1321
          %vm1323 = vcmp.eq.f32.partialorder %v1223, inf
          %v1324 = vsel %vm1323, %v1223, %v1322
          %vm1325 = vcmp.eq.f32.partialorder %v1223, 0.0
          %v1326 = vand.u32 %v1223, 2147483648
          %v1327 = vsel %vm1325, %v1326, %v1324
          %v1328 = vrsqrt.pop %v1224
          %v1329 = vmul.f32 %v1224, %v1328
          %vm1330 = vcmp.eq.f32.partialorder %v1224, inf
          %v1331 = vsel %vm1330, %v1224, %v1329
          %vm1332 = vcmp.eq.f32.partialorder %v1224, 0.0
          %v1333 = vand.u32 %v1224, 2147483648
          %v1334 = vsel %vm1332, %v1333, %v1331
          %v1335 = vrsqrt.pop %v1225
          %v1336 = vmul.f32 %v1225, %v1335
          %vm1337 = vcmp.eq.f32.partialorder %v1225, inf
          %v1338 = vsel %vm1337, %v1225, %v1336
          %vm1339 = vcmp.eq.f32.partialorder %v1225, 0.0
          %v1340 = vand.u32 %v1225, 2147483648
          %v1341 = vsel %vm1339, %v1340, %v1338
          %v1342 = vrsqrt.pop %v1226
          %v1343 = vmul.f32 %v1226, %v1342
          %vm1344 = vcmp.eq.f32.partialorder %v1226, inf
          %v1345 = vsel %vm1344, %v1226, %v1343
          %vm1346 = vcmp.eq.f32.partialorder %v1226, 0.0
          %v1347 = vand.u32 %v1226, 2147483648
          %v1348 = vsel %vm1346, %v1347, %v1345
          %v1349 = vrsqrt.pop %v1227
          %v1350 = vmul.f32 %v1227, %v1349
          %vm1351 = vcmp.eq.f32.partialorder %v1227, inf
          %v1352 = vsel %vm1351, %v1227, %v1350
          %vm1353 = vcmp.eq.f32.partialorder %v1227, 0.0
          %v1354 = vand.u32 %v1227, 2147483648
          %v1355 = vsel %vm1353, %v1354, %v1352
          %v1356 = vrsqrt.pop %v1228
          %v1357 = vmul.f32 %v1228, %v1356
          %vm1358 = vcmp.eq.f32.partialorder %v1228, inf
          %v1359 = vsel %vm1358, %v1228, %v1357
          %vm1360 = vcmp.eq.f32.partialorder %v1228, 0.0
          %v1361 = vand.u32 %v1228, 2147483648
          %v1362 = vsel %vm1360, %v1361, %v1359
          %v1363 = vrsqrt.pop %v1229
          %v1364 = vmul.f32 %v1229, %v1363
          %vm1365 = vcmp.eq.f32.partialorder %v1229, inf
          %v1366 = vsel %vm1365, %v1229, %v1364
          %vm1367 = vcmp.eq.f32.partialorder %v1229, 0.0
          %v1368 = vand.u32 %v1229, 2147483648
          %v1369 = vsel %vm1367, %v1368, %v1366
          %v1370 = vrsqrt.pop %v1230
          %v1371 = vmul.f32 %v1230, %v1370
          %vm1372 = vcmp.eq.f32.partialorder %v1230, inf
          %v1373 = vsel %vm1372, %v1230, %v1371
          %vm1374 = vcmp.eq.f32.partialorder %v1230, 0.0
          %v1375 = vand.u32 %v1230, 2147483648
          %v1376 = vsel %vm1374, %v1375, %v1373
          %v1377 = vrsqrt.pop %v1231
          %v1378 = vmul.f32 %v1231, %v1377
          %vm1379 = vcmp.eq.f32.partialorder %v1231, inf
          %v1380 = vsel %vm1379, %v1231, %v1378
          %vm1381 = vcmp.eq.f32.partialorder %v1231, 0.0
          %v1382 = vand.u32 %v1231, 2147483648
          %v1383 = vsel %vm1381, %v1382, %v1380
          %v1384 = vrsqrt.pop %v1232
          %v1385 = vmul.f32 %v1232, %v1384
          %vm1386 = vcmp.eq.f32.partialorder %v1232, inf
          %v1387 = vsel %vm1386, %v1232, %v1385
          %vm1388 = vcmp.eq.f32.partialorder %v1232, 0.0
          %v1389 = vand.u32 %v1232, 2147483648
          %v1390 = vsel %vm1388, %v1389, %v1387
          %v1391 = vrsqrt.pop %v1233
          %v1392 = vmul.f32 %v1233, %v1391
          %vm1393 = vcmp.eq.f32.partialorder %v1233, inf
          %v1394 = vsel %vm1393, %v1233, %v1392
          %vm1395 = vcmp.eq.f32.partialorder %v1233, 0.0
          %v1396 = vand.u32 %v1233, 2147483648
          %v1397 = vsel %vm1395, %v1396, %v1394
          %v1398 = vrsqrt.pop %v1234
          %v1399 = vmul.f32 %v1234, %v1398
          %vm1400 = vcmp.eq.f32.partialorder %v1234, inf
          %v1401 = vsel %vm1400, %v1234, %v1399
          %vm1402 = vcmp.eq.f32.partialorder %v1234, 0.0
          %v1403 = vand.u32 %v1234, 2147483648
          %v1404 = vsel %vm1402, %v1403, %v1401
          %v1405 = vrsqrt.pop %v1235
          %v1406 = vmul.f32 %v1235, %v1405
          %vm1407 = vcmp.eq.f32.partialorder %v1235, inf
          %v1408 = vsel %vm1407, %v1235, %v1406
          %vm1409 = vcmp.eq.f32.partialorder %v1235, 0.0
          %v1410 = vand.u32 %v1235, 2147483648
          %v1411 = vsel %vm1409, %v1410, %v1408
          %v1412 = vrsqrt.pop %v1236
          %v1413 = vmul.f32 %v1236, %v1412
          %vm1414 = vcmp.eq.f32.partialorder %v1236, inf
          %v1415 = vsel %vm1414, %v1236, %v1413
          %vm1416 = vcmp.eq.f32.partialorder %v1236, 0.0
          %v1417 = vand.u32 %v1236, 2147483648
          %v1418 = vsel %vm1416, %v1417, %v1415
          %v1419 = vrsqrt.pop %v1237
          %v1420 = vmul.f32 %v1237, %v1419
          %vm1421 = vcmp.eq.f32.partialorder %v1237, inf
          %v1422 = vsel %vm1421, %v1237, %v1420
          %vm1423 = vcmp.eq.f32.partialorder %v1237, 0.0
          %v1424 = vand.u32 %v1237, 2147483648
          %v1425 = vsel %vm1423, %v1424, %v1422
          %v1426 = vrsqrt.pop %v1238
          %v1427 = vmul.f32 %v1238, %v1426
          %vm1428 = vcmp.eq.f32.partialorder %v1238, inf
          %v1429 = vsel %vm1428, %v1238, %v1427
          %vm1430 = vcmp.eq.f32.partialorder %v1238, 0.0
          %v1431 = vand.u32 %v1238, 2147483648
          %v1432 = vsel %vm1430, %v1431, %v1429
          %v1433 = vrsqrt.pop %v1239
          %v1434 = vmul.f32 %v1239, %v1433
          %vm1435 = vcmp.eq.f32.partialorder %v1239, inf
          %v1436 = vsel %vm1435, %v1239, %v1434
          %vm1437 = vcmp.eq.f32.partialorder %v1239, 0.0
          %v1438 = vand.u32 %v1239, 2147483648
          %v1439 = vsel %vm1437, %v1438, %v1436
          %v1440 = vrsqrt.pop %v1240
          %v1441 = vmul.f32 %v1240, %v1440
          %vm1442 = vcmp.eq.f32.partialorder %v1240, inf
          %v1443 = vsel %vm1442, %v1240, %v1441
          %vm1444 = vcmp.eq.f32.partialorder %v1240, 0.0
          %v1445 = vand.u32 %v1240, 2147483648
          %v1446 = vsel %vm1444, %v1445, %v1443
          %v1447 = vrsqrt.pop %v1241
          %v1448 = vmul.f32 %v1241, %v1447
          %vm1449 = vcmp.eq.f32.partialorder %v1241, inf
          %v1450 = vsel %vm1449, %v1241, %v1448
          %vm1451 = vcmp.eq.f32.partialorder %v1241, 0.0
          %v1452 = vand.u32 %v1241, 2147483648
          %v1453 = vsel %vm1451, %v1452, %v1450
          %v1454 = vrsqrt.pop %v1242
          %v1455 = vmul.f32 %v1242, %v1454
          %vm1456 = vcmp.eq.f32.partialorder %v1242, inf
          %v1457 = vsel %vm1456, %v1242, %v1455
          %vm1458 = vcmp.eq.f32.partialorder %v1242, 0.0
          %v1459 = vand.u32 %v1242, 2147483648
          %v1460 = vsel %vm1458, %v1459, %v1457
          %v1461 = vrsqrt.pop %v1243
          %v1462 = vmul.f32 %v1243, %v1461
          %vm1463 = vcmp.eq.f32.partialorder %v1243, inf
          %v1464 = vsel %vm1463, %v1243, %v1462
          %vm1465 = vcmp.eq.f32.partialorder %v1243, 0.0
          %v1466 = vand.u32 %v1243, 2147483648
          %v1467 = vsel %vm1465, %v1466, %v1464
          %v1468 = vadd.f32 %v1250, 1e-06
          %v1469 = vadd.f32 %v1257, 1e-06
          %v1470 = vadd.f32 %v1264, 1e-06
          %v1471 = vadd.f32 %v1271, 1e-06
          %v1472 = vadd.f32 %v1278, 1e-06
          %v1473 = vadd.f32 %v1285, 1e-06
          %v1474 = vadd.f32 %v1292, 1e-06
          %v1475 = vadd.f32 %v1299, 1e-06
          %v1476 = vadd.f32 %v1306, 1e-06
          %v1477 = vadd.f32 %v1313, 1e-06
          %v1478 = vadd.f32 %v1320, 1e-06
          %v1479 = vadd.f32 %v1327, 1e-06
          %v1480 = vadd.f32 %v1334, 1e-06
          %v1481 = vadd.f32 %v1341, 1e-06
          %v1482 = vadd.f32 %v1348, 1e-06
          %v1483 = vadd.f32 %v1355, 1e-06
          %v1484 = vadd.f32 %v1362, 1e-06
          %v1485 = vadd.f32 %v1369, 1e-06
          %v1486 = vadd.f32 %v1376, 1e-06
          %v1487 = vadd.f32 %v1383, 1e-06
          %v1488 = vadd.f32 %v1390, 1e-06
          %v1489 = vadd.f32 %v1397, 1e-06
          %v1490 = vadd.f32 %v1404, 1e-06
          %v1491 = vadd.f32 %v1411, 1e-06
          %v1492 = vadd.f32 %v1418, 1e-06
          %v1493 = vadd.f32 %v1425, 1e-06
          %v1494 = vadd.f32 %v1432, 1e-06
          %v1495 = vadd.f32 %v1439, 1e-06
          %v1496 = vadd.f32 %v1446, 1e-06
          %v1497 = vadd.f32 %v1453, 1e-06
          %v1498 = vadd.f32 %v1460, 1e-06
          %v1499 = vadd.f32 %v1467, 1e-06
          %v1500 = vrcp.pop %v1468
          %v1501 = vmul.f32 1.0, %v1500
          %v1502 = vrcp.pop %v1469
          %v1503 = vmul.f32 1.0, %v1502
          %v1504 = vrcp.pop %v1470
          %v1505 = vmul.f32 1.0, %v1504
          %v1506 = vrcp.pop %v1471
          %v1507 = vmul.f32 1.0, %v1506
          %v1508 = vrcp.pop %v1472
          %v1509 = vmul.f32 1.0, %v1508
          %v1510 = vrcp.pop %v1473
          %v1511 = vmul.f32 1.0, %v1510
          %v1512 = vrcp.pop %v1474
          %v1513 = vmul.f32 1.0, %v1512
          %v1514 = vrcp.pop %v1475
          %v1515 = vmul.f32 1.0, %v1514
          %v1516 = vrcp.pop %v1476
          %v1517 = vmul.f32 1.0, %v1516
          %v1518 = vrcp.pop %v1477
          %v1519 = vmul.f32 1.0, %v1518
          %v1520 = vrcp.pop %v1478
          %v1521 = vmul.f32 1.0, %v1520
          %v1522 = vrcp.pop %v1479
          %v1523 = vmul.f32 1.0, %v1522
          %v1524 = vrcp.pop %v1480
          %v1525 = vmul.f32 1.0, %v1524
          %v1526 = vrcp.pop %v1481
          %v1527 = vmul.f32 1.0, %v1526
          %v1528 = vrcp.pop %v1482
          %v1529 = vmul.f32 1.0, %v1528
          %v1530 = vrcp.pop %v1483
          %v1531 = vmul.f32 1.0, %v1530
          %v1532 = vrcp.pop %v1484
          %v1533 = vmul.f32 1.0, %v1532
          %v1534 = vrcp.pop %v1485
          %v1535 = vmul.f32 1.0, %v1534
          %v1536 = vrcp.pop %v1486
          %v1537 = vmul.f32 1.0, %v1536
          %v1538 = vrcp.pop %v1487
          %v1539 = vmul.f32 1.0, %v1538
          %v1540 = vrcp.pop %v1488
          %v1541 = vmul.f32 1.0, %v1540
          %v1542 = vrcp.pop %v1489
          %v1543 = vmul.f32 1.0, %v1542
          %v1544 = vrcp.pop %v1490
          %v1545 = vmul.f32 1.0, %v1544
          %v1546 = vrcp.pop %v1491
          %v1547 = vmul.f32 1.0, %v1546
          %v1548 = vrcp.pop %v1492
          %v1549 = vmul.f32 1.0, %v1548
          %v1550 = vrcp.pop %v1493
          %v1551 = vmul.f32 1.0, %v1550
          %v1552 = vrcp.pop %v1494
          %v1553 = vmul.f32 1.0, %v1552
          %v1554 = vrcp.pop %v1495
          %v1555 = vmul.f32 1.0, %v1554
          %v1556 = vrcp.pop %v1496
          %v1557 = vmul.f32 1.0, %v1556
          %v1558 = vrcp.pop %v1497
          %v1559 = vmul.f32 1.0, %v1558
          %v1560 = vrcp.pop %v1498
          %v1561 = vmul.f32 1.0, %v1560
          %v1562 = vrcp.pop %v1499
          %v1563 = vmul.f32 1.0, %v1562
          %v1564 = vmul.f32 %v988, %v1501
          %v1565 = vmul.f32 %v989, %v1501
          %v1566 = vmul.f32 %v990, %v1503
          %v1567 = vmul.f32 %v991, %v1503
          %v1568 = vmul.f32 %v992, %v1505
          %v1569 = vmul.f32 %v993, %v1505
          %v1570 = vmul.f32 %v994, %v1507
          %v1571 = vmul.f32 %v995, %v1507
          %v1572 = vmul.f32 %v996, %v1509
          %v1573 = vmul.f32 %v997, %v1509
          %v1574 = vmul.f32 %v998, %v1511
          %v1575 = vmul.f32 %v999, %v1511
          %v1576 = vmul.f32 %v1000, %v1513
          %v1577 = vmul.f32 %v1001, %v1513
          %v1578 = vmul.f32 %v1002, %v1515
          %v1579 = vmul.f32 %v1003, %v1515
          %v1580 = vmul.f32 %v1004, %v1517
          %v1581 = vmul.f32 %v1005, %v1517
          %v1582 = vmul.f32 %v1006, %v1519
          %v1583 = vmul.f32 %v1007, %v1519
          %v1584 = vmul.f32 %v1008, %v1521
          %v1585 = vmul.f32 %v1009, %v1521
          %v1586 = vmul.f32 %v1010, %v1523
          %v1587 = vmul.f32 %v1011, %v1523
          %v1588 = vmul.f32 %v1012, %v1525
          %v1589 = vmul.f32 %v1013, %v1525
          %v1590 = vmul.f32 %v1014, %v1527
          %v1591 = vmul.f32 %v1015, %v1527
          %v1592 = vmul.f32 %v1016, %v1529
          %v1593 = vmul.f32 %v1017, %v1529
          %v1594 = vmul.f32 %v1018, %v1531
          %v1595 = vmul.f32 %v1019, %v1531
          %v1596 = vmul.f32 %v1020, %v1533
          %v1597 = vmul.f32 %v1021, %v1533
          %v1598 = vmul.f32 %v1022, %v1535
          %v1599 = vmul.f32 %v1023, %v1535
          %v1600 = vmul.f32 %v1024, %v1537
          %v1601 = vmul.f32 %v1025, %v1537
          %v1602 = vmul.f32 %v1026, %v1539
          %v1603 = vmul.f32 %v1027, %v1539
          %v1604 = vmul.f32 %v1028, %v1541
          %v1605 = vmul.f32 %v1029, %v1541
          %v1606 = vmul.f32 %v1030, %v1543
          %v1607 = vmul.f32 %v1031, %v1543
          %v1608 = vmul.f32 %v1032, %v1545
          %v1609 = vmul.f32 %v1033, %v1545
          %v1610 = vmul.f32 %v1034, %v1547
          %v1611 = vmul.f32 %v1035, %v1547
          %v1612 = vmul.f32 %v1036, %v1549
          %v1613 = vmul.f32 %v1037, %v1549
          %v1614 = vmul.f32 %v1038, %v1551
          %v1615 = vmul.f32 %v1039, %v1551
          %v1616 = vmul.f32 %v1040, %v1553
          %v1617 = vmul.f32 %v1041, %v1553
          %v1618 = vmul.f32 %v1042, %v1555
          %v1619 = vmul.f32 %v1043, %v1555
          %v1620 = vmul.f32 %v1044, %v1557
          %v1621 = vmul.f32 %v1045, %v1557
          %v1622 = vmul.f32 %v1046, %v1559
          %v1623 = vmul.f32 %v1047, %v1559
          %v1624 = vmul.f32 %v1048, %v1561
          %v1625 = vmul.f32 %v1049, %v1561
          %v1626 = vmul.f32 %v1050, %v1563
          %v1627 = vmul.f32 %v1051, %v1563
          %v1629 = vlaneseq
          %v1630 = vshrl.u32 %v1629, 7
          %v1631 = vsub.s32 0, %v1630
          %v1632 = vrot.slane %v789, %v1631
          %v1633 = vlaneseq
          %v1634 = vshrl.u32 %v1633, 7
          %v1635 = vsub.s32 1, %v1634
          %v1636 = vrot.slane %v789, %v1635
          %v1639 = vmul.f32 %v1632, %v1564
          %v1640 = vmul.f32 %v1636, %v1565
          %v1641 = vmul.f32 %v1632, %v1566
          %v1642 = vmul.f32 %v1636, %v1567
          %v1643 = vmul.f32 %v1632, %v1568
          %v1644 = vmul.f32 %v1636, %v1569
          %v1645 = vmul.f32 %v1632, %v1570
          %v1646 = vmul.f32 %v1636, %v1571
          %v1647 = vmul.f32 %v1632, %v1572
          %v1648 = vmul.f32 %v1636, %v1573
          %v1649 = vmul.f32 %v1632, %v1574
          %v1650 = vmul.f32 %v1636, %v1575
          %v1651 = vmul.f32 %v1632, %v1576
          %v1652 = vmul.f32 %v1636, %v1577
          %v1653 = vmul.f32 %v1632, %v1578
          %v1654 = vmul.f32 %v1636, %v1579
          %v1655 = vmul.f32 %v1632, %v1580
          %v1656 = vmul.f32 %v1636, %v1581
          %v1657 = vmul.f32 %v1632, %v1582
          %v1658 = vmul.f32 %v1636, %v1583
          %v1659 = vmul.f32 %v1632, %v1584
          %v1660 = vmul.f32 %v1636, %v1585
          %v1661 = vmul.f32 %v1632, %v1586
          %v1662 = vmul.f32 %v1636, %v1587
          %v1663 = vmul.f32 %v1632, %v1588
          %v1664 = vmul.f32 %v1636, %v1589
          %v1665 = vmul.f32 %v1632, %v1590
          %v1666 = vmul.f32 %v1636, %v1591
          %v1667 = vmul.f32 %v1632, %v1592
          %v1668 = vmul.f32 %v1636, %v1593
          %v1669 = vmul.f32 %v1632, %v1594
          %v1670 = vmul.f32 %v1636, %v1595
          %v1671 = vmul.f32 %v1632, %v1596
          %v1672 = vmul.f32 %v1636, %v1597
          %v1673 = vmul.f32 %v1632, %v1598
          %v1674 = vmul.f32 %v1636, %v1599
          %v1675 = vmul.f32 %v1632, %v1600
          %v1676 = vmul.f32 %v1636, %v1601
          %v1677 = vmul.f32 %v1632, %v1602
          %v1678 = vmul.f32 %v1636, %v1603
          %v1679 = vmul.f32 %v1632, %v1604
          %v1680 = vmul.f32 %v1636, %v1605
          %v1681 = vmul.f32 %v1632, %v1606
          %v1682 = vmul.f32 %v1636, %v1607
          %v1683 = vmul.f32 %v1632, %v1608
          %v1684 = vmul.f32 %v1636, %v1609
          %v1685 = vmul.f32 %v1632, %v1610
          %v1686 = vmul.f32 %v1636, %v1611
          %v1687 = vmul.f32 %v1632, %v1612
          %v1688 = vmul.f32 %v1636, %v1613
          %v1689 = vmul.f32 %v1632, %v1614
          %v1690 = vmul.f32 %v1636, %v1615
          %v1691 = vmul.f32 %v1632, %v1616
          %v1692 = vmul.f32 %v1636, %v1617
          %v1693 = vmul.f32 %v1632, %v1618
          %v1694 = vmul.f32 %v1636, %v1619
          %v1695 = vmul.f32 %v1632, %v1620
          %v1696 = vmul.f32 %v1636, %v1621
          %v1697 = vmul.f32 %v1632, %v1622
          %v1698 = vmul.f32 %v1636, %v1623
          %v1699 = vmul.f32 %v1632, %v1624
          %v1700 = vmul.f32 %v1636, %v1625
          %v1701 = vmul.f32 %v1632, %v1626
          %v1702 = vmul.f32 %v1636, %v1627
          %v1704 = vlaneseq
          %v1705 = vshrl.u32 %v1704, 7
          %v1706 = vsub.s32 0, %v1705
          %v1707 = vrot.slane %v790, %v1706
          %v1708 = vlaneseq
          %v1709 = vshrl.u32 %v1708, 7
          %v1710 = vsub.s32 1, %v1709
          %v1711 = vrot.slane %v790, %v1710
          %v1714 = vadd.f32 %v1639, %v1707
          %v1715 = vadd.f32 %v1640, %v1711
          %v1716 = vadd.f32 %v1641, %v1707
          %v1717 = vadd.f32 %v1642, %v1711
          %v1718 = vadd.f32 %v1643, %v1707
          %v1719 = vadd.f32 %v1644, %v1711
          %v1720 = vadd.f32 %v1645, %v1707
          %v1721 = vadd.f32 %v1646, %v1711
          %v1722 = vadd.f32 %v1647, %v1707
          %v1723 = vadd.f32 %v1648, %v1711
          %v1724 = vadd.f32 %v1649, %v1707
          %v1725 = vadd.f32 %v1650, %v1711
          %v1726 = vadd.f32 %v1651, %v1707
          %v1727 = vadd.f32 %v1652, %v1711
          %v1728 = vadd.f32 %v1653, %v1707
          %v1729 = vadd.f32 %v1654, %v1711
          %v1730 = vadd.f32 %v1655, %v1707
          %v1731 = vadd.f32 %v1656, %v1711
          %v1732 = vadd.f32 %v1657, %v1707
          %v1733 = vadd.f32 %v1658, %v1711
          %v1734 = vadd.f32 %v1659, %v1707
          %v1735 = vadd.f32 %v1660, %v1711
          %v1736 = vadd.f32 %v1661, %v1707
          %v1737 = vadd.f32 %v1662, %v1711
          %v1738 = vadd.f32 %v1663, %v1707
          %v1739 = vadd.f32 %v1664, %v1711
          %v1740 = vadd.f32 %v1665, %v1707
          %v1741 = vadd.f32 %v1666, %v1711
          %v1742 = vadd.f32 %v1667, %v1707
          %v1743 = vadd.f32 %v1668, %v1711
          %v1744 = vadd.f32 %v1669, %v1707
          %v1745 = vadd.f32 %v1670, %v1711
          %v1746 = vadd.f32 %v1671, %v1707
          %v1747 = vadd.f32 %v1672, %v1711
          %v1748 = vadd.f32 %v1673, %v1707
          %v1749 = vadd.f32 %v1674, %v1711
          %v1750 = vadd.f32 %v1675, %v1707
          %v1751 = vadd.f32 %v1676, %v1711
          %v1752 = vadd.f32 %v1677, %v1707
          %v1753 = vadd.f32 %v1678, %v1711
          %v1754 = vadd.f32 %v1679, %v1707
          %v1755 = vadd.f32 %v1680, %v1711
          %v1756 = vadd.f32 %v1681, %v1707
          %v1757 = vadd.f32 %v1682, %v1711
          %v1758 = vadd.f32 %v1683, %v1707
          %v1759 = vadd.f32 %v1684, %v1711
          %v1760 = vadd.f32 %v1685, %v1707
          %v1761 = vadd.f32 %v1686, %v1711
          %v1762 = vadd.f32 %v1687, %v1707
          %v1763 = vadd.f32 %v1688, %v1711
          %v1764 = vadd.f32 %v1689, %v1707
          %v1765 = vadd.f32 %v1690, %v1711
          %v1766 = vadd.f32 %v1691, %v1707
          %v1767 = vadd.f32 %v1692, %v1711
          %v1768 = vadd.f32 %v1693, %v1707
          %v1769 = vadd.f32 %v1694, %v1711
          %v1770 = vadd.f32 %v1695, %v1707
          %v1771 = vadd.f32 %v1696, %v1711
          %v1772 = vadd.f32 %v1697, %v1707
          %v1773 = vadd.f32 %v1698, %v1711
          %v1774 = vadd.f32 %v1699, %v1707
          %v1775 = vadd.f32 %v1700, %v1711
          %v1776 = vadd.f32 %v1701, %v1707
          %v1777 = vadd.f32 %v1702, %v1711
          %v1778 = vpack.c.bf16 %v1716, %v1714
          %v1779 = vpack.c.bf16 %v1717, %v1715
          %v1780 = vpack.c.bf16 %v1720, %v1718
          %v1781 = vpack.c.bf16 %v1721, %v1719
          %v1782 = vpack.c.bf16 %v1724, %v1722
          %v1783 = vpack.c.bf16 %v1725, %v1723
          %v1784 = vpack.c.bf16 %v1728, %v1726
          %v1785 = vpack.c.bf16 %v1729, %v1727
          %v1786 = vpack.c.bf16 %v1732, %v1730
          %v1787 = vpack.c.bf16 %v1733, %v1731
          %v1788 = vpack.c.bf16 %v1736, %v1734
          %v1789 = vpack.c.bf16 %v1737, %v1735
          %v1790 = vpack.c.bf16 %v1740, %v1738
          %v1791 = vpack.c.bf16 %v1741, %v1739
          %v1792 = vpack.c.bf16 %v1744, %v1742
          %v1793 = vpack.c.bf16 %v1745, %v1743
          %v1794 = vpack.c.bf16 %v1748, %v1746
          %v1795 = vpack.c.bf16 %v1749, %v1747
          %v1796 = vpack.c.bf16 %v1752, %v1750
          %v1797 = vpack.c.bf16 %v1753, %v1751
          %v1798 = vpack.c.bf16 %v1756, %v1754
          %v1799 = vpack.c.bf16 %v1757, %v1755
          %v1800 = vpack.c.bf16 %v1760, %v1758
          %v1801 = vpack.c.bf16 %v1761, %v1759
          %v1802 = vpack.c.bf16 %v1764, %v1762
          %v1803 = vpack.c.bf16 %v1765, %v1763
          %v1804 = vpack.c.bf16 %v1768, %v1766
          %v1805 = vpack.c.bf16 %v1769, %v1767
          %v1806 = vpack.c.bf16 %v1772, %v1770
          %v1807 = vpack.c.bf16 %v1773, %v1771
          %v1808 = vpack.c.bf16 %v1776, %v1774
          %v1809 = vpack.c.bf16 %v1777, %v1775
          %v1810 = vld [vmem:[#allocation10] sm:$0xff]
          %v1811 = vld [vmem:[#allocation10 + $0x8] sm:$0xff]
          %v1812 = vld [vmem:[#allocation10 + $0x10] sm:$0xff]
          %v1813 = vld [vmem:[#allocation10 + $0x18] sm:$0xff]
          %v1814 = vld [vmem:[#allocation10 + $0x20] sm:$0xff]
          %v1815 = vld [vmem:[#allocation10 + $0x28] sm:$0xff]
          %v1816 = vld [vmem:[#allocation10 + $0x30] sm:$0xff]
          %v1817 = vld [vmem:[#allocation10 + $0x38] sm:$0xff]
          %v1818 = vld [vmem:[#allocation10 + $0x40] sm:$0xff]
          %v1819 = vld [vmem:[#allocation10 + $0x48] sm:$0xff]
          %v1820 = vld [vmem:[#allocation10 + $0x50] sm:$0xff]
          %v1821 = vld [vmem:[#allocation10 + $0x58] sm:$0xff]
          %v1822 = vld [vmem:[#allocation10 + $0x60] sm:$0xff]
          %v1823 = vld [vmem:[#allocation10 + $0x68] sm:$0xff]
          %v1824 = vld [vmem:[#allocation10 + $0x70] sm:$0xff]
          %v1825 = vld [vmem:[#allocation10 + $0x78] sm:$0xff]
          %v1826 = vld [vmem:[#allocation10 + $0x80] sm:$0xff]
          %v1827 = vld [vmem:[#allocation10 + $0x88] sm:$0xff]
          %v1828 = vld [vmem:[#allocation10 + $0x90] sm:$0xff]
          %v1829 = vld [vmem:[#allocation10 + $0x98] sm:$0xff]
          %v1830 = vld [vmem:[#allocation10 + $0xa0] sm:$0xff]
          %v1831 = vld [vmem:[#allocation10 + $0xa8] sm:$0xff]
          %v1832 = vld [vmem:[#allocation10 + $0xb0] sm:$0xff]
          %v1833 = vld [vmem:[#allocation10 + $0xb8] sm:$0xff]
          %v1834 = vld [vmem:[#allocation10 + $0xc0] sm:$0xff]
          %v1835 = vld [vmem:[#allocation10 + $0xc8] sm:$0xff]
          %v1836 = vld [vmem:[#allocation10 + $0xd0] sm:$0xff]
          %v1837 = vld [vmem:[#allocation10 + $0xd8] sm:$0xff]
          %v1838 = vld [vmem:[#allocation10 + $0xe0] sm:$0xff]
          %v1839 = vld [vmem:[#allocation10 + $0xe8] sm:$0xff]
          %v1840 = vld [vmem:[#allocation10 + $0xf0] sm:$0xff]
          %v1841 = vld [vmem:[#allocation10 + $0xf8] sm:$0xff]
          %v1842 = vld [vmem:[%s7] sm:$0x3]
          %v1844 = vlaneseq
          %v1845 = vshrl.u32 %v1844, 7
          %v1846 = vsub.s32 0, %v1845
          %v1847 = vrot.slane %v1842, %v1846
          %v1848 = vlaneseq
          %v1849 = vshrl.u32 %v1848, 7
          %v1850 = vsub.s32 1, %v1849
          %v1851 = vrot.slane %v1842, %v1850
          %v1886 = vunpack.c.l.b16 %v1810
          %v1887 = vunpack.c.h.b16 %v1810
          %v1888 = vunpack.c.l.b16 %v1811
          %v1889 = vunpack.c.h.b16 %v1811
          %v1890 = vunpack.c.l.b16 %v1812
          %v1891 = vunpack.c.h.b16 %v1812
          %v1892 = vunpack.c.l.b16 %v1813
          %v1893 = vunpack.c.h.b16 %v1813
          %v1894 = vunpack.c.l.b16 %v1814
          %v1895 = vunpack.c.h.b16 %v1814
          %v1896 = vunpack.c.l.b16 %v1815
          %v1897 = vunpack.c.h.b16 %v1815
          %v1898 = vunpack.c.l.b16 %v1816
          %v1899 = vunpack.c.h.b16 %v1816
          %v1900 = vunpack.c.l.b16 %v1817
          %v1901 = vunpack.c.h.b16 %v1817
          %v1902 = vunpack.c.l.b16 %v1818
          %v1903 = vunpack.c.h.b16 %v1818
          %v1904 = vunpack.c.l.b16 %v1819
          %v1905 = vunpack.c.h.b16 %v1819
          %v1906 = vunpack.c.l.b16 %v1820
          %v1907 = vunpack.c.h.b16 %v1820
          %v1908 = vunpack.c.l.b16 %v1821
          %v1909 = vunpack.c.h.b16 %v1821
          %v1910 = vunpack.c.l.b16 %v1822
          %v1911 = vunpack.c.h.b16 %v1822
          %v1912 = vunpack.c.l.b16 %v1823
          %v1913 = vunpack.c.h.b16 %v1823
          %v1914 = vunpack.c.l.b16 %v1824
          %v1915 = vunpack.c.h.b16 %v1824
          %v1916 = vunpack.c.l.b16 %v1825
          %v1917 = vunpack.c.h.b16 %v1825
          %v1918 = vunpack.c.l.b16 %v1826
          %v1919 = vunpack.c.h.b16 %v1826
          %v1920 = vunpack.c.l.b16 %v1827
          %v1921 = vunpack.c.h.b16 %v1827
          %v1922 = vunpack.c.l.b16 %v1828
          %v1923 = vunpack.c.h.b16 %v1828
          %v1924 = vunpack.c.l.b16 %v1829
          %v1925 = vunpack.c.h.b16 %v1829
          %v1926 = vunpack.c.l.b16 %v1830
          %v1927 = vunpack.c.h.b16 %v1830
          %v1928 = vunpack.c.l.b16 %v1831
          %v1929 = vunpack.c.h.b16 %v1831
          %v1930 = vunpack.c.l.b16 %v1832
          %v1931 = vunpack.c.h.b16 %v1832
          %v1932 = vunpack.c.l.b16 %v1833
          %v1933 = vunpack.c.h.b16 %v1833
          %v1934 = vunpack.c.l.b16 %v1834
          %v1935 = vunpack.c.h.b16 %v1834
          %v1936 = vunpack.c.l.b16 %v1835
          %v1937 = vunpack.c.h.b16 %v1835
          %v1938 = vunpack.c.l.b16 %v1836
          %v1939 = vunpack.c.h.b16 %v1836
          %v1940 = vunpack.c.l.b16 %v1837
          %v1941 = vunpack.c.h.b16 %v1837
          %v1942 = vunpack.c.l.b16 %v1838
          %v1943 = vunpack.c.h.b16 %v1838
          %v1944 = vunpack.c.l.b16 %v1839
          %v1945 = vunpack.c.h.b16 %v1839
          %v1946 = vunpack.c.l.b16 %v1840
          %v1947 = vunpack.c.h.b16 %v1840
          %v1948 = vunpack.c.l.b16 %v1841
          %v1949 = vunpack.c.h.b16 %v1841
          %v1950 = vpack.c.b16 %v1888, %v1886
          %v1951 = vpack.c.b16 %v1889, %v1887
          %v1952 = vpack.c.b16 %v1892, %v1890
          %v1953 = vpack.c.b16 %v1893, %v1891
          %v1954 = vpack.c.b16 %v1896, %v1894
          %v1955 = vpack.c.b16 %v1897, %v1895
          %v1956 = vpack.c.b16 %v1900, %v1898
          %v1957 = vpack.c.b16 %v1901, %v1899
          %v1958 = vpack.c.b16 %v1904, %v1902
          %v1959 = vpack.c.b16 %v1905, %v1903
          %v1960 = vpack.c.b16 %v1908, %v1906
          %v1961 = vpack.c.b16 %v1909, %v1907
          %v1962 = vpack.c.b16 %v1912, %v1910
          %v1963 = vpack.c.b16 %v1913, %v1911
          %v1964 = vpack.c.b16 %v1916, %v1914
          %v1965 = vpack.c.b16 %v1917, %v1915
          %v1966 = vpack.c.b16 %v1920, %v1918
          %v1967 = vpack.c.b16 %v1921, %v1919
          %v1968 = vpack.c.b16 %v1924, %v1922
          %v1969 = vpack.c.b16 %v1925, %v1923
          %v1970 = vpack.c.b16 %v1928, %v1926
          %v1971 = vpack.c.b16 %v1929, %v1927
          %v1972 = vpack.c.b16 %v1932, %v1930
          %v1973 = vpack.c.b16 %v1933, %v1931
          %v1974 = vpack.c.b16 %v1936, %v1934
          %v1975 = vpack.c.b16 %v1937, %v1935
          %v1976 = vpack.c.b16 %v1940, %v1938
          %v1977 = vpack.c.b16 %v1941, %v1939
          %v1978 = vpack.c.b16 %v1944, %v1942
          %v1979 = vpack.c.b16 %v1945, %v1943
          %v1980 = vpack.c.b16 %v1948, %v1946
          %v1981 = vpack.c.b16 %v1949, %v1947
          %2014 = vmatprep.subr.bf16.mxu0 %v1951
          %2015 = vmatpush1.bf16.msra.mxu0 %v1950
          %2016 = vmatprep.subr.bf16.mxu0 %v1953
          %2017 = vmatpush1.bf16.msra.mxu0 %v1952
          %2018 = vmatprep.subr.bf16.mxu0 %v1955
          %2019 = vmatpush1.bf16.msra.mxu0 %v1954
          %2020 = vmatprep.subr.bf16.mxu0 %v1957
          %2021 = vmatpush1.bf16.msra.mxu0 %v1956
          %2022 = vmatprep.subr.bf16.mxu0 %v1959
          %2023 = vmatpush1.bf16.msra.mxu0 %v1958
          %2024 = vmatprep.subr.bf16.mxu0 %v1961
          %2025 = vmatpush1.bf16.msra.mxu0 %v1960
          %2026 = vmatprep.subr.bf16.mxu0 %v1963
          %2027 = vmatpush1.bf16.msra.mxu0 %v1962
          %2028 = vmatprep.subr.bf16.mxu0 %v1965
          %2029 = vmatpush1.bf16.msra.mxu0 %v1964
          %2030 = vmatprep.subr.bf16.mxu0 %v1967
          %2031 = vmatpush1.bf16.msra.mxu0 %v1966
          %2032 = vmatprep.subr.bf16.mxu0 %v1969
          %2033 = vmatpush1.bf16.msra.mxu0 %v1968
          %2034 = vmatprep.subr.bf16.mxu0 %v1971
          %2035 = vmatpush1.bf16.msra.mxu0 %v1970
          %2036 = vmatprep.subr.bf16.mxu0 %v1973
          %2037 = vmatpush1.bf16.msra.mxu0 %v1972
          %2038 = vmatprep.subr.bf16.mxu0 %v1975
          %2039 = vmatpush1.bf16.msra.mxu0 %v1974
          %2040 = vmatprep.subr.bf16.mxu0 %v1977
          %2041 = vmatpush1.bf16.msra.mxu0 %v1976
          %2042 = vmatprep.subr.bf16.mxu0 %v1979
          %2043 = vmatpush1.bf16.msra.mxu0 %v1978
          %2044 = vmatprep.subr.bf16.mxu0 %v1981
          %2045 = vmatpush1.bf16.msra.mxu0 %v1980
          %2046 = vmatprep.mubr.bf16.mxu0 %v1779
          %2047 = vmatmul.mubr.bf16.gmra.mrb[0].mxu0 %v1778
          %v2048 = vpop.f32.mrb[0].mxu0
          %v2049 = vadd.f32 %v1847, %v2048
          %v2050 = vpop.f32.mrb[0].mxu0
          %v2051 = vadd.f32 %v1851, %v2050
          %v2052 = vpop.f32.mrb[0].mxu0
          %v2053 = vadd.f32 %v1847, %v2052
          %v2054 = vpop.f32.mrb[0].mxu0
          %v2055 = vadd.f32 %v1851, %v2054
          %2056 = vmatprep.mubr.bf16.mxu0 %v1781
          %2057 = vmatmul.mubr.bf16.gmra.mrb[0].mxu0 %v1780
          %v2058 = vpop.f32.mrb[0].mxu0
          %v2059 = vadd.f32 %v1847, %v2058
          %v2060 = vpop.f32.mrb[0].mxu0
          %v2061 = vadd.f32 %v1851, %v2060
          %v2062 = vpop.f32.mrb[0].mxu0
          %v2063 = vadd.f32 %v1847, %v2062
          %v2064 = vpop.f32.mrb[0].mxu0
          %v2065 = vadd.f32 %v1851, %v2064
          %2066 = vmatprep.mubr.bf16.mxu0 %v1783
          %2067 = vmatmul.mubr.bf16.gmra.mrb[0].mxu0 %v1782
          %v2068 = vpop.f32.mrb[0].mxu0
          %v2069 = vadd.f32 %v1847, %v2068
          %v2070 = vpop.f32.mrb[0].mxu0
          %v2071 = vadd.f32 %v1851, %v2070
          %v2072 = vpop.f32.mrb[0].mxu0
          %v2073 = vadd.f32 %v1847, %v2072
          %v2074 = vpop.f32.mrb[0].mxu0
          %v2075 = vadd.f32 %v1851, %v2074
          %2076 = vmatprep.mubr.bf16.mxu0 %v1785
          %2077 = vmatmul.mubr.bf16.gmra.mrb[0].mxu0 %v1784
          %v2078 = vpop.f32.mrb[0].mxu0
          %v2079 = vadd.f32 %v1847, %v2078
          %v2080 = vpop.f32.mrb[0].mxu0
          %v2081 = vadd.f32 %v1851, %v2080
          %v2082 = vpop.f32.mrb[0].mxu0
          %v2083 = vadd.f32 %v1847, %v2082
          %v2084 = vpop.f32.mrb[0].mxu0
          %v2085 = vadd.f32 %v1851, %v2084
          %2086 = vmatprep.mubr.bf16.mxu0 %v1787
          %2087 = vmatmul.mubr.bf16.gmra.mrb[0].mxu0 %v1786
          %v2088 = vpop.f32.mrb[0].mxu0
          %v2089 = vadd.f32 %v1847, %v2088
          %v2090 = vpop.f32.mrb[0].mxu0
          %v2091 = vadd.f32 %v1851, %v2090
          %v2092 = vpop.f32.mrb[0].mxu0
          %v2093 = vadd.f32 %v1847, %v2092
          %v2094 = vpop.f32.mrb[0].mxu0
          %v2095 = vadd.f32 %v1851, %v2094
          %2096 = vmatprep.mubr.bf16.mxu0 %v1789
          %2097 = vmatmul.mubr.bf16.gmra.mrb[0].mxu0 %v1788
          %v2098 = vpop.f32.mrb[0].mxu0
          %v2099 = vadd.f32 %v1847, %v2098
          %v2100 = vpop.f32.mrb[0].mxu0
          %v2101 = vadd.f32 %v1851, %v2100
          %v2102 = vpop.f32.mrb[0].mxu0
          %v2103 = vadd.f32 %v1847, %v2102
          %v2104 = vpop.f32.mrb[0].mxu0
          %v2105 = vadd.f32 %v1851, %v2104
          %2106 = vmatprep.mubr.bf16.mxu0 %v1791
          %2107 = vmatmul.mubr.bf16.gmra.mrb[0].mxu0 %v1790
          %v2108 = vpop.f32.mrb[0].mxu0
          %v2109 = vadd.f32 %v1847, %v2108
          %v2110 = vpop.f32.mrb[0].mxu0
          %v2111 = vadd.f32 %v1851, %v2110
          %v2112 = vpop.f32.mrb[0].mxu0
          %v2113 = vadd.f32 %v1847, %v2112
          %v2114 = vpop.f32.mrb[0].mxu0
          %v2115 = vadd.f32 %v1851, %v2114
          %2116 = vmatprep.mubr.bf16.mxu0 %v1793
          %2117 = vmatmul.mubr.bf16.gmra.mrb[0].mxu0 %v1792
          %v2118 = vpop.f32.mrb[0].mxu0
          %v2119 = vadd.f32 %v1847, %v2118
          %v2120 = vpop.f32.mrb[0].mxu0
          %v2121 = vadd.f32 %v1851, %v2120
          %v2122 = vpop.f32.mrb[0].mxu0
          %v2123 = vadd.f32 %v1847, %v2122
          %v2124 = vpop.f32.mrb[0].mxu0
          %v2125 = vadd.f32 %v1851, %v2124
          %2126 = vmatprep.mubr.bf16.mxu0 %v1795
          %2127 = vmatmul.mubr.bf16.gmra.mrb[0].mxu0 %v1794
          %v2128 = vpop.f32.mrb[0].mxu0
          %v2129 = vadd.f32 %v1847, %v2128
          %v2130 = vpop.f32.mrb[0].mxu0
          %v2131 = vadd.f32 %v1851, %v2130
          %v2132 = vpop.f32.mrb[0].mxu0
          %v2133 = vadd.f32 %v1847, %v2132
          %v2134 = vpop.f32.mrb[0].mxu0
          %v2135 = vadd.f32 %v1851, %v2134
          %2136 = vmatprep.mubr.bf16.mxu0 %v1797
          %2137 = vmatmul.mubr.bf16.gmra.mrb[0].mxu0 %v1796
          %v2138 = vpop.f32.mrb[0].mxu0
          %v2139 = vadd.f32 %v1847, %v2138
          %v2140 = vpop.f32.mrb[0].mxu0
          %v2141 = vadd.f32 %v1851, %v2140
          %v2142 = vpop.f32.mrb[0].mxu0
          %v2143 = vadd.f32 %v1847, %v2142
          %v2144 = vpop.f32.mrb[0].mxu0
          %v2145 = vadd.f32 %v1851, %v2144
          %2146 = vmatprep.mubr.bf16.mxu0 %v1799
          %2147 = vmatmul.mubr.bf16.gmra.mrb[0].mxu0 %v1798
          %v2148 = vpop.f32.mrb[0].mxu0
          %v2149 = vadd.f32 %v1847, %v2148
          %v2150 = vpop.f32.mrb[0].mxu0
          %v2151 = vadd.f32 %v1851, %v2150
          %v2152 = vpop.f32.mrb[0].mxu0
          %v2153 = vadd.f32 %v1847, %v2152
          %v2154 = vpop.f32.mrb[0].mxu0
          %v2155 = vadd.f32 %v1851, %v2154
          %2156 = vmatprep.mubr.bf16.mxu0 %v1801
          %2157 = vmatmul.mubr.bf16.gmra.mrb[0].mxu0 %v1800
          %v2158 = vpop.f32.mrb[0].mxu0
          %v2159 = vadd.f32 %v1847, %v2158
          %v2160 = vpop.f32.mrb[0].mxu0
          %v2161 = vadd.f32 %v1851, %v2160
          %v2162 = vpop.f32.mrb[0].mxu0
          %v2163 = vadd.f32 %v1847, %v2162
          %v2164 = vpop.f32.mrb[0].mxu0
          %v2165 = vadd.f32 %v1851, %v2164
          %2166 = vmatprep.mubr.bf16.mxu0 %v1803
          %2167 = vmatmul.mubr.bf16.gmra.mrb[0].mxu0 %v1802
          %v2168 = vpop.f32.mrb[0].mxu0
          %v2169 = vadd.f32 %v1847, %v2168
          %v2170 = vpop.f32.mrb[0].mxu0
          %v2171 = vadd.f32 %v1851, %v2170
          %v2172 = vpop.f32.mrb[0].mxu0
          %v2173 = vadd.f32 %v1847, %v2172
          %v2174 = vpop.f32.mrb[0].mxu0
          %v2175 = vadd.f32 %v1851, %v2174
          %2176 = vmatprep.mubr.bf16.mxu0 %v1805
          %2177 = vmatmul.mubr.bf16.gmra.mrb[0].mxu0 %v1804
          %v2178 = vpop.f32.mrb[0].mxu0
          %v2179 = vadd.f32 %v1847, %v2178
          %v2180 = vpop.f32.mrb[0].mxu0
          %v2181 = vadd.f32 %v1851, %v2180
          %v2182 = vpop.f32.mrb[0].mxu0
          %v2183 = vadd.f32 %v1847, %v2182
          %v2184 = vpop.f32.mrb[0].mxu0
          %v2185 = vadd.f32 %v1851, %v2184
          %2186 = vmatprep.mubr.bf16.mxu0 %v1807
          %2187 = vmatmul.mubr.bf16.gmra.mrb[0].mxu0 %v1806
          %v2188 = vpop.f32.mrb[0].mxu0
          %v2189 = vadd.f32 %v1847, %v2188
          %v2190 = vpop.f32.mrb[0].mxu0
          %v2191 = vadd.f32 %v1851, %v2190
          %v2192 = vpop.f32.mrb[0].mxu0
          %v2193 = vadd.f32 %v1847, %v2192
          %v2194 = vpop.f32.mrb[0].mxu0
          %v2195 = vadd.f32 %v1851, %v2194
          %2196 = vmatprep.mubr.bf16.mxu0 %v1809
          %2197 = vmatmul.mubr.bf16.gmra.mrb[0].mxu0 %v1808
          %v2198 = vpop.f32.mrb[0].mxu0
          %v2199 = vadd.f32 %v1847, %v2198
          %v2200 = vpop.f32.mrb[0].mxu0
          %v2201 = vadd.f32 %v1851, %v2200
          %v2202 = vpop.f32.mrb[0].mxu0
          %v2203 = vadd.f32 %v1847, %v2202
          %v2204 = vpop.f32.mrb[0].mxu0
          %v2205 = vadd.f32 %v1851, %v2204
          %2206 = vdwg.mxu0
          %v2207 = vld [vmem:[#allocation12] sm:$0xff]
          %v2208 = vld [vmem:[#allocation12 + $0x8] sm:$0xff]
          %v2209 = vld [vmem:[#allocation12 + $0x10] sm:$0xff]
          %v2210 = vld [vmem:[#allocation12 + $0x18] sm:$0xff]
          %v2211 = vld [vmem:[#allocation12 + $0x20] sm:$0xff]
          %v2212 = vld [vmem:[#allocation12 + $0x28] sm:$0xff]
          %v2213 = vld [vmem:[#allocation12 + $0x30] sm:$0xff]
          %v2214 = vld [vmem:[#allocation12 + $0x38] sm:$0xff]
          %v2215 = vld [vmem:[#allocation12 + $0x40] sm:$0xff]
          %v2216 = vld [vmem:[#allocation12 + $0x48] sm:$0xff]
          %v2217 = vld [vmem:[#allocation12 + $0x50] sm:$0xff]
          %v2218 = vld [vmem:[#allocation12 + $0x58] sm:$0xff]
          %v2219 = vld [vmem:[#allocation12 + $0x60] sm:$0xff]
          %v2220 = vld [vmem:[#allocation12 + $0x68] sm:$0xff]
          %v2221 = vld [vmem:[#allocation12 + $0x70] sm:$0xff]
          %v2222 = vld [vmem:[#allocation12 + $0x78] sm:$0xff]
          %v2223 = vld [vmem:[#allocation12 + $0x80] sm:$0xff]
          %v2224 = vld [vmem:[#allocation12 + $0x88] sm:$0xff]
          %v2225 = vld [vmem:[#allocation12 + $0x90] sm:$0xff]
          %v2226 = vld [vmem:[#allocation12 + $0x98] sm:$0xff]
          %v2227 = vld [vmem:[#allocation12 + $0xa0] sm:$0xff]
          %v2228 = vld [vmem:[#allocation12 + $0xa8] sm:$0xff]
          %v2229 = vld [vmem:[#allocation12 + $0xb0] sm:$0xff]
          %v2230 = vld [vmem:[#allocation12 + $0xb8] sm:$0xff]
          %v2231 = vld [vmem:[#allocation12 + $0xc0] sm:$0xff]
          %v2232 = vld [vmem:[#allocation12 + $0xc8] sm:$0xff]
          %v2233 = vld [vmem:[#allocation12 + $0xd0] sm:$0xff]
          %v2234 = vld [vmem:[#allocation12 + $0xd8] sm:$0xff]
          %v2235 = vld [vmem:[#allocation12 + $0xe0] sm:$0xff]
          %v2236 = vld [vmem:[#allocation12 + $0xe8] sm:$0xff]
          %v2237 = vld [vmem:[#allocation12 + $0xf0] sm:$0xff]
          %v2238 = vld [vmem:[#allocation12 + $0xf8] sm:$0xff]
          %v2239 = vld [vmem:[%s9] sm:$0x3]
          %v2241 = vlaneseq
          %v2242 = vshrl.u32 %v2241, 7
          %v2243 = vsub.s32 0, %v2242
          %v2244 = vrot.slane %v2239, %v2243
          %v2245 = vlaneseq
          %v2246 = vshrl.u32 %v2245, 7
          %v2247 = vsub.s32 1, %v2246
          %v2248 = vrot.slane %v2239, %v2247
          %v2283 = vunpack.c.l.b16 %v2207
          %v2284 = vunpack.c.h.b16 %v2207
          %v2285 = vunpack.c.l.b16 %v2208
          %v2286 = vunpack.c.h.b16 %v2208
          %v2287 = vunpack.c.l.b16 %v2209
          %v2288 = vunpack.c.h.b16 %v2209
          %v2289 = vunpack.c.l.b16 %v2210
          %v2290 = vunpack.c.h.b16 %v2210
          %v2291 = vunpack.c.l.b16 %v2211
          %v2292 = vunpack.c.h.b16 %v2211
          %v2293 = vunpack.c.l.b16 %v2212
          %v2294 = vunpack.c.h.b16 %v2212
          %v2295 = vunpack.c.l.b16 %v2213
          %v2296 = vunpack.c.h.b16 %v2213
          %v2297 = vunpack.c.l.b16 %v2214
          %v2298 = vunpack.c.h.b16 %v2214
          %v2299 = vunpack.c.l.b16 %v2215
          %v2300 = vunpack.c.h.b16 %v2215
          %v2301 = vunpack.c.l.b16 %v2216
          %v2302 = vunpack.c.h.b16 %v2216
          %v2303 = vunpack.c.l.b16 %v2217
          %v2304 = vunpack.c.h.b16 %v2217
          %v2305 = vunpack.c.l.b16 %v2218
          %v2306 = vunpack.c.h.b16 %v2218
          %v2307 = vunpack.c.l.b16 %v2219
          %v2308 = vunpack.c.h.b16 %v2219
          %v2309 = vunpack.c.l.b16 %v2220
          %v2310 = vunpack.c.h.b16 %v2220
          %v2311 = vunpack.c.l.b16 %v2221
          %v2312 = vunpack.c.h.b16 %v2221
          %v2313 = vunpack.c.l.b16 %v2222
          %v2314 = vunpack.c.h.b16 %v2222
          %v2315 = vunpack.c.l.b16 %v2223
          %v2316 = vunpack.c.h.b16 %v2223
          %v2317 = vunpack.c.l.b16 %v2224
          %v2318 = vunpack.c.h.b16 %v2224
          %v2319 = vunpack.c.l.b16 %v2225
          %v2320 = vunpack.c.h.b16 %v2225
          %v2321 = vunpack.c.l.b16 %v2226
          %v2322 = vunpack.c.h.b16 %v2226
          %v2323 = vunpack.c.l.b16 %v2227
          %v2324 = vunpack.c.h.b16 %v2227
          %v2325 = vunpack.c.l.b16 %v2228
          %v2326 = vunpack.c.h.b16 %v2228
          %v2327 = vunpack.c.l.b16 %v2229
          %v2328 = vunpack.c.h.b16 %v2229
          %v2329 = vunpack.c.l.b16 %v2230
          %v2330 = vunpack.c.h.b16 %v2230
          %v2331 = vunpack.c.l.b16 %v2231
          %v2332 = vunpack.c.h.b16 %v2231
          %v2333 = vunpack.c.l.b16 %v2232
          %v2334 = vunpack.c.h.b16 %v2232
          %v2335 = vunpack.c.l.b16 %v2233
          %v2336 = vunpack.c.h.b16 %v2233
          %v2337 = vunpack.c.l.b16 %v2234
          %v2338 = vunpack.c.h.b16 %v2234
          %v2339 = vunpack.c.l.b16 %v2235
          %v2340 = vunpack.c.h.b16 %v2235
          %v2341 = vunpack.c.l.b16 %v2236
          %v2342 = vunpack.c.h.b16 %v2236
          %v2343 = vunpack.c.l.b16 %v2237
          %v2344 = vunpack.c.h.b16 %v2237
          %v2345 = vunpack.c.l.b16 %v2238
          %v2346 = vunpack.c.h.b16 %v2238
          %v2347 = vpack.c.b16 %v2285, %v2283
          %v2348 = vpack.c.b16 %v2286, %v2284
          %v2349 = vpack.c.b16 %v2289, %v2287
          %v2350 = vpack.c.b16 %v2290, %v2288
          %v2351 = vpack.c.b16 %v2293, %v2291
          %v2352 = vpack.c.b16 %v2294, %v2292
          %v2353 = vpack.c.b16 %v2297, %v2295
          %v2354 = vpack.c.b16 %v2298, %v2296
          %v2355 = vpack.c.b16 %v2301, %v2299
          %v2356 = vpack.c.b16 %v2302, %v2300
          %v2357 = vpack.c.b16 %v2305, %v2303
          %v2358 = vpack.c.b16 %v2306, %v2304
          %v2359 = vpack.c.b16 %v2309, %v2307
          %v2360 = vpack.c.b16 %v2310, %v2308
          %v2361 = vpack.c.b16 %v2313, %v2311
          %v2362 = vpack.c.b16 %v2314, %v2312
          %v2363 = vpack.c.b16 %v2317, %v2315
          %v2364 = vpack.c.b16 %v2318, %v2316
          %v2365 = vpack.c.b16 %v2321, %v2319
          %v2366 = vpack.c.b16 %v2322, %v2320
          %v2367 = vpack.c.b16 %v2325, %v2323
          %v2368 = vpack.c.b16 %v2326, %v2324
          %v2369 = vpack.c.b16 %v2329, %v2327
          %v2370 = vpack.c.b16 %v2330, %v2328
          %v2371 = vpack.c.b16 %v2333, %v2331
          %v2372 = vpack.c.b16 %v2334, %v2332
          %v2373 = vpack.c.b16 %v2337, %v2335
          %v2374 = vpack.c.b16 %v2338, %v2336
          %v2375 = vpack.c.b16 %v2341, %v2339
          %v2376 = vpack.c.b16 %v2342, %v2340
          %v2377 = vpack.c.b16 %v2345, %v2343
          %v2378 = vpack.c.b16 %v2346, %v2344
          %2411 = vmatprep.subr.bf16.mxu0 %v2348
          %2412 = vmatpush1.bf16.msra.mxu0 %v2347
          %2413 = vmatprep.subr.bf16.mxu0 %v2350
          %2414 = vmatpush1.bf16.msra.mxu0 %v2349
          %2415 = vmatprep.subr.bf16.mxu0 %v2352
          %2416 = vmatpush1.bf16.msra.mxu0 %v2351
          %2417 = vmatprep.subr.bf16.mxu0 %v2354
          %2418 = vmatpush1.bf16.msra.mxu0 %v2353
          %2419 = vmatprep.subr.bf16.mxu0 %v2356
          %2420 = vmatpush1.bf16.msra.mxu0 %v2355
          %2421 = vmatprep.subr.bf16.mxu0 %v2358
          %2422 = vmatpush1.bf16.msra.mxu0 %v2357
          %2423 = vmatprep.subr.bf16.mxu0 %v2360
          %2424 = vmatpush1.bf16.msra.mxu0 %v2359
          %2425 = vmatprep.subr.bf16.mxu0 %v2362
          %2426 = vmatpush1.bf16.msra.mxu0 %v2361
          %2427 = vmatprep.subr.bf16.mxu0 %v2364
          %2428 = vmatpush1.bf16.msra.mxu0 %v2363
          %2429 = vmatprep.subr.bf16.mxu0 %v2366
          %2430 = vmatpush1.bf16.msra.mxu0 %v2365
          %2431 = vmatprep.subr.bf16.mxu0 %v2368
          %2432 = vmatpush1.bf16.msra.mxu0 %v2367
          %2433 = vmatprep.subr.bf16.mxu0 %v2370
          %2434 = vmatpush1.bf16.msra.mxu0 %v2369
          %2435 = vmatprep.subr.bf16.mxu0 %v2372
          %2436 = vmatpush1.bf16.msra.mxu0 %v2371
          %2437 = vmatprep.subr.bf16.mxu0 %v2374
          %2438 = vmatpush1.bf16.msra.mxu0 %v2373
          %2439 = vmatprep.subr.bf16.mxu0 %v2376
          %2440 = vmatpush1.bf16.msra.mxu0 %v2375
          %2441 = vmatprep.subr.bf16.mxu0 %v2378
          %2442 = vmatpush1.bf16.msra.mxu0 %v2377
          %2443 = vmatprep.mubr.bf16.mxu0 %v1779
          %2444 = vmatmul.mubr.bf16.gmra.mrb[0].mxu0 %v1778
          %v2445 = vpop.f32.mrb[0].mxu0
          %v2446 = vadd.f32 %v2244, %v2445
          %v2447 = vpop.f32.mrb[0].mxu0
          %v2448 = vadd.f32 %v2248, %v2447
          %v2449 = vpop.f32.mrb[0].mxu0
          %v2450 = vadd.f32 %v2244, %v2449
          %v2451 = vpop.f32.mrb[0].mxu0
          %v2452 = vadd.f32 %v2248, %v2451
          %2453 = vmatprep.mubr.bf16.mxu0 %v1781
          %2454 = vmatmul.mubr.bf16.gmra.mrb[0].mxu0 %v1780
          %v2455 = vpop.f32.mrb[0].mxu0
          %v2456 = vadd.f32 %v2244, %v2455
          %v2457 = vpop.f32.mrb[0].mxu0
          %v2458 = vadd.f32 %v2248, %v2457
          %v2459 = vpop.f32.mrb[0].mxu0
          %v2460 = vadd.f32 %v2244, %v2459
          %v2461 = vpop.f32.mrb[0].mxu0
          %v2462 = vadd.f32 %v2248, %v2461
          %2463 = vmatprep.mubr.bf16.mxu0 %v1783
          %2464 = vmatmul.mubr.bf16.gmra.mrb[0].mxu0 %v1782
          %v2465 = vpop.f32.mrb[0].mxu0
          %v2466 = vadd.f32 %v2244, %v2465
          %v2467 = vpop.f32.mrb[0].mxu0
          %v2468 = vadd.f32 %v2248, %v2467
          %v2469 = vpop.f32.mrb[0].mxu0
          %v2470 = vadd.f32 %v2244, %v2469
          %v2471 = vpop.f32.mrb[0].mxu0
          %v2472 = vadd.f32 %v2248, %v2471
          %2473 = vmatprep.mubr.bf16.mxu0 %v1785
          %2474 = vmatmul.mubr.bf16.gmra.mrb[0].mxu0 %v1784
          %v2475 = vpop.f32.mrb[0].mxu0
          %v2476 = vadd.f32 %v2244, %v2475
          %v2477 = vpop.f32.mrb[0].mxu0
          %v2478 = vadd.f32 %v2248, %v2477
          %v2479 = vpop.f32.mrb[0].mxu0
          %v2480 = vadd.f32 %v2244, %v2479
          %v2481 = vpop.f32.mrb[0].mxu0
          %v2482 = vadd.f32 %v2248, %v2481
          %2483 = vmatprep.mubr.bf16.mxu0 %v1787
          %2484 = vmatmul.mubr.bf16.gmra.mrb[0].mxu0 %v1786
          %v2485 = vpop.f32.mrb[0].mxu0
          %v2486 = vadd.f32 %v2244, %v2485
          %v2487 = vpop.f32.mrb[0].mxu0
          %v2488 = vadd.f32 %v2248, %v2487
          %v2489 = vpop.f32.mrb[0].mxu0
          %v2490 = vadd.f32 %v2244, %v2489
          %v2491 = vpop.f32.mrb[0].mxu0
          %v2492 = vadd.f32 %v2248, %v2491
          %2493 = vmatprep.mubr.bf16.mxu0 %v1789
          %2494 = vmatmul.mubr.bf16.gmra.mrb[0].mxu0 %v1788
          %v2495 = vpop.f32.mrb[0].mxu0
          %v2496 = vadd.f32 %v2244, %v2495
          %v2497 = vpop.f32.mrb[0].mxu0
          %v2498 = vadd.f32 %v2248, %v2497
          %v2499 = vpop.f32.mrb[0].mxu0
          %v2500 = vadd.f32 %v2244, %v2499
          %v2501 = vpop.f32.mrb[0].mxu0
          %v2502 = vadd.f32 %v2248, %v2501
          %2503 = vmatprep.mubr.bf16.mxu0 %v1791
          %2504 = vmatmul.mubr.bf16.gmra.mrb[0].mxu0 %v1790
          %v2505 = vpop.f32.mrb[0].mxu0
          %v2506 = vadd.f32 %v2244, %v2505
          %v2507 = vpop.f32.mrb[0].mxu0
          %v2508 = vadd.f32 %v2248, %v2507
          %v2509 = vpop.f32.mrb[0].mxu0
          %v2510 = vadd.f32 %v2244, %v2509
          %v2511 = vpop.f32.mrb[0].mxu0
          %v2512 = vadd.f32 %v2248, %v2511
          %2513 = vmatprep.mubr.bf16.mxu0 %v1793
          %2514 = vmatmul.mubr.bf16.gmra.mrb[0].mxu0 %v1792
          %v2515 = vpop.f32.mrb[0].mxu0
          %v2516 = vadd.f32 %v2244, %v2515
          %v2517 = vpop.f32.mrb[0].mxu0
          %v2518 = vadd.f32 %v2248, %v2517
          %v2519 = vpop.f32.mrb[0].mxu0
          %v2520 = vadd.f32 %v2244, %v2519
          %v2521 = vpop.f32.mrb[0].mxu0
          %v2522 = vadd.f32 %v2248, %v2521
          %2523 = vmatprep.mubr.bf16.mxu0 %v1795
          %2524 = vmatmul.mubr.bf16.gmra.mrb[0].mxu0 %v1794
          %v2525 = vpop.f32.mrb[0].mxu0
          %v2526 = vadd.f32 %v2244, %v2525
          %v2527 = vpop.f32.mrb[0].mxu0
          %v2528 = vadd.f32 %v2248, %v2527
          %v2529 = vpop.f32.mrb[0].mxu0
          %v2530 = vadd.f32 %v2244, %v2529
          %v2531 = vpop.f32.mrb[0].mxu0
          %v2532 = vadd.f32 %v2248, %v2531
          %2533 = vmatprep.mubr.bf16.mxu0 %v1797
          %2534 = vmatmul.mubr.bf16.gmra.mrb[0].mxu0 %v1796
          %v2535 = vpop.f32.mrb[0].mxu0
          %v2536 = vadd.f32 %v2244, %v2535
          %v2537 = vpop.f32.mrb[0].mxu0
          %v2538 = vadd.f32 %v2248, %v2537
          %v2539 = vpop.f32.mrb[0].mxu0
          %v2540 = vadd.f32 %v2244, %v2539
          %v2541 = vpop.f32.mrb[0].mxu0
          %v2542 = vadd.f32 %v2248, %v2541
          %2543 = vmatprep.mubr.bf16.mxu0 %v1799
          %2544 = vmatmul.mubr.bf16.gmra.mrb[0].mxu0 %v1798
          %v2545 = vpop.f32.mrb[0].mxu0
          %v2546 = vadd.f32 %v2244, %v2545
          %v2547 = vpop.f32.mrb[0].mxu0
          %v2548 = vadd.f32 %v2248, %v2547
          %v2549 = vpop.f32.mrb[0].mxu0
          %v2550 = vadd.f32 %v2244, %v2549
          %v2551 = vpop.f32.mrb[0].mxu0
          %v2552 = vadd.f32 %v2248, %v2551
          %2553 = vmatprep.mubr.bf16.mxu0 %v1801
          %2554 = vmatmul.mubr.bf16.gmra.mrb[0].mxu0 %v1800
          %v2555 = vpop.f32.mrb[0].mxu0
          %v2556 = vadd.f32 %v2244, %v2555
          %v2557 = vpop.f32.mrb[0].mxu0
          %v2558 = vadd.f32 %v2248, %v2557
          %v2559 = vpop.f32.mrb[0].mxu0
          %v2560 = vadd.f32 %v2244, %v2559
          %v2561 = vpop.f32.mrb[0].mxu0
          %v2562 = vadd.f32 %v2248, %v2561
          %2563 = vmatprep.mubr.bf16.mxu0 %v1803
          %2564 = vmatmul.mubr.bf16.gmra.mrb[0].mxu0 %v1802
          %v2565 = vpop.f32.mrb[0].mxu0
          %v2566 = vadd.f32 %v2244, %v2565
          %v2567 = vpop.f32.mrb[0].mxu0
          %v2568 = vadd.f32 %v2248, %v2567
          %v2569 = vpop.f32.mrb[0].mxu0
          %v2570 = vadd.f32 %v2244, %v2569
          %v2571 = vpop.f32.mrb[0].mxu0
          %v2572 = vadd.f32 %v2248, %v2571
          %2573 = vmatprep.mubr.bf16.mxu0 %v1805
          %2574 = vmatmul.mubr.bf16.gmra.mrb[0].mxu0 %v1804
          %v2575 = vpop.f32.mrb[0].mxu0
          %v2576 = vadd.f32 %v2244, %v2575
          %v2577 = vpop.f32.mrb[0].mxu0
          %v2578 = vadd.f32 %v2248, %v2577
          %v2579 = vpop.f32.mrb[0].mxu0
          %v2580 = vadd.f32 %v2244, %v2579
          %v2581 = vpop.f32.mrb[0].mxu0
          %v2582 = vadd.f32 %v2248, %v2581
          %2583 = vmatprep.mubr.bf16.mxu0 %v1807
          %2584 = vmatmul.mubr.bf16.gmra.mrb[0].mxu0 %v1806
          %v2585 = vpop.f32.mrb[0].mxu0
          %v2586 = vadd.f32 %v2244, %v2585
          %v2587 = vpop.f32.mrb[0].mxu0
          %v2588 = vadd.f32 %v2248, %v2587
          %v2589 = vpop.f32.mrb[0].mxu0
          %v2590 = vadd.f32 %v2244, %v2589
          %v2591 = vpop.f32.mrb[0].mxu0
          %v2592 = vadd.f32 %v2248, %v2591
          %2593 = vmatprep.mubr.bf16.mxu0 %v1809
          %2594 = vmatmul.mubr.bf16.gmra.mrb[0].mxu0 %v1808
          %v2595 = vpop.f32.mrb[0].mxu0
          %v2596 = vadd.f32 %v2244, %v2595
          %v2597 = vpop.f32.mrb[0].mxu0
          %v2598 = vadd.f32 %v2248, %v2597
          %v2599 = vpop.f32.mrb[0].mxu0
          %v2600 = vadd.f32 %v2244, %v2599
          %v2601 = vpop.f32.mrb[0].mxu0
          %v2602 = vadd.f32 %v2248, %v2601
          %2603 = vdwg.mxu0
          %v2604 = vpack.c.bf16 %v2053, %v2049
          %v2605 = vpack.c.bf16 %v2055, %v2051
          %v2606 = vpack.c.bf16 %v2063, %v2059
          %v2607 = vpack.c.bf16 %v2065, %v2061
          %v2608 = vpack.c.bf16 %v2073, %v2069
          %v2609 = vpack.c.bf16 %v2075, %v2071
          %v2610 = vpack.c.bf16 %v2083, %v2079
          %v2611 = vpack.c.bf16 %v2085, %v2081
          %v2612 = vpack.c.bf16 %v2093, %v2089
          %v2613 = vpack.c.bf16 %v2095, %v2091
          %v2614 = vpack.c.bf16 %v2103, %v2099
          %v2615 = vpack.c.bf16 %v2105, %v2101
          %v2616 = vpack.c.bf16 %v2113, %v2109
          %v2617 = vpack.c.bf16 %v2115, %v2111
          %v2618 = vpack.c.bf16 %v2123, %v2119
          %v2619 = vpack.c.bf16 %v2125, %v2121
          %v2620 = vpack.c.bf16 %v2133, %v2129
          %v2621 = vpack.c.bf16 %v2135, %v2131
          %v2622 = vpack.c.bf16 %v2143, %v2139
          %v2623 = vpack.c.bf16 %v2145, %v2141
          %v2624 = vpack.c.bf16 %v2153, %v2149
          %v2625 = vpack.c.bf16 %v2155, %v2151
          %v2626 = vpack.c.bf16 %v2163, %v2159
          %v2627 = vpack.c.bf16 %v2165, %v2161
          %v2628 = vpack.c.bf16 %v2173, %v2169
          %v2629 = vpack.c.bf16 %v2175, %v2171
          %v2630 = vpack.c.bf16 %v2183, %v2179
          %v2631 = vpack.c.bf16 %v2185, %v2181
          %v2632 = vpack.c.bf16 %v2193, %v2189
          %v2633 = vpack.c.bf16 %v2195, %v2191
          %v2634 = vpack.c.bf16 %v2203, %v2199
          %v2635 = vpack.c.bf16 %v2205, %v2201
          %2636 = vst [vmem:[#allocation2] sm:$0xff] %v2604
          %2637 = vst [vmem:[#allocation2 + $0x8] sm:$0xff] %v2605
          %2638 = vst [vmem:[#allocation2 + $0x10] sm:$0xff] %v2606
          %2639 = vst [vmem:[#allocation2 + $0x18] sm:$0xff] %v2607
          %2640 = vst [vmem:[#allocation2 + $0x20] sm:$0xff] %v2608
          %2641 = vst [vmem:[#allocation2 + $0x28] sm:$0xff] %v2609
          %2642 = vst [vmem:[#allocation2 + $0x30] sm:$0xff] %v2610
          %2643 = vst [vmem:[#allocation2 + $0x38] sm:$0xff] %v2611
          %2644 = vst [vmem:[#allocation2 + $0x40] sm:$0xff] %v2612
          %2645 = vst [vmem:[#allocation2 + $0x48] sm:$0xff] %v2613
          %2646 = vst [vmem:[#allocation2 + $0x50] sm:$0xff] %v2614
          %2647 = vst [vmem:[#allocation2 + $0x58] sm:$0xff] %v2615
          %2648 = vst [vmem:[#allocation2 + $0x60] sm:$0xff] %v2616
          %2649 = vst [vmem:[#allocation2 + $0x68] sm:$0xff] %v2617
          %2650 = vst [vmem:[#allocation2 + $0x70] sm:$0xff] %v2618
          %2651 = vst [vmem:[#allocation2 + $0x78] sm:$0xff] %v2619
          %2652 = vst [vmem:[#allocation2 + $0x80] sm:$0xff] %v2620
          %2653 = vst [vmem:[#allocation2 + $0x88] sm:$0xff] %v2621
          %2654 = vst [vmem:[#allocation2 + $0x90] sm:$0xff] %v2622
          %2655 = vst [vmem:[#allocation2 + $0x98] sm:$0xff] %v2623
          %2656 = vst [vmem:[#allocation2 + $0xa0] sm:$0xff] %v2624
          %2657 = vst [vmem:[#allocation2 + $0xa8] sm:$0xff] %v2625
          %2658 = vst [vmem:[#allocation2 + $0xb0] sm:$0xff] %v2626
          %2659 = vst [vmem:[#allocation2 + $0xb8] sm:$0xff] %v2627
          %2660 = vst [vmem:[#allocation2 + $0xc0] sm:$0xff] %v2628
          %2661 = vst [vmem:[#allocation2 + $0xc8] sm:$0xff] %v2629
          %2662 = vst [vmem:[#allocation2 + $0xd0] sm:$0xff] %v2630
          %2663 = vst [vmem:[#allocation2 + $0xd8] sm:$0xff] %v2631
          %2664 = vst [vmem:[#allocation2 + $0xe0] sm:$0xff] %v2632
          %2665 = vst [vmem:[#allocation2 + $0xe8] sm:$0xff] %v2633
          %2666 = vst [vmem:[#allocation2 + $0xf0] sm:$0xff] %v2634
          %2667 = vst [vmem:[#allocation2 + $0xf8] sm:$0xff] %v2635
          %v2668 = vpack.c.bf16 %v2450, %v2446
          %v2669 = vpack.c.bf16 %v2452, %v2448
          %v2670 = vpack.c.bf16 %v2460, %v2456
          %v2671 = vpack.c.bf16 %v2462, %v2458
          %v2672 = vpack.c.bf16 %v2470, %v2466
          %v2673 = vpack.c.bf16 %v2472, %v2468
          %v2674 = vpack.c.bf16 %v2480, %v2476
          %v2675 = vpack.c.bf16 %v2482, %v2478
          %v2676 = vpack.c.bf16 %v2490, %v2486
          %v2677 = vpack.c.bf16 %v2492, %v2488
          %v2678 = vpack.c.bf16 %v2500, %v2496
          %v2679 = vpack.c.bf16 %v2502, %v2498
          %v2680 = vpack.c.bf16 %v2510, %v2506
          %v2681 = vpack.c.bf16 %v2512, %v2508
          %v2682 = vpack.c.bf16 %v2520, %v2516
          %v2683 = vpack.c.bf16 %v2522, %v2518
          %v2684 = vpack.c.bf16 %v2530, %v2526
          %v2685 = vpack.c.bf16 %v2532, %v2528
          %v2686 = vpack.c.bf16 %v2540, %v2536
          %v2687 = vpack.c.bf16 %v2542, %v2538
          %v2688 = vpack.c.bf16 %v2550, %v2546
          %v2689 = vpack.c.bf16 %v2552, %v2548
          %v2690 = vpack.c.bf16 %v2560, %v2556
          %v2691 = vpack.c.bf16 %v2562, %v2558
          %v2692 = vpack.c.bf16 %v2570, %v2566
          %v2693 = vpack.c.bf16 %v2572, %v2568
          %v2694 = vpack.c.bf16 %v2580, %v2576
          %v2695 = vpack.c.bf16 %v2582, %v2578
          %v2696 = vpack.c.bf16 %v2590, %v2586
          %v2697 = vpack.c.bf16 %v2592, %v2588
          %v2698 = vpack.c.bf16 %v2600, %v2596
          %v2699 = vpack.c.bf16 %v2602, %v2598
          %2700 = vst [vmem:[#allocation3] sm:$0xff] %v2668
          %2701 = vst [vmem:[#allocation3 + $0x8] sm:$0xff] %v2669
          %2702 = vst [vmem:[#allocation3 + $0x10] sm:$0xff] %v2670
          %2703 = vst [vmem:[#allocation3 + $0x18] sm:$0xff] %v2671
          %2704 = vst [vmem:[#allocation3 + $0x20] sm:$0xff] %v2672
          %2705 = vst [vmem:[#allocation3 + $0x28] sm:$0xff] %v2673
          %2706 = vst [vmem:[#allocation3 + $0x30] sm:$0xff] %v2674
          %2707 = vst [vmem:[#allocation3 + $0x38] sm:$0xff] %v2675
          %2708 = vst [vmem:[#allocation3 + $0x40] sm:$0xff] %v2676
          %2709 = vst [vmem:[#allocation3 + $0x48] sm:$0xff] %v2677
          %2710 = vst [vmem:[#allocation3 + $0x50] sm:$0xff] %v2678
          %2711 = vst [vmem:[#allocation3 + $0x58] sm:$0xff] %v2679
          %2712 = vst [vmem:[#allocation3 + $0x60] sm:$0xff] %v2680
          %2713 = vst [vmem:[#allocation3 + $0x68] sm:$0xff] %v2681
          %2714 = vst [vmem:[#allocation3 + $0x70] sm:$0xff] %v2682
          %2715 = vst [vmem:[#allocation3 + $0x78] sm:$0xff] %v2683
          %2716 = vst [vmem:[#allocation3 + $0x80] sm:$0xff] %v2684
          %2717 = vst [vmem:[#allocation3 + $0x88] sm:$0xff] %v2685
          %2718 = vst [vmem:[#allocation3 + $0x90] sm:$0xff] %v2686
          %2719 = vst [vmem:[#allocation3 + $0x98] sm:$0xff] %v2687
          %2720 = vst [vmem:[#allocation3 + $0xa0] sm:$0xff] %v2688
          %2721 = vst [vmem:[#allocation3 + $0xa8] sm:$0xff] %v2689
          %2722 = vst [vmem:[#allocation3 + $0xb0] sm:$0xff] %v2690
          %2723 = vst [vmem:[#allocation3 + $0xb8] sm:$0xff] %v2691
          %2724 = vst [vmem:[#allocation3 + $0xc0] sm:$0xff] %v2692
          %2725 = vst [vmem:[#allocation3 + $0xc8] sm:$0xff] %v2693
          %2726 = vst [vmem:[#allocation3 + $0xd0] sm:$0xff] %v2694
          %2727 = vst [vmem:[#allocation3 + $0xd8] sm:$0xff] %v2695
          %2728 = vst [vmem:[#allocation3 + $0xe0] sm:$0xff] %v2696
          %2729 = vst [vmem:[#allocation3 + $0xe8] sm:$0xff] %v2697
          %2730 = vst [vmem:[#allocation3 + $0xf0] sm:$0xff] %v2698
          %2731 = vst [vmem:[#allocation3 + $0xf8] sm:$0xff] %v2699
        $region136: #{tpu_custom_call.1} parent=99 // pred_fallthru
          _
        %s2732 = smul.u32 %s48, 128
        %s2733 = sshra.s32 %s2732, 3
        %s2734 = sand.u32 %s2732, 7
        %s2735 = smul.u32 %s2733, 2
        %s2736 = smul.addr %s2735, 8
        %s2737 = scalar_lea.vmem %s692, %s2736 [#allocation4]
        %v2738 = vld [vmem:[%s2737] sm:$0xff]
        %v2739 = vld [vmem:[%s2737 + $0x8] sm:$0xff]
        %v2740 = vld [vmem:[%s2737 + $0x10] sm:$0xff]
        %v2741 = vld [vmem:[%s2737 + $0x18] sm:$0xff]
        %v2742 = vld [vmem:[%s2737 + $0x20] sm:$0xff]
        %v2743 = vld [vmem:[%s2737 + $0x28] sm:$0xff]
        %v2744 = vld [vmem:[%s2737 + $0x30] sm:$0xff]
        %v2745 = vld [vmem:[%s2737 + $0x38] sm:$0xff]
        %v2746 = vld [vmem:[%s2737 + $0x40] sm:$0xff]
        %v2747 = vld [vmem:[%s2737 + $0x48] sm:$0xff]
        %v2748 = vld [vmem:[%s2737 + $0x50] sm:$0xff]
        %v2749 = vld [vmem:[%s2737 + $0x58] sm:$0xff]
        %v2750 = vld [vmem:[%s2737 + $0x60] sm:$0xff]
        %v2751 = vld [vmem:[%s2737 + $0x68] sm:$0xff]
        %v2752 = vld [vmem:[%s2737 + $0x70] sm:$0xff]
        %v2753 = vld [vmem:[%s2737 + $0x78] sm:$0xff]
        %v2754 = vld [vmem:[%s2737 + $0x80] sm:$0xff]
        %v2755 = vld [vmem:[%s2737 + $0x88] sm:$0xff]
        %v2756 = vld [vmem:[%s2737 + $0x90] sm:$0xff]
        %v2757 = vld [vmem:[%s2737 + $0x98] sm:$0xff]
        %v2758 = vld [vmem:[%s2737 + $0xa0] sm:$0xff]
        %v2759 = vld [vmem:[%s2737 + $0xa8] sm:$0xff]
        %v2760 = vld [vmem:[%s2737 + $0xb0] sm:$0xff]
        %v2761 = vld [vmem:[%s2737 + $0xb8] sm:$0xff]
        %v2762 = vld [vmem:[%s2737 + $0xc0] sm:$0xff]
        %v2763 = vld [vmem:[%s2737 + $0xc8] sm:$0xff]
        %v2764 = vld [vmem:[%s2737 + $0xd0] sm:$0xff]
        %v2765 = vld [vmem:[%s2737 + $0xd8] sm:$0xff]
        %v2766 = vld [vmem:[%s2737 + $0xe0] sm:$0xff]
        %v2767 = vld [vmem:[%s2737 + $0xe8] sm:$0xff]
        %v2768 = vld [vmem:[%s2737 + $0xf0] sm:$0xff]
        %v2769 = vld [vmem:[%s2737 + $0xf8] sm:$0xff]
        %v2770 = vadd.f32 %v2738, %v2739
        %2771 = vadd.xlane.f32.xlu0 %v2770
        %v2772 = vpop.xlane.xlu0 %2771
        %v2773 = vadd.f32 %v2740, %v2741
        %2774 = vadd.xlane.f32.xlu0 %v2773
        %v2775 = vpop.xlane.xlu0 %2774
        %v2776 = vadd.f32 %v2742, %v2743
        %2777 = vadd.xlane.f32.xlu0 %v2776
        %v2778 = vpop.xlane.xlu0 %2777
        %v2779 = vadd.f32 %v2744, %v2745
        %2780 = vadd.xlane.f32.xlu0 %v2779
        %v2781 = vpop.xlane.xlu0 %2780
        %v2782 = vadd.f32 %v2746, %v2747
        %2783 = vadd.xlane.f32.xlu0 %v2782
        %v2784 = vpop.xlane.xlu0 %2783
        %v2785 = vadd.f32 %v2748, %v2749
        %2786 = vadd.xlane.f32.xlu0 %v2785
        %v2787 = vpop.xlane.xlu0 %2786
        %v2788 = vadd.f32 %v2750, %v2751
        %2789 = vadd.xlane.f32.xlu0 %v2788
        %v2790 = vpop.xlane.xlu0 %2789
        %v2791 = vadd.f32 %v2752, %v2753
        %2792 = vadd.xlane.f32.xlu0 %v2791
        %v2793 = vpop.xlane.xlu0 %2792
        %v2794 = vadd.f32 %v2754, %v2755
        %2795 = vadd.xlane.f32.xlu0 %v2794
        %v2796 = vpop.xlane.xlu0 %2795
        %v2797 = vadd.f32 %v2756, %v2757
        %2798 = vadd.xlane.f32.xlu0 %v2797
        %v2799 = vpop.xlane.xlu0 %2798
        %v2800 = vadd.f32 %v2758, %v2759
        %2801 = vadd.xlane.f32.xlu0 %v2800
        %v2802 = vpop.xlane.xlu0 %2801
        %v2803 = vadd.f32 %v2760, %v2761
        %2804 = vadd.xlane.f32.xlu0 %v2803
        %v2805 = vpop.xlane.xlu0 %2804
        %v2806 = vadd.f32 %v2762, %v2763
        %2807 = vadd.xlane.f32.xlu0 %v2806
        %v2808 = vpop.xlane.xlu0 %2807
        %v2809 = vadd.f32 %v2764, %v2765
        %2810 = vadd.xlane.f32.xlu0 %v2809
        %v2811 = vpop.xlane.xlu0 %2810
        %v2812 = vadd.f32 %v2766, %v2767
        %2813 = vadd.xlane.f32.xlu0 %v2812
        %v2814 = vpop.xlane.xlu0 %2813
        %v2815 = vadd.f32 %v2768, %v2769
        %2816 = vadd.xlane.f32.xlu0 %v2815
        %v2817 = vpop.xlane.xlu0 %2816
        %v2818 = vrcp.pop 256.0
        %v2819 = vmul.f32 %v2772, %v2818
        %v2820 = vmul.f32 %v2775, %v2818
        %v2821 = vmul.f32 %v2778, %v2818
        %v2822 = vmul.f32 %v2781, %v2818
        %v2823 = vmul.f32 %v2784, %v2818
        %v2824 = vmul.f32 %v2787, %v2818
        %v2825 = vmul.f32 %v2790, %v2818
        %v2826 = vmul.f32 %v2793, %v2818
        %v2827 = vmul.f32 %v2796, %v2818
        %v2828 = vmul.f32 %v2799, %v2818
        %v2829 = vmul.f32 %v2802, %v2818
        %v2830 = vmul.f32 %v2805, %v2818
        %v2831 = vmul.f32 %v2808, %v2818
        %v2832 = vmul.f32 %v2811, %v2818
        %v2833 = vmul.f32 %v2814, %v2818
        %v2834 = vmul.f32 %v2817, %v2818
        %v2835 = vsub.f32 %v2738, %v2819
        %v2836 = vsub.f32 %v2739, %v2819
        %v2837 = vsub.f32 %v2740, %v2820
        %v2838 = vsub.f32 %v2741, %v2820
        %v2839 = vsub.f32 %v2742, %v2821
        %v2840 = vsub.f32 %v2743, %v2821
        %v2841 = vsub.f32 %v2744, %v2822
        %v2842 = vsub.f32 %v2745, %v2822
        %v2843 = vsub.f32 %v2746, %v2823
        %v2844 = vsub.f32 %v2747, %v2823
        %v2845 = vsub.f32 %v2748, %v2824
        %v2846 = vsub.f32 %v2749, %v2824
        %v2847 = vsub.f32 %v2750, %v2825
        %v2848 = vsub.f32 %v2751, %v2825
        %v2849 = vsub.f32 %v2752, %v2826
        %v2850 = vsub.f32 %v2753, %v2826
        %v2851 = vsub.f32 %v2754, %v2827
        %v2852 = vsub.f32 %v2755, %v2827
        %v2853 = vsub.f32 %v2756, %v2828
        %v2854 = vsub.f32 %v2757, %v2828
        %v2855 = vsub.f32 %v2758, %v2829
        %v2856 = vsub.f32 %v2759, %v2829
        %v2857 = vsub.f32 %v2760, %v2830
        %v2858 = vsub.f32 %v2761, %v2830
        %v2859 = vsub.f32 %v2762, %v2831
        %v2860 = vsub.f32 %v2763, %v2831
        %v2861 = vsub.f32 %v2764, %v2832
        %v2862 = vsub.f32 %v2765, %v2832
        %v2863 = vsub.f32 %v2766, %v2833
        %v2864 = vsub.f32 %v2767, %v2833
        %v2865 = vsub.f32 %v2768, %v2834
        %v2866 = vsub.f32 %v2769, %v2834
        %v2867 = vmul.f32 %v2835, %v2835
        %v2868 = vmul.f32 %v2836, %v2836
        %v2869 = vmul.f32 %v2837, %v2837
        %v2870 = vmul.f32 %v2838, %v2838
        %v2871 = vmul.f32 %v2839, %v2839
        %v2872 = vmul.f32 %v2840, %v2840
        %v2873 = vmul.f32 %v2841, %v2841
        %v2874 = vmul.f32 %v2842, %v2842
        %v2875 = vmul.f32 %v2843, %v2843
        %v2876 = vmul.f32 %v2844, %v2844
        %v2877 = vmul.f32 %v2845, %v2845
        %v2878 = vmul.f32 %v2846, %v2846
        %v2879 = vmul.f32 %v2847, %v2847
        %v2880 = vmul.f32 %v2848, %v2848
        %v2881 = vmul.f32 %v2849, %v2849
        %v2882 = vmul.f32 %v2850, %v2850
        %v2883 = vmul.f32 %v2851, %v2851
        %v2884 = vmul.f32 %v2852, %v2852
        %v2885 = vmul.f32 %v2853, %v2853
        %v2886 = vmul.f32 %v2854, %v2854
        %v2887 = vmul.f32 %v2855, %v2855
        %v2888 = vmul.f32 %v2856, %v2856
        %v2889 = vmul.f32 %v2857, %v2857
        %v2890 = vmul.f32 %v2858, %v2858
        %v2891 = vmul.f32 %v2859, %v2859
        %v2892 = vmul.f32 %v2860, %v2860
        %v2893 = vmul.f32 %v2861, %v2861
        %v2894 = vmul.f32 %v2862, %v2862
        %v2895 = vmul.f32 %v2863, %v2863
        %v2896 = vmul.f32 %v2864, %v2864
        %v2897 = vmul.f32 %v2865, %v2865
        %v2898 = vmul.f32 %v2866, %v2866
        %v2899 = vadd.f32 %v2867, %v2868
        %2900 = vadd.xlane.f32.xlu0 %v2899
        %v2901 = vpop.xlane.xlu0 %2900
        %v2902 = vadd.f32 %v2869, %v2870
        %2903 = vadd.xlane.f32.xlu0 %v2902
        %v2904 = vpop.xlane.xlu0 %2903
        %v2905 = vadd.f32 %v2871, %v2872
        %2906 = vadd.xlane.f32.xlu0 %v2905
        %v2907 = vpop.xlane.xlu0 %2906
        %v2908 = vadd.f32 %v2873, %v2874
        %2909 = vadd.xlane.f32.xlu0 %v2908
        %v2910 = vpop.xlane.xlu0 %2909
        %v2911 = vadd.f32 %v2875, %v2876
        %2912 = vadd.xlane.f32.xlu0 %v2911
        %v2913 = vpop.xlane.xlu0 %2912
        %v2914 = vadd.f32 %v2877, %v2878
        %2915 = vadd.xlane.f32.xlu0 %v2914
        %v2916 = vpop.xlane.xlu0 %2915
        %v2917 = vadd.f32 %v2879, %v2880
        %2918 = vadd.xlane.f32.xlu0 %v2917
        %v2919 = vpop.xlane.xlu0 %2918
        %v2920 = vadd.f32 %v2881, %v2882
        %2921 = vadd.xlane.f32.xlu0 %v2920
        %v2922 = vpop.xlane.xlu0 %2921
        %v2923 = vadd.f32 %v2883, %v2884
        %2924 = vadd.xlane.f32.xlu0 %v2923
        %v2925 = vpop.xlane.xlu0 %2924
        %v2926 = vadd.f32 %v2885, %v2886
        %2927 = vadd.xlane.f32.xlu0 %v2926
        %v2928 = vpop.xlane.xlu0 %2927
        %v2929 = vadd.f32 %v2887, %v2888
        %2930 = vadd.xlane.f32.xlu0 %v2929
        %v2931 = vpop.xlane.xlu0 %2930
        %v2932 = vadd.f32 %v2889, %v2890
        %2933 = vadd.xlane.f32.xlu0 %v2932
        %v2934 = vpop.xlane.xlu0 %2933
        %v2935 = vadd.f32 %v2891, %v2892
        %2936 = vadd.xlane.f32.xlu0 %v2935
        %v2937 = vpop.xlane.xlu0 %2936
        %v2938 = vadd.f32 %v2893, %v2894
        %2939 = vadd.xlane.f32.xlu0 %v2938
        %v2940 = vpop.xlane.xlu0 %2939
        %v2941 = vadd.f32 %v2895, %v2896
        %2942 = vadd.xlane.f32.xlu0 %v2941
        %v2943 = vpop.xlane.xlu0 %2942
        %v2944 = vadd.f32 %v2897, %v2898
        %2945 = vadd.xlane.f32.xlu0 %v2944
        %v2946 = vpop.xlane.xlu0 %2945
        %v2947 = vmul.f32 %v2901, 0.003921569
        %v2948 = vmul.f32 %v2904, 0.003921569
        %v2949 = vmul.f32 %v2907, 0.003921569
        %v2950 = vmul.f32 %v2910, 0.003921569
        %v2951 = vmul.f32 %v2913, 0.003921569
        %v2952 = vmul.f32 %v2916, 0.003921569
        %v2953 = vmul.f32 %v2919, 0.003921569
        %v2954 = vmul.f32 %v2922, 0.003921569
        %v2955 = vmul.f32 %v2925, 0.003921569
        %v2956 = vmul.f32 %v2928, 0.003921569
        %v2957 = vmul.f32 %v2931, 0.003921569
        %v2958 = vmul.f32 %v2934, 0.003921569
        %v2959 = vmul.f32 %v2937, 0.003921569
        %v2960 = vmul.f32 %v2940, 0.003921569
        %v2961 = vmul.f32 %v2943, 0.003921569
        %v2962 = vmul.f32 %v2946, 0.003921569
        %v2963 = vrsqrt.pop %v2947
        %v2964 = vmul.f32 %v2947, %v2963
        %vm2965 = vcmp.eq.f32.partialorder %v2947, inf
        %v2966 = vsel %vm2965, %v2947, %v2964
        %vm2967 = vcmp.eq.f32.partialorder %v2947, 0.0
        %v2968 = vand.u32 %v2947, 2147483648
        %v2969 = vsel %vm2967, %v2968, %v2966
        %v2970 = vrsqrt.pop %v2948
        %v2971 = vmul.f32 %v2948, %v2970
        %vm2972 = vcmp.eq.f32.partialorder %v2948, inf
        %v2973 = vsel %vm2972, %v2948, %v2971
        %vm2974 = vcmp.eq.f32.partialorder %v2948, 0.0
        %v2975 = vand.u32 %v2948, 2147483648
        %v2976 = vsel %vm2974, %v2975, %v2973
        %v2977 = vrsqrt.pop %v2949
        %v2978 = vmul.f32 %v2949, %v2977
        %vm2979 = vcmp.eq.f32.partialorder %v2949, inf
        %v2980 = vsel %vm2979, %v2949, %v2978
        %vm2981 = vcmp.eq.f32.partialorder %v2949, 0.0
        %v2982 = vand.u32 %v2949, 2147483648
        %v2983 = vsel %vm2981, %v2982, %v2980
        %v2984 = vrsqrt.pop %v2950
        %v2985 = vmul.f32 %v2950, %v2984
        %vm2986 = vcmp.eq.f32.partialorder %v2950, inf
        %v2987 = vsel %vm2986, %v2950, %v2985
        %vm2988 = vcmp.eq.f32.partialorder %v2950, 0.0
        %v2989 = vand.u32 %v2950, 2147483648
        %v2990 = vsel %vm2988, %v2989, %v2987
        %v2991 = vrsqrt.pop %v2951
        %v2992 = vmul.f32 %v2951, %v2991
        %vm2993 = vcmp.eq.f32.partialorder %v2951, inf
        %v2994 = vsel %vm2993, %v2951, %v2992
        %vm2995 = vcmp.eq.f32.partialorder %v2951, 0.0
        %v2996 = vand.u32 %v2951, 2147483648
        %v2997 = vsel %vm2995, %v2996, %v2994
        %v2998 = vrsqrt.pop %v2952
        %v2999 = vmul.f32 %v2952, %v2998
        %vm3000 = vcmp.eq.f32.partialorder %v2952, inf
        %v3001 = vsel %vm3000, %v2952, %v2999
        %vm3002 = vcmp.eq.f32.partialorder %v2952, 0.0
        %v3003 = vand.u32 %v2952, 2147483648
        %v3004 = vsel %vm3002, %v3003, %v3001
        %v3005 = vrsqrt.pop %v2953
        %v3006 = vmul.f32 %v2953, %v3005
        %vm3007 = vcmp.eq.f32.partialorder %v2953, inf
        %v3008 = vsel %vm3007, %v2953, %v3006
        %vm3009 = vcmp.eq.f32.partialorder %v2953, 0.0
        %v3010 = vand.u32 %v2953, 2147483648
        %v3011 = vsel %vm3009, %v3010, %v3008
        %v3012 = vrsqrt.pop %v2954
        %v3013 = vmul.f32 %v2954, %v3012
        %vm3014 = vcmp.eq.f32.partialorder %v2954, inf
        %v3015 = vsel %vm3014, %v2954, %v3013
        %vm3016 = vcmp.eq.f32.partialorder %v2954, 0.0
        %v3017 = vand.u32 %v2954, 2147483648
        %v3018 = vsel %vm3016, %v3017, %v3015
        %v3019 = vrsqrt.pop %v2955
        %v3020 = vmul.f32 %v2955, %v3019
        %vm3021 = vcmp.eq.f32.partialorder %v2955, inf
        %v3022 = vsel %vm3021, %v2955, %v3020
        %vm3023 = vcmp.eq.f32.partialorder %v2955, 0.0
        %v3024 = vand.u32 %v2955, 2147483648
        %v3025 = vsel %vm3023, %v3024, %v3022
        %v3026 = vrsqrt.pop %v2956
        %v3027 = vmul.f32 %v2956, %v3026
        %vm3028 = vcmp.eq.f32.partialorder %v2956, inf
        %v3029 = vsel %vm3028, %v2956, %v3027
        %vm3030 = vcmp.eq.f32.partialorder %v2956, 0.0
        %v3031 = vand.u32 %v2956, 2147483648
        %v3032 = vsel %vm3030, %v3031, %v3029
        %v3033 = vrsqrt.pop %v2957
        %v3034 = vmul.f32 %v2957, %v3033
        %vm3035 = vcmp.eq.f32.partialorder %v2957, inf
        %v3036 = vsel %vm3035, %v2957, %v3034
        %vm3037 = vcmp.eq.f32.partialorder %v2957, 0.0
        %v3038 = vand.u32 %v2957, 2147483648
        %v3039 = vsel %vm3037, %v3038, %v3036
        %v3040 = vrsqrt.pop %v2958
        %v3041 = vmul.f32 %v2958, %v3040
        %vm3042 = vcmp.eq.f32.partialorder %v2958, inf
        %v3043 = vsel %vm3042, %v2958, %v3041
        %vm3044 = vcmp.eq.f32.partialorder %v2958, 0.0
        %v3045 = vand.u32 %v2958, 2147483648
        %v3046 = vsel %vm3044, %v3045, %v3043
        %v3047 = vrsqrt.pop %v2959
        %v3048 = vmul.f32 %v2959, %v3047
        %vm3049 = vcmp.eq.f32.partialorder %v2959, inf
        %v3050 = vsel %vm3049, %v2959, %v3048
        %vm3051 = vcmp.eq.f32.partialorder %v2959, 0.0
        %v3052 = vand.u32 %v2959, 2147483648
        %v3053 = vsel %vm3051, %v3052, %v3050
        %v3054 = vrsqrt.pop %v2960
        %v3055 = vmul.f32 %v2960, %v3054
        %vm3056 = vcmp.eq.f32.partialorder %v2960, inf
        %v3057 = vsel %vm3056, %v2960, %v3055
        %vm3058 = vcmp.eq.f32.partialorder %v2960, 0.0
        %v3059 = vand.u32 %v2960, 2147483648
        %v3060 = vsel %vm3058, %v3059, %v3057
        %v3061 = vrsqrt.pop %v2961
        %v3062 = vmul.f32 %v2961, %v3061
        %vm3063 = vcmp.eq.f32.partialorder %v2961, inf
        %v3064 = vsel %vm3063, %v2961, %v3062
        %vm3065 = vcmp.eq.f32.partialorder %v2961, 0.0
        %v3066 = vand.u32 %v2961, 2147483648
        %v3067 = vsel %vm3065, %v3066, %v3064
        %v3068 = vrsqrt.pop %v2962
        %v3069 = vmul.f32 %v2962, %v3068
        %vm3070 = vcmp.eq.f32.partialorder %v2962, inf
        %v3071 = vsel %vm3070, %v2962, %v3069
        %vm3072 = vcmp.eq.f32.partialorder %v2962, 0.0
        %v3073 = vand.u32 %v2962, 2147483648
        %v3074 = vsel %vm3072, %v3073, %v3071
        %v3075 = vadd.f32 %v2969, 1e-06
        %v3076 = vadd.f32 %v2976, 1e-06
        %v3077 = vadd.f32 %v2983, 1e-06
        %v3078 = vadd.f32 %v2990, 1e-06
        %v3079 = vadd.f32 %v2997, 1e-06
        %v3080 = vadd.f32 %v3004, 1e-06
        %v3081 = vadd.f32 %v3011, 1e-06
        %v3082 = vadd.f32 %v3018, 1e-06
        %v3083 = vadd.f32 %v3025, 1e-06
        %v3084 = vadd.f32 %v3032, 1e-06
        %v3085 = vadd.f32 %v3039, 1e-06
        %v3086 = vadd.f32 %v3046, 1e-06
        %v3087 = vadd.f32 %v3053, 1e-06
        %v3088 = vadd.f32 %v3060, 1e-06
        %v3089 = vadd.f32 %v3067, 1e-06
        %v3090 = vadd.f32 %v3074, 1e-06
        %v3091 = vrcp.pop %v3075
        %v3092 = vmul.f32 1.0, %v3091
        %v3093 = vrcp.pop %v3076
        %v3094 = vmul.f32 1.0, %v3093
        %v3095 = vrcp.pop %v3077
        %v3096 = vmul.f32 1.0, %v3095
        %v3097 = vrcp.pop %v3078
        %v3098 = vmul.f32 1.0, %v3097
        %v3099 = vrcp.pop %v3079
        %v3100 = vmul.f32 1.0, %v3099
        %v3101 = vrcp.pop %v3080
        %v3102 = vmul.f32 1.0, %v3101
        %v3103 = vrcp.pop %v3081
        %v3104 = vmul.f32 1.0, %v3103
        %v3105 = vrcp.pop %v3082
        %v3106 = vmul.f32 1.0, %v3105
        %v3107 = vrcp.pop %v3083
        %v3108 = vmul.f32 1.0, %v3107
        %v3109 = vrcp.pop %v3084
        %v3110 = vmul.f32 1.0, %v3109
        %v3111 = vrcp.pop %v3085
        %v3112 = vmul.f32 1.0, %v3111
        %v3113 = vrcp.pop %v3086
        %v3114 = vmul.f32 1.0, %v3113
        %v3115 = vrcp.pop %v3087
        %v3116 = vmul.f32 1.0, %v3115
        %v3117 = vrcp.pop %v3088
        %v3118 = vmul.f32 1.0, %v3117
        %v3119 = vrcp.pop %v3089
        %v3120 = vmul.f32 1.0, %v3119
        %v3121 = vrcp.pop %v3090
        %v3122 = vmul.f32 1.0, %v3121
        %v3123 = vmul.f32 %v2835, %v3092
        %v3124 = vmul.f32 %v2836, %v3092
        %v3125 = vmul.f32 %v2837, %v3094
        %v3126 = vmul.f32 %v2838, %v3094
        %v3127 = vmul.f32 %v2839, %v3096
        %v3128 = vmul.f32 %v2840, %v3096
        %v3129 = vmul.f32 %v2841, %v3098
        %v3130 = vmul.f32 %v2842, %v3098
        %v3131 = vmul.f32 %v2843, %v3100
        %v3132 = vmul.f32 %v2844, %v3100
        %v3133 = vmul.f32 %v2845, %v3102
        %v3134 = vmul.f32 %v2846, %v3102
        %v3135 = vmul.f32 %v2847, %v3104
        %v3136 = vmul.f32 %v2848, %v3104
        %v3137 = vmul.f32 %v2849, %v3106
        %v3138 = vmul.f32 %v2850, %v3106
        %v3139 = vmul.f32 %v2851, %v3108
        %v3140 = vmul.f32 %v2852, %v3108
        %v3141 = vmul.f32 %v2853, %v3110
        %v3142 = vmul.f32 %v2854, %v3110
        %v3143 = vmul.f32 %v2855, %v3112
        %v3144 = vmul.f32 %v2856, %v3112
        %v3145 = vmul.f32 %v2857, %v3114
        %v3146 = vmul.f32 %v2858, %v3114
        %v3147 = vmul.f32 %v2859, %v3116
        %v3148 = vmul.f32 %v2860, %v3116
        %v3149 = vmul.f32 %v2861, %v3118
        %v3150 = vmul.f32 %v2862, %v3118
        %v3151 = vmul.f32 %v2863, %v3120
        %v3152 = vmul.f32 %v2864, %v3120
        %v3153 = vmul.f32 %v2865, %v3122
        %v3154 = vmul.f32 %v2866, %v3122
        %v3156 = vlaneseq
        %v3157 = vshrl.u32 %v3156, 7
        %v3158 = vsub.s32 0, %v3157
        %v3159 = vrot.slane %v789, %v3158
        %v3160 = vlaneseq
        %v3161 = vshrl.u32 %v3160, 7
        %v3162 = vsub.s32 1, %v3161
        %v3163 = vrot.slane %v789, %v3162
        %v3166 = vmul.f32 %v3159, %v3123
        %v3167 = vmul.f32 %v3163, %v3124
        %v3168 = vmul.f32 %v3159, %v3125
        %v3169 = vmul.f32 %v3163, %v3126
        %v3170 = vmul.f32 %v3159, %v3127
        %v3171 = vmul.f32 %v3163, %v3128
        %v3172 = vmul.f32 %v3159, %v3129
        %v3173 = vmul.f32 %v3163, %v3130
        %v3174 = vmul.f32 %v3159, %v3131
        %v3175 = vmul.f32 %v3163, %v3132
        %v3176 = vmul.f32 %v3159, %v3133
        %v3177 = vmul.f32 %v3163, %v3134
        %v3178 = vmul.f32 %v3159, %v3135
        %v3179 = vmul.f32 %v3163, %v3136
        %v3180 = vmul.f32 %v3159, %v3137
        %v3181 = vmul.f32 %v3163, %v3138
        %v3182 = vmul.f32 %v3159, %v3139
        %v3183 = vmul.f32 %v3163, %v3140
        %v3184 = vmul.f32 %v3159, %v3141
        %v3185 = vmul.f32 %v3163, %v3142
        %v3186 = vmul.f32 %v3159, %v3143
        %v3187 = vmul.f32 %v3163, %v3144
        %v3188 = vmul.f32 %v3159, %v3145
        %v3189 = vmul.f32 %v3163, %v3146
        %v3190 = vmul.f32 %v3159, %v3147
        %v3191 = vmul.f32 %v3163, %v3148
        %v3192 = vmul.f32 %v3159, %v3149
        %v3193 = vmul.f32 %v3163, %v3150
        %v3194 = vmul.f32 %v3159, %v3151
        %v3195 = vmul.f32 %v3163, %v3152
        %v3196 = vmul.f32 %v3159, %v3153
        %v3197 = vmul.f32 %v3163, %v3154
        %v3199 = vlaneseq
        %v3200 = vshrl.u32 %v3199, 7
        %v3201 = vsub.s32 0, %v3200
        %v3202 = vrot.slane %v790, %v3201
        %v3203 = vlaneseq
        %v3204 = vshrl.u32 %v3203, 7
        %v3205 = vsub.s32 1, %v3204
        %v3206 = vrot.slane %v790, %v3205
        %v3209 = vadd.f32 %v3166, %v3202
        %v3210 = vadd.f32 %v3167, %v3206
        %v3211 = vadd.f32 %v3168, %v3202
        %v3212 = vadd.f32 %v3169, %v3206
        %v3213 = vadd.f32 %v3170, %v3202
        %v3214 = vadd.f32 %v3171, %v3206
        %v3215 = vadd.f32 %v3172, %v3202
        %v3216 = vadd.f32 %v3173, %v3206
        %v3217 = vadd.f32 %v3174, %v3202
        %v3218 = vadd.f32 %v3175, %v3206
        %v3219 = vadd.f32 %v3176, %v3202
        %v3220 = vadd.f32 %v3177, %v3206
        %v3221 = vadd.f32 %v3178, %v3202
        %v3222 = vadd.f32 %v3179, %v3206
        %v3223 = vadd.f32 %v3180, %v3202
        %v3224 = vadd.f32 %v3181, %v3206
        %v3225 = vadd.f32 %v3182, %v3202
        %v3226 = vadd.f32 %v3183, %v3206
        %v3227 = vadd.f32 %v3184, %v3202
        %v3228 = vadd.f32 %v3185, %v3206
        %v3229 = vadd.f32 %v3186, %v3202
        %v3230 = vadd.f32 %v3187, %v3206
        %v3231 = vadd.f32 %v3188, %v3202
        %v3232 = vadd.f32 %v3189, %v3206
        %v3233 = vadd.f32 %v3190, %v3202
        %v3234 = vadd.f32 %v3191, %v3206
        %v3235 = vadd.f32 %v3192, %v3202
        %v3236 = vadd.f32 %v3193, %v3206
        %v3237 = vadd.f32 %v3194, %v3202
        %v3238 = vadd.f32 %v3195, %v3206
        %v3239 = vadd.f32 %v3196, %v3202
        %v3240 = vadd.f32 %v3197, %v3206
        %v3241 = vpack.c.bf16 %v3211, %v3209
        %v3242 = vpack.c.bf16 %v3212, %v3210
        %v3243 = vpack.c.bf16 %v3215, %v3213
        %v3244 = vpack.c.bf16 %v3216, %v3214
        %v3245 = vpack.c.bf16 %v3219, %v3217
        %v3246 = vpack.c.bf16 %v3220, %v3218
        %v3247 = vpack.c.bf16 %v3223, %v3221
        %v3248 = vpack.c.bf16 %v3224, %v3222
        %v3249 = vpack.c.bf16 %v3227, %v3225
        %v3250 = vpack.c.bf16 %v3228, %v3226
        %v3251 = vpack.c.bf16 %v3231, %v3229
        %v3252 = vpack.c.bf16 %v3232, %v3230
        %v3253 = vpack.c.bf16 %v3235, %v3233
        %v3254 = vpack.c.bf16 %v3236, %v3234
        %v3255 = vpack.c.bf16 %v3239, %v3237
        %v3256 = vpack.c.bf16 %v3240, %v3238
        %v3257 = vld [vmem:[#allocation9] sm:$0xff]
        %v3258 = vld [vmem:[#allocation9 + $0x8] sm:$0xff]
        %v3259 = vld [vmem:[#allocation9 + $0x10] sm:$0xff]
        %v3260 = vld [vmem:[#allocation9 + $0x18] sm:$0xff]
        %v3261 = vld [vmem:[#allocation9 + $0x20] sm:$0xff]
        %v3262 = vld [vmem:[#allocation9 + $0x28] sm:$0xff]
        %v3263 = vld [vmem:[#allocation9 + $0x30] sm:$0xff]
        %v3264 = vld [vmem:[#allocation9 + $0x38] sm:$0xff]
        %v3265 = vld [vmem:[#allocation9 + $0x40] sm:$0xff]
        %v3266 = vld [vmem:[#allocation9 + $0x48] sm:$0xff]
        %v3267 = vld [vmem:[#allocation9 + $0x50] sm:$0xff]
        %v3268 = vld [vmem:[#allocation9 + $0x58] sm:$0xff]
        %v3269 = vld [vmem:[#allocation9 + $0x60] sm:$0xff]
        %v3270 = vld [vmem:[#allocation9 + $0x68] sm:$0xff]
        %v3271 = vld [vmem:[#allocation9 + $0x70] sm:$0xff]
        %v3272 = vld [vmem:[#allocation9 + $0x78] sm:$0xff]
        %v3273 = vld [vmem:[#allocation9 + $0x80] sm:$0xff]
        %v3274 = vld [vmem:[#allocation9 + $0x88] sm:$0xff]
        %v3275 = vld [vmem:[#allocation9 + $0x90] sm:$0xff]
        %v3276 = vld [vmem:[#allocation9 + $0x98] sm:$0xff]
        %v3277 = vld [vmem:[#allocation9 + $0xa0] sm:$0xff]
        %v3278 = vld [vmem:[#allocation9 + $0xa8] sm:$0xff]
        %v3279 = vld [vmem:[#allocation9 + $0xb0] sm:$0xff]
        %v3280 = vld [vmem:[#allocation9 + $0xb8] sm:$0xff]
        %v3281 = vld [vmem:[#allocation9 + $0xc0] sm:$0xff]
        %v3282 = vld [vmem:[#allocation9 + $0xc8] sm:$0xff]
        %v3283 = vld [vmem:[#allocation9 + $0xd0] sm:$0xff]
        %v3284 = vld [vmem:[#allocation9 + $0xd8] sm:$0xff]
        %v3285 = vld [vmem:[#allocation9 + $0xe0] sm:$0xff]
        %v3286 = vld [vmem:[#allocation9 + $0xe8] sm:$0xff]
        %v3287 = vld [vmem:[#allocation9 + $0xf0] sm:$0xff]
        %v3288 = vld [vmem:[#allocation9 + $0xf8] sm:$0xff]
        %v3289 = vld [vmem:[%s5] sm:$0x3]
        %v3291 = vlaneseq
        %v3292 = vshrl.u32 %v3291, 7
        %v3293 = vsub.s32 0, %v3292
        %v3294 = vrot.slane %v3289, %v3293
        %v3295 = vlaneseq
        %v3296 = vshrl.u32 %v3295, 7
        %v3297 = vsub.s32 1, %v3296
        %v3298 = vrot.slane %v3289, %v3297
        %v3333 = vunpack.c.l.b16 %v3257
        %v3334 = vunpack.c.h.b16 %v3257
        %v3335 = vunpack.c.l.b16 %v3258
        %v3336 = vunpack.c.h.b16 %v3258
        %v3337 = vunpack.c.l.b16 %v3259
        %v3338 = vunpack.c.h.b16 %v3259
        %v3339 = vunpack.c.l.b16 %v3260
        %v3340 = vunpack.c.h.b16 %v3260
        %v3341 = vunpack.c.l.b16 %v3261
        %v3342 = vunpack.c.h.b16 %v3261
        %v3343 = vunpack.c.l.b16 %v3262
        %v3344 = vunpack.c.h.b16 %v3262
        %v3345 = vunpack.c.l.b16 %v3263
        %v3346 = vunpack.c.h.b16 %v3263
        %v3347 = vunpack.c.l.b16 %v3264
        %v3348 = vunpack.c.h.b16 %v3264
        %v3349 = vunpack.c.l.b16 %v3265
        %v3350 = vunpack.c.h.b16 %v3265
        %v3351 = vunpack.c.l.b16 %v3266
        %v3352 = vunpack.c.h.b16 %v3266
        %v3353 = vunpack.c.l.b16 %v3267
        %v3354 = vunpack.c.h.b16 %v3267
        %v3355 = vunpack.c.l.b16 %v3268
        %v3356 = vunpack.c.h.b16 %v3268
        %v3357 = vunpack.c.l.b16 %v3269
        %v3358 = vunpack.c.h.b16 %v3269
        %v3359 = vunpack.c.l.b16 %v3270
        %v3360 = vunpack.c.h.b16 %v3270
        %v3361 = vunpack.c.l.b16 %v3271
        %v3362 = vunpack.c.h.b16 %v3271
        %v3363 = vunpack.c.l.b16 %v3272
        %v3364 = vunpack.c.h.b16 %v3272
        %v3365 = vunpack.c.l.b16 %v3273
        %v3366 = vunpack.c.h.b16 %v3273
        %v3367 = vunpack.c.l.b16 %v3274
        %v3368 = vunpack.c.h.b16 %v3274
        %v3369 = vunpack.c.l.b16 %v3275
        %v3370 = vunpack.c.h.b16 %v3275
        %v3371 = vunpack.c.l.b16 %v3276
        %v3372 = vunpack.c.h.b16 %v3276
        %v3373 = vunpack.c.l.b16 %v3277
        %v3374 = vunpack.c.h.b16 %v3277
        %v3375 = vunpack.c.l.b16 %v3278
        %v3376 = vunpack.c.h.b16 %v3278
        %v3377 = vunpack.c.l.b16 %v3279
        %v3378 = vunpack.c.h.b16 %v3279
        %v3379 = vunpack.c.l.b16 %v3280
        %v3380 = vunpack.c.h.b16 %v3280
        %v3381 = vunpack.c.l.b16 %v3281
        %v3382 = vunpack.c.h.b16 %v3281
        %v3383 = vunpack.c.l.b16 %v3282
        %v3384 = vunpack.c.h.b16 %v3282
        %v3385 = vunpack.c.l.b16 %v3283
        %v3386 = vunpack.c.h.b16 %v3283
        %v3387 = vunpack.c.l.b16 %v3284
        %v3388 = vunpack.c.h.b16 %v3284
        %v3389 = vunpack.c.l.b16 %v3285
        %v3390 = vunpack.c.h.b16 %v3285
        %v3391 = vunpack.c.l.b16 %v3286
        %v3392 = vunpack.c.h.b16 %v3286
        %v3393 = vunpack.c.l.b16 %v3287
        %v3394 = vunpack.c.h.b16 %v3287
        %v3395 = vunpack.c.l.b16 %v3288
        %v3396 = vunpack.c.h.b16 %v3288
        %v3397 = vpack.c.b16 %v3335, %v3333
        %v3398 = vpack.c.b16 %v3336, %v3334
        %v3399 = vpack.c.b16 %v3339, %v3337
        %v3400 = vpack.c.b16 %v3340, %v3338
        %v3401 = vpack.c.b16 %v3343, %v3341
        %v3402 = vpack.c.b16 %v3344, %v3342
        %v3403 = vpack.c.b16 %v3347, %v3345
        %v3404 = vpack.c.b16 %v3348, %v3346
        %v3405 = vpack.c.b16 %v3351, %v3349
        %v3406 = vpack.c.b16 %v3352, %v3350
        %v3407 = vpack.c.b16 %v3355, %v3353
        %v3408 = vpack.c.b16 %v3356, %v3354
        %v3409 = vpack.c.b16 %v3359, %v3357
        %v3410 = vpack.c.b16 %v3360, %v3358
        %v3411 = vpack.c.b16 %v3363, %v3361
        %v3412 = vpack.c.b16 %v3364, %v3362
        %v3413 = vpack.c.b16 %v3367, %v3365
        %v3414 = vpack.c.b16 %v3368, %v3366
        %v3415 = vpack.c.b16 %v3371, %v3369
        %v3416 = vpack.c.b16 %v3372, %v3370
        %v3417 = vpack.c.b16 %v3375, %v3373
        %v3418 = vpack.c.b16 %v3376, %v3374
        %v3419 = vpack.c.b16 %v3379, %v3377
        %v3420 = vpack.c.b16 %v3380, %v3378
        %v3421 = vpack.c.b16 %v3383, %v3381
        %v3422 = vpack.c.b16 %v3384, %v3382
        %v3423 = vpack.c.b16 %v3387, %v3385
        %v3424 = vpack.c.b16 %v3388, %v3386
        %v3425 = vpack.c.b16 %v3391, %v3389
        %v3426 = vpack.c.b16 %v3392, %v3390
        %v3427 = vpack.c.b16 %v3395, %v3393
        %v3428 = vpack.c.b16 %v3396, %v3394
        %3461 = vmatprep.subr.bf16.mxu0 %v3398
        %3462 = vmatpush1.bf16.msra.mxu0 %v3397
        %3463 = vmatprep.subr.bf16.mxu0 %v3400
        %3464 = vmatpush1.bf16.msra.mxu0 %v3399
        %3465 = vmatprep.subr.bf16.mxu0 %v3402
        %3466 = vmatpush1.bf16.msra.mxu0 %v3401
        %3467 = vmatprep.subr.bf16.mxu0 %v3404
        %3468 = vmatpush1.bf16.msra.mxu0 %v3403
        %3469 = vmatprep.subr.bf16.mxu0 %v3406
        %3470 = vmatpush1.bf16.msra.mxu0 %v3405
        %3471 = vmatprep.subr.bf16.mxu0 %v3408
        %3472 = vmatpush1.bf16.msra.mxu0 %v3407
        %3473 = vmatprep.subr.bf16.mxu0 %v3410
        %3474 = vmatpush1.bf16.msra.mxu0 %v3409
        %3475 = vmatprep.subr.bf16.mxu0 %v3412
        %3476 = vmatpush1.bf16.msra.mxu0 %v3411
        %3477 = vmatprep.subr.bf16.mxu0 %v3414
        %3478 = vmatpush1.bf16.msra.mxu0 %v3413
        %3479 = vmatprep.subr.bf16.mxu0 %v3416
        %3480 = vmatpush1.bf16.msra.mxu0 %v3415
        %3481 = vmatprep.subr.bf16.mxu0 %v3418
        %3482 = vmatpush1.bf16.msra.mxu0 %v3417
        %3483 = vmatprep.subr.bf16.mxu0 %v3420
        %3484 = vmatpush1.bf16.msra.mxu0 %v3419
        %3485 = vmatprep.subr.bf16.mxu0 %v3422
        %3486 = vmatpush1.bf16.msra.mxu0 %v3421
        %3487 = vmatprep.subr.bf16.mxu0 %v3424
        %3488 = vmatpush1.bf16.msra.mxu0 %v3423
        %3489 = vmatprep.subr.bf16.mxu0 %v3426
        %3490 = vmatpush1.bf16.msra.mxu0 %v3425
        %3491 = vmatprep.subr.bf16.mxu0 %v3428
        %3492 = vmatpush1.bf16.msra.mxu0 %v3427
        %3493 = vmatprep.mubr.bf16.mxu0 %v3242
        %3494 = vmatmul.mubr.bf16.gmra.mrb[0].mxu0 %v3241
        %v3495 = vpop.f32.mrb[0].mxu0
        %v3496 = vadd.f32 %v3294, %v3495
        %v3497 = vpop.f32.mrb[0].mxu0
        %v3498 = vadd.f32 %v3298, %v3497
        %v3499 = vpop.f32.mrb[0].mxu0
        %v3500 = vadd.f32 %v3294, %v3499
        %v3501 = vpop.f32.mrb[0].mxu0
        %v3502 = vadd.f32 %v3298, %v3501
        %3503 = vmatprep.mubr.bf16.mxu0 %v3244
        %3504 = vmatmul.mubr.bf16.gmra.mrb[0].mxu0 %v3243
        %v3505 = vpop.f32.mrb[0].mxu0
        %v3506 = vadd.f32 %v3294, %v3505
        %v3507 = vpop.f32.mrb[0].mxu0
        %v3508 = vadd.f32 %v3298, %v3507
        %v3509 = vpop.f32.mrb[0].mxu0
        %v3510 = vadd.f32 %v3294, %v3509
        %v3511 = vpop.f32.mrb[0].mxu0
        %v3512 = vadd.f32 %v3298, %v3511
        %3513 = vmatprep.mubr.bf16.mxu0 %v3246
        %3514 = vmatmul.mubr.bf16.gmra.mrb[0].mxu0 %v3245
        %v3515 = vpop.f32.mrb[0].mxu0
        %v3516 = vadd.f32 %v3294, %v3515
        %v3517 = vpop.f32.mrb[0].mxu0
        %v3518 = vadd.f32 %v3298, %v3517
        %v3519 = vpop.f32.mrb[0].mxu0
        %v3520 = vadd.f32 %v3294, %v3519
        %v3521 = vpop.f32.mrb[0].mxu0
        %v3522 = vadd.f32 %v3298, %v3521
        %3523 = vmatprep.mubr.bf16.mxu0 %v3248
        %3524 = vmatmul.mubr.bf16.gmra.mrb[0].mxu0 %v3247
        %v3525 = vpop.f32.mrb[0].mxu0
        %v3526 = vadd.f32 %v3294, %v3525
        %v3527 = vpop.f32.mrb[0].mxu0
        %v3528 = vadd.f32 %v3298, %v3527
        %v3529 = vpop.f32.mrb[0].mxu0
        %v3530 = vadd.f32 %v3294, %v3529
        %v3531 = vpop.f32.mrb[0].mxu0
        %v3532 = vadd.f32 %v3298, %v3531
        %3533 = vmatprep.mubr.bf16.mxu0 %v3250
        %3534 = vmatmul.mubr.bf16.gmra.mrb[0].mxu0 %v3249
        %v3535 = vpop.f32.mrb[0].mxu0
        %v3536 = vadd.f32 %v3294, %v3535
        %v3537 = vpop.f32.mrb[0].mxu0
        %v3538 = vadd.f32 %v3298, %v3537
        %v3539 = vpop.f32.mrb[0].mxu0
        %v3540 = vadd.f32 %v3294, %v3539
        %v3541 = vpop.f32.mrb[0].mxu0
        %v3542 = vadd.f32 %v3298, %v3541
        %3543 = vmatprep.mubr.bf16.mxu0 %v3252
        %3544 = vmatmul.mubr.bf16.gmra.mrb[0].mxu0 %v3251
        %v3545 = vpop.f32.mrb[0].mxu0
        %v3546 = vadd.f32 %v3294, %v3545
        %v3547 = vpop.f32.mrb[0].mxu0
        %v3548 = vadd.f32 %v3298, %v3547
        %v3549 = vpop.f32.mrb[0].mxu0
        %v3550 = vadd.f32 %v3294, %v3549
        %v3551 = vpop.f32.mrb[0].mxu0
        %v3552 = vadd.f32 %v3298, %v3551
        %3553 = vmatprep.mubr.bf16.mxu0 %v3254
        %3554 = vmatmul.mubr.bf16.gmra.mrb[0].mxu0 %v3253
        %v3555 = vpop.f32.mrb[0].mxu0
        %v3556 = vadd.f32 %v3294, %v3555
        %v3557 = vpop.f32.mrb[0].mxu0
        %v3558 = vadd.f32 %v3298, %v3557
        %v3559 = vpop.f32.mrb[0].mxu0
        %v3560 = vadd.f32 %v3294, %v3559
        %v3561 = vpop.f32.mrb[0].mxu0
        %v3562 = vadd.f32 %v3298, %v3561
        %3563 = vmatprep.mubr.bf16.mxu0 %v3256
        %3564 = vmatmul.mubr.bf16.gmra.mrb[0].mxu0 %v3255
        %v3565 = vpop.f32.mrb[0].mxu0
        %v3566 = vadd.f32 %v3294, %v3565
        %v3567 = vpop.f32.mrb[0].mxu0
        %v3568 = vadd.f32 %v3298, %v3567
        %v3569 = vpop.f32.mrb[0].mxu0
        %v3570 = vadd.f32 %v3294, %v3569
        %v3571 = vpop.f32.mrb[0].mxu0
        %v3572 = vadd.f32 %v3298, %v3571
        %3573 = vdwg.mxu0
        %v3574 = vmul.f32 %v3496, 0.125
        %v3575 = vmul.f32 %v3498, 0.125
        %v3576 = vmul.f32 %v3500, 0.125
        %v3577 = vmul.f32 %v3502, 0.125
        %v3578 = vmul.f32 %v3506, 0.125
        %v3579 = vmul.f32 %v3508, 0.125
        %v3580 = vmul.f32 %v3510, 0.125
        %v3581 = vmul.f32 %v3512, 0.125
        %v3582 = vmul.f32 %v3516, 0.125
        %v3583 = vmul.f32 %v3518, 0.125
        %v3584 = vmul.f32 %v3520, 0.125
        %v3585 = vmul.f32 %v3522, 0.125
        %v3586 = vmul.f32 %v3526, 0.125
        %v3587 = vmul.f32 %v3528, 0.125
        %v3588 = vmul.f32 %v3530, 0.125
        %v3589 = vmul.f32 %v3532, 0.125
        %v3590 = vmul.f32 %v3536, 0.125
        %v3591 = vmul.f32 %v3538, 0.125
        %v3592 = vmul.f32 %v3540, 0.125
        %v3593 = vmul.f32 %v3542, 0.125
        %v3594 = vmul.f32 %v3546, 0.125
        %v3595 = vmul.f32 %v3548, 0.125
        %v3596 = vmul.f32 %v3550, 0.125
        %v3597 = vmul.f32 %v3552, 0.125
        %v3598 = vmul.f32 %v3556, 0.125
        %v3599 = vmul.f32 %v3558, 0.125
        %v3600 = vmul.f32 %v3560, 0.125
        %v3601 = vmul.f32 %v3562, 0.125
        %v3602 = vmul.f32 %v3566, 0.125
        %v3603 = vmul.f32 %v3568, 0.125
        %v3604 = vmul.f32 %v3570, 0.125
        %v3605 = vmul.f32 %v3572, 0.125
        %v3606 = vpack.c.bf16 %v3576, %v3574
        %v3607 = vpack.c.bf16 %v3577, %v3575
        %v3608 = vpack.c.bf16 %v3580, %v3578
        %v3609 = vpack.c.bf16 %v3581, %v3579
        %v3610 = vpack.c.bf16 %v3584, %v3582
        %v3611 = vpack.c.bf16 %v3585, %v3583
        %v3612 = vpack.c.bf16 %v3588, %v3586
        %v3613 = vpack.c.bf16 %v3589, %v3587
        %v3614 = vpack.c.bf16 %v3592, %v3590
        %v3615 = vpack.c.bf16 %v3593, %v3591
        %v3616 = vpack.c.bf16 %v3596, %v3594
        %v3617 = vpack.c.bf16 %v3597, %v3595
        %v3618 = vpack.c.bf16 %v3600, %v3598
        %v3619 = vpack.c.bf16 %v3601, %v3599
        %v3620 = vpack.c.bf16 %v3604, %v3602
        %v3621 = vpack.c.bf16 %v3605, %v3603
        %v3622 = vld [vmem:[#allocation2] sm:$0xff]
        %v3623 = vld [vmem:[#allocation2 + $0x8] sm:$0xff]
        %v3624 = vld [vmem:[#allocation2 + $0x10] sm:$0xff]
        %v3625 = vld [vmem:[#allocation2 + $0x18] sm:$0xff]
        %v3626 = vld [vmem:[#allocation2 + $0x20] sm:$0xff]
        %v3627 = vld [vmem:[#allocation2 + $0x28] sm:$0xff]
        %v3628 = vld [vmem:[#allocation2 + $0x30] sm:$0xff]
        %v3629 = vld [vmem:[#allocation2 + $0x38] sm:$0xff]
        %v3630 = vld [vmem:[#allocation2 + $0x40] sm:$0xff]
        %v3631 = vld [vmem:[#allocation2 + $0x48] sm:$0xff]
        %v3632 = vld [vmem:[#allocation2 + $0x50] sm:$0xff]
        %v3633 = vld [vmem:[#allocation2 + $0x58] sm:$0xff]
        %v3634 = vld [vmem:[#allocation2 + $0x60] sm:$0xff]
        %v3635 = vld [vmem:[#allocation2 + $0x68] sm:$0xff]
        %v3636 = vld [vmem:[#allocation2 + $0x70] sm:$0xff]
        %v3637 = vld [vmem:[#allocation2 + $0x78] sm:$0xff]
        %v3638 = vld [vmem:[#allocation2 + $0x80] sm:$0xff]
        %v3639 = vld [vmem:[#allocation2 + $0x88] sm:$0xff]
        %v3640 = vld [vmem:[#allocation2 + $0x90] sm:$0xff]
        %v3641 = vld [vmem:[#allocation2 + $0x98] sm:$0xff]
        %v3642 = vld [vmem:[#allocation2 + $0xa0] sm:$0xff]
        %v3643 = vld [vmem:[#allocation2 + $0xa8] sm:$0xff]
        %v3644 = vld [vmem:[#allocation2 + $0xb0] sm:$0xff]
        %v3645 = vld [vmem:[#allocation2 + $0xb8] sm:$0xff]
        %v3646 = vld [vmem:[#allocation2 + $0xc0] sm:$0xff]
        %v3647 = vld [vmem:[#allocation2 + $0xc8] sm:$0xff]
        %v3648 = vld [vmem:[#allocation2 + $0xd0] sm:$0xff]
        %v3649 = vld [vmem:[#allocation2 + $0xd8] sm:$0xff]
        %v3650 = vld [vmem:[#allocation2 + $0xe0] sm:$0xff]
        %v3651 = vld [vmem:[#allocation2 + $0xe8] sm:$0xff]
        %v3652 = vld [vmem:[#allocation2 + $0xf0] sm:$0xff]
        %v3653 = vld [vmem:[#allocation2 + $0xf8] sm:$0xff]
        %v3654 = vld [vmem:[#allocation3] sm:$0xff]
        %v3655 = vld [vmem:[#allocation3 + $0x8] sm:$0xff]
        %v3656 = vld [vmem:[#allocation3 + $0x10] sm:$0xff]
        %v3657 = vld [vmem:[#allocation3 + $0x18] sm:$0xff]
        %v3658 = vld [vmem:[#allocation3 + $0x20] sm:$0xff]
        %v3659 = vld [vmem:[#allocation3 + $0x28] sm:$0xff]
        %v3660 = vld [vmem:[#allocation3 + $0x30] sm:$0xff]
        %v3661 = vld [vmem:[#allocation3 + $0x38] sm:$0xff]
        %v3662 = vld [vmem:[#allocation3 + $0x40] sm:$0xff]
        %v3663 = vld [vmem:[#allocation3 + $0x48] sm:$0xff]
        %v3664 = vld [vmem:[#allocation3 + $0x50] sm:$0xff]
        %v3665 = vld [vmem:[#allocation3 + $0x58] sm:$0xff]
        %v3666 = vld [vmem:[#allocation3 + $0x60] sm:$0xff]
        %v3667 = vld [vmem:[#allocation3 + $0x68] sm:$0xff]
        %v3668 = vld [vmem:[#allocation3 + $0x70] sm:$0xff]
        %v3669 = vld [vmem:[#allocation3 + $0x78] sm:$0xff]
        %v3670 = vld [vmem:[#allocation3 + $0x80] sm:$0xff]
        %v3671 = vld [vmem:[#allocation3 + $0x88] sm:$0xff]
        %v3672 = vld [vmem:[#allocation3 + $0x90] sm:$0xff]
        %v3673 = vld [vmem:[#allocation3 + $0x98] sm:$0xff]
        %v3674 = vld [vmem:[#allocation3 + $0xa0] sm:$0xff]
        %v3675 = vld [vmem:[#allocation3 + $0xa8] sm:$0xff]
        %v3676 = vld [vmem:[#allocation3 + $0xb0] sm:$0xff]
        %v3677 = vld [vmem:[#allocation3 + $0xb8] sm:$0xff]
        %v3678 = vld [vmem:[#allocation3 + $0xc0] sm:$0xff]
        %v3679 = vld [vmem:[#allocation3 + $0xc8] sm:$0xff]
        %v3680 = vld [vmem:[#allocation3 + $0xd0] sm:$0xff]
        %v3681 = vld [vmem:[#allocation3 + $0xd8] sm:$0xff]
        %v3682 = vld [vmem:[#allocation3 + $0xe0] sm:$0xff]
        %v3683 = vld [vmem:[#allocation3 + $0xe8] sm:$0xff]
        %v3684 = vld [vmem:[#allocation3 + $0xf0] sm:$0xff]
        %v3685 = vld [vmem:[#allocation3 + $0xf8] sm:$0xff]
        %v3686 = vld [vmem:[%s701] sm:$0x3]
        %v3688 = vlaneseq
        %v3689 = vshrl.u32 %v3688, 7
        %v3690 = vsub.s32 0, %v3689
        %v3691 = vrot.slane %v3686, %v3690
        %v3692 = vlaneseq
        %v3693 = vshrl.u32 %v3692, 7
        %v3694 = vsub.s32 1, %v3693
        %v3695 = vrot.slane %v3686, %v3694
        %vm3698 = vcmask 523264
        %v3700 = vsel %vm3698, %v3606, 0
        %v3703 = vsel %vm3698, %v3608, 0
        %v3706 = vsel %vm3698, %v3610, 0
        %v3709 = vsel %vm3698, %v3612, 0
        %v3712 = vsel %vm3698, %v3614, 0
        %v3715 = vsel %vm3698, %v3616, 0
        %v3718 = vsel %vm3698, %v3618, 0
        %v3721 = vsel %vm3698, %v3620, 0
        %v3724 = vsel %vm3698, %v3622, 0
        %v3727 = vsel %vm3698, %v3624, 0
        %v3730 = vsel %vm3698, %v3626, 0
        %v3733 = vsel %vm3698, %v3628, 0
        %v3736 = vsel %vm3698, %v3630, 0
        %v3739 = vsel %vm3698, %v3632, 0
        %v3742 = vsel %vm3698, %v3634, 0
        %v3745 = vsel %vm3698, %v3636, 0
        %v3748 = vsel %vm3698, %v3638, 0
        %v3751 = vsel %vm3698, %v3640, 0
        %v3754 = vsel %vm3698, %v3642, 0
        %v3757 = vsel %vm3698, %v3644, 0
        %v3760 = vsel %vm3698, %v3646, 0
        %v3763 = vsel %vm3698, %v3648, 0
        %v3766 = vsel %vm3698, %v3650, 0
        %v3769 = vsel %vm3698, %v3652, 0
        %3771 = vmatprep.subr.bf16.mxu0 0
        %3772 = vmatpush1.bf16.xpose.msra.mxu0 %v3724
        %3773 = vmatprep.subr.bf16.mxu0 0
        %3774 = vmatpush1.bf16.xpose.msra.mxu0 %v3727
        %3775 = vmatprep.subr.bf16.mxu0 0
        %3776 = vmatpush1.bf16.xpose.msra.mxu0 %v3730
        %3777 = vmatprep.subr.bf16.mxu0 0
        %3778 = vmatpush1.bf16.xpose.msra.mxu0 %v3733
        %3779 = vmatprep.subr.bf16.mxu0 0
        %3780 = vmatpush1.bf16.xpose.msra.mxu0 %v3736
        %3781 = vmatprep.subr.bf16.mxu0 0
        %3782 = vmatpush1.bf16.xpose.msra.mxu0 %v3739
        %3783 = vmatprep.subr.bf16.mxu0 0
        %3784 = vmatpush1.bf16.xpose.msra.mxu0 %v3742
        %3785 = vmatprep.subr.bf16.mxu0 0
        %3786 = vmatpush1.bf16.xpose.msra.mxu0 %v3745
        %3787 = vmatprep.subr.bf16.mxu0 0
        %3788 = vmatpush1.bf16.xpose.msra.mxu0 %v3748
        %3789 = vmatprep.subr.bf16.mxu0 0
        %3790 = vmatpush1.bf16.xpose.msra.mxu0 %v3751
        %3791 = vmatprep.subr.bf16.mxu0 0
        %3792 = vmatpush1.bf16.xpose.msra.mxu0 %v3754
        %3793 = vmatprep.subr.bf16.mxu0 0
        %3794 = vmatpush1.bf16.xpose.msra.mxu0 %v3757
        %3795 = vmatprep.subr.bf16.mxu0 0
        %3796 = vmatpush1.bf16.xpose.msra.mxu0 %v3760
        %3797 = vmatprep.subr.bf16.mxu0 0
        %3798 = vmatpush1.bf16.xpose.msra.mxu0 %v3763
        %3799 = vmatprep.subr.bf16.mxu0 0
        %3800 = vmatpush1.bf16.xpose.msra.mxu0 %v3766
        %3801 = vmatprep.subr.bf16.mxu0 0
        %3802 = vmatpush1.bf16.xpose.msra.mxu0 %v3769
        %3803 = vmatprep.mubr.bf16.mxu0 0
        %3804 = vmatmul.mubr.bf16.gmra.mrb[0].mxu0 %v3700
        %v3805 = vpop.f32.mrb[0].mxu0
        %v3806 = vadd.f32 %v3691, %v3805
        %v3807 = vpop.f32.mrb[0].mxu0
        %v3808 = vadd.f32 %v3695, %v3807
        %v3809 = vpop.f32.mrb[0].mxu0
        %v3810 = vadd.f32 %v3691, %v3809
        %v3811 = vpop.f32.mrb[0].mxu0
        %v3812 = vadd.f32 %v3695, %v3811
        %3813 = vmatprep.mubr.bf16.mxu0 0
        %3814 = vmatmul.mubr.bf16.gmra.mrb[0].mxu0 %v3703
        %v3815 = vpop.f32.mrb[0].mxu0
        %v3816 = vadd.f32 %v3691, %v3815
        %v3817 = vpop.f32.mrb[0].mxu0
        %v3818 = vadd.f32 %v3695, %v3817
        %v3819 = vpop.f32.mrb[0].mxu0
        %v3820 = vadd.f32 %v3691, %v3819
        %v3821 = vpop.f32.mrb[0].mxu0
        %v3822 = vadd.f32 %v3695, %v3821
        %3823 = vmatprep.mubr.bf16.mxu0 0
        %3824 = vmatmul.mubr.bf16.gmra.mrb[0].mxu0 %v3706
        %v3825 = vpop.f32.mrb[0].mxu0
        %v3826 = vadd.f32 %v3691, %v3825
        %v3827 = vpop.f32.mrb[0].mxu0
        %v3828 = vadd.f32 %v3695, %v3827
        %v3829 = vpop.f32.mrb[0].mxu0
        %v3830 = vadd.f32 %v3691, %v3829
        %v3831 = vpop.f32.mrb[0].mxu0
        %v3832 = vadd.f32 %v3695, %v3831
        %3833 = vmatprep.mubr.bf16.mxu0 0
        %3834 = vmatmul.mubr.bf16.gmra.mrb[0].mxu0 %v3709
        %v3835 = vpop.f32.mrb[0].mxu0
        %v3836 = vadd.f32 %v3691, %v3835
        %v3837 = vpop.f32.mrb[0].mxu0
        %v3838 = vadd.f32 %v3695, %v3837
        %v3839 = vpop.f32.mrb[0].mxu0
        %v3840 = vadd.f32 %v3691, %v3839
        %v3841 = vpop.f32.mrb[0].mxu0
        %v3842 = vadd.f32 %v3695, %v3841
        %3843 = vmatprep.mubr.bf16.mxu0 0
        %3844 = vmatmul.mubr.bf16.gmra.mrb[0].mxu0 %v3712
        %v3845 = vpop.f32.mrb[0].mxu0
        %v3846 = vadd.f32 %v3691, %v3845
        %v3847 = vpop.f32.mrb[0].mxu0
        %v3848 = vadd.f32 %v3695, %v3847
        %v3849 = vpop.f32.mrb[0].mxu0
        %v3850 = vadd.f32 %v3691, %v3849
        %v3851 = vpop.f32.mrb[0].mxu0
        %v3852 = vadd.f32 %v3695, %v3851
        %3853 = vmatprep.mubr.bf16.mxu0 0
        %3854 = vmatmul.mubr.bf16.gmra.mrb[0].mxu0 %v3715
        %v3855 = vpop.f32.mrb[0].mxu0
        %v3856 = vadd.f32 %v3691, %v3855
        %v3857 = vpop.f32.mrb[0].mxu0
        %v3858 = vadd.f32 %v3695, %v3857
        %v3859 = vpop.f32.mrb[0].mxu0
        %v3860 = vadd.f32 %v3691, %v3859
        %v3861 = vpop.f32.mrb[0].mxu0
        %v3862 = vadd.f32 %v3695, %v3861
        %3863 = vmatprep.mubr.bf16.mxu0 0
        %3864 = vmatmul.mubr.bf16.gmra.mrb[0].mxu0 %v3718
        %v3865 = vpop.f32.mrb[0].mxu0
        %v3866 = vadd.f32 %v3691, %v3865
        %v3867 = vpop.f32.mrb[0].mxu0
        %v3868 = vadd.f32 %v3695, %v3867
        %v3869 = vpop.f32.mrb[0].mxu0
        %v3870 = vadd.f32 %v3691, %v3869
        %v3871 = vpop.f32.mrb[0].mxu0
        %v3872 = vadd.f32 %v3695, %v3871
        %3873 = vmatprep.mubr.bf16.mxu0 0
        %3874 = vmatmul.mubr.bf16.gmra.mrb[0].mxu0 %v3721
        %v3875 = vpop.f32.mrb[0].mxu0
        %v3876 = vadd.f32 %v3691, %v3875
        %v3877 = vpop.f32.mrb[0].mxu0
        %v3878 = vadd.f32 %v3695, %v3877
        %v3879 = vpop.f32.mrb[0].mxu0
        %v3880 = vadd.f32 %v3691, %v3879
        %v3881 = vpop.f32.mrb[0].mxu0
        %v3882 = vadd.f32 %v3695, %v3881
        %3883 = vdwg.mxu0
        %v3884 = vmax.f32 %v3806, %v3808
        %3885 = vmax.xlane.f32.xlu0 %v3884
        %v3886 = vpop.xlane.xlu0 %3885
        %v3887 = vmax.f32 %v3810, %v3812
        %3888 = vmax.xlane.f32.xlu0 %v3887
        %v3889 = vpop.xlane.xlu0 %3888
        %v3890 = vmax.f32 %v3816, %v3818
        %3891 = vmax.xlane.f32.xlu0 %v3890
        %v3892 = vpop.xlane.xlu0 %3891
        %v3893 = vmax.f32 %v3820, %v3822
        %3894 = vmax.xlane.f32.xlu0 %v3893
        %v3895 = vpop.xlane.xlu0 %3894
        %v3896 = vmax.f32 %v3826, %v3828
        %3897 = vmax.xlane.f32.xlu0 %v3896
        %v3898 = vpop.xlane.xlu0 %3897
        %v3899 = vmax.f32 %v3830, %v3832
        %3900 = vmax.xlane.f32.xlu0 %v3899
        %v3901 = vpop.xlane.xlu0 %3900
        %v3902 = vmax.f32 %v3836, %v3838
        %3903 = vmax.xlane.f32.xlu0 %v3902
        %v3904 = vpop.xlane.xlu0 %3903
        %v3905 = vmax.f32 %v3840, %v3842
        %3906 = vmax.xlane.f32.xlu0 %v3905
        %v3907 = vpop.xlane.xlu0 %3906
        %v3908 = vmax.f32 %v3846, %v3848
        %3909 = vmax.xlane.f32.xlu0 %v3908
        %v3910 = vpop.xlane.xlu0 %3909
        %v3911 = vmax.f32 %v3850, %v3852
        %3912 = vmax.xlane.f32.xlu0 %v3911
        %v3913 = vpop.xlane.xlu0 %3912
        %v3914 = vmax.f32 %v3856, %v3858
        %3915 = vmax.xlane.f32.xlu0 %v3914
        %v3916 = vpop.xlane.xlu0 %3915
        %v3917 = vmax.f32 %v3860, %v3862
        %3918 = vmax.xlane.f32.xlu0 %v3917
        %v3919 = vpop.xlane.xlu0 %3918
        %v3920 = vmax.f32 %v3866, %v3868
        %3921 = vmax.xlane.f32.xlu0 %v3920
        %v3922 = vpop.xlane.xlu0 %3921
        %v3923 = vmax.f32 %v3870, %v3872
        %3924 = vmax.xlane.f32.xlu0 %v3923
        %v3925 = vpop.xlane.xlu0 %3924
        %v3926 = vmax.f32 %v3876, %v3878
        %3927 = vmax.xlane.f32.xlu0 %v3926
        %v3928 = vpop.xlane.xlu0 %3927
        %v3929 = vmax.f32 %v3880, %v3882
        %3930 = vmax.xlane.f32.xlu0 %v3929
        %v3931 = vpop.xlane.xlu0 %3930
        %v3932 = vsub.f32 %v3806, %v3886
        %v3933 = vsub.f32 %v3808, %v3886
        %v3934 = vsub.f32 %v3810, %v3889
        %v3935 = vsub.f32 %v3812, %v3889
        %v3936 = vsub.f32 %v3816, %v3892
        %v3937 = vsub.f32 %v3818, %v3892
        %v3938 = vsub.f32 %v3820, %v3895
        %v3939 = vsub.f32 %v3822, %v3895
        %v3940 = vsub.f32 %v3826, %v3898
        %v3941 = vsub.f32 %v3828, %v3898
        %v3942 = vsub.f32 %v3830, %v3901
        %v3943 = vsub.f32 %v3832, %v3901
        %v3944 = vsub.f32 %v3836, %v3904
        %v3945 = vsub.f32 %v3838, %v3904
        %v3946 = vsub.f32 %v3840, %v3907
        %v3947 = vsub.f32 %v3842, %v3907
        %v3948 = vsub.f32 %v3846, %v3910
        %v3949 = vsub.f32 %v3848, %v3910
        %v3950 = vsub.f32 %v3850, %v3913
        %v3951 = vsub.f32 %v3852, %v3913
        %v3952 = vsub.f32 %v3856, %v3916
        %v3953 = vsub.f32 %v3858, %v3916
        %v3954 = vsub.f32 %v3860, %v3919
        %v3955 = vsub.f32 %v3862, %v3919
        %v3956 = vsub.f32 %v3866, %v3922
        %v3957 = vsub.f32 %v3868, %v3922
        %v3958 = vsub.f32 %v3870, %v3925
        %v3959 = vsub.f32 %v3872, %v3925
        %v3960 = vsub.f32 %v3876, %v3928
        %v3961 = vsub.f32 %v3878, %v3928
        %v3962 = vsub.f32 %v3880, %v3931
        %v3963 = vsub.f32 %v3882, %v3931
        %v3964 = vmul.f32 %v3932, 1.442695
        %v3965 = vpow.pop %v3964
        %v3966 = vmul.f32 %v3933, 1.442695
        %v3967 = vpow.pop %v3966
        %v3968 = vmul.f32 %v3934, 1.442695
        %v3969 = vpow.pop %v3968
        %v3970 = vmul.f32 %v3935, 1.442695
        %v3971 = vpow.pop %v3970
        %v3972 = vmul.f32 %v3936, 1.442695
        %v3973 = vpow.pop %v3972
        %v3974 = vmul.f32 %v3937, 1.442695
        %v3975 = vpow.pop %v3974
        %v3976 = vmul.f32 %v3938, 1.442695
        %v3977 = vpow.pop %v3976
        %v3978 = vmul.f32 %v3939, 1.442695
        %v3979 = vpow.pop %v3978
        %v3980 = vmul.f32 %v3940, 1.442695
        %v3981 = vpow.pop %v3980
        %v3982 = vmul.f32 %v3941, 1.442695
        %v3983 = vpow.pop %v3982
        %v3984 = vmul.f32 %v3942, 1.442695
        %v3985 = vpow.pop %v3984
        %v3986 = vmul.f32 %v3943, 1.442695
        %v3987 = vpow.pop %v3986
        %v3988 = vmul.f32 %v3944, 1.442695
        %v3989 = vpow.pop %v3988
        %v3990 = vmul.f32 %v3945, 1.442695
        %v3991 = vpow.pop %v3990
        %v3992 = vmul.f32 %v3946, 1.442695
        %v3993 = vpow.pop %v3992
        %v3994 = vmul.f32 %v3947, 1.442695
        %v3995 = vpow.pop %v3994
        %v3996 = vmul.f32 %v3948, 1.442695
        %v3997 = vpow.pop %v3996
        %v3998 = vmul.f32 %v3949, 1.442695
        %v3999 = vpow.pop %v3998
        %v4000 = vmul.f32 %v3950, 1.442695
        %v4001 = vpow.pop %v4000
        %v4002 = vmul.f32 %v3951, 1.442695
        %v4003 = vpow.pop %v4002
        %v4004 = vmul.f32 %v3952, 1.442695
        %v4005 = vpow.pop %v4004
        %v4006 = vmul.f32 %v3953, 1.442695
        %v4007 = vpow.pop %v4006
        %v4008 = vmul.f32 %v3954, 1.442695
        %v4009 = vpow.pop %v4008
        %v4010 = vmul.f32 %v3955, 1.442695
        %v4011 = vpow.pop %v4010
        %v4012 = vmul.f32 %v3956, 1.442695
        %v4013 = vpow.pop %v4012
        %v4014 = vmul.f32 %v3957, 1.442695
        %v4015 = vpow.pop %v4014
        %v4016 = vmul.f32 %v3958, 1.442695
        %v4017 = vpow.pop %v4016
        %v4018 = vmul.f32 %v3959, 1.442695
        %v4019 = vpow.pop %v4018
        %v4020 = vmul.f32 %v3960, 1.442695
        %v4021 = vpow.pop %v4020
        %v4022 = vmul.f32 %v3961, 1.442695
        %v4023 = vpow.pop %v4022
        %v4024 = vmul.f32 %v3962, 1.442695
        %v4025 = vpow.pop %v4024
        %v4026 = vmul.f32 %v3963, 1.442695
        %v4027 = vpow.pop %v4026
        %v4028 = vadd.f32 %v3965, %v3967
        %4029 = vadd.xlane.f32.xlu0 %v4028
        %v4030 = vpop.xlane.xlu0 %4029
        %v4031 = vadd.f32 %v3969, %v3971
        %4032 = vadd.xlane.f32.xlu0 %v4031
        %v4033 = vpop.xlane.xlu0 %4032
        %v4034 = vadd.f32 %v3973, %v3975
        %4035 = vadd.xlane.f32.xlu0 %v4034
        %v4036 = vpop.xlane.xlu0 %4035
        %v4037 = vadd.f32 %v3977, %v3979
        %4038 = vadd.xlane.f32.xlu0 %v4037
        %v4039 = vpop.xlane.xlu0 %4038
        %v4040 = vadd.f32 %v3981, %v3983
        %4041 = vadd.xlane.f32.xlu0 %v4040
        %v4042 = vpop.xlane.xlu0 %4041
        %v4043 = vadd.f32 %v3985, %v3987
        %4044 = vadd.xlane.f32.xlu0 %v4043
        %v4045 = vpop.xlane.xlu0 %4044
        %v4046 = vadd.f32 %v3989, %v3991
        %4047 = vadd.xlane.f32.xlu0 %v4046
        %v4048 = vpop.xlane.xlu0 %4047
        %v4049 = vadd.f32 %v3993, %v3995
        %4050 = vadd.xlane.f32.xlu0 %v4049
        %v4051 = vpop.xlane.xlu0 %4050
        %v4052 = vadd.f32 %v3997, %v3999
        %4053 = vadd.xlane.f32.xlu0 %v4052
        %v4054 = vpop.xlane.xlu0 %4053
        %v4055 = vadd.f32 %v4001, %v4003
        %4056 = vadd.xlane.f32.xlu0 %v4055
        %v4057 = vpop.xlane.xlu0 %4056
        %v4058 = vadd.f32 %v4005, %v4007
        %4059 = vadd.xlane.f32.xlu0 %v4058
        %v4060 = vpop.xlane.xlu0 %4059
        %v4061 = vadd.f32 %v4009, %v4011
        %4062 = vadd.xlane.f32.xlu0 %v4061
        %v4063 = vpop.xlane.xlu0 %4062
        %v4064 = vadd.f32 %v4013, %v4015
        %4065 = vadd.xlane.f32.xlu0 %v4064
        %v4066 = vpop.xlane.xlu0 %4065
        %v4067 = vadd.f32 %v4017, %v4019
        %4068 = vadd.xlane.f32.xlu0 %v4067
        %v4069 = vpop.xlane.xlu0 %4068
        %v4070 = vadd.f32 %v4021, %v4023
        %4071 = vadd.xlane.f32.xlu0 %v4070
        %v4072 = vpop.xlane.xlu0 %4071
        %v4073 = vadd.f32 %v4025, %v4027
        %4074 = vadd.xlane.f32.xlu0 %v4073
        %v4075 = vpop.xlane.xlu0 %4074
        %v4076 = vrcp.pop %v4030
        %v4077 = vrcp.pop %v4033
        %v4078 = vrcp.pop %v4036
        %v4079 = vrcp.pop %v4039
        %v4080 = vrcp.pop %v4042
        %v4081 = vrcp.pop %v4045
        %v4082 = vrcp.pop %v4048
        %v4083 = vrcp.pop %v4051
        %v4084 = vrcp.pop %v4054
        %v4085 = vrcp.pop %v4057
        %v4086 = vrcp.pop %v4060
        %v4087 = vrcp.pop %v4063
        %v4088 = vrcp.pop %v4066
        %v4089 = vrcp.pop %v4069
        %v4090 = vrcp.pop %v4072
        %v4091 = vrcp.pop %v4075
        %v4092 = vmul.f32 %v3965, %v4076
        %v4093 = vmul.f32 %v3967, %v4076
        %v4094 = vmul.f32 %v3969, %v4077
        %v4095 = vmul.f32 %v3971, %v4077
        %v4096 = vmul.f32 %v3973, %v4078
        %v4097 = vmul.f32 %v3975, %v4078
        %v4098 = vmul.f32 %v3977, %v4079
        %v4099 = vmul.f32 %v3979, %v4079
        %v4100 = vmul.f32 %v3981, %v4080
        %v4101 = vmul.f32 %v3983, %v4080
        %v4102 = vmul.f32 %v3985, %v4081
        %v4103 = vmul.f32 %v3987, %v4081
        %v4104 = vmul.f32 %v3989, %v4082
        %v4105 = vmul.f32 %v3991, %v4082
        %v4106 = vmul.f32 %v3993, %v4083
        %v4107 = vmul.f32 %v3995, %v4083
        %v4108 = vmul.f32 %v3997, %v4084
        %v4109 = vmul.f32 %v3999, %v4084
        %v4110 = vmul.f32 %v4001, %v4085
        %v4111 = vmul.f32 %v4003, %v4085
        %v4112 = vmul.f32 %v4005, %v4086
        %v4113 = vmul.f32 %v4007, %v4086
        %v4114 = vmul.f32 %v4009, %v4087
        %v4115 = vmul.f32 %v4011, %v4087
        %v4116 = vmul.f32 %v4013, %v4088
        %v4117 = vmul.f32 %v4015, %v4088
        %v4118 = vmul.f32 %v4017, %v4089
        %v4119 = vmul.f32 %v4019, %v4089
        %v4120 = vmul.f32 %v4021, %v4090
        %v4121 = vmul.f32 %v4023, %v4090
        %v4122 = vmul.f32 %v4025, %v4091
        %v4123 = vmul.f32 %v4027, %v4091
        %v4124 = vpack.c.bf16 %v4094, %v4092
        %v4125 = vpack.c.bf16 %v4095, %v4093
        %v4126 = vpack.c.bf16 %v4098, %v4096
        %v4127 = vpack.c.bf16 %v4099, %v4097
        %v4128 = vpack.c.bf16 %v4102, %v4100
        %v4129 = vpack.c.bf16 %v4103, %v4101
        %v4130 = vpack.c.bf16 %v4106, %v4104
        %v4131 = vpack.c.bf16 %v4107, %v4105
        %v4132 = vpack.c.bf16 %v4110, %v4108
        %v4133 = vpack.c.bf16 %v4111, %v4109
        %v4134 = vpack.c.bf16 %v4114, %v4112
        %v4135 = vpack.c.bf16 %v4115, %v4113
        %v4136 = vpack.c.bf16 %v4118, %v4116
        %v4137 = vpack.c.bf16 %v4119, %v4117
        %v4138 = vpack.c.bf16 %v4122, %v4120
        %v4139 = vpack.c.bf16 %v4123, %v4121
        %4140 = vmatprep.subr.bf16.mxu0 0
        %4141 = vmatpush1.bf16.msra.mxu0 %v3654
        %4142 = vmatprep.subr.bf16.mxu0 0
        %4143 = vmatpush1.bf16.msra.mxu0 %v3656
        %4144 = vmatprep.subr.bf16.mxu0 0
        %4145 = vmatpush1.bf16.msra.mxu0 %v3658
        %4146 = vmatprep.subr.bf16.mxu0 0
        %4147 = vmatpush1.bf16.msra.mxu0 %v3660
        %4148 = vmatprep.subr.bf16.mxu0 0
        %4149 = vmatpush1.bf16.msra.mxu0 %v3662
        %4150 = vmatprep.subr.bf16.mxu0 0
        %4151 = vmatpush1.bf16.msra.mxu0 %v3664
        %4152 = vmatprep.subr.bf16.mxu0 0
        %4153 = vmatpush1.bf16.msra.mxu0 %v3666
        %4154 = vmatprep.subr.bf16.mxu0 0
        %4155 = vmatpush1.bf16.msra.mxu0 %v3668
        %4156 = vmatprep.subr.bf16.mxu0 0
        %4157 = vmatpush1.bf16.msra.mxu0 %v3670
        %4158 = vmatprep.subr.bf16.mxu0 0
        %4159 = vmatpush1.bf16.msra.mxu0 %v3672
        %4160 = vmatprep.subr.bf16.mxu0 0
        %4161 = vmatpush1.bf16.msra.mxu0 %v3674
        %4162 = vmatprep.subr.bf16.mxu0 0
        %4163 = vmatpush1.bf16.msra.mxu0 %v3676
        %4164 = vmatprep.subr.bf16.mxu0 0
        %4165 = vmatpush1.bf16.msra.mxu0 %v3678
        %4166 = vmatprep.subr.bf16.mxu0 0
        %4167 = vmatpush1.bf16.msra.mxu0 %v3680
        %4168 = vmatprep.subr.bf16.mxu0 0
        %4169 = vmatpush1.bf16.msra.mxu0 %v3682
        %4170 = vmatprep.subr.bf16.mxu0 0
        %4171 = vmatpush1.bf16.msra.mxu0 %v3684
        %4172 = vmatprep.mubr.bf16.mxu0 %v4125
        %4173 = vmatmul.mubr.bf16.gmra.mrb[0].mxu0 %v4124
        %v4174 = vpop.f32.mrb[0].mxu0
        %v4175 = vadd.f32 0.0, %v4174
        %v4176 = vpop.f32.mrb[0].mxu0
        %v4177 = vpop.f32.mrb[0].mxu0
        %v4178 = vadd.f32 0.0, %v4177
        %v4179 = vpop.f32.mrb[0].mxu0
        %4180 = vmatprep.mubr.bf16.mxu0 %v4127
        %4181 = vmatmul.mubr.bf16.gmra.mrb[0].mxu0 %v4126
        %v4182 = vpop.f32.mrb[0].mxu0
        %v4183 = vadd.f32 0.0, %v4182
        %v4184 = vpop.f32.mrb[0].mxu0
        %v4185 = vpop.f32.mrb[0].mxu0
        %v4186 = vadd.f32 0.0, %v4185
        %v4187 = vpop.f32.mrb[0].mxu0
        %4188 = vmatprep.mubr.bf16.mxu0 %v4129
        %4189 = vmatmul.mubr.bf16.gmra.mrb[0].mxu0 %v4128
        %v4190 = vpop.f32.mrb[0].mxu0
        %v4191 = vadd.f32 0.0, %v4190
        %v4192 = vpop.f32.mrb[0].mxu0
        %v4193 = vpop.f32.mrb[0].mxu0
        %v4194 = vadd.f32 0.0, %v4193
        %v4195 = vpop.f32.mrb[0].mxu0
        %4196 = vmatprep.mubr.bf16.mxu0 %v4131
        %4197 = vmatmul.mubr.bf16.gmra.mrb[0].mxu0 %v4130
        %v4198 = vpop.f32.mrb[0].mxu0
        %v4199 = vadd.f32 0.0, %v4198
        %v4200 = vpop.f32.mrb[0].mxu0
        %v4201 = vpop.f32.mrb[0].mxu0
        %v4202 = vadd.f32 0.0, %v4201
        %v4203 = vpop.f32.mrb[0].mxu0
        %4204 = vmatprep.mubr.bf16.mxu0 %v4133
        %4205 = vmatmul.mubr.bf16.gmra.mrb[0].mxu0 %v4132
        %v4206 = vpop.f32.mrb[0].mxu0
        %v4207 = vadd.f32 0.0, %v4206
        %v4208 = vpop.f32.mrb[0].mxu0
        %v4209 = vpop.f32.mrb[0].mxu0
        %v4210 = vadd.f32 0.0, %v4209
        %v4211 = vpop.f32.mrb[0].mxu0
        %4212 = vmatprep.mubr.bf16.mxu0 %v4135
        %4213 = vmatmul.mubr.bf16.gmra.mrb[0].mxu0 %v4134
        %v4214 = vpop.f32.mrb[0].mxu0
        %v4215 = vadd.f32 0.0, %v4214
        %v4216 = vpop.f32.mrb[0].mxu0
        %v4217 = vpop.f32.mrb[0].mxu0
        %v4218 = vadd.f32 0.0, %v4217
        %v4219 = vpop.f32.mrb[0].mxu0
        %4220 = vmatprep.mubr.bf16.mxu0 %v4137
        %4221 = vmatmul.mubr.bf16.gmra.mrb[0].mxu0 %v4136
        %v4222 = vpop.f32.mrb[0].mxu0
        %v4223 = vadd.f32 0.0, %v4222
        %v4224 = vpop.f32.mrb[0].mxu0
        %v4225 = vpop.f32.mrb[0].mxu0
        %v4226 = vadd.f32 0.0, %v4225
        %v4227 = vpop.f32.mrb[0].mxu0
        %4228 = vmatprep.mubr.bf16.mxu0 %v4139
        %4229 = vmatmul.mubr.bf16.gmra.mrb[0].mxu0 %v4138
        %v4230 = vpop.f32.mrb[0].mxu0
        %v4231 = vadd.f32 0.0, %v4230
        %v4232 = vpop.f32.mrb[0].mxu0
        %v4233 = vpop.f32.mrb[0].mxu0
        %v4234 = vadd.f32 0.0, %v4233
        %v4235 = vpop.f32.mrb[0].mxu0
        %4236 = vdwg.mxu0
        %4245 = vrot.lane.b32.xlu0 %v3606, 64
        %v4246 = vpop.permute.xlu0 %4245
        %4247 = vrot.lane.b32.xlu0 %v3608, 64
        %v4248 = vpop.permute.xlu0 %4247
        %4249 = vrot.lane.b32.xlu0 %v3610, 64
        %v4250 = vpop.permute.xlu0 %4249
        %4251 = vrot.lane.b32.xlu0 %v3612, 64
        %v4252 = vpop.permute.xlu0 %4251
        %4253 = vrot.lane.b32.xlu0 %v3614, 64
        %v4254 = vpop.permute.xlu0 %4253
        %4255 = vrot.lane.b32.xlu0 %v3616, 64
        %v4256 = vpop.permute.xlu0 %4255
        %4257 = vrot.lane.b32.xlu0 %v3618, 64
        %v4258 = vpop.permute.xlu0 %4257
        %4259 = vrot.lane.b32.xlu0 %v3620, 64
        %v4260 = vpop.permute.xlu0 %4259
        %4277 = vrot.lane.b32.xlu0 %v3622, 64
        %v4278 = vpop.permute.xlu0 %4277
        %4279 = vrot.lane.b32.xlu0 %v3624, 64
        %v4280 = vpop.permute.xlu0 %4279
        %4281 = vrot.lane.b32.xlu0 %v3626, 64
        %v4282 = vpop.permute.xlu0 %4281
        %4283 = vrot.lane.b32.xlu0 %v3628, 64
        %v4284 = vpop.permute.xlu0 %4283
        %4285 = vrot.lane.b32.xlu0 %v3630, 64
        %v4286 = vpop.permute.xlu0 %4285
        %4287 = vrot.lane.b32.xlu0 %v3632, 64
        %v4288 = vpop.permute.xlu0 %4287
        %4289 = vrot.lane.b32.xlu0 %v3634, 64
        %v4290 = vpop.permute.xlu0 %4289
        %4291 = vrot.lane.b32.xlu0 %v3636, 64
        %v4292 = vpop.permute.xlu0 %4291
        %4293 = vrot.lane.b32.xlu0 %v3638, 64
        %v4294 = vpop.permute.xlu0 %4293
        %4295 = vrot.lane.b32.xlu0 %v3640, 64
        %v4296 = vpop.permute.xlu0 %4295
        %4297 = vrot.lane.b32.xlu0 %v3642, 64
        %v4298 = vpop.permute.xlu0 %4297
        %4299 = vrot.lane.b32.xlu0 %v3644, 64
        %v4300 = vpop.permute.xlu0 %4299
        %4301 = vrot.lane.b32.xlu0 %v3646, 64
        %v4302 = vpop.permute.xlu0 %4301
        %4303 = vrot.lane.b32.xlu0 %v3648, 64
        %v4304 = vpop.permute.xlu0 %4303
        %4305 = vrot.lane.b32.xlu0 %v3650, 64
        %v4306 = vpop.permute.xlu0 %4305
        %4307 = vrot.lane.b32.xlu0 %v3652, 64
        %v4308 = vpop.permute.xlu0 %4307
        %v4310 = vsel %vm3698, %v4246, 0
        %v4313 = vsel %vm3698, %v4248, 0
        %v4316 = vsel %vm3698, %v4250, 0
        %v4319 = vsel %vm3698, %v4252, 0
        %v4322 = vsel %vm3698, %v4254, 0
        %v4325 = vsel %vm3698, %v4256, 0
        %v4328 = vsel %vm3698, %v4258, 0
        %v4331 = vsel %vm3698, %v4260, 0
        %v4334 = vsel %vm3698, %v4278, 0
        %v4337 = vsel %vm3698, %v4280, 0
        %v4340 = vsel %vm3698, %v4282, 0
        %v4343 = vsel %vm3698, %v4284, 0
        %v4346 = vsel %vm3698, %v4286, 0
        %v4349 = vsel %vm3698, %v4288, 0
        %v4352 = vsel %vm3698, %v4290, 0
        %v4355 = vsel %vm3698, %v4292, 0
        %v4358 = vsel %vm3698, %v4294, 0
        %v4361 = vsel %vm3698, %v4296, 0
        %v4364 = vsel %vm3698, %v4298, 0
        %v4367 = vsel %vm3698, %v4300, 0
        %v4370 = vsel %vm3698, %v4302, 0
        %v4373 = vsel %vm3698, %v4304, 0
        %v4376 = vsel %vm3698, %v4306, 0
        %v4379 = vsel %vm3698, %v4308, 0
        %4381 = vmatprep.subr.bf16.mxu0 0
        %4382 = vmatpush1.bf16.xpose.msra.mxu0 %v4334
        %4383 = vmatprep.subr.bf16.mxu0 0
        %4384 = vmatpush1.bf16.xpose.msra.mxu0 %v4337
        %4385 = vmatprep.subr.bf16.mxu0 0
        %4386 = vmatpush1.bf16.xpose.msra.mxu0 %v4340
        %4387 = vmatprep.subr.bf16.mxu0 0
        %4388 = vmatpush1.bf16.xpose.msra.mxu0 %v4343
        %4389 = vmatprep.subr.bf16.mxu0 0
        %4390 = vmatpush1.bf16.xpose.msra.mxu0 %v4346
        %4391 = vmatprep.subr.bf16.mxu0 0
        %4392 = vmatpush1.bf16.xpose.msra.mxu0 %v4349
        %4393 = vmatprep.subr.bf16.mxu0 0
        %4394 = vmatpush1.bf16.xpose.msra.mxu0 %v4352
        %4395 = vmatprep.subr.bf16.mxu0 0
        %4396 = vmatpush1.bf16.xpose.msra.mxu0 %v4355
        %4397 = vmatprep.subr.bf16.mxu0 0
        %4398 = vmatpush1.bf16.xpose.msra.mxu0 %v4358
        %4399 = vmatprep.subr.bf16.mxu0 0
        %4400 = vmatpush1.bf16.xpose.msra.mxu0 %v4361
        %4401 = vmatprep.subr.bf16.mxu0 0
        %4402 = vmatpush1.bf16.xpose.msra.mxu0 %v4364
        %4403 = vmatprep.subr.bf16.mxu0 0
        %4404 = vmatpush1.bf16.xpose.msra.mxu0 %v4367
        %4405 = vmatprep.subr.bf16.mxu0 0
        %4406 = vmatpush1.bf16.xpose.msra.mxu0 %v4370
        %4407 = vmatprep.subr.bf16.mxu0 0
        %4408 = vmatpush1.bf16.xpose.msra.mxu0 %v4373
        %4409 = vmatprep.subr.bf16.mxu0 0
        %4410 = vmatpush1.bf16.xpose.msra.mxu0 %v4376
        %4411 = vmatprep.subr.bf16.mxu0 0
        %4412 = vmatpush1.bf16.xpose.msra.mxu0 %v4379
        %4413 = vmatprep.mubr.bf16.mxu0 0
        %4414 = vmatmul.mubr.bf16.gmra.mrb[0].mxu0 %v4310
        %v4415 = vpop.f32.mrb[0].mxu0
        %v4416 = vadd.f32 %v3691, %v4415
        %v4417 = vpop.f32.mrb[0].mxu0
        %v4418 = vadd.f32 %v3695, %v4417
        %v4419 = vpop.f32.mrb[0].mxu0
        %v4420 = vadd.f32 %v3691, %v4419
        %v4421 = vpop.f32.mrb[0].mxu0
        %v4422 = vadd.f32 %v3695, %v4421
        %4423 = vmatprep.mubr.bf16.mxu0 0
        %4424 = vmatmul.mubr.bf16.gmra.mrb[0].mxu0 %v4313
        %v4425 = vpop.f32.mrb[0].mxu0
        %v4426 = vadd.f32 %v3691, %v4425
        %v4427 = vpop.f32.mrb[0].mxu0
        %v4428 = vadd.f32 %v3695, %v4427
        %v4429 = vpop.f32.mrb[0].mxu0
        %v4430 = vadd.f32 %v3691, %v4429
        %v4431 = vpop.f32.mrb[0].mxu0
        %v4432 = vadd.f32 %v3695, %v4431
        %4433 = vmatprep.mubr.bf16.mxu0 0
        %4434 = vmatmul.mubr.bf16.gmra.mrb[0].mxu0 %v4316
        %v4435 = vpop.f32.mrb[0].mxu0
        %v4436 = vadd.f32 %v3691, %v4435
        %v4437 = vpop.f32.mrb[0].mxu0
        %v4438 = vadd.f32 %v3695, %v4437
        %v4439 = vpop.f32.mrb[0].mxu0
        %v4440 = vadd.f32 %v3691, %v4439
        %v4441 = vpop.f32.mrb[0].mxu0
        %v4442 = vadd.f32 %v3695, %v4441
        %4443 = vmatprep.mubr.bf16.mxu0 0
        %4444 = vmatmul.mubr.bf16.gmra.mrb[0].mxu0 %v4319
        %v4445 = vpop.f32.mrb[0].mxu0
        %v4446 = vadd.f32 %v3691, %v4445
        %v4447 = vpop.f32.mrb[0].mxu0
        %v4448 = vadd.f32 %v3695, %v4447
        %v4449 = vpop.f32.mrb[0].mxu0
        %v4450 = vadd.f32 %v3691, %v4449
        %v4451 = vpop.f32.mrb[0].mxu0
        %v4452 = vadd.f32 %v3695, %v4451
        %4453 = vmatprep.mubr.bf16.mxu0 0
        %4454 = vmatmul.mubr.bf16.gmra.mrb[0].mxu0 %v4322
        %v4455 = vpop.f32.mrb[0].mxu0
        %v4456 = vadd.f32 %v3691, %v4455
        %v4457 = vpop.f32.mrb[0].mxu0
        %v4458 = vadd.f32 %v3695, %v4457
        %v4459 = vpop.f32.mrb[0].mxu0
        %v4460 = vadd.f32 %v3691, %v4459
        %v4461 = vpop.f32.mrb[0].mxu0
        %v4462 = vadd.f32 %v3695, %v4461
        %4463 = vmatprep.mubr.bf16.mxu0 0
        %4464 = vmatmul.mubr.bf16.gmra.mrb[0].mxu0 %v4325
        %v4465 = vpop.f32.mrb[0].mxu0
        %v4466 = vadd.f32 %v3691, %v4465
        %v4467 = vpop.f32.mrb[0].mxu0
        %v4468 = vadd.f32 %v3695, %v4467
        %v4469 = vpop.f32.mrb[0].mxu0
        %v4470 = vadd.f32 %v3691, %v4469
        %v4471 = vpop.f32.mrb[0].mxu0
        %v4472 = vadd.f32 %v3695, %v4471
        %4473 = vmatprep.mubr.bf16.mxu0 0
        %4474 = vmatmul.mubr.bf16.gmra.mrb[0].mxu0 %v4328
        %v4475 = vpop.f32.mrb[0].mxu0
        %v4476 = vadd.f32 %v3691, %v4475
        %v4477 = vpop.f32.mrb[0].mxu0
        %v4478 = vadd.f32 %v3695, %v4477
        %v4479 = vpop.f32.mrb[0].mxu0
        %v4480 = vadd.f32 %v3691, %v4479
        %v4481 = vpop.f32.mrb[0].mxu0
        %v4482 = vadd.f32 %v3695, %v4481
        %4483 = vmatprep.mubr.bf16.mxu0 0
        %4484 = vmatmul.mubr.bf16.gmra.mrb[0].mxu0 %v4331
        %v4485 = vpop.f32.mrb[0].mxu0
        %v4486 = vadd.f32 %v3691, %v4485
        %v4487 = vpop.f32.mrb[0].mxu0
        %v4488 = vadd.f32 %v3695, %v4487
        %v4489 = vpop.f32.mrb[0].mxu0
        %v4490 = vadd.f32 %v3691, %v4489
        %v4491 = vpop.f32.mrb[0].mxu0
        %v4492 = vadd.f32 %v3695, %v4491
        %4493 = vdwg.mxu0
        %v4494 = vmax.f32 %v4416, %v4418
        %4495 = vmax.xlane.f32.xlu0 %v4494
        %v4496 = vpop.xlane.xlu0 %4495
        %v4497 = vmax.f32 %v4420, %v4422
        %4498 = vmax.xlane.f32.xlu0 %v4497
        %v4499 = vpop.xlane.xlu0 %4498
        %v4500 = vmax.f32 %v4426, %v4428
        %4501 = vmax.xlane.f32.xlu0 %v4500
        %v4502 = vpop.xlane.xlu0 %4501
        %v4503 = vmax.f32 %v4430, %v4432
        %4504 = vmax.xlane.f32.xlu0 %v4503
        %v4505 = vpop.xlane.xlu0 %4504
        %v4506 = vmax.f32 %v4436, %v4438
        %4507 = vmax.xlane.f32.xlu0 %v4506
        %v4508 = vpop.xlane.xlu0 %4507
        %v4509 = vmax.f32 %v4440, %v4442
        %4510 = vmax.xlane.f32.xlu0 %v4509
        %v4511 = vpop.xlane.xlu0 %4510
        %v4512 = vmax.f32 %v4446, %v4448
        %4513 = vmax.xlane.f32.xlu0 %v4512
        %v4514 = vpop.xlane.xlu0 %4513
        %v4515 = vmax.f32 %v4450, %v4452
        %4516 = vmax.xlane.f32.xlu0 %v4515
        %v4517 = vpop.xlane.xlu0 %4516
        %v4518 = vmax.f32 %v4456, %v4458
        %4519 = vmax.xlane.f32.xlu0 %v4518
        %v4520 = vpop.xlane.xlu0 %4519
        %v4521 = vmax.f32 %v4460, %v4462
        %4522 = vmax.xlane.f32.xlu0 %v4521
        %v4523 = vpop.xlane.xlu0 %4522
        %v4524 = vmax.f32 %v4466, %v4468
        %4525 = vmax.xlane.f32.xlu0 %v4524
        %v4526 = vpop.xlane.xlu0 %4525
        %v4527 = vmax.f32 %v4470, %v4472
        %4528 = vmax.xlane.f32.xlu0 %v4527
        %v4529 = vpop.xlane.xlu0 %4528
        %v4530 = vmax.f32 %v4476, %v4478
        %4531 = vmax.xlane.f32.xlu0 %v4530
        %v4532 = vpop.xlane.xlu0 %4531
        %v4533 = vmax.f32 %v4480, %v4482
        %4534 = vmax.xlane.f32.xlu0 %v4533
        %v4535 = vpop.xlane.xlu0 %4534
        %v4536 = vmax.f32 %v4486, %v4488
        %4537 = vmax.xlane.f32.xlu0 %v4536
        %v4538 = vpop.xlane.xlu0 %4537
        %v4539 = vmax.f32 %v4490, %v4492
        %4540 = vmax.xlane.f32.xlu0 %v4539
        %v4541 = vpop.xlane.xlu0 %4540
        %v4542 = vsub.f32 %v4416, %v4496
        %v4543 = vsub.f32 %v4418, %v4496
        %v4544 = vsub.f32 %v4420, %v4499
        %v4545 = vsub.f32 %v4422, %v4499
        %v4546 = vsub.f32 %v4426, %v4502
        %v4547 = vsub.f32 %v4428, %v4502
        %v4548 = vsub.f32 %v4430, %v4505
        %v4549 = vsub.f32 %v4432, %v4505
        %v4550 = vsub.f32 %v4436, %v4508
        %v4551 = vsub.f32 %v4438, %v4508
        %v4552 = vsub.f32 %v4440, %v4511
        %v4553 = vsub.f32 %v4442, %v4511
        %v4554 = vsub.f32 %v4446, %v4514
        %v4555 = vsub.f32 %v4448, %v4514
        %v4556 = vsub.f32 %v4450, %v4517
        %v4557 = vsub.f32 %v4452, %v4517
        %v4558 = vsub.f32 %v4456, %v4520
        %v4559 = vsub.f32 %v4458, %v4520
        %v4560 = vsub.f32 %v4460, %v4523
        %v4561 = vsub.f32 %v4462, %v4523
        %v4562 = vsub.f32 %v4466, %v4526
        %v4563 = vsub.f32 %v4468, %v4526
        %v4564 = vsub.f32 %v4470, %v4529
        %v4565 = vsub.f32 %v4472, %v4529
        %v4566 = vsub.f32 %v4476, %v4532
        %v4567 = vsub.f32 %v4478, %v4532
        %v4568 = vsub.f32 %v4480, %v4535
        %v4569 = vsub.f32 %v4482, %v4535
        %v4570 = vsub.f32 %v4486, %v4538
        %v4571 = vsub.f32 %v4488, %v4538
        %v4572 = vsub.f32 %v4490, %v4541
        %v4573 = vsub.f32 %v4492, %v4541
        %v4574 = vmul.f32 %v4542, 1.442695
        %v4575 = vpow.pop %v4574
        %v4576 = vmul.f32 %v4543, 1.442695
        %v4577 = vpow.pop %v4576
        %v4578 = vmul.f32 %v4544, 1.442695
        %v4579 = vpow.pop %v4578
        %v4580 = vmul.f32 %v4545, 1.442695
        %v4581 = vpow.pop %v4580
        %v4582 = vmul.f32 %v4546, 1.442695
        %v4583 = vpow.pop %v4582
        %v4584 = vmul.f32 %v4547, 1.442695
        %v4585 = vpow.pop %v4584
        %v4586 = vmul.f32 %v4548, 1.442695
        %v4587 = vpow.pop %v4586
        %v4588 = vmul.f32 %v4549, 1.442695
        %v4589 = vpow.pop %v4588
        %v4590 = vmul.f32 %v4550, 1.442695
        %v4591 = vpow.pop %v4590
        %v4592 = vmul.f32 %v4551, 1.442695
        %v4593 = vpow.pop %v4592
        %v4594 = vmul.f32 %v4552, 1.442695
        %v4595 = vpow.pop %v4594
        %v4596 = vmul.f32 %v4553, 1.442695
        %v4597 = vpow.pop %v4596
        %v4598 = vmul.f32 %v4554, 1.442695
        %v4599 = vpow.pop %v4598
        %v4600 = vmul.f32 %v4555, 1.442695
        %v4601 = vpow.pop %v4600
        %v4602 = vmul.f32 %v4556, 1.442695
        %v4603 = vpow.pop %v4602
        %v4604 = vmul.f32 %v4557, 1.442695
        %v4605 = vpow.pop %v4604
        %v4606 = vmul.f32 %v4558, 1.442695
        %v4607 = vpow.pop %v4606
        %v4608 = vmul.f32 %v4559, 1.442695
        %v4609 = vpow.pop %v4608
        %v4610 = vmul.f32 %v4560, 1.442695
        %v4611 = vpow.pop %v4610
        %v4612 = vmul.f32 %v4561, 1.442695
        %v4613 = vpow.pop %v4612
        %v4614 = vmul.f32 %v4562, 1.442695
        %v4615 = vpow.pop %v4614
        %v4616 = vmul.f32 %v4563, 1.442695
        %v4617 = vpow.pop %v4616
        %v4618 = vmul.f32 %v4564, 1.442695
        %v4619 = vpow.pop %v4618
        %v4620 = vmul.f32 %v4565, 1.442695
        %v4621 = vpow.pop %v4620
        %v4622 = vmul.f32 %v4566, 1.442695
        %v4623 = vpow.pop %v4622
        %v4624 = vmul.f32 %v4567, 1.442695
        %v4625 = vpow.pop %v4624
        %v4626 = vmul.f32 %v4568, 1.442695
        %v4627 = vpow.pop %v4626
        %v4628 = vmul.f32 %v4569, 1.442695
        %v4629 = vpow.pop %v4628
        %v4630 = vmul.f32 %v4570, 1.442695
        %v4631 = vpow.pop %v4630
        %v4632 = vmul.f32 %v4571, 1.442695
        %v4633 = vpow.pop %v4632
        %v4634 = vmul.f32 %v4572, 1.442695
        %v4635 = vpow.pop %v4634
        %v4636 = vmul.f32 %v4573, 1.442695
        %v4637 = vpow.pop %v4636
        %v4638 = vadd.f32 %v4575, %v4577
        %4639 = vadd.xlane.f32.xlu0 %v4638
        %v4640 = vpop.xlane.xlu0 %4639
        %v4641 = vadd.f32 %v4579, %v4581
        %4642 = vadd.xlane.f32.xlu0 %v4641
        %v4643 = vpop.xlane.xlu0 %4642
        %v4644 = vadd.f32 %v4583, %v4585
        %4645 = vadd.xlane.f32.xlu0 %v4644
        %v4646 = vpop.xlane.xlu0 %4645
        %v4647 = vadd.f32 %v4587, %v4589
        %4648 = vadd.xlane.f32.xlu0 %v4647
        %v4649 = vpop.xlane.xlu0 %4648
        %v4650 = vadd.f32 %v4591, %v4593
        %4651 = vadd.xlane.f32.xlu0 %v4650
        %v4652 = vpop.xlane.xlu0 %4651
        %v4653 = vadd.f32 %v4595, %v4597
        %4654 = vadd.xlane.f32.xlu0 %v4653
        %v4655 = vpop.xlane.xlu0 %4654
        %v4656 = vadd.f32 %v4599, %v4601
        %4657 = vadd.xlane.f32.xlu0 %v4656
        %v4658 = vpop.xlane.xlu0 %4657
        %v4659 = vadd.f32 %v4603, %v4605
        %4660 = vadd.xlane.f32.xlu0 %v4659
        %v4661 = vpop.xlane.xlu0 %4660
        %v4662 = vadd.f32 %v4607, %v4609
        %4663 = vadd.xlane.f32.xlu0 %v4662
        %v4664 = vpop.xlane.xlu0 %4663
        %v4665 = vadd.f32 %v4611, %v4613
        %4666 = vadd.xlane.f32.xlu0 %v4665
        %v4667 = vpop.xlane.xlu0 %4666
        %v4668 = vadd.f32 %v4615, %v4617
        %4669 = vadd.xlane.f32.xlu0 %v4668
        %v4670 = vpop.xlane.xlu0 %4669
        %v4671 = vadd.f32 %v4619, %v4621
        %4672 = vadd.xlane.f32.xlu0 %v4671
        %v4673 = vpop.xlane.xlu0 %4672
        %v4674 = vadd.f32 %v4623, %v4625
        %4675 = vadd.xlane.f32.xlu0 %v4674
        %v4676 = vpop.xlane.xlu0 %4675
        %v4677 = vadd.f32 %v4627, %v4629
        %4678 = vadd.xlane.f32.xlu0 %v4677
        %v4679 = vpop.xlane.xlu0 %4678
        %v4680 = vadd.f32 %v4631, %v4633
        %4681 = vadd.xlane.f32.xlu0 %v4680
        %v4682 = vpop.xlane.xlu0 %4681
        %v4683 = vadd.f32 %v4635, %v4637
        %4684 = vadd.xlane.f32.xlu0 %v4683
        %v4685 = vpop.xlane.xlu0 %4684
        %v4686 = vrcp.pop %v4640
        %v4687 = vrcp.pop %v4643
        %v4688 = vrcp.pop %v4646
        %v4689 = vrcp.pop %v4649
        %v4690 = vrcp.pop %v4652
        %v4691 = vrcp.pop %v4655
        %v4692 = vrcp.pop %v4658
        %v4693 = vrcp.pop %v4661
        %v4694 = vrcp.pop %v4664
        %v4695 = vrcp.pop %v4667
        %v4696 = vrcp.pop %v4670
        %v4697 = vrcp.pop %v4673
        %v4698 = vrcp.pop %v4676
        %v4699 = vrcp.pop %v4679
        %v4700 = vrcp.pop %v4682
        %v4701 = vrcp.pop %v4685
        %v4702 = vmul.f32 %v4575, %v4686
        %v4703 = vmul.f32 %v4577, %v4686
        %v4704 = vmul.f32 %v4579, %v4687
        %v4705 = vmul.f32 %v4581, %v4687
        %v4706 = vmul.f32 %v4583, %v4688
        %v4707 = vmul.f32 %v4585, %v4688
        %v4708 = vmul.f32 %v4587, %v4689
        %v4709 = vmul.f32 %v4589, %v4689
        %v4710 = vmul.f32 %v4591, %v4690
        %v4711 = vmul.f32 %v4593, %v4690
        %v4712 = vmul.f32 %v4595, %v4691
        %v4713 = vmul.f32 %v4597, %v4691
        %v4714 = vmul.f32 %v4599, %v4692
        %v4715 = vmul.f32 %v4601, %v4692
        %v4716 = vmul.f32 %v4603, %v4693
        %v4717 = vmul.f32 %v4605, %v4693
        %v4718 = vmul.f32 %v4607, %v4694
        %v4719 = vmul.f32 %v4609, %v4694
        %v4720 = vmul.f32 %v4611, %v4695
        %v4721 = vmul.f32 %v4613, %v4695
        %v4722 = vmul.f32 %v4615, %v4696
        %v4723 = vmul.f32 %v4617, %v4696
        %v4724 = vmul.f32 %v4619, %v4697
        %v4725 = vmul.f32 %v4621, %v4697
        %v4726 = vmul.f32 %v4623, %v4698
        %v4727 = vmul.f32 %v4625, %v4698
        %v4728 = vmul.f32 %v4627, %v4699
        %v4729 = vmul.f32 %v4629, %v4699
        %v4730 = vmul.f32 %v4631, %v4700
        %v4731 = vmul.f32 %v4633, %v4700
        %v4732 = vmul.f32 %v4635, %v4701
        %v4733 = vmul.f32 %v4637, %v4701
        %v4734 = vpack.c.bf16 %v4704, %v4702
        %v4735 = vpack.c.bf16 %v4705, %v4703
        %v4736 = vpack.c.bf16 %v4708, %v4706
        %v4737 = vpack.c.bf16 %v4709, %v4707
        %v4738 = vpack.c.bf16 %v4712, %v4710
        %v4739 = vpack.c.bf16 %v4713, %v4711
        %v4740 = vpack.c.bf16 %v4716, %v4714
        %v4741 = vpack.c.bf16 %v4717, %v4715
        %v4742 = vpack.c.bf16 %v4720, %v4718
        %v4743 = vpack.c.bf16 %v4721, %v4719
        %v4744 = vpack.c.bf16 %v4724, %v4722
        %v4745 = vpack.c.bf16 %v4725, %v4723
        %v4746 = vpack.c.bf16 %v4728, %v4726
        %v4747 = vpack.c.bf16 %v4729, %v4727
        %v4748 = vpack.c.bf16 %v4732, %v4730
        %v4749 = vpack.c.bf16 %v4733, %v4731
        %4766 = vrot.lane.b32.xlu0 %v3654, 64
        %v4767 = vpop.permute.xlu0 %4766
        %4768 = vrot.lane.b32.xlu0 %v3656, 64
        %v4769 = vpop.permute.xlu0 %4768
        %4770 = vrot.lane.b32.xlu0 %v3658, 64
        %v4771 = vpop.permute.xlu0 %4770
        %4772 = vrot.lane.b32.xlu0 %v3660, 64
        %v4773 = vpop.permute.xlu0 %4772
        %4774 = vrot.lane.b32.xlu0 %v3662, 64
        %v4775 = vpop.permute.xlu0 %4774
        %4776 = vrot.lane.b32.xlu0 %v3664, 64
        %v4777 = vpop.permute.xlu0 %4776
        %4778 = vrot.lane.b32.xlu0 %v3666, 64
        %v4779 = vpop.permute.xlu0 %4778
        %4780 = vrot.lane.b32.xlu0 %v3668, 64
        %v4781 = vpop.permute.xlu0 %4780
        %4782 = vrot.lane.b32.xlu0 %v3670, 64
        %v4783 = vpop.permute.xlu0 %4782
        %4784 = vrot.lane.b32.xlu0 %v3672, 64
        %v4785 = vpop.permute.xlu0 %4784
        %4786 = vrot.lane.b32.xlu0 %v3674, 64
        %v4787 = vpop.permute.xlu0 %4786
        %4788 = vrot.lane.b32.xlu0 %v3676, 64
        %v4789 = vpop.permute.xlu0 %4788
        %4790 = vrot.lane.b32.xlu0 %v3678, 64
        %v4791 = vpop.permute.xlu0 %4790
        %4792 = vrot.lane.b32.xlu0 %v3680, 64
        %v4793 = vpop.permute.xlu0 %4792
        %4794 = vrot.lane.b32.xlu0 %v3682, 64
        %v4795 = vpop.permute.xlu0 %4794
        %4796 = vrot.lane.b32.xlu0 %v3684, 64
        %v4797 = vpop.permute.xlu0 %4796
        %4814 = vmatprep.subr.bf16.mxu0 0
        %4815 = vmatpush1.bf16.msra.mxu0 %v4767
        %4816 = vmatprep.subr.bf16.mxu0 0
        %4817 = vmatpush1.bf16.msra.mxu0 %v4769
        %4818 = vmatprep.subr.bf16.mxu0 0
        %4819 = vmatpush1.bf16.msra.mxu0 %v4771
        %4820 = vmatprep.subr.bf16.mxu0 0
        %4821 = vmatpush1.bf16.msra.mxu0 %v4773
        %4822 = vmatprep.subr.bf16.mxu0 0
        %4823 = vmatpush1.bf16.msra.mxu0 %v4775
        %4824 = vmatprep.subr.bf16.mxu0 0
        %4825 = vmatpush1.bf16.msra.mxu0 %v4777
        %4826 = vmatprep.subr.bf16.mxu0 0
        %4827 = vmatpush1.bf16.msra.mxu0 %v4779
        %4828 = vmatprep.subr.bf16.mxu0 0
        %4829 = vmatpush1.bf16.msra.mxu0 %v4781
        %4830 = vmatprep.subr.bf16.mxu0 0
        %4831 = vmatpush1.bf16.msra.mxu0 %v4783
        %4832 = vmatprep.subr.bf16.mxu0 0
        %4833 = vmatpush1.bf16.msra.mxu0 %v4785
        %4834 = vmatprep.subr.bf16.mxu0 0
        %4835 = vmatpush1.bf16.msra.mxu0 %v4787
        %4836 = vmatprep.subr.bf16.mxu0 0
        %4837 = vmatpush1.bf16.msra.mxu0 %v4789
        %4838 = vmatprep.subr.bf16.mxu0 0
        %4839 = vmatpush1.bf16.msra.mxu0 %v4791
        %4840 = vmatprep.subr.bf16.mxu0 0
        %4841 = vmatpush1.bf16.msra.mxu0 %v4793
        %4842 = vmatprep.subr.bf16.mxu0 0
        %4843 = vmatpush1.bf16.msra.mxu0 %v4795
        %4844 = vmatprep.subr.bf16.mxu0 0
        %4845 = vmatpush1.bf16.msra.mxu0 %v4797
        %4846 = vmatprep.mubr.bf16.mxu0 %v4735
        %4847 = vmatmul.mubr.bf16.gmra.mrb[0].mxu0 %v4734
        %v4848 = vpop.f32.mrb[0].mxu0
        %v4849 = vadd.f32 0.0, %v4848
        %v4850 = vpop.f32.mrb[0].mxu0
        %v4851 = vpop.f32.mrb[0].mxu0
        %v4852 = vadd.f32 0.0, %v4851
        %v4853 = vpop.f32.mrb[0].mxu0
        %4854 = vmatprep.mubr.bf16.mxu0 %v4737
        %4855 = vmatmul.mubr.bf16.gmra.mrb[0].mxu0 %v4736
        %v4856 = vpop.f32.mrb[0].mxu0
        %v4857 = vadd.f32 0.0, %v4856
        %v4858 = vpop.f32.mrb[0].mxu0
        %v4859 = vpop.f32.mrb[0].mxu0
        %v4860 = vadd.f32 0.0, %v4859
        %v4861 = vpop.f32.mrb[0].mxu0
        %4862 = vmatprep.mubr.bf16.mxu0 %v4739
        %4863 = vmatmul.mubr.bf16.gmra.mrb[0].mxu0 %v4738
        %v4864 = vpop.f32.mrb[0].mxu0
        %v4865 = vadd.f32 0.0, %v4864
        %v4866 = vpop.f32.mrb[0].mxu0
        %v4867 = vpop.f32.mrb[0].mxu0
        %v4868 = vadd.f32 0.0, %v4867
        %v4869 = vpop.f32.mrb[0].mxu0
        %4870 = vmatprep.mubr.bf16.mxu0 %v4741
        %4871 = vmatmul.mubr.bf16.gmra.mrb[0].mxu0 %v4740
        %v4872 = vpop.f32.mrb[0].mxu0
        %v4873 = vadd.f32 0.0, %v4872
        %v4874 = vpop.f32.mrb[0].mxu0
        %v4875 = vpop.f32.mrb[0].mxu0
        %v4876 = vadd.f32 0.0, %v4875
        %v4877 = vpop.f32.mrb[0].mxu0
        %4878 = vmatprep.mubr.bf16.mxu0 %v4743
        %4879 = vmatmul.mubr.bf16.gmra.mrb[0].mxu0 %v4742
        %v4880 = vpop.f32.mrb[0].mxu0
        %v4881 = vadd.f32 0.0, %v4880
        %v4882 = vpop.f32.mrb[0].mxu0
        %v4883 = vpop.f32.mrb[0].mxu0
        %v4884 = vadd.f32 0.0, %v4883
        %v4885 = vpop.f32.mrb[0].mxu0
        %4886 = vmatprep.mubr.bf16.mxu0 %v4745
        %4887 = vmatmul.mubr.bf16.gmra.mrb[0].mxu0 %v4744
        %v4888 = vpop.f32.mrb[0].mxu0
        %v4889 = vadd.f32 0.0, %v4888
        %v4890 = vpop.f32.mrb[0].mxu0
        %v4891 = vpop.f32.mrb[0].mxu0
        %v4892 = vadd.f32 0.0, %v4891
        %v4893 = vpop.f32.mrb[0].mxu0
        %4894 = vmatprep.mubr.bf16.mxu0 %v4747
        %4895 = vmatmul.mubr.bf16.gmra.mrb[0].mxu0 %v4746
        %v4896 = vpop.f32.mrb[0].mxu0
        %v4897 = vadd.f32 0.0, %v4896
        %v4898 = vpop.f32.mrb[0].mxu0
        %v4899 = vpop.f32.mrb[0].mxu0
        %v4900 = vadd.f32 0.0, %v4899
        %v4901 = vpop.f32.mrb[0].mxu0
        %4902 = vmatprep.mubr.bf16.mxu0 %v4749
        %4903 = vmatmul.mubr.bf16.gmra.mrb[0].mxu0 %v4748
        %v4904 = vpop.f32.mrb[0].mxu0
        %v4905 = vadd.f32 0.0, %v4904
        %v4906 = vpop.f32.mrb[0].mxu0
        %v4907 = vpop.f32.mrb[0].mxu0
        %v4908 = vadd.f32 0.0, %v4907
        %v4909 = vpop.f32.mrb[0].mxu0
        %4910 = vdwg.mxu0
        %v4912 = vsel %vm3698, %v3607, 0
        %v4915 = vsel %vm3698, %v3609, 0
        %v4918 = vsel %vm3698, %v3611, 0
        %v4921 = vsel %vm3698, %v3613, 0
        %v4924 = vsel %vm3698, %v3615, 0
        %v4927 = vsel %vm3698, %v3617, 0
        %v4930 = vsel %vm3698, %v3619, 0
        %v4933 = vsel %vm3698, %v3621, 0
        %v4936 = vsel %vm3698, %v3623, 0
        %v4939 = vsel %vm3698, %v3625, 0
        %v4942 = vsel %vm3698, %v3627, 0
        %v4945 = vsel %vm3698, %v3629, 0
        %v4948 = vsel %vm3698, %v3631, 0
        %v4951 = vsel %vm3698, %v3633, 0
        %v4954 = vsel %vm3698, %v3635, 0
        %v4957 = vsel %vm3698, %v3637, 0
        %v4960 = vsel %vm3698, %v3639, 0
        %v4963 = vsel %vm3698, %v3641, 0
        %v4966 = vsel %vm3698, %v3643, 0
        %v4969 = vsel %vm3698, %v3645, 0
        %v4972 = vsel %vm3698, %v3647, 0
        %v4975 = vsel %vm3698, %v3649, 0
        %v4978 = vsel %vm3698, %v3651, 0
        %v4981 = vsel %vm3698, %v3653, 0
        %4983 = vmatprep.subr.bf16.mxu0 0
        %4984 = vmatpush1.bf16.xpose.msra.mxu0 %v4936
        %4985 = vmatprep.subr.bf16.mxu0 0
        %4986 = vmatpush1.bf16.xpose.msra.mxu0 %v4939
        %4987 = vmatprep.subr.bf16.mxu0 0
        %4988 = vmatpush1.bf16.xpose.msra.mxu0 %v4942
        %4989 = vmatprep.subr.bf16.mxu0 0
        %4990 = vmatpush1.bf16.xpose.msra.mxu0 %v4945
        %4991 = vmatprep.subr.bf16.mxu0 0
        %4992 = vmatpush1.bf16.xpose.msra.mxu0 %v4948
        %4993 = vmatprep.subr.bf16.mxu0 0
        %4994 = vmatpush1.bf16.xpose.msra.mxu0 %v4951
        %4995 = vmatprep.subr.bf16.mxu0 0
        %4996 = vmatpush1.bf16.xpose.msra.mxu0 %v4954
        %4997 = vmatprep.subr.bf16.mxu0 0
        %4998 = vmatpush1.bf16.xpose.msra.mxu0 %v4957
        %4999 = vmatprep.subr.bf16.mxu0 0
        %5000 = vmatpush1.bf16.xpose.msra.mxu0 %v4960
        %5001 = vmatprep.subr.bf16.mxu0 0
        %5002 = vmatpush1.bf16.xpose.msra.mxu0 %v4963
        %5003 = vmatprep.subr.bf16.mxu0 0
        %5004 = vmatpush1.bf16.xpose.msra.mxu0 %v4966
        %5005 = vmatprep.subr.bf16.mxu0 0
        %5006 = vmatpush1.bf16.xpose.msra.mxu0 %v4969
        %5007 = vmatprep.subr.bf16.mxu0 0
        %5008 = vmatpush1.bf16.xpose.msra.mxu0 %v4972
        %5009 = vmatprep.subr.bf16.mxu0 0
        %5010 = vmatpush1.bf16.xpose.msra.mxu0 %v4975
        %5011 = vmatprep.subr.bf16.mxu0 0
        %5012 = vmatpush1.bf16.xpose.msra.mxu0 %v4978
        %5013 = vmatprep.subr.bf16.mxu0 0
        %5014 = vmatpush1.bf16.xpose.msra.mxu0 %v4981
        %5015 = vmatprep.mubr.bf16.mxu0 0
        %5016 = vmatmul.mubr.bf16.gmra.mrb[0].mxu0 %v4912
        %v5017 = vpop.f32.mrb[0].mxu0
        %v5018 = vadd.f32 %v3691, %v5017
        %v5019 = vpop.f32.mrb[0].mxu0
        %v5020 = vadd.f32 %v3695, %v5019
        %v5021 = vpop.f32.mrb[0].mxu0
        %v5022 = vadd.f32 %v3691, %v5021
        %v5023 = vpop.f32.mrb[0].mxu0
        %v5024 = vadd.f32 %v3695, %v5023
        %5025 = vmatprep.mubr.bf16.mxu0 0
        %5026 = vmatmul.mubr.bf16.gmra.mrb[0].mxu0 %v4915
        %v5027 = vpop.f32.mrb[0].mxu0
        %v5028 = vadd.f32 %v3691, %v5027
        %v5029 = vpop.f32.mrb[0].mxu0
        %v5030 = vadd.f32 %v3695, %v5029
        %v5031 = vpop.f32.mrb[0].mxu0
        %v5032 = vadd.f32 %v3691, %v5031
        %v5033 = vpop.f32.mrb[0].mxu0
        %v5034 = vadd.f32 %v3695, %v5033
        %5035 = vmatprep.mubr.bf16.mxu0 0
        %5036 = vmatmul.mubr.bf16.gmra.mrb[0].mxu0 %v4918
        %v5037 = vpop.f32.mrb[0].mxu0
        %v5038 = vadd.f32 %v3691, %v5037
        %v5039 = vpop.f32.mrb[0].mxu0
        %v5040 = vadd.f32 %v3695, %v5039
        %v5041 = vpop.f32.mrb[0].mxu0
        %v5042 = vadd.f32 %v3691, %v5041
        %v5043 = vpop.f32.mrb[0].mxu0
        %v5044 = vadd.f32 %v3695, %v5043
        %5045 = vmatprep.mubr.bf16.mxu0 0
        %5046 = vmatmul.mubr.bf16.gmra.mrb[0].mxu0 %v4921
        %v5047 = vpop.f32.mrb[0].mxu0
        %v5048 = vadd.f32 %v3691, %v5047
        %v5049 = vpop.f32.mrb[0].mxu0
        %v5050 = vadd.f32 %v3695, %v5049
        %v5051 = vpop.f32.mrb[0].mxu0
        %v5052 = vadd.f32 %v3691, %v5051
        %v5053 = vpop.f32.mrb[0].mxu0
        %v5054 = vadd.f32 %v3695, %v5053
        %5055 = vmatprep.mubr.bf16.mxu0 0
        %5056 = vmatmul.mubr.bf16.gmra.mrb[0].mxu0 %v4924
        %v5057 = vpop.f32.mrb[0].mxu0
        %v5058 = vadd.f32 %v3691, %v5057
        %v5059 = vpop.f32.mrb[0].mxu0
        %v5060 = vadd.f32 %v3695, %v5059
        %v5061 = vpop.f32.mrb[0].mxu0
        %v5062 = vadd.f32 %v3691, %v5061
        %v5063 = vpop.f32.mrb[0].mxu0
        %v5064 = vadd.f32 %v3695, %v5063
        %5065 = vmatprep.mubr.bf16.mxu0 0
        %5066 = vmatmul.mubr.bf16.gmra.mrb[0].mxu0 %v4927
        %v5067 = vpop.f32.mrb[0].mxu0
        %v5068 = vadd.f32 %v3691, %v5067
        %v5069 = vpop.f32.mrb[0].mxu0
        %v5070 = vadd.f32 %v3695, %v5069
        %v5071 = vpop.f32.mrb[0].mxu0
        %v5072 = vadd.f32 %v3691, %v5071
        %v5073 = vpop.f32.mrb[0].mxu0
        %v5074 = vadd.f32 %v3695, %v5073
        %5075 = vmatprep.mubr.bf16.mxu0 0
        %5076 = vmatmul.mubr.bf16.gmra.mrb[0].mxu0 %v4930
        %v5077 = vpop.f32.mrb[0].mxu0
        %v5078 = vadd.f32 %v3691, %v5077
        %v5079 = vpop.f32.mrb[0].mxu0
        %v5080 = vadd.f32 %v3695, %v5079
        %v5081 = vpop.f32.mrb[0].mxu0
        %v5082 = vadd.f32 %v3691, %v5081
        %v5083 = vpop.f32.mrb[0].mxu0
        %v5084 = vadd.f32 %v3695, %v5083
        %5085 = vmatprep.mubr.bf16.mxu0 0
        %5086 = vmatmul.mubr.bf16.gmra.mrb[0].mxu0 %v4933
        %v5087 = vpop.f32.mrb[0].mxu0
        %v5088 = vadd.f32 %v3691, %v5087
        %v5089 = vpop.f32.mrb[0].mxu0
        %v5090 = vadd.f32 %v3695, %v5089
        %v5091 = vpop.f32.mrb[0].mxu0
        %v5092 = vadd.f32 %v3691, %v5091
        %v5093 = vpop.f32.mrb[0].mxu0
        %v5094 = vadd.f32 %v3695, %v5093
        %5095 = vdwg.mxu0
        %v5096 = vmax.f32 %v5018, %v5020
        %5097 = vmax.xlane.f32.xlu0 %v5096
        %v5098 = vpop.xlane.xlu0 %5097
        %v5099 = vmax.f32 %v5022, %v5024
        %5100 = vmax.xlane.f32.xlu0 %v5099
        %v5101 = vpop.xlane.xlu0 %5100
        %v5102 = vmax.f32 %v5028, %v5030
        %5103 = vmax.xlane.f32.xlu0 %v5102
        %v5104 = vpop.xlane.xlu0 %5103
        %v5105 = vmax.f32 %v5032, %v5034
        %5106 = vmax.xlane.f32.xlu0 %v5105
        %v5107 = vpop.xlane.xlu0 %5106
        %v5108 = vmax.f32 %v5038, %v5040
        %5109 = vmax.xlane.f32.xlu0 %v5108
        %v5110 = vpop.xlane.xlu0 %5109
        %v5111 = vmax.f32 %v5042, %v5044
        %5112 = vmax.xlane.f32.xlu0 %v5111
        %v5113 = vpop.xlane.xlu0 %5112
        %v5114 = vmax.f32 %v5048, %v5050
        %5115 = vmax.xlane.f32.xlu0 %v5114
        %v5116 = vpop.xlane.xlu0 %5115
        %v5117 = vmax.f32 %v5052, %v5054
        %5118 = vmax.xlane.f32.xlu0 %v5117
        %v5119 = vpop.xlane.xlu0 %5118
        %v5120 = vmax.f32 %v5058, %v5060
        %5121 = vmax.xlane.f32.xlu0 %v5120
        %v5122 = vpop.xlane.xlu0 %5121
        %v5123 = vmax.f32 %v5062, %v5064
        %5124 = vmax.xlane.f32.xlu0 %v5123
        %v5125 = vpop.xlane.xlu0 %5124
        %v5126 = vmax.f32 %v5068, %v5070
        %5127 = vmax.xlane.f32.xlu0 %v5126
        %v5128 = vpop.xlane.xlu0 %5127
        %v5129 = vmax.f32 %v5072, %v5074
        %5130 = vmax.xlane.f32.xlu0 %v5129
        %v5131 = vpop.xlane.xlu0 %5130
        %v5132 = vmax.f32 %v5078, %v5080
        %5133 = vmax.xlane.f32.xlu0 %v5132
        %v5134 = vpop.xlane.xlu0 %5133
        %v5135 = vmax.f32 %v5082, %v5084
        %5136 = vmax.xlane.f32.xlu0 %v5135
        %v5137 = vpop.xlane.xlu0 %5136
        %v5138 = vmax.f32 %v5088, %v5090
        %5139 = vmax.xlane.f32.xlu0 %v5138
        %v5140 = vpop.xlane.xlu0 %5139
        %v5141 = vmax.f32 %v5092, %v5094
        %5142 = vmax.xlane.f32.xlu0 %v5141
        %v5143 = vpop.xlane.xlu0 %5142
        %v5144 = vsub.f32 %v5018, %v5098
        %v5145 = vsub.f32 %v5020, %v5098
        %v5146 = vsub.f32 %v5022, %v5101
        %v5147 = vsub.f32 %v5024, %v5101
        %v5148 = vsub.f32 %v5028, %v5104
        %v5149 = vsub.f32 %v5030, %v5104
        %v5150 = vsub.f32 %v5032, %v5107
        %v5151 = vsub.f32 %v5034, %v5107
        %v5152 = vsub.f32 %v5038, %v5110
        %v5153 = vsub.f32 %v5040, %v5110
        %v5154 = vsub.f32 %v5042, %v5113
        %v5155 = vsub.f32 %v5044, %v5113
        %v5156 = vsub.f32 %v5048, %v5116
        %v5157 = vsub.f32 %v5050, %v5116
        %v5158 = vsub.f32 %v5052, %v5119
        %v5159 = vsub.f32 %v5054, %v5119
        %v5160 = vsub.f32 %v5058, %v5122
        %v5161 = vsub.f32 %v5060, %v5122
        %v5162 = vsub.f32 %v5062, %v5125
        %v5163 = vsub.f32 %v5064, %v5125
        %v5164 = vsub.f32 %v5068, %v5128
        %v5165 = vsub.f32 %v5070, %v5128
        %v5166 = vsub.f32 %v5072, %v5131
        %v5167 = vsub.f32 %v5074, %v5131
        %v5168 = vsub.f32 %v5078, %v5134
        %v5169 = vsub.f32 %v5080, %v5134
        %v5170 = vsub.f32 %v5082, %v5137
        %v5171 = vsub.f32 %v5084, %v5137
        %v5172 = vsub.f32 %v5088, %v5140
        %v5173 = vsub.f32 %v5090, %v5140
        %v5174 = vsub.f32 %v5092, %v5143
        %v5175 = vsub.f32 %v5094, %v5143
        %v5176 = vmul.f32 %v5144, 1.442695
        %v5177 = vpow.pop %v5176
        %v5178 = vmul.f32 %v5145, 1.442695
        %v5179 = vpow.pop %v5178
        %v5180 = vmul.f32 %v5146, 1.442695
        %v5181 = vpow.pop %v5180
        %v5182 = vmul.f32 %v5147, 1.442695
        %v5183 = vpow.pop %v5182
        %v5184 = vmul.f32 %v5148, 1.442695
        %v5185 = vpow.pop %v5184
        %v5186 = vmul.f32 %v5149, 1.442695
        %v5187 = vpow.pop %v5186
        %v5188 = vmul.f32 %v5150, 1.442695
        %v5189 = vpow.pop %v5188
        %v5190 = vmul.f32 %v5151, 1.442695
        %v5191 = vpow.pop %v5190
        %v5192 = vmul.f32 %v5152, 1.442695
        %v5193 = vpow.pop %v5192
        %v5194 = vmul.f32 %v5153, 1.442695
        %v5195 = vpow.pop %v5194
        %v5196 = vmul.f32 %v5154, 1.442695
        %v5197 = vpow.pop %v5196
        %v5198 = vmul.f32 %v5155, 1.442695
        %v5199 = vpow.pop %v5198
        %v5200 = vmul.f32 %v5156, 1.442695
        %v5201 = vpow.pop %v5200
        %v5202 = vmul.f32 %v5157, 1.442695
        %v5203 = vpow.pop %v5202
        %v5204 = vmul.f32 %v5158, 1.442695
        %v5205 = vpow.pop %v5204
        %v5206 = vmul.f32 %v5159, 1.442695
        %v5207 = vpow.pop %v5206
        %v5208 = vmul.f32 %v5160, 1.442695
        %v5209 = vpow.pop %v5208
        %v5210 = vmul.f32 %v5161, 1.442695
        %v5211 = vpow.pop %v5210
        %v5212 = vmul.f32 %v5162, 1.442695
        %v5213 = vpow.pop %v5212
        %v5214 = vmul.f32 %v5163, 1.442695
        %v5215 = vpow.pop %v5214
        %v5216 = vmul.f32 %v5164, 1.442695
        %v5217 = vpow.pop %v5216
        %v5218 = vmul.f32 %v5165, 1.442695
        %v5219 = vpow.pop %v5218
        %v5220 = vmul.f32 %v5166, 1.442695
        %v5221 = vpow.pop %v5220
        %v5222 = vmul.f32 %v5167, 1.442695
        %v5223 = vpow.pop %v5222
        %v5224 = vmul.f32 %v5168, 1.442695
        %v5225 = vpow.pop %v5224
        %v5226 = vmul.f32 %v5169, 1.442695
        %v5227 = vpow.pop %v5226
        %v5228 = vmul.f32 %v5170, 1.442695
        %v5229 = vpow.pop %v5228
        %v5230 = vmul.f32 %v5171, 1.442695
        %v5231 = vpow.pop %v5230
        %v5232 = vmul.f32 %v5172, 1.442695
        %v5233 = vpow.pop %v5232
        %v5234 = vmul.f32 %v5173, 1.442695
        %v5235 = vpow.pop %v5234
        %v5236 = vmul.f32 %v5174, 1.442695
        %v5237 = vpow.pop %v5236
        %v5238 = vmul.f32 %v5175, 1.442695
        %v5239 = vpow.pop %v5238
        %v5240 = vadd.f32 %v5177, %v5179
        %5241 = vadd.xlane.f32.xlu0 %v5240
        %v5242 = vpop.xlane.xlu0 %5241
        %v5243 = vadd.f32 %v5181, %v5183
        %5244 = vadd.xlane.f32.xlu0 %v5243
        %v5245 = vpop.xlane.xlu0 %5244
        %v5246 = vadd.f32 %v5185, %v5187
        %5247 = vadd.xlane.f32.xlu0 %v5246
        %v5248 = vpop.xlane.xlu0 %5247
        %v5249 = vadd.f32 %v5189, %v5191
        %5250 = vadd.xlane.f32.xlu0 %v5249
        %v5251 = vpop.xlane.xlu0 %5250
        %v5252 = vadd.f32 %v5193, %v5195
        %5253 = vadd.xlane.f32.xlu0 %v5252
        %v5254 = vpop.xlane.xlu0 %5253
        %v5255 = vadd.f32 %v5197, %v5199
        %5256 = vadd.xlane.f32.xlu0 %v5255
        %v5257 = vpop.xlane.xlu0 %5256
        %v5258 = vadd.f32 %v5201, %v5203
        %5259 = vadd.xlane.f32.xlu0 %v5258
        %v5260 = vpop.xlane.xlu0 %5259
        %v5261 = vadd.f32 %v5205, %v5207
        %5262 = vadd.xlane.f32.xlu0 %v5261
        %v5263 = vpop.xlane.xlu0 %5262
        %v5264 = vadd.f32 %v5209, %v5211
        %5265 = vadd.xlane.f32.xlu0 %v5264
        %v5266 = vpop.xlane.xlu0 %5265
        %v5267 = vadd.f32 %v5213, %v5215
        %5268 = vadd.xlane.f32.xlu0 %v5267
        %v5269 = vpop.xlane.xlu0 %5268
        %v5270 = vadd.f32 %v5217, %v5219
        %5271 = vadd.xlane.f32.xlu0 %v5270
        %v5272 = vpop.xlane.xlu0 %5271
        %v5273 = vadd.f32 %v5221, %v5223
        %5274 = vadd.xlane.f32.xlu0 %v5273
        %v5275 = vpop.xlane.xlu0 %5274
        %v5276 = vadd.f32 %v5225, %v5227
        %5277 = vadd.xlane.f32.xlu0 %v5276
        %v5278 = vpop.xlane.xlu0 %5277
        %v5279 = vadd.f32 %v5229, %v5231
        %5280 = vadd.xlane.f32.xlu0 %v5279
        %v5281 = vpop.xlane.xlu0 %5280
        %v5282 = vadd.f32 %v5233, %v5235
        %5283 = vadd.xlane.f32.xlu0 %v5282
        %v5284 = vpop.xlane.xlu0 %5283
        %v5285 = vadd.f32 %v5237, %v5239
        %5286 = vadd.xlane.f32.xlu0 %v5285
        %v5287 = vpop.xlane.xlu0 %5286
        %v5288 = vrcp.pop %v5242
        %v5289 = vrcp.pop %v5245
        %v5290 = vrcp.pop %v5248
        %v5291 = vrcp.pop %v5251
        %v5292 = vrcp.pop %v5254
        %v5293 = vrcp.pop %v5257
        %v5294 = vrcp.pop %v5260
        %v5295 = vrcp.pop %v5263
        %v5296 = vrcp.pop %v5266
        %v5297 = vrcp.pop %v5269
        %v5298 = vrcp.pop %v5272
        %v5299 = vrcp.pop %v5275
        %v5300 = vrcp.pop %v5278
        %v5301 = vrcp.pop %v5281
        %v5302 = vrcp.pop %v5284
        %v5303 = vrcp.pop %v5287
        %v5304 = vmul.f32 %v5177, %v5288
        %v5305 = vmul.f32 %v5179, %v5288
        %v5306 = vmul.f32 %v5181, %v5289
        %v5307 = vmul.f32 %v5183, %v5289
        %v5308 = vmul.f32 %v5185, %v5290
        %v5309 = vmul.f32 %v5187, %v5290
        %v5310 = vmul.f32 %v5189, %v5291
        %v5311 = vmul.f32 %v5191, %v5291
        %v5312 = vmul.f32 %v5193, %v5292
        %v5313 = vmul.f32 %v5195, %v5292
        %v5314 = vmul.f32 %v5197, %v5293
        %v5315 = vmul.f32 %v5199, %v5293
        %v5316 = vmul.f32 %v5201, %v5294
        %v5317 = vmul.f32 %v5203, %v5294
        %v5318 = vmul.f32 %v5205, %v5295
        %v5319 = vmul.f32 %v5207, %v5295
        %v5320 = vmul.f32 %v5209, %v5296
        %v5321 = vmul.f32 %v5211, %v5296
        %v5322 = vmul.f32 %v5213, %v5297
        %v5323 = vmul.f32 %v5215, %v5297
        %v5324 = vmul.f32 %v5217, %v5298
        %v5325 = vmul.f32 %v5219, %v5298
        %v5326 = vmul.f32 %v5221, %v5299
        %v5327 = vmul.f32 %v5223, %v5299
        %v5328 = vmul.f32 %v5225, %v5300
        %v5329 = vmul.f32 %v5227, %v5300
        %v5330 = vmul.f32 %v5229, %v5301
        %v5331 = vmul.f32 %v5231, %v5301
        %v5332 = vmul.f32 %v5233, %v5302
        %v5333 = vmul.f32 %v5235, %v5302
        %v5334 = vmul.f32 %v5237, %v5303
        %v5335 = vmul.f32 %v5239, %v5303
        %v5336 = vpack.c.bf16 %v5306, %v5304
        %v5337 = vpack.c.bf16 %v5307, %v5305
        %v5338 = vpack.c.bf16 %v5310, %v5308
        %v5339 = vpack.c.bf16 %v5311, %v5309
        %v5340 = vpack.c.bf16 %v5314, %v5312
        %v5341 = vpack.c.bf16 %v5315, %v5313
        %v5342 = vpack.c.bf16 %v5318, %v5316
        %v5343 = vpack.c.bf16 %v5319, %v5317
        %v5344 = vpack.c.bf16 %v5322, %v5320
        %v5345 = vpack.c.bf16 %v5323, %v5321
        %v5346 = vpack.c.bf16 %v5326, %v5324
        %v5347 = vpack.c.bf16 %v5327, %v5325
        %v5348 = vpack.c.bf16 %v5330, %v5328
        %v5349 = vpack.c.bf16 %v5331, %v5329
        %v5350 = vpack.c.bf16 %v5334, %v5332
        %v5351 = vpack.c.bf16 %v5335, %v5333
        %5352 = vmatprep.subr.bf16.mxu0 0
        %5353 = vmatpush1.bf16.msra.mxu0 %v3655
        %5354 = vmatprep.subr.bf16.mxu0 0
        %5355 = vmatpush1.bf16.msra.mxu0 %v3657
        %5356 = vmatprep.subr.bf16.mxu0 0
        %5357 = vmatpush1.bf16.msra.mxu0 %v3659
        %5358 = vmatprep.subr.bf16.mxu0 0
        %5359 = vmatpush1.bf16.msra.mxu0 %v3661
        %5360 = vmatprep.subr.bf16.mxu0 0
        %5361 = vmatpush1.bf16.msra.mxu0 %v3663
        %5362 = vmatprep.subr.bf16.mxu0 0
        %5363 = vmatpush1.bf16.msra.mxu0 %v3665
        %5364 = vmatprep.subr.bf16.mxu0 0
        %5365 = vmatpush1.bf16.msra.mxu0 %v3667
        %5366 = vmatprep.subr.bf16.mxu0 0
        %5367 = vmatpush1.bf16.msra.mxu0 %v3669
        %5368 = vmatprep.subr.bf16.mxu0 0
        %5369 = vmatpush1.bf16.msra.mxu0 %v3671
        %5370 = vmatprep.subr.bf16.mxu0 0
        %5371 = vmatpush1.bf16.msra.mxu0 %v3673
        %5372 = vmatprep.subr.bf16.mxu0 0
        %5373 = vmatpush1.bf16.msra.mxu0 %v3675
        %5374 = vmatprep.subr.bf16.mxu0 0
        %5375 = vmatpush1.bf16.msra.mxu0 %v3677
        %5376 = vmatprep.subr.bf16.mxu0 0
        %5377 = vmatpush1.bf16.msra.mxu0 %v3679
        %5378 = vmatprep.subr.bf16.mxu0 0
        %5379 = vmatpush1.bf16.msra.mxu0 %v3681
        %5380 = vmatprep.subr.bf16.mxu0 0
        %5381 = vmatpush1.bf16.msra.mxu0 %v3683
        %5382 = vmatprep.subr.bf16.mxu0 0
        %5383 = vmatpush1.bf16.msra.mxu0 %v3685
        %5384 = vmatprep.mubr.bf16.mxu0 %v5337
        %5385 = vmatmul.mubr.bf16.gmra.mrb[0].mxu0 %v5336
        %v5386 = vpop.f32.mrb[0].mxu0
        %v5387 = vadd.f32 0.0, %v5386
        %v5388 = vpop.f32.mrb[0].mxu0
        %v5389 = vpop.f32.mrb[0].mxu0
        %v5390 = vadd.f32 0.0, %v5389
        %v5391 = vpop.f32.mrb[0].mxu0
        %5392 = vmatprep.mubr.bf16.mxu0 %v5339
        %5393 = vmatmul.mubr.bf16.gmra.mrb[0].mxu0 %v5338
        %v5394 = vpop.f32.mrb[0].mxu0
        %v5395 = vadd.f32 0.0, %v5394
        %v5396 = vpop.f32.mrb[0].mxu0
        %v5397 = vpop.f32.mrb[0].mxu0
        %v5398 = vadd.f32 0.0, %v5397
        %v5399 = vpop.f32.mrb[0].mxu0
        %5400 = vmatprep.mubr.bf16.mxu0 %v5341
        %5401 = vmatmul.mubr.bf16.gmra.mrb[0].mxu0 %v5340
        %v5402 = vpop.f32.mrb[0].mxu0
        %v5403 = vadd.f32 0.0, %v5402
        %v5404 = vpop.f32.mrb[0].mxu0
        %v5405 = vpop.f32.mrb[0].mxu0
        %v5406 = vadd.f32 0.0, %v5405
        %v5407 = vpop.f32.mrb[0].mxu0
        %5408 = vmatprep.mubr.bf16.mxu0 %v5343
        %5409 = vmatmul.mubr.bf16.gmra.mrb[0].mxu0 %v5342
        %v5410 = vpop.f32.mrb[0].mxu0
        %v5411 = vadd.f32 0.0, %v5410
        %v5412 = vpop.f32.mrb[0].mxu0
        %v5413 = vpop.f32.mrb[0].mxu0
        %v5414 = vadd.f32 0.0, %v5413
        %v5415 = vpop.f32.mrb[0].mxu0
        %5416 = vmatprep.mubr.bf16.mxu0 %v5345
        %5417 = vmatmul.mubr.bf16.gmra.mrb[0].mxu0 %v5344
        %v5418 = vpop.f32.mrb[0].mxu0
        %v5419 = vadd.f32 0.0, %v5418
        %v5420 = vpop.f32.mrb[0].mxu0
        %v5421 = vpop.f32.mrb[0].mxu0
        %v5422 = vadd.f32 0.0, %v5421
        %v5423 = vpop.f32.mrb[0].mxu0
        %5424 = vmatprep.mubr.bf16.mxu0 %v5347
        %5425 = vmatmul.mubr.bf16.gmra.mrb[0].mxu0 %v5346
        %v5426 = vpop.f32.mrb[0].mxu0
        %v5427 = vadd.f32 0.0, %v5426
        %v5428 = vpop.f32.mrb[0].mxu0
        %v5429 = vpop.f32.mrb[0].mxu0
        %v5430 = vadd.f32 0.0, %v5429
        %v5431 = vpop.f32.mrb[0].mxu0
        %5432 = vmatprep.mubr.bf16.mxu0 %v5349
        %5433 = vmatmul.mubr.bf16.gmra.mrb[0].mxu0 %v5348
        %v5434 = vpop.f32.mrb[0].mxu0
        %v5435 = vadd.f32 0.0, %v5434
        %v5436 = vpop.f32.mrb[0].mxu0
        %v5437 = vpop.f32.mrb[0].mxu0
        %v5438 = vadd.f32 0.0, %v5437
        %v5439 = vpop.f32.mrb[0].mxu0
        %5440 = vmatprep.mubr.bf16.mxu0 %v5351
        %5441 = vmatmul.mubr.bf16.gmra.mrb[0].mxu0 %v5350
        %v5442 = vpop.f32.mrb[0].mxu0
        %v5443 = vadd.f32 0.0, %v5442
        %v5444 = vpop.f32.mrb[0].mxu0
        %v5445 = vpop.f32.mrb[0].mxu0
        %v5446 = vadd.f32 0.0, %v5445
        %v5447 = vpop.f32.mrb[0].mxu0
        %5448 = vdwg.mxu0
        %5457 = vrot.lane.b32.xlu0 %v3607, 64
        %v5458 = vpop.permute.xlu0 %5457
        %5459 = vrot.lane.b32.xlu0 %v3609, 64
        %v5460 = vpop.permute.xlu0 %5459
        %5461 = vrot.lane.b32.xlu0 %v3611, 64
        %v5462 = vpop.permute.xlu0 %5461
        %5463 = vrot.lane.b32.xlu0 %v3613, 64
        %v5464 = vpop.permute.xlu0 %5463
        %5465 = vrot.lane.b32.xlu0 %v3615, 64
        %v5466 = vpop.permute.xlu0 %5465
        %5467 = vrot.lane.b32.xlu0 %v3617, 64
        %v5468 = vpop.permute.xlu0 %5467
        %5469 = vrot.lane.b32.xlu0 %v3619, 64
        %v5470 = vpop.permute.xlu0 %5469
        %5471 = vrot.lane.b32.xlu0 %v3621, 64
        %v5472 = vpop.permute.xlu0 %5471
        %5489 = vrot.lane.b32.xlu0 %v3623, 64
        %v5490 = vpop.permute.xlu0 %5489
        %5491 = vrot.lane.b32.xlu0 %v3625, 64
        %v5492 = vpop.permute.xlu0 %5491
        %5493 = vrot.lane.b32.xlu0 %v3627, 64
        %v5494 = vpop.permute.xlu0 %5493
        %5495 = vrot.lane.b32.xlu0 %v3629, 64
        %v5496 = vpop.permute.xlu0 %5495
        %5497 = vrot.lane.b32.xlu0 %v3631, 64
        %v5498 = vpop.permute.xlu0 %5497
        %5499 = vrot.lane.b32.xlu0 %v3633, 64
        %v5500 = vpop.permute.xlu0 %5499
        %5501 = vrot.lane.b32.xlu0 %v3635, 64
        %v5502 = vpop.permute.xlu0 %5501
        %5503 = vrot.lane.b32.xlu0 %v3637, 64
        %v5504 = vpop.permute.xlu0 %5503
        %5505 = vrot.lane.b32.xlu0 %v3639, 64
        %v5506 = vpop.permute.xlu0 %5505
        %5507 = vrot.lane.b32.xlu0 %v3641, 64
        %v5508 = vpop.permute.xlu0 %5507
        %5509 = vrot.lane.b32.xlu0 %v3643, 64
        %v5510 = vpop.permute.xlu0 %5509
        %5511 = vrot.lane.b32.xlu0 %v3645, 64
        %v5512 = vpop.permute.xlu0 %5511
        %5513 = vrot.lane.b32.xlu0 %v3647, 64
        %v5514 = vpop.permute.xlu0 %5513
        %5515 = vrot.lane.b32.xlu0 %v3649, 64
        %v5516 = vpop.permute.xlu0 %5515
        %5517 = vrot.lane.b32.xlu0 %v3651, 64
        %v5518 = vpop.permute.xlu0 %5517
        %5519 = vrot.lane.b32.xlu0 %v3653, 64
        %v5520 = vpop.permute.xlu0 %5519
        %v5522 = vsel %vm3698, %v5458, 0
        %v5525 = vsel %vm3698, %v5460, 0
        %v5528 = vsel %vm3698, %v5462, 0
        %v5531 = vsel %vm3698, %v5464, 0
        %v5534 = vsel %vm3698, %v5466, 0
        %v5537 = vsel %vm3698, %v5468, 0
        %v5540 = vsel %vm3698, %v5470, 0
        %v5543 = vsel %vm3698, %v5472, 0
        %v5546 = vsel %vm3698, %v5490, 0
        %v5549 = vsel %vm3698, %v5492, 0
        %v5552 = vsel %vm3698, %v5494, 0
        %v5555 = vsel %vm3698, %v5496, 0
        %v5558 = vsel %vm3698, %v5498, 0
        %v5561 = vsel %vm3698, %v5500, 0
        %v5564 = vsel %vm3698, %v5502, 0
        %v5567 = vsel %vm3698, %v5504, 0
        %v5570 = vsel %vm3698, %v5506, 0
        %v5573 = vsel %vm3698, %v5508, 0
        %v5576 = vsel %vm3698, %v5510, 0
        %v5579 = vsel %vm3698, %v5512, 0
        %v5582 = vsel %vm3698, %v5514, 0
        %v5585 = vsel %vm3698, %v5516, 0
        %v5588 = vsel %vm3698, %v5518, 0
        %v5591 = vsel %vm3698, %v5520, 0
        %5593 = vmatprep.subr.bf16.mxu0 0
        %5594 = vmatpush1.bf16.xpose.msra.mxu0 %v5546
        %5595 = vmatprep.subr.bf16.mxu0 0
        %5596 = vmatpush1.bf16.xpose.msra.mxu0 %v5549
        %5597 = vmatprep.subr.bf16.mxu0 0
        %5598 = vmatpush1.bf16.xpose.msra.mxu0 %v5552
        %5599 = vmatprep.subr.bf16.mxu0 0
        %5600 = vmatpush1.bf16.xpose.msra.mxu0 %v5555
        %5601 = vmatprep.subr.bf16.mxu0 0
        %5602 = vmatpush1.bf16.xpose.msra.mxu0 %v5558
        %5603 = vmatprep.subr.bf16.mxu0 0
        %5604 = vmatpush1.bf16.xpose.msra.mxu0 %v5561
        %5605 = vmatprep.subr.bf16.mxu0 0
        %5606 = vmatpush1.bf16.xpose.msra.mxu0 %v5564
        %5607 = vmatprep.subr.bf16.mxu0 0
        %5608 = vmatpush1.bf16.xpose.msra.mxu0 %v5567
        %5609 = vmatprep.subr.bf16.mxu0 0
        %5610 = vmatpush1.bf16.xpose.msra.mxu0 %v5570
        %5611 = vmatprep.subr.bf16.mxu0 0
        %5612 = vmatpush1.bf16.xpose.msra.mxu0 %v5573
        %5613 = vmatprep.subr.bf16.mxu0 0
        %5614 = vmatpush1.bf16.xpose.msra.mxu0 %v5576
        %5615 = vmatprep.subr.bf16.mxu0 0
        %5616 = vmatpush1.bf16.xpose.msra.mxu0 %v5579
        %5617 = vmatprep.subr.bf16.mxu0 0
        %5618 = vmatpush1.bf16.xpose.msra.mxu0 %v5582
        %5619 = vmatprep.subr.bf16.mxu0 0
        %5620 = vmatpush1.bf16.xpose.msra.mxu0 %v5585
        %5621 = vmatprep.subr.bf16.mxu0 0
        %5622 = vmatpush1.bf16.xpose.msra.mxu0 %v5588
        %5623 = vmatprep.subr.bf16.mxu0 0
        %5624 = vmatpush1.bf16.xpose.msra.mxu0 %v5591
        %5625 = vmatprep.mubr.bf16.mxu0 0
        %5626 = vmatmul.mubr.bf16.gmra.mrb[0].mxu0 %v5522
        %v5627 = vpop.f32.mrb[0].mxu0
        %v5628 = vadd.f32 %v3691, %v5627
        %v5629 = vpop.f32.mrb[0].mxu0
        %v5630 = vadd.f32 %v3695, %v5629
        %v5631 = vpop.f32.mrb[0].mxu0
        %v5632 = vadd.f32 %v3691, %v5631
        %v5633 = vpop.f32.mrb[0].mxu0
        %v5634 = vadd.f32 %v3695, %v5633
        %5635 = vmatprep.mubr.bf16.mxu0 0
        %5636 = vmatmul.mubr.bf16.gmra.mrb[0].mxu0 %v5525
        %v5637 = vpop.f32.mrb[0].mxu0
        %v5638 = vadd.f32 %v3691, %v5637
        %v5639 = vpop.f32.mrb[0].mxu0
        %v5640 = vadd.f32 %v3695, %v5639
        %v5641 = vpop.f32.mrb[0].mxu0
        %v5642 = vadd.f32 %v3691, %v5641
        %v5643 = vpop.f32.mrb[0].mxu0
        %v5644 = vadd.f32 %v3695, %v5643
        %5645 = vmatprep.mubr.bf16.mxu0 0
        %5646 = vmatmul.mubr.bf16.gmra.mrb[0].mxu0 %v5528
        %v5647 = vpop.f32.mrb[0].mxu0
        %v5648 = vadd.f32 %v3691, %v5647
        %v5649 = vpop.f32.mrb[0].mxu0
        %v5650 = vadd.f32 %v3695, %v5649
        %v5651 = vpop.f32.mrb[0].mxu0
        %v5652 = vadd.f32 %v3691, %v5651
        %v5653 = vpop.f32.mrb[0].mxu0
        %v5654 = vadd.f32 %v3695, %v5653
        %5655 = vmatprep.mubr.bf16.mxu0 0
        %5656 = vmatmul.mubr.bf16.gmra.mrb[0].mxu0 %v5531
        %v5657 = vpop.f32.mrb[0].mxu0
        %v5658 = vadd.f32 %v3691, %v5657
        %v5659 = vpop.f32.mrb[0].mxu0
        %v5660 = vadd.f32 %v3695, %v5659
        %v5661 = vpop.f32.mrb[0].mxu0
        %v5662 = vadd.f32 %v3691, %v5661
        %v5663 = vpop.f32.mrb[0].mxu0
        %v5664 = vadd.f32 %v3695, %v5663
        %5665 = vmatprep.mubr.bf16.mxu0 0
        %5666 = vmatmul.mubr.bf16.gmra.mrb[0].mxu0 %v5534
        %v5667 = vpop.f32.mrb[0].mxu0
        %v5668 = vadd.f32 %v3691, %v5667
        %v5669 = vpop.f32.mrb[0].mxu0
        %v5670 = vadd.f32 %v3695, %v5669
        %v5671 = vpop.f32.mrb[0].mxu0
        %v5672 = vadd.f32 %v3691, %v5671
        %v5673 = vpop.f32.mrb[0].mxu0
        %v5674 = vadd.f32 %v3695, %v5673
        %5675 = vmatprep.mubr.bf16.mxu0 0
        %5676 = vmatmul.mubr.bf16.gmra.mrb[0].mxu0 %v5537
        %v5677 = vpop.f32.mrb[0].mxu0
        %v5678 = vadd.f32 %v3691, %v5677
        %v5679 = vpop.f32.mrb[0].mxu0
        %v5680 = vadd.f32 %v3695, %v5679
        %v5681 = vpop.f32.mrb[0].mxu0
        %v5682 = vadd.f32 %v3691, %v5681
        %v5683 = vpop.f32.mrb[0].mxu0
        %v5684 = vadd.f32 %v3695, %v5683
        %5685 = vmatprep.mubr.bf16.mxu0 0
        %5686 = vmatmul.mubr.bf16.gmra.mrb[0].mxu0 %v5540
        %v5687 = vpop.f32.mrb[0].mxu0
        %v5688 = vadd.f32 %v3691, %v5687
        %v5689 = vpop.f32.mrb[0].mxu0
        %v5690 = vadd.f32 %v3695, %v5689
        %v5691 = vpop.f32.mrb[0].mxu0
        %v5692 = vadd.f32 %v3691, %v5691
        %v5693 = vpop.f32.mrb[0].mxu0
        %v5694 = vadd.f32 %v3695, %v5693
        %5695 = vmatprep.mubr.bf16.mxu0 0
        %5696 = vmatmul.mubr.bf16.gmra.mrb[0].mxu0 %v5543
        %v5697 = vpop.f32.mrb[0].mxu0
        %v5698 = vadd.f32 %v3691, %v5697
        %v5699 = vpop.f32.mrb[0].mxu0
        %v5700 = vadd.f32 %v3695, %v5699
        %v5701 = vpop.f32.mrb[0].mxu0
        %v5702 = vadd.f32 %v3691, %v5701
        %v5703 = vpop.f32.mrb[0].mxu0
        %v5704 = vadd.f32 %v3695, %v5703
        %5705 = vdwg.mxu0
        %v5706 = vmax.f32 %v5628, %v5630
        %5707 = vmax.xlane.f32.xlu0 %v5706
        %v5708 = vpop.xlane.xlu0 %5707
        %v5709 = vmax.f32 %v5632, %v5634
        %5710 = vmax.xlane.f32.xlu0 %v5709
        %v5711 = vpop.xlane.xlu0 %5710
        %v5712 = vmax.f32 %v5638, %v5640
        %5713 = vmax.xlane.f32.xlu0 %v5712
        %v5714 = vpop.xlane.xlu0 %5713
        %v5715 = vmax.f32 %v5642, %v5644
        %5716 = vmax.xlane.f32.xlu0 %v5715
        %v5717 = vpop.xlane.xlu0 %5716
        %v5718 = vmax.f32 %v5648, %v5650
        %5719 = vmax.xlane.f32.xlu0 %v5718
        %v5720 = vpop.xlane.xlu0 %5719
        %v5721 = vmax.f32 %v5652, %v5654
        %5722 = vmax.xlane.f32.xlu0 %v5721
        %v5723 = vpop.xlane.xlu0 %5722
        %v5724 = vmax.f32 %v5658, %v5660
        %5725 = vmax.xlane.f32.xlu0 %v5724
        %v5726 = vpop.xlane.xlu0 %5725
        %v5727 = vmax.f32 %v5662, %v5664
        %5728 = vmax.xlane.f32.xlu0 %v5727
        %v5729 = vpop.xlane.xlu0 %5728
        %v5730 = vmax.f32 %v5668, %v5670
        %5731 = vmax.xlane.f32.xlu0 %v5730
        %v5732 = vpop.xlane.xlu0 %5731
        %v5733 = vmax.f32 %v5672, %v5674
        %5734 = vmax.xlane.f32.xlu0 %v5733
        %v5735 = vpop.xlane.xlu0 %5734
        %v5736 = vmax.f32 %v5678, %v5680
        %5737 = vmax.xlane.f32.xlu0 %v5736
        %v5738 = vpop.xlane.xlu0 %5737
        %v5739 = vmax.f32 %v5682, %v5684
        %5740 = vmax.xlane.f32.xlu0 %v5739
        %v5741 = vpop.xlane.xlu0 %5740
        %v5742 = vmax.f32 %v5688, %v5690
        %5743 = vmax.xlane.f32.xlu0 %v5742
        %v5744 = vpop.xlane.xlu0 %5743
        %v5745 = vmax.f32 %v5692, %v5694
        %5746 = vmax.xlane.f32.xlu0 %v5745
        %v5747 = vpop.xlane.xlu0 %5746
        %v5748 = vmax.f32 %v5698, %v5700
        %5749 = vmax.xlane.f32.xlu0 %v5748
        %v5750 = vpop.xlane.xlu0 %5749
        %v5751 = vmax.f32 %v5702, %v5704
        %5752 = vmax.xlane.f32.xlu0 %v5751
        %v5753 = vpop.xlane.xlu0 %5752
        %v5754 = vsub.f32 %v5628, %v5708
        %v5755 = vsub.f32 %v5630, %v5708
        %v5756 = vsub.f32 %v5632, %v5711
        %v5757 = vsub.f32 %v5634, %v5711
        %v5758 = vsub.f32 %v5638, %v5714
        %v5759 = vsub.f32 %v5640, %v5714
        %v5760 = vsub.f32 %v5642, %v5717
        %v5761 = vsub.f32 %v5644, %v5717
        %v5762 = vsub.f32 %v5648, %v5720
        %v5763 = vsub.f32 %v5650, %v5720
        %v5764 = vsub.f32 %v5652, %v5723
        %v5765 = vsub.f32 %v5654, %v5723
        %v5766 = vsub.f32 %v5658, %v5726
        %v5767 = vsub.f32 %v5660, %v5726
        %v5768 = vsub.f32 %v5662, %v5729
        %v5769 = vsub.f32 %v5664, %v5729
        %v5770 = vsub.f32 %v5668, %v5732
        %v5771 = vsub.f32 %v5670, %v5732
        %v5772 = vsub.f32 %v5672, %v5735
        %v5773 = vsub.f32 %v5674, %v5735
        %v5774 = vsub.f32 %v5678, %v5738
        %v5775 = vsub.f32 %v5680, %v5738
        %v5776 = vsub.f32 %v5682, %v5741
        %v5777 = vsub.f32 %v5684, %v5741
        %v5778 = vsub.f32 %v5688, %v5744
        %v5779 = vsub.f32 %v5690, %v5744
        %v5780 = vsub.f32 %v5692, %v5747
        %v5781 = vsub.f32 %v5694, %v5747
        %v5782 = vsub.f32 %v5698, %v5750
        %v5783 = vsub.f32 %v5700, %v5750
        %v5784 = vsub.f32 %v5702, %v5753
        %v5785 = vsub.f32 %v5704, %v5753
        %v5786 = vmul.f32 %v5754, 1.442695
        %v5787 = vpow.pop %v5786
        %v5788 = vmul.f32 %v5755, 1.442695
        %v5789 = vpow.pop %v5788
        %v5790 = vmul.f32 %v5756, 1.442695
        %v5791 = vpow.pop %v5790
        %v5792 = vmul.f32 %v5757, 1.442695
        %v5793 = vpow.pop %v5792
        %v5794 = vmul.f32 %v5758, 1.442695
        %v5795 = vpow.pop %v5794
        %v5796 = vmul.f32 %v5759, 1.442695
        %v5797 = vpow.pop %v5796
        %v5798 = vmul.f32 %v5760, 1.442695
        %v5799 = vpow.pop %v5798
        %v5800 = vmul.f32 %v5761, 1.442695
        %v5801 = vpow.pop %v5800
        %v5802 = vmul.f32 %v5762, 1.442695
        %v5803 = vpow.pop %v5802
        %v5804 = vmul.f32 %v5763, 1.442695
        %v5805 = vpow.pop %v5804
        %v5806 = vmul.f32 %v5764, 1.442695
        %v5807 = vpow.pop %v5806
        %v5808 = vmul.f32 %v5765, 1.442695
        %v5809 = vpow.pop %v5808
        %v5810 = vmul.f32 %v5766, 1.442695
        %v5811 = vpow.pop %v5810
        %v5812 = vmul.f32 %v5767, 1.442695
        %v5813 = vpow.pop %v5812
        %v5814 = vmul.f32 %v5768, 1.442695
        %v5815 = vpow.pop %v5814
        %v5816 = vmul.f32 %v5769, 1.442695
        %v5817 = vpow.pop %v5816
        %v5818 = vmul.f32 %v5770, 1.442695
        %v5819 = vpow.pop %v5818
        %v5820 = vmul.f32 %v5771, 1.442695
        %v5821 = vpow.pop %v5820
        %v5822 = vmul.f32 %v5772, 1.442695
        %v5823 = vpow.pop %v5822
        %v5824 = vmul.f32 %v5773, 1.442695
        %v5825 = vpow.pop %v5824
        %v5826 = vmul.f32 %v5774, 1.442695
        %v5827 = vpow.pop %v5826
        %v5828 = vmul.f32 %v5775, 1.442695
        %v5829 = vpow.pop %v5828
        %v5830 = vmul.f32 %v5776, 1.442695
        %v5831 = vpow.pop %v5830
        %v5832 = vmul.f32 %v5777, 1.442695
        %v5833 = vpow.pop %v5832
        %v5834 = vmul.f32 %v5778, 1.442695
        %v5835 = vpow.pop %v5834
        %v5836 = vmul.f32 %v5779, 1.442695
        %v5837 = vpow.pop %v5836
        %v5838 = vmul.f32 %v5780, 1.442695
        %v5839 = vpow.pop %v5838
        %v5840 = vmul.f32 %v5781, 1.442695
        %v5841 = vpow.pop %v5840
        %v5842 = vmul.f32 %v5782, 1.442695
        %v5843 = vpow.pop %v5842
        %v5844 = vmul.f32 %v5783, 1.442695
        %v5845 = vpow.pop %v5844
        %v5846 = vmul.f32 %v5784, 1.442695
        %v5847 = vpow.pop %v5846
        %v5848 = vmul.f32 %v5785, 1.442695
        %v5849 = vpow.pop %v5848
        %v5850 = vadd.f32 %v5787, %v5789
        %5851 = vadd.xlane.f32.xlu0 %v5850
        %v5852 = vpop.xlane.xlu0 %5851
        %v5853 = vadd.f32 %v5791, %v5793
        %5854 = vadd.xlane.f32.xlu0 %v5853
        %v5855 = vpop.xlane.xlu0 %5854
        %v5856 = vadd.f32 %v5795, %v5797
        %5857 = vadd.xlane.f32.xlu0 %v5856
        %v5858 = vpop.xlane.xlu0 %5857
        %v5859 = vadd.f32 %v5799, %v5801
        %5860 = vadd.xlane.f32.xlu0 %v5859
        %v5861 = vpop.xlane.xlu0 %5860
        %v5862 = vadd.f32 %v5803, %v5805
        %5863 = vadd.xlane.f32.xlu0 %v5862
        %v5864 = vpop.xlane.xlu0 %5863
        %v5865 = vadd.f32 %v5807, %v5809
        %5866 = vadd.xlane.f32.xlu0 %v5865
        %v5867 = vpop.xlane.xlu0 %5866
        %v5868 = vadd.f32 %v5811, %v5813
        %5869 = vadd.xlane.f32.xlu0 %v5868
        %v5870 = vpop.xlane.xlu0 %5869
        %v5871 = vadd.f32 %v5815, %v5817
        %5872 = vadd.xlane.f32.xlu0 %v5871
        %v5873 = vpop.xlane.xlu0 %5872
        %v5874 = vadd.f32 %v5819, %v5821
        %5875 = vadd.xlane.f32.xlu0 %v5874
        %v5876 = vpop.xlane.xlu0 %5875
        %v5877 = vadd.f32 %v5823, %v5825
        %5878 = vadd.xlane.f32.xlu0 %v5877
        %v5879 = vpop.xlane.xlu0 %5878
        %v5880 = vadd.f32 %v5827, %v5829
        %5881 = vadd.xlane.f32.xlu0 %v5880
        %v5882 = vpop.xlane.xlu0 %5881
        %v5883 = vadd.f32 %v5831, %v5833
        %5884 = vadd.xlane.f32.xlu0 %v5883
        %v5885 = vpop.xlane.xlu0 %5884
        %v5886 = vadd.f32 %v5835, %v5837
        %5887 = vadd.xlane.f32.xlu0 %v5886
        %v5888 = vpop.xlane.xlu0 %5887
        %v5889 = vadd.f32 %v5839, %v5841
        %5890 = vadd.xlane.f32.xlu0 %v5889
        %v5891 = vpop.xlane.xlu0 %5890
        %v5892 = vadd.f32 %v5843, %v5845
        %5893 = vadd.xlane.f32.xlu0 %v5892
        %v5894 = vpop.xlane.xlu0 %5893
        %v5895 = vadd.f32 %v5847, %v5849
        %5896 = vadd.xlane.f32.xlu0 %v5895
        %v5897 = vpop.xlane.xlu0 %5896
        %v5898 = vrcp.pop %v5852
        %v5899 = vrcp.pop %v5855
        %v5900 = vrcp.pop %v5858
        %v5901 = vrcp.pop %v5861
        %v5902 = vrcp.pop %v5864
        %v5903 = vrcp.pop %v5867
        %v5904 = vrcp.pop %v5870
        %v5905 = vrcp.pop %v5873
        %v5906 = vrcp.pop %v5876
        %v5907 = vrcp.pop %v5879
        %v5908 = vrcp.pop %v5882
        %v5909 = vrcp.pop %v5885
        %v5910 = vrcp.pop %v5888
        %v5911 = vrcp.pop %v5891
        %v5912 = vrcp.pop %v5894
        %v5913 = vrcp.pop %v5897
        %v5914 = vmul.f32 %v5787, %v5898
        %v5915 = vmul.f32 %v5789, %v5898
        %v5916 = vmul.f32 %v5791, %v5899
        %v5917 = vmul.f32 %v5793, %v5899
        %v5918 = vmul.f32 %v5795, %v5900
        %v5919 = vmul.f32 %v5797, %v5900
        %v5920 = vmul.f32 %v5799, %v5901
        %v5921 = vmul.f32 %v5801, %v5901
        %v5922 = vmul.f32 %v5803, %v5902
        %v5923 = vmul.f32 %v5805, %v5902
        %v5924 = vmul.f32 %v5807, %v5903
        %v5925 = vmul.f32 %v5809, %v5903
        %v5926 = vmul.f32 %v5811, %v5904
        %v5927 = vmul.f32 %v5813, %v5904
        %v5928 = vmul.f32 %v5815, %v5905
        %v5929 = vmul.f32 %v5817, %v5905
        %v5930 = vmul.f32 %v5819, %v5906
        %v5931 = vmul.f32 %v5821, %v5906
        %v5932 = vmul.f32 %v5823, %v5907
        %v5933 = vmul.f32 %v5825, %v5907
        %v5934 = vmul.f32 %v5827, %v5908
        %v5935 = vmul.f32 %v5829, %v5908
        %v5936 = vmul.f32 %v5831, %v5909
        %v5937 = vmul.f32 %v5833, %v5909
        %v5938 = vmul.f32 %v5835, %v5910
        %v5939 = vmul.f32 %v5837, %v5910
        %v5940 = vmul.f32 %v5839, %v5911
        %v5941 = vmul.f32 %v5841, %v5911
        %v5942 = vmul.f32 %v5843, %v5912
        %v5943 = vmul.f32 %v5845, %v5912
        %v5944 = vmul.f32 %v5847, %v5913
        %v5945 = vmul.f32 %v5849, %v5913
        %v5946 = vpack.c.bf16 %v5916, %v5914
        %v5947 = vpack.c.bf16 %v5917, %v5915
        %v5948 = vpack.c.bf16 %v5920, %v5918
        %v5949 = vpack.c.bf16 %v5921, %v5919
        %v5950 = vpack.c.bf16 %v5924, %v5922
        %v5951 = vpack.c.bf16 %v5925, %v5923
        %v5952 = vpack.c.bf16 %v5928, %v5926
        %v5953 = vpack.c.bf16 %v5929, %v5927
        %v5954 = vpack.c.bf16 %v5932, %v5930
        %v5955 = vpack.c.bf16 %v5933, %v5931
        %v5956 = vpack.c.bf16 %v5936, %v5934
        %v5957 = vpack.c.bf16 %v5937, %v5935
        %v5958 = vpack.c.bf16 %v5940, %v5938
        %v5959 = vpack.c.bf16 %v5941, %v5939
        %v5960 = vpack.c.bf16 %v5944, %v5942
        %v5961 = vpack.c.bf16 %v5945, %v5943
        %5978 = vrot.lane.b32.xlu0 %v3655, 64
        %v5979 = vpop.permute.xlu0 %5978
        %5980 = vrot.lane.b32.xlu0 %v3657, 64
        %v5981 = vpop.permute.xlu0 %5980
        %5982 = vrot.lane.b32.xlu0 %v3659, 64
        %v5983 = vpop.permute.xlu0 %5982
        %5984 = vrot.lane.b32.xlu0 %v3661, 64
        %v5985 = vpop.permute.xlu0 %5984
        %5986 = vrot.lane.b32.xlu0 %v3663, 64
        %v5987 = vpop.permute.xlu0 %5986
        %5988 = vrot.lane.b32.xlu0 %v3665, 64
        %v5989 = vpop.permute.xlu0 %5988
        %5990 = vrot.lane.b32.xlu0 %v3667, 64
        %v5991 = vpop.permute.xlu0 %5990
        %5992 = vrot.lane.b32.xlu0 %v3669, 64
        %v5993 = vpop.permute.xlu0 %5992
        %5994 = vrot.lane.b32.xlu0 %v3671, 64
        %v5995 = vpop.permute.xlu0 %5994
        %5996 = vrot.lane.b32.xlu0 %v3673, 64
        %v5997 = vpop.permute.xlu0 %5996
        %5998 = vrot.lane.b32.xlu0 %v3675, 64
        %v5999 = vpop.permute.xlu0 %5998
        %6000 = vrot.lane.b32.xlu0 %v3677, 64
        %v6001 = vpop.permute.xlu0 %6000
        %6002 = vrot.lane.b32.xlu0 %v3679, 64
        %v6003 = vpop.permute.xlu0 %6002
        %6004 = vrot.lane.b32.xlu0 %v3681, 64
        %v6005 = vpop.permute.xlu0 %6004
        %6006 = vrot.lane.b32.xlu0 %v3683, 64
        %v6007 = vpop.permute.xlu0 %6006
        %6008 = vrot.lane.b32.xlu0 %v3685, 64
        %v6009 = vpop.permute.xlu0 %6008
        %6026 = vmatprep.subr.bf16.mxu0 0
        %6027 = vmatpush1.bf16.msra.mxu0 %v5979
        %6028 = vmatprep.subr.bf16.mxu0 0
        %6029 = vmatpush1.bf16.msra.mxu0 %v5981
        %6030 = vmatprep.subr.bf16.mxu0 0
        %6031 = vmatpush1.bf16.msra.mxu0 %v5983
        %6032 = vmatprep.subr.bf16.mxu0 0
        %6033 = vmatpush1.bf16.msra.mxu0 %v5985
        %6034 = vmatprep.subr.bf16.mxu0 0
        %6035 = vmatpush1.bf16.msra.mxu0 %v5987
        %6036 = vmatprep.subr.bf16.mxu0 0
        %6037 = vmatpush1.bf16.msra.mxu0 %v5989
        %6038 = vmatprep.subr.bf16.mxu0 0
        %6039 = vmatpush1.bf16.msra.mxu0 %v5991
        %6040 = vmatprep.subr.bf16.mxu0 0
        %6041 = vmatpush1.bf16.msra.mxu0 %v5993
        %6042 = vmatprep.subr.bf16.mxu0 0
        %6043 = vmatpush1.bf16.msra.mxu0 %v5995
        %6044 = vmatprep.subr.bf16.mxu0 0
        %6045 = vmatpush1.bf16.msra.mxu0 %v5997
        %6046 = vmatprep.subr.bf16.mxu0 0
        %6047 = vmatpush1.bf16.msra.mxu0 %v5999
        %6048 = vmatprep.subr.bf16.mxu0 0
        %6049 = vmatpush1.bf16.msra.mxu0 %v6001
        %6050 = vmatprep.subr.bf16.mxu0 0
        %6051 = vmatpush1.bf16.msra.mxu0 %v6003
        %6052 = vmatprep.subr.bf16.mxu0 0
        %6053 = vmatpush1.bf16.msra.mxu0 %v6005
        %6054 = vmatprep.subr.bf16.mxu0 0
        %6055 = vmatpush1.bf16.msra.mxu0 %v6007
        %6056 = vmatprep.subr.bf16.mxu0 0
        %6057 = vmatpush1.bf16.msra.mxu0 %v6009
        %6058 = vmatprep.mubr.bf16.mxu0 %v5947
        %6059 = vmatmul.mubr.bf16.gmra.mrb[0].mxu0 %v5946
        %v6060 = vpop.f32.mrb[0].mxu0
        %v6061 = vadd.f32 0.0, %v6060
        %v6062 = vpop.f32.mrb[0].mxu0
        %v6063 = vpop.f32.mrb[0].mxu0
        %v6064 = vadd.f32 0.0, %v6063
        %v6065 = vpop.f32.mrb[0].mxu0
        %6066 = vmatprep.mubr.bf16.mxu0 %v5949
        %6067 = vmatmul.mubr.bf16.gmra.mrb[0].mxu0 %v5948
        %v6068 = vpop.f32.mrb[0].mxu0
        %v6069 = vadd.f32 0.0, %v6068
        %v6070 = vpop.f32.mrb[0].mxu0
        %v6071 = vpop.f32.mrb[0].mxu0
        %v6072 = vadd.f32 0.0, %v6071
        %v6073 = vpop.f32.mrb[0].mxu0
        %6074 = vmatprep.mubr.bf16.mxu0 %v5951
        %6075 = vmatmul.mubr.bf16.gmra.mrb[0].mxu0 %v5950
        %v6076 = vpop.f32.mrb[0].mxu0
        %v6077 = vadd.f32 0.0, %v6076
        %v6078 = vpop.f32.mrb[0].mxu0
        %v6079 = vpop.f32.mrb[0].mxu0
        %v6080 = vadd.f32 0.0, %v6079
        %v6081 = vpop.f32.mrb[0].mxu0
        %6082 = vmatprep.mubr.bf16.mxu0 %v5953
        %6083 = vmatmul.mubr.bf16.gmra.mrb[0].mxu0 %v5952
        %v6084 = vpop.f32.mrb[0].mxu0
        %v6085 = vadd.f32 0.0, %v6084
        %v6086 = vpop.f32.mrb[0].mxu0
        %v6087 = vpop.f32.mrb[0].mxu0
        %v6088 = vadd.f32 0.0, %v6087
        %v6089 = vpop.f32.mrb[0].mxu0
        %6090 = vmatprep.mubr.bf16.mxu0 %v5955
        %6091 = vmatmul.mubr.bf16.gmra.mrb[0].mxu0 %v5954
        %v6092 = vpop.f32.mrb[0].mxu0
        %v6093 = vadd.f32 0.0, %v6092
        %v6094 = vpop.f32.mrb[0].mxu0
        %v6095 = vpop.f32.mrb[0].mxu0
        %v6096 = vadd.f32 0.0, %v6095
        %v6097 = vpop.f32.mrb[0].mxu0
        %6098 = vmatprep.mubr.bf16.mxu0 %v5957
        %6099 = vmatmul.mubr.bf16.gmra.mrb[0].mxu0 %v5956
        %v6100 = vpop.f32.mrb[0].mxu0
        %v6101 = vadd.f32 0.0, %v6100
        %v6102 = vpop.f32.mrb[0].mxu0
        %v6103 = vpop.f32.mrb[0].mxu0
        %v6104 = vadd.f32 0.0, %v6103
        %v6105 = vpop.f32.mrb[0].mxu0
        %6106 = vmatprep.mubr.bf16.mxu0 %v5959
        %6107 = vmatmul.mubr.bf16.gmra.mrb[0].mxu0 %v5958
        %v6108 = vpop.f32.mrb[0].mxu0
        %v6109 = vadd.f32 0.0, %v6108
        %v6110 = vpop.f32.mrb[0].mxu0
        %v6111 = vpop.f32.mrb[0].mxu0
        %v6112 = vadd.f32 0.0, %v6111
        %v6113 = vpop.f32.mrb[0].mxu0
        %6114 = vmatprep.mubr.bf16.mxu0 %v5961
        %6115 = vmatmul.mubr.bf16.gmra.mrb[0].mxu0 %v5960
        %v6116 = vpop.f32.mrb[0].mxu0
        %v6117 = vadd.f32 0.0, %v6116
        %v6118 = vpop.f32.mrb[0].mxu0
        %v6119 = vpop.f32.mrb[0].mxu0
        %v6120 = vadd.f32 0.0, %v6119
        %v6121 = vpop.f32.mrb[0].mxu0
        %6122 = vdwg.mxu0
        %6139 = vrot.lane.b32.xlu0 %v4849, 64
        %v6140 = vpop.permute.xlu0 %6139
        %6141 = vrot.lane.b32.xlu0 %v4852, 64
        %v6142 = vpop.permute.xlu0 %6141
        %6143 = vrot.lane.b32.xlu0 %v4857, 64
        %v6144 = vpop.permute.xlu0 %6143
        %6145 = vrot.lane.b32.xlu0 %v4860, 64
        %v6146 = vpop.permute.xlu0 %6145
        %6147 = vrot.lane.b32.xlu0 %v4865, 64
        %v6148 = vpop.permute.xlu0 %6147
        %6149 = vrot.lane.b32.xlu0 %v4868, 64
        %v6150 = vpop.permute.xlu0 %6149
        %6151 = vrot.lane.b32.xlu0 %v4873, 64
        %v6152 = vpop.permute.xlu0 %6151
        %6153 = vrot.lane.b32.xlu0 %v4876, 64
        %v6154 = vpop.permute.xlu0 %6153
        %6155 = vrot.lane.b32.xlu0 %v4881, 64
        %v6156 = vpop.permute.xlu0 %6155
        %6157 = vrot.lane.b32.xlu0 %v4884, 64
        %v6158 = vpop.permute.xlu0 %6157
        %6159 = vrot.lane.b32.xlu0 %v4889, 64
        %v6160 = vpop.permute.xlu0 %6159
        %6161 = vrot.lane.b32.xlu0 %v4892, 64
        %v6162 = vpop.permute.xlu0 %6161
        %6163 = vrot.lane.b32.xlu0 %v4897, 64
        %v6164 = vpop.permute.xlu0 %6163
        %6165 = vrot.lane.b32.xlu0 %v4900, 64
        %v6166 = vpop.permute.xlu0 %6165
        %6167 = vrot.lane.b32.xlu0 %v4905, 64
        %v6168 = vpop.permute.xlu0 %6167
        %6169 = vrot.lane.b32.xlu0 %v4908, 64
        %v6170 = vpop.permute.xlu0 %6169
        %6203 = vrot.lane.b32.xlu0 %v6061, 64
        %v6204 = vpop.permute.xlu0 %6203
        %6205 = vrot.lane.b32.xlu0 %v6064, 64
        %v6206 = vpop.permute.xlu0 %6205
        %6207 = vrot.lane.b32.xlu0 %v6069, 64
        %v6208 = vpop.permute.xlu0 %6207
        %6209 = vrot.lane.b32.xlu0 %v6072, 64
        %v6210 = vpop.permute.xlu0 %6209
        %6211 = vrot.lane.b32.xlu0 %v6077, 64
        %v6212 = vpop.permute.xlu0 %6211
        %6213 = vrot.lane.b32.xlu0 %v6080, 64
        %v6214 = vpop.permute.xlu0 %6213
        %6215 = vrot.lane.b32.xlu0 %v6085, 64
        %v6216 = vpop.permute.xlu0 %6215
        %6217 = vrot.lane.b32.xlu0 %v6088, 64
        %v6218 = vpop.permute.xlu0 %6217
        %6219 = vrot.lane.b32.xlu0 %v6093, 64
        %v6220 = vpop.permute.xlu0 %6219
        %6221 = vrot.lane.b32.xlu0 %v6096, 64
        %v6222 = vpop.permute.xlu0 %6221
        %6223 = vrot.lane.b32.xlu0 %v6101, 64
        %v6224 = vpop.permute.xlu0 %6223
        %6225 = vrot.lane.b32.xlu0 %v6104, 64
        %v6226 = vpop.permute.xlu0 %6225
        %6227 = vrot.lane.b32.xlu0 %v6109, 64
        %v6228 = vpop.permute.xlu0 %6227
        %6229 = vrot.lane.b32.xlu0 %v6112, 64
        %v6230 = vpop.permute.xlu0 %6229
        %6231 = vrot.lane.b32.xlu0 %v6117, 64
        %v6232 = vpop.permute.xlu0 %6231
        %6233 = vrot.lane.b32.xlu0 %v6120, 64
        %v6234 = vpop.permute.xlu0 %6233
        %v6251 = vsel %vm3698, %v4175, %v6140
        %v6252 = vsel %vm3698, %v4178, %v6142
        %v6253 = vsel %vm3698, %v4183, %v6144
        %v6254 = vsel %vm3698, %v4186, %v6146
        %v6255 = vsel %vm3698, %v4191, %v6148
        %v6256 = vsel %vm3698, %v4194, %v6150
        %v6257 = vsel %vm3698, %v4199, %v6152
        %v6258 = vsel %vm3698, %v4202, %v6154
        %v6259 = vsel %vm3698, %v4207, %v6156
        %v6260 = vsel %vm3698, %v4210, %v6158
        %v6261 = vsel %vm3698, %v4215, %v6160
        %v6262 = vsel %vm3698, %v4218, %v6162
        %v6263 = vsel %vm3698, %v4223, %v6164
        %v6264 = vsel %vm3698, %v4226, %v6166
        %v6265 = vsel %vm3698, %v4231, %v6168
        %v6266 = vsel %vm3698, %v4234, %v6170
        %v6267 = vsel %vm3698, %v5387, %v6204
        %v6268 = vsel %vm3698, %v5390, %v6206
        %v6269 = vsel %vm3698, %v5395, %v6208
        %v6270 = vsel %vm3698, %v5398, %v6210
        %v6271 = vsel %vm3698, %v5403, %v6212
        %v6272 = vsel %vm3698, %v5406, %v6214
        %v6273 = vsel %vm3698, %v5411, %v6216
        %v6274 = vsel %vm3698, %v5414, %v6218
        %v6275 = vsel %vm3698, %v5419, %v6220
        %v6276 = vsel %vm3698, %v5422, %v6222
        %v6277 = vsel %vm3698, %v5427, %v6224
        %v6278 = vsel %vm3698, %v5430, %v6226
        %v6279 = vsel %vm3698, %v5435, %v6228
        %v6280 = vsel %vm3698, %v5438, %v6230
        %v6281 = vsel %vm3698, %v5443, %v6232
        %v6282 = vsel %vm3698, %v5446, %v6234
        %v6283 = vpack.c.bf16 %v6252, %v6251
        %v6284 = vpack.c.bf16 %v6268, %v6267
        %v6285 = vpack.c.bf16 %v6254, %v6253
        %v6286 = vpack.c.bf16 %v6270, %v6269
        %v6287 = vpack.c.bf16 %v6256, %v6255
        %v6288 = vpack.c.bf16 %v6272, %v6271
        %v6289 = vpack.c.bf16 %v6258, %v6257
        %v6290 = vpack.c.bf16 %v6274, %v6273
        %v6291 = vpack.c.bf16 %v6260, %v6259
        %v6292 = vpack.c.bf16 %v6276, %v6275
        %v6293 = vpack.c.bf16 %v6262, %v6261
        %v6294 = vpack.c.bf16 %v6278, %v6277
        %v6295 = vpack.c.bf16 %v6264, %v6263
        %v6296 = vpack.c.bf16 %v6280, %v6279
        %v6297 = vpack.c.bf16 %v6266, %v6265
        %v6298 = vpack.c.bf16 %v6282, %v6281
        %v6299 = vld [vmem:[#allocation13] sm:$0xff]
        %v6300 = vld [vmem:[#allocation13 + $0x8] sm:$0xff]
        %v6301 = vld [vmem:[#allocation13 + $0x10] sm:$0xff]
        %v6302 = vld [vmem:[#allocation13 + $0x18] sm:$0xff]
        %v6303 = vld [vmem:[#allocation13 + $0x20] sm:$0xff]
        %v6304 = vld [vmem:[#allocation13 + $0x28] sm:$0xff]
        %v6305 = vld [vmem:[#allocation13 + $0x30] sm:$0xff]
        %v6306 = vld [vmem:[#allocation13 + $0x38] sm:$0xff]
        %v6307 = vld [vmem:[#allocation13 + $0x40] sm:$0xff]
        %v6308 = vld [vmem:[#allocation13 + $0x48] sm:$0xff]
        %v6309 = vld [vmem:[#allocation13 + $0x50] sm:$0xff]
        %v6310 = vld [vmem:[#allocation13 + $0x58] sm:$0xff]
        %v6311 = vld [vmem:[#allocation13 + $0x60] sm:$0xff]
        %v6312 = vld [vmem:[#allocation13 + $0x68] sm:$0xff]
        %v6313 = vld [vmem:[#allocation13 + $0x70] sm:$0xff]
        %v6314 = vld [vmem:[#allocation13 + $0x78] sm:$0xff]
        %v6315 = vld [vmem:[#allocation13 + $0x80] sm:$0xff]
        %v6316 = vld [vmem:[#allocation13 + $0x88] sm:$0xff]
        %v6317 = vld [vmem:[#allocation13 + $0x90] sm:$0xff]
        %v6318 = vld [vmem:[#allocation13 + $0x98] sm:$0xff]
        %v6319 = vld [vmem:[#allocation13 + $0xa0] sm:$0xff]
        %v6320 = vld [vmem:[#allocation13 + $0xa8] sm:$0xff]
        %v6321 = vld [vmem:[#allocation13 + $0xb0] sm:$0xff]
        %v6322 = vld [vmem:[#allocation13 + $0xb8] sm:$0xff]
        %v6323 = vld [vmem:[#allocation13 + $0xc0] sm:$0xff]
        %v6324 = vld [vmem:[#allocation13 + $0xc8] sm:$0xff]
        %v6325 = vld [vmem:[#allocation13 + $0xd0] sm:$0xff]
        %v6326 = vld [vmem:[#allocation13 + $0xd8] sm:$0xff]
        %v6327 = vld [vmem:[#allocation13 + $0xe0] sm:$0xff]
        %v6328 = vld [vmem:[#allocation13 + $0xe8] sm:$0xff]
        %v6329 = vld [vmem:[#allocation13 + $0xf0] sm:$0xff]
        %v6330 = vld [vmem:[#allocation13 + $0xf8] sm:$0xff]
        %v6331 = vld [vmem:[%s11] sm:$0x3]
        %v6333 = vlaneseq
        %v6334 = vshrl.u32 %v6333, 7
        %v6335 = vsub.s32 0, %v6334
        %v6336 = vrot.slane %v6331, %v6335
        %v6337 = vlaneseq
        %v6338 = vshrl.u32 %v6337, 7
        %v6339 = vsub.s32 1, %v6338
        %v6340 = vrot.slane %v6331, %v6339
        %v6375 = vunpack.c.l.b16 %v6299
        %v6376 = vunpack.c.h.b16 %v6299
        %v6377 = vunpack.c.l.b16 %v6300
        %v6378 = vunpack.c.h.b16 %v6300
        %v6379 = vunpack.c.l.b16 %v6301
        %v6380 = vunpack.c.h.b16 %v6301
        %v6381 = vunpack.c.l.b16 %v6302
        %v6382 = vunpack.c.h.b16 %v6302
        %v6383 = vunpack.c.l.b16 %v6303
        %v6384 = vunpack.c.h.b16 %v6303
        %v6385 = vunpack.c.l.b16 %v6304
        %v6386 = vunpack.c.h.b16 %v6304
        %v6387 = vunpack.c.l.b16 %v6305
        %v6388 = vunpack.c.h.b16 %v6305
        %v6389 = vunpack.c.l.b16 %v6306
        %v6390 = vunpack.c.h.b16 %v6306
        %v6391 = vunpack.c.l.b16 %v6307
        %v6392 = vunpack.c.h.b16 %v6307
        %v6393 = vunpack.c.l.b16 %v6308
        %v6394 = vunpack.c.h.b16 %v6308
        %v6395 = vunpack.c.l.b16 %v6309
        %v6396 = vunpack.c.h.b16 %v6309
        %v6397 = vunpack.c.l.b16 %v6310
        %v6398 = vunpack.c.h.b16 %v6310
        %v6399 = vunpack.c.l.b16 %v6311
        %v6400 = vunpack.c.h.b16 %v6311
        %v6401 = vunpack.c.l.b16 %v6312
        %v6402 = vunpack.c.h.b16 %v6312
        %v6403 = vunpack.c.l.b16 %v6313
        %v6404 = vunpack.c.h.b16 %v6313
        %v6405 = vunpack.c.l.b16 %v6314
        %v6406 = vunpack.c.h.b16 %v6314
        %v6407 = vunpack.c.l.b16 %v6315
        %v6408 = vunpack.c.h.b16 %v6315
        %v6409 = vunpack.c.l.b16 %v6316
        %v6410 = vunpack.c.h.b16 %v6316
        %v6411 = vunpack.c.l.b16 %v6317
        %v6412 = vunpack.c.h.b16 %v6317
        %v6413 = vunpack.c.l.b16 %v6318
        %v6414 = vunpack.c.h.b16 %v6318
        %v6415 = vunpack.c.l.b16 %v6319
        %v6416 = vunpack.c.h.b16 %v6319
        %v6417 = vunpack.c.l.b16 %v6320
        %v6418 = vunpack.c.h.b16 %v6320
        %v6419 = vunpack.c.l.b16 %v6321
        %v6420 = vunpack.c.h.b16 %v6321
        %v6421 = vunpack.c.l.b16 %v6322
        %v6422 = vunpack.c.h.b16 %v6322
        %v6423 = vunpack.c.l.b16 %v6323
        %v6424 = vunpack.c.h.b16 %v6323
        %v6425 = vunpack.c.l.b16 %v6324
        %v6426 = vunpack.c.h.b16 %v6324
        %v6427 = vunpack.c.l.b16 %v6325
        %v6428 = vunpack.c.h.b16 %v6325
        %v6429 = vunpack.c.l.b16 %v6326
        %v6430 = vunpack.c.h.b16 %v6326
        %v6431 = vunpack.c.l.b16 %v6327
        %v6432 = vunpack.c.h.b16 %v6327
        %v6433 = vunpack.c.l.b16 %v6328
        %v6434 = vunpack.c.h.b16 %v6328
        %v6435 = vunpack.c.l.b16 %v6329
        %v6436 = vunpack.c.h.b16 %v6329
        %v6437 = vunpack.c.l.b16 %v6330
        %v6438 = vunpack.c.h.b16 %v6330
        %v6439 = vpack.c.b16 %v6377, %v6375
        %v6440 = vpack.c.b16 %v6378, %v6376
        %v6441 = vpack.c.b16 %v6381, %v6379
        %v6442 = vpack.c.b16 %v6382, %v6380
        %v6443 = vpack.c.b16 %v6385, %v6383
        %v6444 = vpack.c.b16 %v6386, %v6384
        %v6445 = vpack.c.b16 %v6389, %v6387
        %v6446 = vpack.c.b16 %v6390, %v6388
        %v6447 = vpack.c.b16 %v6393, %v6391
        %v6448 = vpack.c.b16 %v6394, %v6392
        %v6449 = vpack.c.b16 %v6397, %v6395
        %v6450 = vpack.c.b16 %v6398, %v6396
        %v6451 = vpack.c.b16 %v6401, %v6399
        %v6452 = vpack.c.b16 %v6402, %v6400
        %v6453 = vpack.c.b16 %v6405, %v6403
        %v6454 = vpack.c.b16 %v6406, %v6404
        %v6455 = vpack.c.b16 %v6409, %v6407
        %v6456 = vpack.c.b16 %v6410, %v6408
        %v6457 = vpack.c.b16 %v6413, %v6411
        %v6458 = vpack.c.b16 %v6414, %v6412
        %v6459 = vpack.c.b16 %v6417, %v6415
        %v6460 = vpack.c.b16 %v6418, %v6416
        %v6461 = vpack.c.b16 %v6421, %v6419
        %v6462 = vpack.c.b16 %v6422, %v6420
        %v6463 = vpack.c.b16 %v6425, %v6423
        %v6464 = vpack.c.b16 %v6426, %v6424
        %v6465 = vpack.c.b16 %v6429, %v6427
        %v6466 = vpack.c.b16 %v6430, %v6428
        %v6467 = vpack.c.b16 %v6433, %v6431
        %v6468 = vpack.c.b16 %v6434, %v6432
        %v6469 = vpack.c.b16 %v6437, %v6435
        %v6470 = vpack.c.b16 %v6438, %v6436
        %6503 = vmatprep.subr.bf16.mxu0 %v6440
        %6504 = vmatpush1.bf16.msra.mxu0 %v6439
        %6505 = vmatprep.subr.bf16.mxu0 %v6442
        %6506 = vmatpush1.bf16.msra.mxu0 %v6441
        %6507 = vmatprep.subr.bf16.mxu0 %v6444
        %6508 = vmatpush1.bf16.msra.mxu0 %v6443
        %6509 = vmatprep.subr.bf16.mxu0 %v6446
        %6510 = vmatpush1.bf16.msra.mxu0 %v6445
        %6511 = vmatprep.subr.bf16.mxu0 %v6448
        %6512 = vmatpush1.bf16.msra.mxu0 %v6447
        %6513 = vmatprep.subr.bf16.mxu0 %v6450
        %6514 = vmatpush1.bf16.msra.mxu0 %v6449
        %6515 = vmatprep.subr.bf16.mxu0 %v6452
        %6516 = vmatpush1.bf16.msra.mxu0 %v6451
        %6517 = vmatprep.subr.bf16.mxu0 %v6454
        %6518 = vmatpush1.bf16.msra.mxu0 %v6453
        %6519 = vmatprep.subr.bf16.mxu0 %v6456
        %6520 = vmatpush1.bf16.msra.mxu0 %v6455
        %6521 = vmatprep.subr.bf16.mxu0 %v6458
        %6522 = vmatpush1.bf16.msra.mxu0 %v6457
        %6523 = vmatprep.subr.bf16.mxu0 %v6460
        %6524 = vmatpush1.bf16.msra.mxu0 %v6459
        %6525 = vmatprep.subr.bf16.mxu0 %v6462
        %6526 = vmatpush1.bf16.msra.mxu0 %v6461
        %6527 = vmatprep.subr.bf16.mxu0 %v6464
        %6528 = vmatpush1.bf16.msra.mxu0 %v6463
        %6529 = vmatprep.subr.bf16.mxu0 %v6466
        %6530 = vmatpush1.bf16.msra.mxu0 %v6465
        %6531 = vmatprep.subr.bf16.mxu0 %v6468
        %6532 = vmatpush1.bf16.msra.mxu0 %v6467
        %6533 = vmatprep.subr.bf16.mxu0 %v6470
        %6534 = vmatpush1.bf16.msra.mxu0 %v6469
        %6535 = vmatprep.mubr.bf16.mxu0 %v6284
        %6536 = vmatmul.mubr.bf16.gmra.mrb[0].mxu0 %v6283
        %v6537 = vpop.f32.mrb[0].mxu0
        %v6538 = vadd.f32 %v6336, %v6537
        %v6539 = vpop.f32.mrb[0].mxu0
        %v6540 = vadd.f32 %v6340, %v6539
        %v6541 = vpop.f32.mrb[0].mxu0
        %v6542 = vadd.f32 %v6336, %v6541
        %v6543 = vpop.f32.mrb[0].mxu0
        %v6544 = vadd.f32 %v6340, %v6543
        %6545 = vmatprep.mubr.bf16.mxu0 %v6286
        %6546 = vmatmul.mubr.bf16.gmra.mrb[0].mxu0 %v6285
        %v6547 = vpop.f32.mrb[0].mxu0
        %v6548 = vadd.f32 %v6336, %v6547
        %v6549 = vpop.f32.mrb[0].mxu0
        %v6550 = vadd.f32 %v6340, %v6549
        %v6551 = vpop.f32.mrb[0].mxu0
        %v6552 = vadd.f32 %v6336, %v6551
        %v6553 = vpop.f32.mrb[0].mxu0
        %v6554 = vadd.f32 %v6340, %v6553
        %6555 = vmatprep.mubr.bf16.mxu0 %v6288
        %6556 = vmatmul.mubr.bf16.gmra.mrb[0].mxu0 %v6287
        %v6557 = vpop.f32.mrb[0].mxu0
        %v6558 = vadd.f32 %v6336, %v6557
        %v6559 = vpop.f32.mrb[0].mxu0
        %v6560 = vadd.f32 %v6340, %v6559
        %v6561 = vpop.f32.mrb[0].mxu0
        %v6562 = vadd.f32 %v6336, %v6561
        %v6563 = vpop.f32.mrb[0].mxu0
        %v6564 = vadd.f32 %v6340, %v6563
        %6565 = vmatprep.mubr.bf16.mxu0 %v6290
        %6566 = vmatmul.mubr.bf16.gmra.mrb[0].mxu0 %v6289
        %v6567 = vpop.f32.mrb[0].mxu0
        %v6568 = vadd.f32 %v6336, %v6567
        %v6569 = vpop.f32.mrb[0].mxu0
        %v6570 = vadd.f32 %v6340, %v6569
        %v6571 = vpop.f32.mrb[0].mxu0
        %v6572 = vadd.f32 %v6336, %v6571
        %v6573 = vpop.f32.mrb[0].mxu0
        %v6574 = vadd.f32 %v6340, %v6573
        %6575 = vmatprep.mubr.bf16.mxu0 %v6292
        %6576 = vmatmul.mubr.bf16.gmra.mrb[0].mxu0 %v6291
        %v6577 = vpop.f32.mrb[0].mxu0
        %v6578 = vadd.f32 %v6336, %v6577
        %v6579 = vpop.f32.mrb[0].mxu0
        %v6580 = vadd.f32 %v6340, %v6579
        %v6581 = vpop.f32.mrb[0].mxu0
        %v6582 = vadd.f32 %v6336, %v6581
        %v6583 = vpop.f32.mrb[0].mxu0
        %v6584 = vadd.f32 %v6340, %v6583
        %6585 = vmatprep.mubr.bf16.mxu0 %v6294
        %6586 = vmatmul.mubr.bf16.gmra.mrb[0].mxu0 %v6293
        %v6587 = vpop.f32.mrb[0].mxu0
        %v6588 = vadd.f32 %v6336, %v6587
        %v6589 = vpop.f32.mrb[0].mxu0
        %v6590 = vadd.f32 %v6340, %v6589
        %v6591 = vpop.f32.mrb[0].mxu0
        %v6592 = vadd.f32 %v6336, %v6591
        %v6593 = vpop.f32.mrb[0].mxu0
        %v6594 = vadd.f32 %v6340, %v6593
        %6595 = vmatprep.mubr.bf16.mxu0 %v6296
        %6596 = vmatmul.mubr.bf16.gmra.mrb[0].mxu0 %v6295
        %v6597 = vpop.f32.mrb[0].mxu0
        %v6598 = vadd.f32 %v6336, %v6597
        %v6599 = vpop.f32.mrb[0].mxu0
        %v6600 = vadd.f32 %v6340, %v6599
        %v6601 = vpop.f32.mrb[0].mxu0
        %v6602 = vadd.f32 %v6336, %v6601
        %v6603 = vpop.f32.mrb[0].mxu0
        %v6604 = vadd.f32 %v6340, %v6603
        %6605 = vmatprep.mubr.bf16.mxu0 %v6298
        %6606 = vmatmul.mubr.bf16.gmra.mrb[0].mxu0 %v6297
        %v6607 = vpop.f32.mrb[0].mxu0
        %v6608 = vadd.f32 %v6336, %v6607
        %v6609 = vpop.f32.mrb[0].mxu0
        %v6610 = vadd.f32 %v6340, %v6609
        %v6611 = vpop.f32.mrb[0].mxu0
        %v6612 = vadd.f32 %v6336, %v6611
        %v6613 = vpop.f32.mrb[0].mxu0
        %v6614 = vadd.f32 %v6340, %v6613
        %6615 = vdwg.mxu0
        %v6616 = vadd.f32 %v2738, %v6538
        %v6617 = vadd.f32 %v2739, %v6540
        %v6618 = vadd.f32 %v2740, %v6542
        %v6619 = vadd.f32 %v2741, %v6544
        %v6620 = vadd.f32 %v2742, %v6548
        %v6621 = vadd.f32 %v2743, %v6550
        %v6622 = vadd.f32 %v2744, %v6552
        %v6623 = vadd.f32 %v2745, %v6554
        %v6624 = vadd.f32 %v2746, %v6558
        %v6625 = vadd.f32 %v2747, %v6560
        %v6626 = vadd.f32 %v2748, %v6562
        %v6627 = vadd.f32 %v2749, %v6564
        %v6628 = vadd.f32 %v2750, %v6568
        %v6629 = vadd.f32 %v2751, %v6570
        %v6630 = vadd.f32 %v2752, %v6572
        %v6631 = vadd.f32 %v2753, %v6574
        %v6632 = vadd.f32 %v2754, %v6578
        %v6633 = vadd.f32 %v2755, %v6580
        %v6634 = vadd.f32 %v2756, %v6582
        %v6635 = vadd.f32 %v2757, %v6584
        %v6636 = vadd.f32 %v2758, %v6588
        %v6637 = vadd.f32 %v2759, %v6590
        %v6638 = vadd.f32 %v2760, %v6592
        %v6639 = vadd.f32 %v2761, %v6594
        %v6640 = vadd.f32 %v2762, %v6598
        %v6641 = vadd.f32 %v2763, %v6600
        %v6642 = vadd.f32 %v2764, %v6602
        %v6643 = vadd.f32 %v2765, %v6604
        %v6644 = vadd.f32 %v2766, %v6608
        %v6645 = vadd.f32 %v2767, %v6610
        %v6646 = vadd.f32 %v2768, %v6612
        %v6647 = vadd.f32 %v2769, %v6614
        %v6648 = vld [vmem:[%s12] sm:$0x3]
        %v6649 = vld [vmem:[%s13] sm:$0x3]
        %v6650 = vadd.f32 %v6616, %v6617
        %6651 = vadd.xlane.f32.xlu0 %v6650
        %v6652 = vpop.xlane.xlu0 %6651
        %v6653 = vadd.f32 %v6618, %v6619
        %6654 = vadd.xlane.f32.xlu0 %v6653
        %v6655 = vpop.xlane.xlu0 %6654
        %v6656 = vadd.f32 %v6620, %v6621
        %6657 = vadd.xlane.f32.xlu0 %v6656
        %v6658 = vpop.xlane.xlu0 %6657
        %v6659 = vadd.f32 %v6622, %v6623
        %6660 = vadd.xlane.f32.xlu0 %v6659
        %v6661 = vpop.xlane.xlu0 %6660
        %v6662 = vadd.f32 %v6624, %v6625
        %6663 = vadd.xlane.f32.xlu0 %v6662
        %v6664 = vpop.xlane.xlu0 %6663
        %v6665 = vadd.f32 %v6626, %v6627
        %6666 = vadd.xlane.f32.xlu0 %v6665
        %v6667 = vpop.xlane.xlu0 %6666
        %v6668 = vadd.f32 %v6628, %v6629
        %6669 = vadd.xlane.f32.xlu0 %v6668
        %v6670 = vpop.xlane.xlu0 %6669
        %v6671 = vadd.f32 %v6630, %v6631
        %6672 = vadd.xlane.f32.xlu0 %v6671
        %v6673 = vpop.xlane.xlu0 %6672
        %v6674 = vadd.f32 %v6632, %v6633
        %6675 = vadd.xlane.f32.xlu0 %v6674
        %v6676 = vpop.xlane.xlu0 %6675
        %v6677 = vadd.f32 %v6634, %v6635
        %6678 = vadd.xlane.f32.xlu0 %v6677
        %v6679 = vpop.xlane.xlu0 %6678
        %v6680 = vadd.f32 %v6636, %v6637
        %6681 = vadd.xlane.f32.xlu0 %v6680
        %v6682 = vpop.xlane.xlu0 %6681
        %v6683 = vadd.f32 %v6638, %v6639
        %6684 = vadd.xlane.f32.xlu0 %v6683
        %v6685 = vpop.xlane.xlu0 %6684
        %v6686 = vadd.f32 %v6640, %v6641
        %6687 = vadd.xlane.f32.xlu0 %v6686
        %v6688 = vpop.xlane.xlu0 %6687
        %v6689 = vadd.f32 %v6642, %v6643
        %6690 = vadd.xlane.f32.xlu0 %v6689
        %v6691 = vpop.xlane.xlu0 %6690
        %v6692 = vadd.f32 %v6644, %v6645
        %6693 = vadd.xlane.f32.xlu0 %v6692
        %v6694 = vpop.xlane.xlu0 %6693
        %v6695 = vadd.f32 %v6646, %v6647
        %6696 = vadd.xlane.f32.xlu0 %v6695
        %v6697 = vpop.xlane.xlu0 %6696
        %v6698 = vmul.f32 %v6652, %v2818
        %v6699 = vmul.f32 %v6655, %v2818
        %v6700 = vmul.f32 %v6658, %v2818
        %v6701 = vmul.f32 %v6661, %v2818
        %v6702 = vmul.f32 %v6664, %v2818
        %v6703 = vmul.f32 %v6667, %v2818
        %v6704 = vmul.f32 %v6670, %v2818
        %v6705 = vmul.f32 %v6673, %v2818
        %v6706 = vmul.f32 %v6676, %v2818
        %v6707 = vmul.f32 %v6679, %v2818
        %v6708 = vmul.f32 %v6682, %v2818
        %v6709 = vmul.f32 %v6685, %v2818
        %v6710 = vmul.f32 %v6688, %v2818
        %v6711 = vmul.f32 %v6691, %v2818
        %v6712 = vmul.f32 %v6694, %v2818
        %v6713 = vmul.f32 %v6697, %v2818
        %v6714 = vsub.f32 %v6616, %v6698
        %v6715 = vsub.f32 %v6617, %v6698
        %v6716 = vsub.f32 %v6618, %v6699
        %v6717 = vsub.f32 %v6619, %v6699
        %v6718 = vsub.f32 %v6620, %v6700
        %v6719 = vsub.f32 %v6621, %v6700
        %v6720 = vsub.f32 %v6622, %v6701
        %v6721 = vsub.f32 %v6623, %v6701
        %v6722 = vsub.f32 %v6624, %v6702
        %v6723 = vsub.f32 %v6625, %v6702
        %v6724 = vsub.f32 %v6626, %v6703
        %v6725 = vsub.f32 %v6627, %v6703
        %v6726 = vsub.f32 %v6628, %v6704
        %v6727 = vsub.f32 %v6629, %v6704
        %v6728 = vsub.f32 %v6630, %v6705
        %v6729 = vsub.f32 %v6631, %v6705
        %v6730 = vsub.f32 %v6632, %v6706
        %v6731 = vsub.f32 %v6633, %v6706
        %v6732 = vsub.f32 %v6634, %v6707
        %v6733 = vsub.f32 %v6635, %v6707
        %v6734 = vsub.f32 %v6636, %v6708
        %v6735 = vsub.f32 %v6637, %v6708
        %v6736 = vsub.f32 %v6638, %v6709
        %v6737 = vsub.f32 %v6639, %v6709
        %v6738 = vsub.f32 %v6640, %v6710
        %v6739 = vsub.f32 %v6641, %v6710
        %v6740 = vsub.f32 %v6642, %v6711
        %v6741 = vsub.f32 %v6643, %v6711
        %v6742 = vsub.f32 %v6644, %v6712
        %v6743 = vsub.f32 %v6645, %v6712
        %v6744 = vsub.f32 %v6646, %v6713
        %v6745 = vsub.f32 %v6647, %v6713
        %v6746 = vmul.f32 %v6714, %v6714
        %v6747 = vmul.f32 %v6715, %v6715
        %v6748 = vmul.f32 %v6716, %v6716
        %v6749 = vmul.f32 %v6717, %v6717
        %v6750 = vmul.f32 %v6718, %v6718
        %v6751 = vmul.f32 %v6719, %v6719
        %v6752 = vmul.f32 %v6720, %v6720
        %v6753 = vmul.f32 %v6721, %v6721
        %v6754 = vmul.f32 %v6722, %v6722
        %v6755 = vmul.f32 %v6723, %v6723
        %v6756 = vmul.f32 %v6724, %v6724
        %v6757 = vmul.f32 %v6725, %v6725
        %v6758 = vmul.f32 %v6726, %v6726
        %v6759 = vmul.f32 %v6727, %v6727
        %v6760 = vmul.f32 %v6728, %v6728
        %v6761 = vmul.f32 %v6729, %v6729
        %v6762 = vmul.f32 %v6730, %v6730
        %v6763 = vmul.f32 %v6731, %v6731
        %v6764 = vmul.f32 %v6732, %v6732
        %v6765 = vmul.f32 %v6733, %v6733
        %v6766 = vmul.f32 %v6734, %v6734
        %v6767 = vmul.f32 %v6735, %v6735
        %v6768 = vmul.f32 %v6736, %v6736
        %v6769 = vmul.f32 %v6737, %v6737
        %v6770 = vmul.f32 %v6738, %v6738
        %v6771 = vmul.f32 %v6739, %v6739
        %v6772 = vmul.f32 %v6740, %v6740
        %v6773 = vmul.f32 %v6741, %v6741
        %v6774 = vmul.f32 %v6742, %v6742
        %v6775 = vmul.f32 %v6743, %v6743
        %v6776 = vmul.f32 %v6744, %v6744
        %v6777 = vmul.f32 %v6745, %v6745
        %v6778 = vadd.f32 %v6746, %v6747
        %6779 = vadd.xlane.f32.xlu0 %v6778
        %v6780 = vpop.xlane.xlu0 %6779
        %v6781 = vadd.f32 %v6748, %v6749
        %6782 = vadd.xlane.f32.xlu0 %v6781
        %v6783 = vpop.xlane.xlu0 %6782
        %v6784 = vadd.f32 %v6750, %v6751
        %6785 = vadd.xlane.f32.xlu0 %v6784
        %v6786 = vpop.xlane.xlu0 %6785
        %v6787 = vadd.f32 %v6752, %v6753
        %6788 = vadd.xlane.f32.xlu0 %v6787
        %v6789 = vpop.xlane.xlu0 %6788
        %v6790 = vadd.f32 %v6754, %v6755
        %6791 = vadd.xlane.f32.xlu0 %v6790
        %v6792 = vpop.xlane.xlu0 %6791
        %v6793 = vadd.f32 %v6756, %v6757
        %6794 = vadd.xlane.f32.xlu0 %v6793
        %v6795 = vpop.xlane.xlu0 %6794
        %v6796 = vadd.f32 %v6758, %v6759
        %6797 = vadd.xlane.f32.xlu0 %v6796
        %v6798 = vpop.xlane.xlu0 %6797
        %v6799 = vadd.f32 %v6760, %v6761
        %6800 = vadd.xlane.f32.xlu0 %v6799
        %v6801 = vpop.xlane.xlu0 %6800
        %v6802 = vadd.f32 %v6762, %v6763
        %6803 = vadd.xlane.f32.xlu0 %v6802
        %v6804 = vpop.xlane.xlu0 %6803
        %v6805 = vadd.f32 %v6764, %v6765
        %6806 = vadd.xlane.f32.xlu0 %v6805
        %v6807 = vpop.xlane.xlu0 %6806
        %v6808 = vadd.f32 %v6766, %v6767
        %6809 = vadd.xlane.f32.xlu0 %v6808
        %v6810 = vpop.xlane.xlu0 %6809
        %v6811 = vadd.f32 %v6768, %v6769
        %6812 = vadd.xlane.f32.xlu0 %v6811
        %v6813 = vpop.xlane.xlu0 %6812
        %v6814 = vadd.f32 %v6770, %v6771
        %6815 = vadd.xlane.f32.xlu0 %v6814
        %v6816 = vpop.xlane.xlu0 %6815
        %v6817 = vadd.f32 %v6772, %v6773
        %6818 = vadd.xlane.f32.xlu0 %v6817
        %v6819 = vpop.xlane.xlu0 %6818
        %v6820 = vadd.f32 %v6774, %v6775
        %6821 = vadd.xlane.f32.xlu0 %v6820
        %v6822 = vpop.xlane.xlu0 %6821
        %v6823 = vadd.f32 %v6776, %v6777
        %6824 = vadd.xlane.f32.xlu0 %v6823
        %v6825 = vpop.xlane.xlu0 %6824
        %v6826 = vmul.f32 %v6780, 0.003921569
        %v6827 = vmul.f32 %v6783, 0.003921569
        %v6828 = vmul.f32 %v6786, 0.003921569
        %v6829 = vmul.f32 %v6789, 0.003921569
        %v6830 = vmul.f32 %v6792, 0.003921569
        %v6831 = vmul.f32 %v6795, 0.003921569
        %v6832 = vmul.f32 %v6798, 0.003921569
        %v6833 = vmul.f32 %v6801, 0.003921569
        %v6834 = vmul.f32 %v6804, 0.003921569
        %v6835 = vmul.f32 %v6807, 0.003921569
        %v6836 = vmul.f32 %v6810, 0.003921569
        %v6837 = vmul.f32 %v6813, 0.003921569
        %v6838 = vmul.f32 %v6816, 0.003921569
        %v6839 = vmul.f32 %v6819, 0.003921569
        %v6840 = vmul.f32 %v6822, 0.003921569
        %v6841 = vmul.f32 %v6825, 0.003921569
        %v6842 = vrsqrt.pop %v6826
        %v6843 = vmul.f32 %v6826, %v6842
        %vm6844 = vcmp.eq.f32.partialorder %v6826, inf
        %v6845 = vsel %vm6844, %v6826, %v6843
        %vm6846 = vcmp.eq.f32.partialorder %v6826, 0.0
        %v6847 = vand.u32 %v6826, 2147483648
        %v6848 = vsel %vm6846, %v6847, %v6845
        %v6849 = vrsqrt.pop %v6827
        %v6850 = vmul.f32 %v6827, %v6849
        %vm6851 = vcmp.eq.f32.partialorder %v6827, inf
        %v6852 = vsel %vm6851, %v6827, %v6850
        %vm6853 = vcmp.eq.f32.partialorder %v6827, 0.0
        %v6854 = vand.u32 %v6827, 2147483648
        %v6855 = vsel %vm6853, %v6854, %v6852
        %v6856 = vrsqrt.pop %v6828
        %v6857 = vmul.f32 %v6828, %v6856
        %vm6858 = vcmp.eq.f32.partialorder %v6828, inf
        %v6859 = vsel %vm6858, %v6828, %v6857
        %vm6860 = vcmp.eq.f32.partialorder %v6828, 0.0
        %v6861 = vand.u32 %v6828, 2147483648
        %v6862 = vsel %vm6860, %v6861, %v6859
        %v6863 = vrsqrt.pop %v6829
        %v6864 = vmul.f32 %v6829, %v6863
        %vm6865 = vcmp.eq.f32.partialorder %v6829, inf
        %v6866 = vsel %vm6865, %v6829, %v6864
        %vm6867 = vcmp.eq.f32.partialorder %v6829, 0.0
        %v6868 = vand.u32 %v6829, 2147483648
        %v6869 = vsel %vm6867, %v6868, %v6866
        %v6870 = vrsqrt.pop %v6830
        %v6871 = vmul.f32 %v6830, %v6870
        %vm6872 = vcmp.eq.f32.partialorder %v6830, inf
        %v6873 = vsel %vm6872, %v6830, %v6871
        %vm6874 = vcmp.eq.f32.partialorder %v6830, 0.0
        %v6875 = vand.u32 %v6830, 2147483648
        %v6876 = vsel %vm6874, %v6875, %v6873
        %v6877 = vrsqrt.pop %v6831
        %v6878 = vmul.f32 %v6831, %v6877
        %vm6879 = vcmp.eq.f32.partialorder %v6831, inf
        %v6880 = vsel %vm6879, %v6831, %v6878
        %vm6881 = vcmp.eq.f32.partialorder %v6831, 0.0
        %v6882 = vand.u32 %v6831, 2147483648
        %v6883 = vsel %vm6881, %v6882, %v6880
        %v6884 = vrsqrt.pop %v6832
        %v6885 = vmul.f32 %v6832, %v6884
        %vm6886 = vcmp.eq.f32.partialorder %v6832, inf
        %v6887 = vsel %vm6886, %v6832, %v6885
        %vm6888 = vcmp.eq.f32.partialorder %v6832, 0.0
        %v6889 = vand.u32 %v6832, 2147483648
        %v6890 = vsel %vm6888, %v6889, %v6887
        %v6891 = vrsqrt.pop %v6833
        %v6892 = vmul.f32 %v6833, %v6891
        %vm6893 = vcmp.eq.f32.partialorder %v6833, inf
        %v6894 = vsel %vm6893, %v6833, %v6892
        %vm6895 = vcmp.eq.f32.partialorder %v6833, 0.0
        %v6896 = vand.u32 %v6833, 2147483648
        %v6897 = vsel %vm6895, %v6896, %v6894
        %v6898 = vrsqrt.pop %v6834
        %v6899 = vmul.f32 %v6834, %v6898
        %vm6900 = vcmp.eq.f32.partialorder %v6834, inf
        %v6901 = vsel %vm6900, %v6834, %v6899
        %vm6902 = vcmp.eq.f32.partialorder %v6834, 0.0
        %v6903 = vand.u32 %v6834, 2147483648
        %v6904 = vsel %vm6902, %v6903, %v6901
        %v6905 = vrsqrt.pop %v6835
        %v6906 = vmul.f32 %v6835, %v6905
        %vm6907 = vcmp.eq.f32.partialorder %v6835, inf
        %v6908 = vsel %vm6907, %v6835, %v6906
        %vm6909 = vcmp.eq.f32.partialorder %v6835, 0.0
        %v6910 = vand.u32 %v6835, 2147483648
        %v6911 = vsel %vm6909, %v6910, %v6908
        %v6912 = vrsqrt.pop %v6836
        %v6913 = vmul.f32 %v6836, %v6912
        %vm6914 = vcmp.eq.f32.partialorder %v6836, inf
        %v6915 = vsel %vm6914, %v6836, %v6913
        %vm6916 = vcmp.eq.f32.partialorder %v6836, 0.0
        %v6917 = vand.u32 %v6836, 2147483648
        %v6918 = vsel %vm6916, %v6917, %v6915
        %v6919 = vrsqrt.pop %v6837
        %v6920 = vmul.f32 %v6837, %v6919
        %vm6921 = vcmp.eq.f32.partialorder %v6837, inf
        %v6922 = vsel %vm6921, %v6837, %v6920
        %vm6923 = vcmp.eq.f32.partialorder %v6837, 0.0
        %v6924 = vand.u32 %v6837, 2147483648
        %v6925 = vsel %vm6923, %v6924, %v6922
        %v6926 = vrsqrt.pop %v6838
        %v6927 = vmul.f32 %v6838, %v6926
        %vm6928 = vcmp.eq.f32.partialorder %v6838, inf
        %v6929 = vsel %vm6928, %v6838, %v6927
        %vm6930 = vcmp.eq.f32.partialorder %v6838, 0.0
        %v6931 = vand.u32 %v6838, 2147483648
        %v6932 = vsel %vm6930, %v6931, %v6929
        %v6933 = vrsqrt.pop %v6839
        %v6934 = vmul.f32 %v6839, %v6933
        %vm6935 = vcmp.eq.f32.partialorder %v6839, inf
        %v6936 = vsel %vm6935, %v6839, %v6934
        %vm6937 = vcmp.eq.f32.partialorder %v6839, 0.0
        %v6938 = vand.u32 %v6839, 2147483648
        %v6939 = vsel %vm6937, %v6938, %v6936
        %v6940 = vrsqrt.pop %v6840
        %v6941 = vmul.f32 %v6840, %v6940
        %vm6942 = vcmp.eq.f32.partialorder %v6840, inf
        %v6943 = vsel %vm6942, %v6840, %v6941
        %vm6944 = vcmp.eq.f32.partialorder %v6840, 0.0
        %v6945 = vand.u32 %v6840, 2147483648
        %v6946 = vsel %vm6944, %v6945, %v6943
        %v6947 = vrsqrt.pop %v6841
        %v6948 = vmul.f32 %v6841, %v6947
        %vm6949 = vcmp.eq.f32.partialorder %v6841, inf
        %v6950 = vsel %vm6949, %v6841, %v6948
        %vm6951 = vcmp.eq.f32.partialorder %v6841, 0.0
        %v6952 = vand.u32 %v6841, 2147483648
        %v6953 = vsel %vm6951, %v6952, %v6950
        %v6954 = vadd.f32 %v6848, 1e-06
        %v6955 = vadd.f32 %v6855, 1e-06
        %v6956 = vadd.f32 %v6862, 1e-06
        %v6957 = vadd.f32 %v6869, 1e-06
        %v6958 = vadd.f32 %v6876, 1e-06
        %v6959 = vadd.f32 %v6883, 1e-06
        %v6960 = vadd.f32 %v6890, 1e-06
        %v6961 = vadd.f32 %v6897, 1e-06
        %v6962 = vadd.f32 %v6904, 1e-06
        %v6963 = vadd.f32 %v6911, 1e-06
        %v6964 = vadd.f32 %v6918, 1e-06
        %v6965 = vadd.f32 %v6925, 1e-06
        %v6966 = vadd.f32 %v6932, 1e-06
        %v6967 = vadd.f32 %v6939, 1e-06
        %v6968 = vadd.f32 %v6946, 1e-06
        %v6969 = vadd.f32 %v6953, 1e-06
        %v6970 = vrcp.pop %v6954
        %v6971 = vmul.f32 1.0, %v6970
        %v6972 = vrcp.pop %v6955
        %v6973 = vmul.f32 1.0, %v6972
        %v6974 = vrcp.pop %v6956
        %v6975 = vmul.f32 1.0, %v6974
        %v6976 = vrcp.pop %v6957
        %v6977 = vmul.f32 1.0, %v6976
        %v6978 = vrcp.pop %v6958
        %v6979 = vmul.f32 1.0, %v6978
        %v6980 = vrcp.pop %v6959
        %v6981 = vmul.f32 1.0, %v6980
        %v6982 = vrcp.pop %v6960
        %v6983 = vmul.f32 1.0, %v6982
        %v6984 = vrcp.pop %v6961
        %v6985 = vmul.f32 1.0, %v6984
        %v6986 = vrcp.pop %v6962
        %v6987 = vmul.f32 1.0, %v6986
        %v6988 = vrcp.pop %v6963
        %v6989 = vmul.f32 1.0, %v6988
        %v6990 = vrcp.pop %v6964
        %v6991 = vmul.f32 1.0, %v6990
        %v6992 = vrcp.pop %v6965
        %v6993 = vmul.f32 1.0, %v6992
        %v6994 = vrcp.pop %v6966
        %v6995 = vmul.f32 1.0, %v6994
        %v6996 = vrcp.pop %v6967
        %v6997 = vmul.f32 1.0, %v6996
        %v6998 = vrcp.pop %v6968
        %v6999 = vmul.f32 1.0, %v6998
        %v7000 = vrcp.pop %v6969
        %v7001 = vmul.f32 1.0, %v7000
        %v7002 = vmul.f32 %v6714, %v6971
        %v7003 = vmul.f32 %v6715, %v6971
        %v7004 = vmul.f32 %v6716, %v6973
        %v7005 = vmul.f32 %v6717, %v6973
        %v7006 = vmul.f32 %v6718, %v6975
        %v7007 = vmul.f32 %v6719, %v6975
        %v7008 = vmul.f32 %v6720, %v6977
        %v7009 = vmul.f32 %v6721, %v6977
        %v7010 = vmul.f32 %v6722, %v6979
        %v7011 = vmul.f32 %v6723, %v6979
        %v7012 = vmul.f32 %v6724, %v6981
        %v7013 = vmul.f32 %v6725, %v6981
        %v7014 = vmul.f32 %v6726, %v6983
        %v7015 = vmul.f32 %v6727, %v6983
        %v7016 = vmul.f32 %v6728, %v6985
        %v7017 = vmul.f32 %v6729, %v6985
        %v7018 = vmul.f32 %v6730, %v6987
        %v7019 = vmul.f32 %v6731, %v6987
        %v7020 = vmul.f32 %v6732, %v6989
        %v7021 = vmul.f32 %v6733, %v6989
        %v7022 = vmul.f32 %v6734, %v6991
        %v7023 = vmul.f32 %v6735, %v6991
        %v7024 = vmul.f32 %v6736, %v6993
        %v7025 = vmul.f32 %v6737, %v6993
        %v7026 = vmul.f32 %v6738, %v6995
        %v7027 = vmul.f32 %v6739, %v6995
        %v7028 = vmul.f32 %v6740, %v6997
        %v7029 = vmul.f32 %v6741, %v6997
        %v7030 = vmul.f32 %v6742, %v6999
        %v7031 = vmul.f32 %v6743, %v6999
        %v7032 = vmul.f32 %v6744, %v7001
        %v7033 = vmul.f32 %v6745, %v7001
        %v7035 = vlaneseq
        %v7036 = vshrl.u32 %v7035, 7
        %v7037 = vsub.s32 0, %v7036
        %v7038 = vrot.slane %v6648, %v7037
        %v7039 = vlaneseq
        %v7040 = vshrl.u32 %v7039, 7
        %v7041 = vsub.s32 1, %v7040
        %v7042 = vrot.slane %v6648, %v7041
        %v7045 = vmul.f32 %v7038, %v7002
        %v7046 = vmul.f32 %v7042, %v7003
        %v7047 = vmul.f32 %v7038, %v7004
        %v7048 = vmul.f32 %v7042, %v7005
        %v7049 = vmul.f32 %v7038, %v7006
        %v7050 = vmul.f32 %v7042, %v7007
        %v7051 = vmul.f32 %v7038, %v7008
        %v7052 = vmul.f32 %v7042, %v7009
        %v7053 = vmul.f32 %v7038, %v7010
        %v7054 = vmul.f32 %v7042, %v7011
        %v7055 = vmul.f32 %v7038, %v7012
        %v7056 = vmul.f32 %v7042, %v7013
        %v7057 = vmul.f32 %v7038, %v7014
        %v7058 = vmul.f32 %v7042, %v7015
        %v7059 = vmul.f32 %v7038, %v7016
        %v7060 = vmul.f32 %v7042, %v7017
        %v7061 = vmul.f32 %v7038, %v7018
        %v7062 = vmul.f32 %v7042, %v7019
        %v7063 = vmul.f32 %v7038, %v7020
        %v7064 = vmul.f32 %v7042, %v7021
        %v7065 = vmul.f32 %v7038, %v7022
        %v7066 = vmul.f32 %v7042, %v7023
        %v7067 = vmul.f32 %v7038, %v7024
        %v7068 = vmul.f32 %v7042, %v7025
        %v7069 = vmul.f32 %v7038, %v7026
        %v7070 = vmul.f32 %v7042, %v7027
        %v7071 = vmul.f32 %v7038, %v7028
        %v7072 = vmul.f32 %v7042, %v7029
        %v7073 = vmul.f32 %v7038, %v7030
        %v7074 = vmul.f32 %v7042, %v7031
        %v7075 = vmul.f32 %v7038, %v7032
        %v7076 = vmul.f32 %v7042, %v7033
        %v7078 = vlaneseq
        %v7079 = vshrl.u32 %v7078, 7
        %v7080 = vsub.s32 0, %v7079
        %v7081 = vrot.slane %v6649, %v7080
        %v7082 = vlaneseq
        %v7083 = vshrl.u32 %v7082, 7
        %v7084 = vsub.s32 1, %v7083
        %v7085 = vrot.slane %v6649, %v7084
        %v7088 = vadd.f32 %v7045, %v7081
        %v7089 = vadd.f32 %v7046, %v7085
        %v7090 = vadd.f32 %v7047, %v7081
        %v7091 = vadd.f32 %v7048, %v7085
        %v7092 = vadd.f32 %v7049, %v7081
        %v7093 = vadd.f32 %v7050, %v7085
        %v7094 = vadd.f32 %v7051, %v7081
        %v7095 = vadd.f32 %v7052, %v7085
        %v7096 = vadd.f32 %v7053, %v7081
        %v7097 = vadd.f32 %v7054, %v7085
        %v7098 = vadd.f32 %v7055, %v7081
        %v7099 = vadd.f32 %v7056, %v7085
        %v7100 = vadd.f32 %v7057, %v7081
        %v7101 = vadd.f32 %v7058, %v7085
        %v7102 = vadd.f32 %v7059, %v7081
        %v7103 = vadd.f32 %v7060, %v7085
        %v7104 = vadd.f32 %v7061, %v7081
        %v7105 = vadd.f32 %v7062, %v7085
        %v7106 = vadd.f32 %v7063, %v7081
        %v7107 = vadd.f32 %v7064, %v7085
        %v7108 = vadd.f32 %v7065, %v7081
        %v7109 = vadd.f32 %v7066, %v7085
        %v7110 = vadd.f32 %v7067, %v7081
        %v7111 = vadd.f32 %v7068, %v7085
        %v7112 = vadd.f32 %v7069, %v7081
        %v7113 = vadd.f32 %v7070, %v7085
        %v7114 = vadd.f32 %v7071, %v7081
        %v7115 = vadd.f32 %v7072, %v7085
        %v7116 = vadd.f32 %v7073, %v7081
        %v7117 = vadd.f32 %v7074, %v7085
        %v7118 = vadd.f32 %v7075, %v7081
        %v7119 = vadd.f32 %v7076, %v7085
        %v7120 = vpack.c.bf16 %v7090, %v7088
        %v7121 = vpack.c.bf16 %v7091, %v7089
        %v7122 = vpack.c.bf16 %v7094, %v7092
        %v7123 = vpack.c.bf16 %v7095, %v7093
        %v7124 = vpack.c.bf16 %v7098, %v7096
        %v7125 = vpack.c.bf16 %v7099, %v7097
        %v7126 = vpack.c.bf16 %v7102, %v7100
        %v7127 = vpack.c.bf16 %v7103, %v7101
        %v7128 = vpack.c.bf16 %v7106, %v7104
        %v7129 = vpack.c.bf16 %v7107, %v7105
        %v7130 = vpack.c.bf16 %v7110, %v7108
        %v7131 = vpack.c.bf16 %v7111, %v7109
        %v7132 = vpack.c.bf16 %v7114, %v7112
        %v7133 = vpack.c.bf16 %v7115, %v7113
        %v7134 = vpack.c.bf16 %v7118, %v7116
        %v7135 = vpack.c.bf16 %v7119, %v7117
        %v7136 = vld [vmem:[#allocation15] sm:$0xff]
        %v7137 = vld [vmem:[#allocation15 + $0x8] sm:$0xff]
        %v7138 = vld [vmem:[#allocation15 + $0x10] sm:$0xff]
        %v7139 = vld [vmem:[#allocation15 + $0x18] sm:$0xff]
        %v7140 = vld [vmem:[#allocation15 + $0x20] sm:$0xff]
        %v7141 = vld [vmem:[#allocation15 + $0x28] sm:$0xff]
        %v7142 = vld [vmem:[#allocation15 + $0x30] sm:$0xff]
        %v7143 = vld [vmem:[#allocation15 + $0x38] sm:$0xff]
        %v7144 = vld [vmem:[#allocation15 + $0x40] sm:$0xff]
        %v7145 = vld [vmem:[#allocation15 + $0x48] sm:$0xff]
        %v7146 = vld [vmem:[#allocation15 + $0x50] sm:$0xff]
        %v7147 = vld [vmem:[#allocation15 + $0x58] sm:$0xff]
        %v7148 = vld [vmem:[#allocation15 + $0x60] sm:$0xff]
        %v7149 = vld [vmem:[#allocation15 + $0x68] sm:$0xff]
        %v7150 = vld [vmem:[#allocation15 + $0x70] sm:$0xff]
        %v7151 = vld [vmem:[#allocation15 + $0x78] sm:$0xff]
        %v7152 = vld [vmem:[#allocation15 + $0x80] sm:$0xff]
        %v7153 = vld [vmem:[#allocation15 + $0x88] sm:$0xff]
        %v7154 = vld [vmem:[#allocation15 + $0x90] sm:$0xff]
        %v7155 = vld [vmem:[#allocation15 + $0x98] sm:$0xff]
        %v7156 = vld [vmem:[#allocation15 + $0xa0] sm:$0xff]
        %v7157 = vld [vmem:[#allocation15 + $0xa8] sm:$0xff]
        %v7158 = vld [vmem:[#allocation15 + $0xb0] sm:$0xff]
        %v7159 = vld [vmem:[#allocation15 + $0xb8] sm:$0xff]
        %v7160 = vld [vmem:[#allocation15 + $0xc0] sm:$0xff]
        %v7161 = vld [vmem:[#allocation15 + $0xc8] sm:$0xff]
        %v7162 = vld [vmem:[#allocation15 + $0xd0] sm:$0xff]
        %v7163 = vld [vmem:[#allocation15 + $0xd8] sm:$0xff]
        %v7164 = vld [vmem:[#allocation15 + $0xe0] sm:$0xff]
        %v7165 = vld [vmem:[#allocation15 + $0xe8] sm:$0xff]
        %v7166 = vld [vmem:[#allocation15 + $0xf0] sm:$0xff]
        %v7167 = vld [vmem:[#allocation15 + $0xf8] sm:$0xff]
        %v7168 = vld [vmem:[#allocation15 + $0x100] sm:$0xff]
        %v7169 = vld [vmem:[#allocation15 + $0x108] sm:$0xff]
        %v7170 = vld [vmem:[#allocation15 + $0x110] sm:$0xff]
        %v7171 = vld [vmem:[#allocation15 + $0x118] sm:$0xff]
        %v7172 = vld [vmem:[#allocation15 + $0x120] sm:$0xff]
        %v7173 = vld [vmem:[#allocation15 + $0x128] sm:$0xff]
        %v7174 = vld [vmem:[#allocation15 + $0x130] sm:$0xff]
        %v7175 = vld [vmem:[#allocation15 + $0x138] sm:$0xff]
        %v7176 = vld [vmem:[#allocation15 + $0x140] sm:$0xff]
        %v7177 = vld [vmem:[#allocation15 + $0x148] sm:$0xff]
        %v7178 = vld [vmem:[#allocation15 + $0x150] sm:$0xff]
        %v7179 = vld [vmem:[#allocation15 + $0x158] sm:$0xff]
        %v7180 = vld [vmem:[#allocation15 + $0x160] sm:$0xff]
        %v7181 = vld [vmem:[#allocation15 + $0x168] sm:$0xff]
        %v7182 = vld [vmem:[#allocation15 + $0x170] sm:$0xff]
        %v7183 = vld [vmem:[#allocation15 + $0x178] sm:$0xff]
        %v7184 = vld [vmem:[#allocation15 + $0x180] sm:$0xff]
        %v7185 = vld [vmem:[#allocation15 + $0x188] sm:$0xff]
        %v7186 = vld [vmem:[#allocation15 + $0x190] sm:$0xff]
        %v7187 = vld [vmem:[#allocation15 + $0x198] sm:$0xff]
        %v7188 = vld [vmem:[#allocation15 + $0x1a0] sm:$0xff]
        %v7189 = vld [vmem:[#allocation15 + $0x1a8] sm:$0xff]
        %v7190 = vld [vmem:[#allocation15 + $0x1b0] sm:$0xff]
        %v7191 = vld [vmem:[#allocation15 + $0x1b8] sm:$0xff]
        %v7192 = vld [vmem:[#allocation15 + $0x1c0] sm:$0xff]
        %v7193 = vld [vmem:[#allocation15 + $0x1c8] sm:$0xff]
        %v7194 = vld [vmem:[#allocation15 + $0x1d0] sm:$0xff]
        %v7195 = vld [vmem:[#allocation15 + $0x1d8] sm:$0xff]
        %v7196 = vld [vmem:[#allocation15 + $0x1e0] sm:$0xff]
        %v7197 = vld [vmem:[#allocation15 + $0x1e8] sm:$0xff]
        %v7198 = vld [vmem:[#allocation15 + $0x1f0] sm:$0xff]
        %v7199 = vld [vmem:[#allocation15 + $0x1f8] sm:$0xff]
        %v7200 = vld [vmem:[%s15] sm:$0xf]
        %v7202 = vlaneseq
        %v7203 = vshrl.u32 %v7202, 7
        %v7204 = vsub.s32 0, %v7203
        %v7205 = vrot.slane %v7200, %v7204
        %v7206 = vlaneseq
        %v7207 = vshrl.u32 %v7206, 7
        %v7208 = vsub.s32 1, %v7207
        %v7209 = vrot.slane %v7200, %v7208
        %v7210 = vlaneseq
        %v7211 = vshrl.u32 %v7210, 7
        %v7212 = vsub.s32 2, %v7211
        %v7213 = vrot.slane %v7200, %v7212
        %v7214 = vlaneseq
        %v7215 = vshrl.u32 %v7214, 7
        %v7216 = vsub.s32 3, %v7215
        %v7217 = vrot.slane %v7200, %v7216
        %v7286 = vunpack.c.l.b16 %v7136
        %v7287 = vunpack.c.h.b16 %v7136
        %v7288 = vunpack.c.l.b16 %v7137
        %v7289 = vunpack.c.h.b16 %v7137
        %v7290 = vunpack.c.l.b16 %v7138
        %v7291 = vunpack.c.h.b16 %v7138
        %v7292 = vunpack.c.l.b16 %v7139
        %v7293 = vunpack.c.h.b16 %v7139
        %v7294 = vunpack.c.l.b16 %v7140
        %v7295 = vunpack.c.h.b16 %v7140
        %v7296 = vunpack.c.l.b16 %v7141
        %v7297 = vunpack.c.h.b16 %v7141
        %v7298 = vunpack.c.l.b16 %v7142
        %v7299 = vunpack.c.h.b16 %v7142
        %v7300 = vunpack.c.l.b16 %v7143
        %v7301 = vunpack.c.h.b16 %v7143
        %v7302 = vunpack.c.l.b16 %v7144
        %v7303 = vunpack.c.h.b16 %v7144
        %v7304 = vunpack.c.l.b16 %v7145
        %v7305 = vunpack.c.h.b16 %v7145
        %v7306 = vunpack.c.l.b16 %v7146
        %v7307 = vunpack.c.h.b16 %v7146
        %v7308 = vunpack.c.l.b16 %v7147
        %v7309 = vunpack.c.h.b16 %v7147
        %v7310 = vunpack.c.l.b16 %v7148
        %v7311 = vunpack.c.h.b16 %v7148
        %v7312 = vunpack.c.l.b16 %v7149
        %v7313 = vunpack.c.h.b16 %v7149
        %v7314 = vunpack.c.l.b16 %v7150
        %v7315 = vunpack.c.h.b16 %v7150
        %v7316 = vunpack.c.l.b16 %v7151
        %v7317 = vunpack.c.h.b16 %v7151
        %v7318 = vunpack.c.l.b16 %v7152
        %v7319 = vunpack.c.h.b16 %v7152
        %v7320 = vunpack.c.l.b16 %v7153
        %v7321 = vunpack.c.h.b16 %v7153
        %v7322 = vunpack.c.l.b16 %v7154
        %v7323 = vunpack.c.h.b16 %v7154
        %v7324 = vunpack.c.l.b16 %v7155
        %v7325 = vunpack.c.h.b16 %v7155
        %v7326 = vunpack.c.l.b16 %v7156
        %v7327 = vunpack.c.h.b16 %v7156
        %v7328 = vunpack.c.l.b16 %v7157
        %v7329 = vunpack.c.h.b16 %v7157
        %v7330 = vunpack.c.l.b16 %v7158
        %v7331 = vunpack.c.h.b16 %v7158
        %v7332 = vunpack.c.l.b16 %v7159
        %v7333 = vunpack.c.h.b16 %v7159
        %v7334 = vunpack.c.l.b16 %v7160
        %v7335 = vunpack.c.h.b16 %v7160
        %v7336 = vunpack.c.l.b16 %v7161
        %v7337 = vunpack.c.h.b16 %v7161
        %v7338 = vunpack.c.l.b16 %v7162
        %v7339 = vunpack.c.h.b16 %v7162
        %v7340 = vunpack.c.l.b16 %v7163
        %v7341 = vunpack.c.h.b16 %v7163
        %v7342 = vunpack.c.l.b16 %v7164
        %v7343 = vunpack.c.h.b16 %v7164
        %v7344 = vunpack.c.l.b16 %v7165
        %v7345 = vunpack.c.h.b16 %v7165
        %v7346 = vunpack.c.l.b16 %v7166
        %v7347 = vunpack.c.h.b16 %v7166
        %v7348 = vunpack.c.l.b16 %v7167
        %v7349 = vunpack.c.h.b16 %v7167
        %v7350 = vunpack.c.l.b16 %v7168
        %v7351 = vunpack.c.h.b16 %v7168
        %v7352 = vunpack.c.l.b16 %v7169
        %v7353 = vunpack.c.h.b16 %v7169
        %v7354 = vunpack.c.l.b16 %v7170
        %v7355 = vunpack.c.h.b16 %v7170
        %v7356 = vunpack.c.l.b16 %v7171
        %v7357 = vunpack.c.h.b16 %v7171
        %v7358 = vunpack.c.l.b16 %v7172
        %v7359 = vunpack.c.h.b16 %v7172
        %v7360 = vunpack.c.l.b16 %v7173
        %v7361 = vunpack.c.h.b16 %v7173
        %v7362 = vunpack.c.l.b16 %v7174
        %v7363 = vunpack.c.h.b16 %v7174
        %v7364 = vunpack.c.l.b16 %v7175
        %v7365 = vunpack.c.h.b16 %v7175
        %v7366 = vunpack.c.l.b16 %v7176
        %v7367 = vunpack.c.h.b16 %v7176
        %v7368 = vunpack.c.l.b16 %v7177
        %v7369 = vunpack.c.h.b16 %v7177
        %v7370 = vunpack.c.l.b16 %v7178
        %v7371 = vunpack.c.h.b16 %v7178
        %v7372 = vunpack.c.l.b16 %v7179
        %v7373 = vunpack.c.h.b16 %v7179
        %v7374 = vunpack.c.l.b16 %v7180
        %v7375 = vunpack.c.h.b16 %v7180
        %v7376 = vunpack.c.l.b16 %v7181
        %v7377 = vunpack.c.h.b16 %v7181
        %v7378 = vunpack.c.l.b16 %v7182
        %v7379 = vunpack.c.h.b16 %v7182
        %v7380 = vunpack.c.l.b16 %v7183
        %v7381 = vunpack.c.h.b16 %v7183
        %v7382 = vunpack.c.l.b16 %v7184
        %v7383 = vunpack.c.h.b16 %v7184
        %v7384 = vunpack.c.l.b16 %v7185
        %v7385 = vunpack.c.h.b16 %v7185
        %v7386 = vunpack.c.l.b16 %v7186
        %v7387 = vunpack.c.h.b16 %v7186
        %v7388 = vunpack.c.l.b16 %v7187
        %v7389 = vunpack.c.h.b16 %v7187
        %v7390 = vunpack.c.l.b16 %v7188
        %v7391 = vunpack.c.h.b16 %v7188
        %v7392 = vunpack.c.l.b16 %v7189
        %v7393 = vunpack.c.h.b16 %v7189
        %v7394 = vunpack.c.l.b16 %v7190
        %v7395 = vunpack.c.h.b16 %v7190
        %v7396 = vunpack.c.l.b16 %v7191
        %v7397 = vunpack.c.h.b16 %v7191
        %v7398 = vunpack.c.l.b16 %v7192
        %v7399 = vunpack.c.h.b16 %v7192
        %v7400 = vunpack.c.l.b16 %v7193
        %v7401 = vunpack.c.h.b16 %v7193
        %v7402 = vunpack.c.l.b16 %v7194
        %v7403 = vunpack.c.h.b16 %v7194
        %v7404 = vunpack.c.l.b16 %v7195
        %v7405 = vunpack.c.h.b16 %v7195
        %v7406 = vunpack.c.l.b16 %v7196
        %v7407 = vunpack.c.h.b16 %v7196
        %v7408 = vunpack.c.l.b16 %v7197
        %v7409 = vunpack.c.h.b16 %v7197
        %v7410 = vunpack.c.l.b16 %v7198
        %v7411 = vunpack.c.h.b16 %v7198
        %v7412 = vunpack.c.l.b16 %v7199
        %v7413 = vunpack.c.h.b16 %v7199
        %v7414 = vpack.c.b16 %v7290, %v7286
        %v7415 = vpack.c.b16 %v7291, %v7287
        %v7416 = vpack.c.b16 %v7292, %v7288
        %v7417 = vpack.c.b16 %v7293, %v7289
        %v7418 = vpack.c.b16 %v7298, %v7294
        %v7419 = vpack.c.b16 %v7299, %v7295
        %v7420 = vpack.c.b16 %v7300, %v7296
        %v7421 = vpack.c.b16 %v7301, %v7297
        %v7422 = vpack.c.b16 %v7306, %v7302
        %v7423 = vpack.c.b16 %v7307, %v7303
        %v7424 = vpack.c.b16 %v7308, %v7304
        %v7425 = vpack.c.b16 %v7309, %v7305
        %v7426 = vpack.c.b16 %v7314, %v7310
        %v7427 = vpack.c.b16 %v7315, %v7311
        %v7428 = vpack.c.b16 %v7316, %v7312
        %v7429 = vpack.c.b16 %v7317, %v7313
        %v7430 = vpack.c.b16 %v7322, %v7318
        %v7431 = vpack.c.b16 %v7323, %v7319
        %v7432 = vpack.c.b16 %v7324, %v7320
        %v7433 = vpack.c.b16 %v7325, %v7321
        %v7434 = vpack.c.b16 %v7330, %v7326
        %v7435 = vpack.c.b16 %v7331, %v7327
        %v7436 = vpack.c.b16 %v7332, %v7328
        %v7437 = vpack.c.b16 %v7333, %v7329
        %v7438 = vpack.c.b16 %v7338, %v7334
        %v7439 = vpack.c.b16 %v7339, %v7335
        %v7440 = vpack.c.b16 %v7340, %v7336
        %v7441 = vpack.c.b16 %v7341, %v7337
        %v7442 = vpack.c.b16 %v7346, %v7342
        %v7443 = vpack.c.b16 %v7347, %v7343
        %v7444 = vpack.c.b16 %v7348, %v7344
        %v7445 = vpack.c.b16 %v7349, %v7345
        %v7446 = vpack.c.b16 %v7354, %v7350
        %v7447 = vpack.c.b16 %v7355, %v7351
        %v7448 = vpack.c.b16 %v7356, %v7352
        %v7449 = vpack.c.b16 %v7357, %v7353
        %v7450 = vpack.c.b16 %v7362, %v7358
        %v7451 = vpack.c.b16 %v7363, %v7359
        %v7452 = vpack.c.b16 %v7364, %v7360
        %v7453 = vpack.c.b16 %v7365, %v7361
        %v7454 = vpack.c.b16 %v7370, %v7366
        %v7455 = vpack.c.b16 %v7371, %v7367
        %v7456 = vpack.c.b16 %v7372, %v7368
        %v7457 = vpack.c.b16 %v7373, %v7369
        %v7458 = vpack.c.b16 %v7378, %v7374
        %v7459 = vpack.c.b16 %v7379, %v7375
        %v7460 = vpack.c.b16 %v7380, %v7376
        %v7461 = vpack.c.b16 %v7381, %v7377
        %v7462 = vpack.c.b16 %v7386, %v7382
        %v7463 = vpack.c.b16 %v7387, %v7383
        %v7464 = vpack.c.b16 %v7388, %v7384
        %v7465 = vpack.c.b16 %v7389, %v7385
        %v7466 = vpack.c.b16 %v7394, %v7390
        %v7467 = vpack.c.b16 %v7395, %v7391
        %v7468 = vpack.c.b16 %v7396, %v7392
        %v7469 = vpack.c.b16 %v7397, %v7393
        %v7470 = vpack.c.b16 %v7402, %v7398
        %v7471 = vpack.c.b16 %v7403, %v7399
        %v7472 = vpack.c.b16 %v7404, %v7400
        %v7473 = vpack.c.b16 %v7405, %v7401
        %v7474 = vpack.c.b16 %v7410, %v7406
        %v7475 = vpack.c.b16 %v7411, %v7407
        %v7476 = vpack.c.b16 %v7412, %v7408
        %v7477 = vpack.c.b16 %v7413, %v7409
        %7542 = vmatprep.subr.bf16.mxu0 %v7415
        %7543 = vmatpush1.bf16.msra.mxu0 %v7414
        %7544 = vmatprep.subr.bf16.mxu0 %v7419
        %7545 = vmatpush1.bf16.msra.mxu0 %v7418
        %7546 = vmatprep.subr.bf16.mxu0 %v7423
        %7547 = vmatpush1.bf16.msra.mxu0 %v7422
        %7548 = vmatprep.subr.bf16.mxu0 %v7427
        %7549 = vmatpush1.bf16.msra.mxu0 %v7426
        %7550 = vmatprep.subr.bf16.mxu0 %v7431
        %7551 = vmatpush1.bf16.msra.mxu0 %v7430
        %7552 = vmatprep.subr.bf16.mxu0 %v7435
        %7553 = vmatpush1.bf16.msra.mxu0 %v7434
        %7554 = vmatprep.subr.bf16.mxu0 %v7439
        %7555 = vmatpush1.bf16.msra.mxu0 %v7438
        %7556 = vmatprep.subr.bf16.mxu0 %v7443
        %7557 = vmatpush1.bf16.msra.mxu0 %v7442
        %7558 = vmatprep.subr.bf16.mxu0 %v7447
        %7559 = vmatpush1.bf16.msra.mxu0 %v7446
        %7560 = vmatprep.subr.bf16.mxu0 %v7451
        %7561 = vmatpush1.bf16.msra.mxu0 %v7450
        %7562 = vmatprep.subr.bf16.mxu0 %v7455
        %7563 = vmatpush1.bf16.msra.mxu0 %v7454
        %7564 = vmatprep.subr.bf16.mxu0 %v7459
        %7565 = vmatpush1.bf16.msra.mxu0 %v7458
        %7566 = vmatprep.subr.bf16.mxu0 %v7463
        %7567 = vmatpush1.bf16.msra.mxu0 %v7462
        %7568 = vmatprep.subr.bf16.mxu0 %v7467
        %7569 = vmatpush1.bf16.msra.mxu0 %v7466
        %7570 = vmatprep.subr.bf16.mxu0 %v7471
        %7571 = vmatpush1.bf16.msra.mxu0 %v7470
        %7572 = vmatprep.subr.bf16.mxu0 %v7475
        %7573 = vmatpush1.bf16.msra.mxu0 %v7474
        %7574 = vmatprep.mubr.bf16.mxu0 %v7121
        %7575 = vmatmul.mubr.bf16.gmra.mrb[0].mxu0 %v7120
        %v7576 = vpop.f32.mrb[0].mxu0
        %v7577 = vadd.f32 %v7205, %v7576
        %v7578 = vpop.f32.mrb[0].mxu0
        %v7579 = vadd.f32 %v7209, %v7578
        %v7580 = vpop.f32.mrb[0].mxu0
        %v7581 = vadd.f32 %v7205, %v7580
        %v7582 = vpop.f32.mrb[0].mxu0
        %v7583 = vadd.f32 %v7209, %v7582
        %7584 = vmatprep.mubr.bf16.mxu0 %v7123
        %7585 = vmatmul.mubr.bf16.gmra.mrb[0].mxu0 %v7122
        %v7586 = vpop.f32.mrb[0].mxu0
        %v7587 = vadd.f32 %v7205, %v7586
        %v7588 = vpop.f32.mrb[0].mxu0
        %v7589 = vadd.f32 %v7209, %v7588
        %v7590 = vpop.f32.mrb[0].mxu0
        %v7591 = vadd.f32 %v7205, %v7590
        %v7592 = vpop.f32.mrb[0].mxu0
        %v7593 = vadd.f32 %v7209, %v7592
        %7594 = vmatprep.mubr.bf16.mxu0 %v7125
        %7595 = vmatmul.mubr.bf16.gmra.mrb[0].mxu0 %v7124
        %v7596 = vpop.f32.mrb[0].mxu0
        %v7597 = vadd.f32 %v7205, %v7596
        %v7598 = vpop.f32.mrb[0].mxu0
        %v7599 = vadd.f32 %v7209, %v7598
        %v7600 = vpop.f32.mrb[0].mxu0
        %v7601 = vadd.f32 %v7205, %v7600
        %v7602 = vpop.f32.mrb[0].mxu0
        %v7603 = vadd.f32 %v7209, %v7602
        %7604 = vmatprep.mubr.bf16.mxu0 %v7127
        %7605 = vmatmul.mubr.bf16.gmra.mrb[0].mxu0 %v7126
        %v7606 = vpop.f32.mrb[0].mxu0
        %v7607 = vadd.f32 %v7205, %v7606
        %v7608 = vpop.f32.mrb[0].mxu0
        %v7609 = vadd.f32 %v7209, %v7608
        %v7610 = vpop.f32.mrb[0].mxu0
        %v7611 = vadd.f32 %v7205, %v7610
        %v7612 = vpop.f32.mrb[0].mxu0
        %v7613 = vadd.f32 %v7209, %v7612
        %7614 = vmatprep.mubr.bf16.mxu0 %v7129
        %7615 = vmatmul.mubr.bf16.gmra.mrb[0].mxu0 %v7128
        %v7616 = vpop.f32.mrb[0].mxu0
        %v7617 = vadd.f32 %v7205, %v7616
        %v7618 = vpop.f32.mrb[0].mxu0
        %v7619 = vadd.f32 %v7209, %v7618
        %v7620 = vpop.f32.mrb[0].mxu0
        %v7621 = vadd.f32 %v7205, %v7620
        %v7622 = vpop.f32.mrb[0].mxu0
        %v7623 = vadd.f32 %v7209, %v7622
        %7624 = vmatprep.mubr.bf16.mxu0 %v7131
        %7625 = vmatmul.mubr.bf16.gmra.mrb[0].mxu0 %v7130
        %v7626 = vpop.f32.mrb[0].mxu0
        %v7627 = vadd.f32 %v7205, %v7626
        %v7628 = vpop.f32.mrb[0].mxu0
        %v7629 = vadd.f32 %v7209, %v7628
        %v7630 = vpop.f32.mrb[0].mxu0
        %v7631 = vadd.f32 %v7205, %v7630
        %v7632 = vpop.f32.mrb[0].mxu0
        %v7633 = vadd.f32 %v7209, %v7632
        %7634 = vmatprep.mubr.bf16.mxu0 %v7133
        %7635 = vmatmul.mubr.bf16.gmra.mrb[0].mxu0 %v7132
        %v7636 = vpop.f32.mrb[0].mxu0
        %v7637 = vadd.f32 %v7205, %v7636
        %v7638 = vpop.f32.mrb[0].mxu0
        %v7639 = vadd.f32 %v7209, %v7638
        %v7640 = vpop.f32.mrb[0].mxu0
        %v7641 = vadd.f32 %v7205, %v7640
        %v7642 = vpop.f32.mrb[0].mxu0
        %v7643 = vadd.f32 %v7209, %v7642
        %7644 = vmatprep.mubr.bf16.mxu0 %v7135
        %7645 = vmatmul.mubr.bf16.gmra.mrb[0].mxu0 %v7134
        %v7646 = vpop.f32.mrb[0].mxu0
        %v7647 = vadd.f32 %v7205, %v7646
        %v7648 = vpop.f32.mrb[0].mxu0
        %v7649 = vadd.f32 %v7209, %v7648
        %v7650 = vpop.f32.mrb[0].mxu0
        %v7651 = vadd.f32 %v7205, %v7650
        %v7652 = vpop.f32.mrb[0].mxu0
        %v7653 = vadd.f32 %v7209, %v7652
        %7654 = vdwg.mxu0
        %7655 = vmatprep.subr.bf16.mxu0 %v7417
        %7656 = vmatpush1.bf16.msra.mxu0 %v7416
        %7657 = vmatprep.subr.bf16.mxu0 %v7421
        %7658 = vmatpush1.bf16.msra.mxu0 %v7420
        %7659 = vmatprep.subr.bf16.mxu0 %v7425
        %7660 = vmatpush1.bf16.msra.mxu0 %v7424
        %7661 = vmatprep.subr.bf16.mxu0 %v7429
        %7662 = vmatpush1.bf16.msra.mxu0 %v7428
        %7663 = vmatprep.subr.bf16.mxu0 %v7433
        %7664 = vmatpush1.bf16.msra.mxu0 %v7432
        %7665 = vmatprep.subr.bf16.mxu0 %v7437
        %7666 = vmatpush1.bf16.msra.mxu0 %v7436
        %7667 = vmatprep.subr.bf16.mxu0 %v7441
        %7668 = vmatpush1.bf16.msra.mxu0 %v7440
        %7669 = vmatprep.subr.bf16.mxu0 %v7445
        %7670 = vmatpush1.bf16.msra.mxu0 %v7444
        %7671 = vmatprep.subr.bf16.mxu0 %v7449
        %7672 = vmatpush1.bf16.msra.mxu0 %v7448
        %7673 = vmatprep.subr.bf16.mxu0 %v7453
        %7674 = vmatpush1.bf16.msra.mxu0 %v7452
        %7675 = vmatprep.subr.bf16.mxu0 %v7457
        %7676 = vmatpush1.bf16.msra.mxu0 %v7456
        %7677 = vmatprep.subr.bf16.mxu0 %v7461
        %7678 = vmatpush1.bf16.msra.mxu0 %v7460
        %7679 = vmatprep.subr.bf16.mxu0 %v7465
        %7680 = vmatpush1.bf16.msra.mxu0 %v7464
        %7681 = vmatprep.subr.bf16.mxu0 %v7469
        %7682 = vmatpush1.bf16.msra.mxu0 %v7468
        %7683 = vmatprep.subr.bf16.mxu0 %v7473
        %7684 = vmatpush1.bf16.msra.mxu0 %v7472
        %7685 = vmatprep.subr.bf16.mxu0 %v7477
        %7686 = vmatpush1.bf16.msra.mxu0 %v7476
        %7687 = vmatprep.mubr.bf16.mxu0 %v7121
        %7688 = vmatmul.mubr.bf16.gmra.mrb[0].mxu0 %v7120
        %v7689 = vpop.f32.mrb[0].mxu0
        %v7690 = vadd.f32 %v7213, %v7689
        %v7691 = vpop.f32.mrb[0].mxu0
        %v7692 = vadd.f32 %v7217, %v7691
        %v7693 = vpop.f32.mrb[0].mxu0
        %v7694 = vadd.f32 %v7213, %v7693
        %v7695 = vpop.f32.mrb[0].mxu0
        %v7696 = vadd.f32 %v7217, %v7695
        %7697 = vmatprep.mubr.bf16.mxu0 %v7123
        %7698 = vmatmul.mubr.bf16.gmra.mrb[0].mxu0 %v7122
        %v7699 = vpop.f32.mrb[0].mxu0
        %v7700 = vadd.f32 %v7213, %v7699
        %v7701 = vpop.f32.mrb[0].mxu0
        %v7702 = vadd.f32 %v7217, %v7701
        %v7703 = vpop.f32.mrb[0].mxu0
        %v7704 = vadd.f32 %v7213, %v7703
        %v7705 = vpop.f32.mrb[0].mxu0
        %v7706 = vadd.f32 %v7217, %v7705
        %7707 = vmatprep.mubr.bf16.mxu0 %v7125
        %7708 = vmatmul.mubr.bf16.gmra.mrb[0].mxu0 %v7124
        %v7709 = vpop.f32.mrb[0].mxu0
        %v7710 = vadd.f32 %v7213, %v7709
        %v7711 = vpop.f32.mrb[0].mxu0
        %v7712 = vadd.f32 %v7217, %v7711
        %v7713 = vpop.f32.mrb[0].mxu0
        %v7714 = vadd.f32 %v7213, %v7713
        %v7715 = vpop.f32.mrb[0].mxu0
        %v7716 = vadd.f32 %v7217, %v7715
        %7717 = vmatprep.mubr.bf16.mxu0 %v7127
        %7718 = vmatmul.mubr.bf16.gmra.mrb[0].mxu0 %v7126
        %v7719 = vpop.f32.mrb[0].mxu0
        %v7720 = vadd.f32 %v7213, %v7719
        %v7721 = vpop.f32.mrb[0].mxu0
        %v7722 = vadd.f32 %v7217, %v7721
        %v7723 = vpop.f32.mrb[0].mxu0
        %v7724 = vadd.f32 %v7213, %v7723
        %v7725 = vpop.f32.mrb[0].mxu0
        %v7726 = vadd.f32 %v7217, %v7725
        %7727 = vmatprep.mubr.bf16.mxu0 %v7129
        %7728 = vmatmul.mubr.bf16.gmra.mrb[0].mxu0 %v7128
        %v7729 = vpop.f32.mrb[0].mxu0
        %v7730 = vadd.f32 %v7213, %v7729
        %v7731 = vpop.f32.mrb[0].mxu0
        %v7732 = vadd.f32 %v7217, %v7731
        %v7733 = vpop.f32.mrb[0].mxu0
        %v7734 = vadd.f32 %v7213, %v7733
        %v7735 = vpop.f32.mrb[0].mxu0
        %v7736 = vadd.f32 %v7217, %v7735
        %7737 = vmatprep.mubr.bf16.mxu0 %v7131
        %7738 = vmatmul.mubr.bf16.gmra.mrb[0].mxu0 %v7130
        %v7739 = vpop.f32.mrb[0].mxu0
        %v7740 = vadd.f32 %v7213, %v7739
        %v7741 = vpop.f32.mrb[0].mxu0
        %v7742 = vadd.f32 %v7217, %v7741
        %v7743 = vpop.f32.mrb[0].mxu0
        %v7744 = vadd.f32 %v7213, %v7743
        %v7745 = vpop.f32.mrb[0].mxu0
        %v7746 = vadd.f32 %v7217, %v7745
        %7747 = vmatprep.mubr.bf16.mxu0 %v7133
        %7748 = vmatmul.mubr.bf16.gmra.mrb[0].mxu0 %v7132
        %v7749 = vpop.f32.mrb[0].mxu0
        %v7750 = vadd.f32 %v7213, %v7749
        %v7751 = vpop.f32.mrb[0].mxu0
        %v7752 = vadd.f32 %v7217, %v7751
        %v7753 = vpop.f32.mrb[0].mxu0
        %v7754 = vadd.f32 %v7213, %v7753
        %v7755 = vpop.f32.mrb[0].mxu0
        %v7756 = vadd.f32 %v7217, %v7755
        %7757 = vmatprep.mubr.bf16.mxu0 %v7135
        %7758 = vmatmul.mubr.bf16.gmra.mrb[0].mxu0 %v7134
        %v7759 = vpop.f32.mrb[0].mxu0
        %v7760 = vadd.f32 %v7213, %v7759
        %v7761 = vpop.f32.mrb[0].mxu0
        %v7762 = vadd.f32 %v7217, %v7761
        %v7763 = vpop.f32.mrb[0].mxu0
        %v7764 = vadd.f32 %v7213, %v7763
        %v7765 = vpop.f32.mrb[0].mxu0
        %v7766 = vadd.f32 %v7217, %v7765
        %7767 = vdwg.mxu0
        %v7768 = vmax.f32 %v7577, 0.0
        %v7769 = vmax.f32 %v7579, 0.0
        %v7770 = vmax.f32 %v7690, 0.0
        %v7771 = vmax.f32 %v7692, 0.0
        %v7772 = vmax.f32 %v7581, 0.0
        %v7773 = vmax.f32 %v7583, 0.0
        %v7774 = vmax.f32 %v7694, 0.0
        %v7775 = vmax.f32 %v7696, 0.0
        %v7776 = vmax.f32 %v7587, 0.0
        %v7777 = vmax.f32 %v7589, 0.0
        %v7778 = vmax.f32 %v7700, 0.0
        %v7779 = vmax.f32 %v7702, 0.0
        %v7780 = vmax.f32 %v7591, 0.0
        %v7781 = vmax.f32 %v7593, 0.0
        %v7782 = vmax.f32 %v7704, 0.0
        %v7783 = vmax.f32 %v7706, 0.0
        %v7784 = vmax.f32 %v7597, 0.0
        %v7785 = vmax.f32 %v7599, 0.0
        %v7786 = vmax.f32 %v7710, 0.0
        %v7787 = vmax.f32 %v7712, 0.0
        %v7788 = vmax.f32 %v7601, 0.0
        %v7789 = vmax.f32 %v7603, 0.0
        %v7790 = vmax.f32 %v7714, 0.0
        %v7791 = vmax.f32 %v7716, 0.0
        %v7792 = vmax.f32 %v7607, 0.0
        %v7793 = vmax.f32 %v7609, 0.0
        %v7794 = vmax.f32 %v7720, 0.0
        %v7795 = vmax.f32 %v7722, 0.0
        %v7796 = vmax.f32 %v7611, 0.0
        %v7797 = vmax.f32 %v7613, 0.0
        %v7798 = vmax.f32 %v7724, 0.0
        %v7799 = vmax.f32 %v7726, 0.0
        %v7800 = vmax.f32 %v7617, 0.0
        %v7801 = vmax.f32 %v7619, 0.0
        %v7802 = vmax.f32 %v7730, 0.0
        %v7803 = vmax.f32 %v7732, 0.0
        %v7804 = vmax.f32 %v7621, 0.0
        %v7805 = vmax.f32 %v7623, 0.0
        %v7806 = vmax.f32 %v7734, 0.0
        %v7807 = vmax.f32 %v7736, 0.0
        %v7808 = vmax.f32 %v7627, 0.0
        %v7809 = vmax.f32 %v7629, 0.0
        %v7810 = vmax.f32 %v7740, 0.0
        %v7811 = vmax.f32 %v7742, 0.0
        %v7812 = vmax.f32 %v7631, 0.0
        %v7813 = vmax.f32 %v7633, 0.0
        %v7814 = vmax.f32 %v7744, 0.0
        %v7815 = vmax.f32 %v7746, 0.0
        %v7816 = vmax.f32 %v7637, 0.0
        %v7817 = vmax.f32 %v7639, 0.0
        %v7818 = vmax.f32 %v7750, 0.0
        %v7819 = vmax.f32 %v7752, 0.0
        %v7820 = vmax.f32 %v7641, 0.0
        %v7821 = vmax.f32 %v7643, 0.0
        %v7822 = vmax.f32 %v7754, 0.0
        %v7823 = vmax.f32 %v7756, 0.0
        %v7824 = vmax.f32 %v7647, 0.0
        %v7825 = vmax.f32 %v7649, 0.0
        %v7826 = vmax.f32 %v7760, 0.0
        %v7827 = vmax.f32 %v7762, 0.0
        %v7828 = vmax.f32 %v7651, 0.0
        %v7829 = vmax.f32 %v7653, 0.0
        %v7830 = vmax.f32 %v7764, 0.0
        %v7831 = vmax.f32 %v7766, 0.0
        %v7832 = vpack.c.bf16 %v7772, %v7768
        %v7833 = vpack.c.bf16 %v7773, %v7769
        %v7834 = vpack.c.bf16 %v7774, %v7770
        %v7835 = vpack.c.bf16 %v7775, %v7771
        %v7836 = vpack.c.bf16 %v7780, %v7776
        %v7837 = vpack.c.bf16 %v7781, %v7777
        %v7838 = vpack.c.bf16 %v7782, %v7778
        %v7839 = vpack.c.bf16 %v7783, %v7779
        %v7840 = vpack.c.bf16 %v7788, %v7784
        %v7841 = vpack.c.bf16 %v7789, %v7785
        %v7842 = vpack.c.bf16 %v7790, %v7786
        %v7843 = vpack.c.bf16 %v7791, %v7787
        %v7844 = vpack.c.bf16 %v7796, %v7792
        %v7845 = vpack.c.bf16 %v7797, %v7793
        %v7846 = vpack.c.bf16 %v7798, %v7794
        %v7847 = vpack.c.bf16 %v7799, %v7795
        %v7848 = vpack.c.bf16 %v7804, %v7800
        %v7849 = vpack.c.bf16 %v7805, %v7801
        %v7850 = vpack.c.bf16 %v7806, %v7802
        %v7851 = vpack.c.bf16 %v7807, %v7803
        %v7852 = vpack.c.bf16 %v7812, %v7808
        %v7853 = vpack.c.bf16 %v7813, %v7809
        %v7854 = vpack.c.bf16 %v7814, %v7810
        %v7855 = vpack.c.bf16 %v7815, %v7811
        %v7856 = vpack.c.bf16 %v7820, %v7816
        %v7857 = vpack.c.bf16 %v7821, %v7817
        %v7858 = vpack.c.bf16 %v7822, %v7818
        %v7859 = vpack.c.bf16 %v7823, %v7819
        %v7860 = vpack.c.bf16 %v7828, %v7824
        %v7861 = vpack.c.bf16 %v7829, %v7825
        %v7862 = vpack.c.bf16 %v7830, %v7826
        %v7863 = vpack.c.bf16 %v7831, %v7827
        %v7864 = vld [vmem:[#allocation16] sm:$0xff]
        %v7865 = vld [vmem:[#allocation16 + $0x8] sm:$0xff]
        %v7866 = vld [vmem:[#allocation16 + $0x10] sm:$0xff]
        %v7867 = vld [vmem:[#allocation16 + $0x18] sm:$0xff]
        %v7868 = vld [vmem:[#allocation16 + $0x20] sm:$0xff]
        %v7869 = vld [vmem:[#allocation16 + $0x28] sm:$0xff]
        %v7870 = vld [vmem:[#allocation16 + $0x30] sm:$0xff]
        %v7871 = vld [vmem:[#allocation16 + $0x38] sm:$0xff]
        %v7872 = vld [vmem:[#allocation16 + $0x40] sm:$0xff]
        %v7873 = vld [vmem:[#allocation16 + $0x48] sm:$0xff]
        %v7874 = vld [vmem:[#allocation16 + $0x50] sm:$0xff]
        %v7875 = vld [vmem:[#allocation16 + $0x58] sm:$0xff]
        %v7876 = vld [vmem:[#allocation16 + $0x60] sm:$0xff]
        %v7877 = vld [vmem:[#allocation16 + $0x68] sm:$0xff]
        %v7878 = vld [vmem:[#allocation16 + $0x70] sm:$0xff]
        %v7879 = vld [vmem:[#allocation16 + $0x78] sm:$0xff]
        %v7880 = vld [vmem:[#allocation16 + $0x80] sm:$0xff]
        %v7881 = vld [vmem:[#allocation16 + $0x88] sm:$0xff]
        %v7882 = vld [vmem:[#allocation16 + $0x90] sm:$0xff]
        %v7883 = vld [vmem:[#allocation16 + $0x98] sm:$0xff]
        %v7884 = vld [vmem:[#allocation16 + $0xa0] sm:$0xff]
        %v7885 = vld [vmem:[#allocation16 + $0xa8] sm:$0xff]
        %v7886 = vld [vmem:[#allocation16 + $0xb0] sm:$0xff]
        %v7887 = vld [vmem:[#allocation16 + $0xb8] sm:$0xff]
        %v7888 = vld [vmem:[#allocation16 + $0xc0] sm:$0xff]
        %v7889 = vld [vmem:[#allocation16 + $0xc8] sm:$0xff]
        %v7890 = vld [vmem:[#allocation16 + $0xd0] sm:$0xff]
        %v7891 = vld [vmem:[#allocation16 + $0xd8] sm:$0xff]
        %v7892 = vld [vmem:[#allocation16 + $0xe0] sm:$0xff]
        %v7893 = vld [vmem:[#allocation16 + $0xe8] sm:$0xff]
        %v7894 = vld [vmem:[#allocation16 + $0xf0] sm:$0xff]
        %v7895 = vld [vmem:[#allocation16 + $0xf8] sm:$0xff]
        %v7896 = vld [vmem:[#allocation16 + $0x100] sm:$0xff]
        %v7897 = vld [vmem:[#allocation16 + $0x108] sm:$0xff]
        %v7898 = vld [vmem:[#allocation16 + $0x110] sm:$0xff]
        %v7899 = vld [vmem:[#allocation16 + $0x118] sm:$0xff]
        %v7900 = vld [vmem:[#allocation16 + $0x120] sm:$0xff]
        %v7901 = vld [vmem:[#allocation16 + $0x128] sm:$0xff]
        %v7902 = vld [vmem:[#allocation16 + $0x130] sm:$0xff]
        %v7903 = vld [vmem:[#allocation16 + $0x138] sm:$0xff]
        %v7904 = vld [vmem:[#allocation16 + $0x140] sm:$0xff]
        %v7905 = vld [vmem:[#allocation16 + $0x148] sm:$0xff]
        %v7906 = vld [vmem:[#allocation16 + $0x150] sm:$0xff]
        %v7907 = vld [vmem:[#allocation16 + $0x158] sm:$0xff]
        %v7908 = vld [vmem:[#allocation16 + $0x160] sm:$0xff]
        %v7909 = vld [vmem:[#allocation16 + $0x168] sm:$0xff]
        %v7910 = vld [vmem:[#allocation16 + $0x170] sm:$0xff]
        %v7911 = vld [vmem:[#allocation16 + $0x178] sm:$0xff]
        %v7912 = vld [vmem:[#allocation16 + $0x180] sm:$0xff]
        %v7913 = vld [vmem:[#allocation16 + $0x188] sm:$0xff]
        %v7914 = vld [vmem:[#allocation16 + $0x190] sm:$0xff]
        %v7915 = vld [vmem:[#allocation16 + $0x198] sm:$0xff]
        %v7916 = vld [vmem:[#allocation16 + $0x1a0] sm:$0xff]
        %v7917 = vld [vmem:[#allocation16 + $0x1a8] sm:$0xff]
        %v7918 = vld [vmem:[#allocation16 + $0x1b0] sm:$0xff]
        %v7919 = vld [vmem:[#allocation16 + $0x1b8] sm:$0xff]
        %v7920 = vld [vmem:[#allocation16 + $0x1c0] sm:$0xff]
        %v7921 = vld [vmem:[#allocation16 + $0x1c8] sm:$0xff]
        %v7922 = vld [vmem:[#allocation16 + $0x1d0] sm:$0xff]
        %v7923 = vld [vmem:[#allocation16 + $0x1d8] sm:$0xff]
        %v7924 = vld [vmem:[#allocation16 + $0x1e0] sm:$0xff]
        %v7925 = vld [vmem:[#allocation16 + $0x1e8] sm:$0xff]
        %v7926 = vld [vmem:[#allocation16 + $0x1f0] sm:$0xff]
        %v7927 = vld [vmem:[#allocation16 + $0x1f8] sm:$0xff]
        %v7928 = vld [vmem:[%s17] sm:$0x3]
        %v7930 = vlaneseq
        %v7931 = vshrl.u32 %v7930, 7
        %v7932 = vsub.s32 0, %v7931
        %v7933 = vrot.slane %v7928, %v7932
        %v7934 = vlaneseq
        %v7935 = vshrl.u32 %v7934, 7
        %v7936 = vsub.s32 1, %v7935
        %v7937 = vrot.slane %v7928, %v7936
        %v8004 = vunpack.c.l.b16 %v7864
        %v8005 = vunpack.c.h.b16 %v7864
        %v8006 = vunpack.c.l.b16 %v7865
        %v8007 = vunpack.c.h.b16 %v7865
        %v8008 = vunpack.c.l.b16 %v7866
        %v8009 = vunpack.c.h.b16 %v7866
        %v8010 = vunpack.c.l.b16 %v7867
        %v8011 = vunpack.c.h.b16 %v7867
        %v8012 = vunpack.c.l.b16 %v7868
        %v8013 = vunpack.c.h.b16 %v7868
        %v8014 = vunpack.c.l.b16 %v7869
        %v8015 = vunpack.c.h.b16 %v7869
        %v8016 = vunpack.c.l.b16 %v7870
        %v8017 = vunpack.c.h.b16 %v7870
        %v8018 = vunpack.c.l.b16 %v7871
        %v8019 = vunpack.c.h.b16 %v7871
        %v8020 = vunpack.c.l.b16 %v7872
        %v8021 = vunpack.c.h.b16 %v7872
        %v8022 = vunpack.c.l.b16 %v7873
        %v8023 = vunpack.c.h.b16 %v7873
        %v8024 = vunpack.c.l.b16 %v7874
        %v8025 = vunpack.c.h.b16 %v7874
        %v8026 = vunpack.c.l.b16 %v7875
        %v8027 = vunpack.c.h.b16 %v7875
        %v8028 = vunpack.c.l.b16 %v7876
        %v8029 = vunpack.c.h.b16 %v7876
        %v8030 = vunpack.c.l.b16 %v7877
        %v8031 = vunpack.c.h.b16 %v7877
        %v8032 = vunpack.c.l.b16 %v7878
        %v8033 = vunpack.c.h.b16 %v7878
        %v8034 = vunpack.c.l.b16 %v7879
        %v8035 = vunpack.c.h.b16 %v7879
        %v8036 = vunpack.c.l.b16 %v7880
        %v8037 = vunpack.c.h.b16 %v7880
        %v8038 = vunpack.c.l.b16 %v7881
        %v8039 = vunpack.c.h.b16 %v7881
        %v8040 = vunpack.c.l.b16 %v7882
        %v8041 = vunpack.c.h.b16 %v7882
        %v8042 = vunpack.c.l.b16 %v7883
        %v8043 = vunpack.c.h.b16 %v7883
        %v8044 = vunpack.c.l.b16 %v7884
        %v8045 = vunpack.c.h.b16 %v7884
        %v8046 = vunpack.c.l.b16 %v7885
        %v8047 = vunpack.c.h.b16 %v7885
        %v8048 = vunpack.c.l.b16 %v7886
        %v8049 = vunpack.c.h.b16 %v7886
        %v8050 = vunpack.c.l.b16 %v7887
        %v8051 = vunpack.c.h.b16 %v7887
        %v8052 = vunpack.c.l.b16 %v7888
        %v8053 = vunpack.c.h.b16 %v7888
        %v8054 = vunpack.c.l.b16 %v7889
        %v8055 = vunpack.c.h.b16 %v7889
        %v8056 = vunpack.c.l.b16 %v7890
        %v8057 = vunpack.c.h.b16 %v7890
        %v8058 = vunpack.c.l.b16 %v7891
        %v8059 = vunpack.c.h.b16 %v7891
        %v8060 = vunpack.c.l.b16 %v7892
        %v8061 = vunpack.c.h.b16 %v7892
        %v8062 = vunpack.c.l.b16 %v7893
        %v8063 = vunpack.c.h.b16 %v7893
        %v8064 = vunpack.c.l.b16 %v7894
        %v8065 = vunpack.c.h.b16 %v7894
        %v8066 = vunpack.c.l.b16 %v7895
        %v8067 = vunpack.c.h.b16 %v7895
        %v8068 = vunpack.c.l.b16 %v7896
        %v8069 = vunpack.c.h.b16 %v7896
        %v8070 = vunpack.c.l.b16 %v7897
        %v8071 = vunpack.c.h.b16 %v7897
        %v8072 = vunpack.c.l.b16 %v7898
        %v8073 = vunpack.c.h.b16 %v7898
        %v8074 = vunpack.c.l.b16 %v7899
        %v8075 = vunpack.c.h.b16 %v7899
        %v8076 = vunpack.c.l.b16 %v7900
        %v8077 = vunpack.c.h.b16 %v7900
        %v8078 = vunpack.c.l.b16 %v7901
        %v8079 = vunpack.c.h.b16 %v7901
        %v8080 = vunpack.c.l.b16 %v7902
        %v8081 = vunpack.c.h.b16 %v7902
        %v8082 = vunpack.c.l.b16 %v7903
        %v8083 = vunpack.c.h.b16 %v7903
        %v8084 = vunpack.c.l.b16 %v7904
        %v8085 = vunpack.c.h.b16 %v7904
        %v8086 = vunpack.c.l.b16 %v7905
        %v8087 = vunpack.c.h.b16 %v7905
        %v8088 = vunpack.c.l.b16 %v7906
        %v8089 = vunpack.c.h.b16 %v7906
        %v8090 = vunpack.c.l.b16 %v7907
        %v8091 = vunpack.c.h.b16 %v7907
        %v8092 = vunpack.c.l.b16 %v7908
        %v8093 = vunpack.c.h.b16 %v7908
        %v8094 = vunpack.c.l.b16 %v7909
        %v8095 = vunpack.c.h.b16 %v7909
        %v8096 = vunpack.c.l.b16 %v7910
        %v8097 = vunpack.c.h.b16 %v7910
        %v8098 = vunpack.c.l.b16 %v7911
        %v8099 = vunpack.c.h.b16 %v7911
        %v8100 = vunpack.c.l.b16 %v7912
        %v8101 = vunpack.c.h.b16 %v7912
        %v8102 = vunpack.c.l.b16 %v7913
        %v8103 = vunpack.c.h.b16 %v7913
        %v8104 = vunpack.c.l.b16 %v7914
        %v8105 = vunpack.c.h.b16 %v7914
        %v8106 = vunpack.c.l.b16 %v7915
        %v8107 = vunpack.c.h.b16 %v7915
        %v8108 = vunpack.c.l.b16 %v7916
        %v8109 = vunpack.c.h.b16 %v7916
        %v8110 = vunpack.c.l.b16 %v7917
        %v8111 = vunpack.c.h.b16 %v7917
        %v8112 = vunpack.c.l.b16 %v7918
        %v8113 = vunpack.c.h.b16 %v7918
        %v8114 = vunpack.c.l.b16 %v7919
        %v8115 = vunpack.c.h.b16 %v7919
        %v8116 = vunpack.c.l.b16 %v7920
        %v8117 = vunpack.c.h.b16 %v7920
        %v8118 = vunpack.c.l.b16 %v7921
        %v8119 = vunpack.c.h.b16 %v7921
        %v8120 = vunpack.c.l.b16 %v7922
        %v8121 = vunpack.c.h.b16 %v7922
        %v8122 = vunpack.c.l.b16 %v7923
        %v8123 = vunpack.c.h.b16 %v7923
        %v8124 = vunpack.c.l.b16 %v7924
        %v8125 = vunpack.c.h.b16 %v7924
        %v8126 = vunpack.c.l.b16 %v7925
        %v8127 = vunpack.c.h.b16 %v7925
        %v8128 = vunpack.c.l.b16 %v7926
        %v8129 = vunpack.c.h.b16 %v7926
        %v8130 = vunpack.c.l.b16 %v7927
        %v8131 = vunpack.c.h.b16 %v7927
        %v8132 = vpack.c.b16 %v8006, %v8004
        %v8133 = vpack.c.b16 %v8007, %v8005
        %v8134 = vpack.c.b16 %v8010, %v8008
        %v8135 = vpack.c.b16 %v8011, %v8009
        %v8136 = vpack.c.b16 %v8014, %v8012
        %v8137 = vpack.c.b16 %v8015, %v8013
        %v8138 = vpack.c.b16 %v8018, %v8016
        %v8139 = vpack.c.b16 %v8019, %v8017
        %v8140 = vpack.c.b16 %v8022, %v8020
        %v8141 = vpack.c.b16 %v8023, %v8021
        %v8142 = vpack.c.b16 %v8026, %v8024
        %v8143 = vpack.c.b16 %v8027, %v8025
        %v8144 = vpack.c.b16 %v8030, %v8028
        %v8145 = vpack.c.b16 %v8031, %v8029
        %v8146 = vpack.c.b16 %v8034, %v8032
        %v8147 = vpack.c.b16 %v8035, %v8033
        %v8148 = vpack.c.b16 %v8038, %v8036
        %v8149 = vpack.c.b16 %v8039, %v8037
        %v8150 = vpack.c.b16 %v8042, %v8040
        %v8151 = vpack.c.b16 %v8043, %v8041
        %v8152 = vpack.c.b16 %v8046, %v8044
        %v8153 = vpack.c.b16 %v8047, %v8045
        %v8154 = vpack.c.b16 %v8050, %v8048
        %v8155 = vpack.c.b16 %v8051, %v8049
        %v8156 = vpack.c.b16 %v8054, %v8052
        %v8157 = vpack.c.b16 %v8055, %v8053
        %v8158 = vpack.c.b16 %v8058, %v8056
        %v8159 = vpack.c.b16 %v8059, %v8057
        %v8160 = vpack.c.b16 %v8062, %v8060
        %v8161 = vpack.c.b16 %v8063, %v8061
        %v8162 = vpack.c.b16 %v8066, %v8064
        %v8163 = vpack.c.b16 %v8067, %v8065
        %v8164 = vpack.c.b16 %v8070, %v8068
        %v8165 = vpack.c.b16 %v8071, %v8069
        %v8166 = vpack.c.b16 %v8074, %v8072
        %v8167 = vpack.c.b16 %v8075, %v8073
        %v8168 = vpack.c.b16 %v8078, %v8076
        %v8169 = vpack.c.b16 %v8079, %v8077
        %v8170 = vpack.c.b16 %v8082, %v8080
        %v8171 = vpack.c.b16 %v8083, %v8081
        %v8172 = vpack.c.b16 %v8086, %v8084
        %v8173 = vpack.c.b16 %v8087, %v8085
        %v8174 = vpack.c.b16 %v8090, %v8088
        %v8175 = vpack.c.b16 %v8091, %v8089
        %v8176 = vpack.c.b16 %v8094, %v8092
        %v8177 = vpack.c.b16 %v8095, %v8093
        %v8178 = vpack.c.b16 %v8098, %v8096
        %v8179 = vpack.c.b16 %v8099, %v8097
        %v8180 = vpack.c.b16 %v8102, %v8100
        %v8181 = vpack.c.b16 %v8103, %v8101
        %v8182 = vpack.c.b16 %v8106, %v8104
        %v8183 = vpack.c.b16 %v8107, %v8105
        %v8184 = vpack.c.b16 %v8110, %v8108
        %v8185 = vpack.c.b16 %v8111, %v8109
        %v8186 = vpack.c.b16 %v8114, %v8112
        %v8187 = vpack.c.b16 %v8115, %v8113
        %v8188 = vpack.c.b16 %v8118, %v8116
        %v8189 = vpack.c.b16 %v8119, %v8117
        %v8190 = vpack.c.b16 %v8122, %v8120
        %v8191 = vpack.c.b16 %v8123, %v8121
        %v8192 = vpack.c.b16 %v8126, %v8124
        %v8193 = vpack.c.b16 %v8127, %v8125
        %v8194 = vpack.c.b16 %v8130, %v8128
        %v8195 = vpack.c.b16 %v8131, %v8129
        %8260 = vmatprep.subr.bf16.mxu0 %v8133
        %8261 = vmatpush1.bf16.msra.mxu0 %v8132
        %8262 = vmatprep.subr.bf16.mxu0 %v8135
        %8263 = vmatpush1.bf16.msra.mxu0 %v8134
        %8264 = vmatprep.subr.bf16.mxu0 %v8137
        %8265 = vmatpush1.bf16.msra.mxu0 %v8136
        %8266 = vmatprep.subr.bf16.mxu0 %v8139
        %8267 = vmatpush1.bf16.msra.mxu0 %v8138
        %8268 = vmatprep.subr.bf16.mxu0 %v8141
        %8269 = vmatpush1.bf16.msra.mxu0 %v8140
        %8270 = vmatprep.subr.bf16.mxu0 %v8143
        %8271 = vmatpush1.bf16.msra.mxu0 %v8142
        %8272 = vmatprep.subr.bf16.mxu0 %v8145
        %8273 = vmatpush1.bf16.msra.mxu0 %v8144
        %8274 = vmatprep.subr.bf16.mxu0 %v8147
        %8275 = vmatpush1.bf16.msra.mxu0 %v8146
        %8276 = vmatprep.subr.bf16.mxu0 %v8149
        %8277 = vmatpush1.bf16.msra.mxu0 %v8148
        %8278 = vmatprep.subr.bf16.mxu0 %v8151
        %8279 = vmatpush1.bf16.msra.mxu0 %v8150
        %8280 = vmatprep.subr.bf16.mxu0 %v8153
        %8281 = vmatpush1.bf16.msra.mxu0 %v8152
        %8282 = vmatprep.subr.bf16.mxu0 %v8155
        %8283 = vmatpush1.bf16.msra.mxu0 %v8154
        %8284 = vmatprep.subr.bf16.mxu0 %v8157
        %8285 = vmatpush1.bf16.msra.mxu0 %v8156
        %8286 = vmatprep.subr.bf16.mxu0 %v8159
        %8287 = vmatpush1.bf16.msra.mxu0 %v8158
        %8288 = vmatprep.subr.bf16.mxu0 %v8161
        %8289 = vmatpush1.bf16.msra.mxu0 %v8160
        %8290 = vmatprep.subr.bf16.mxu0 %v8163
        %8291 = vmatpush1.bf16.msra.mxu0 %v8162
        %8292 = vmatprep.mubr.bf16.mxu0 %v7833
        %8293 = vmatmul.mubr.bf16.gmra.mrb[0].mxu0 %v7832
        %v8294 = vpop.f32.mrb[0].mxu0
        %v8295 = vadd.f32 %v7933, %v8294
        %v8296 = vpop.f32.mrb[0].mxu0
        %v8297 = vadd.f32 %v7937, %v8296
        %v8298 = vpop.f32.mrb[0].mxu0
        %v8299 = vadd.f32 %v7933, %v8298
        %v8300 = vpop.f32.mrb[0].mxu0
        %v8301 = vadd.f32 %v7937, %v8300
        %8302 = vmatprep.mubr.bf16.mxu0 %v7837
        %8303 = vmatmul.mubr.bf16.gmra.mrb[0].mxu0 %v7836
        %v8304 = vpop.f32.mrb[0].mxu0
        %v8305 = vadd.f32 %v7933, %v8304
        %v8306 = vpop.f32.mrb[0].mxu0
        %v8307 = vadd.f32 %v7937, %v8306
        %v8308 = vpop.f32.mrb[0].mxu0
        %v8309 = vadd.f32 %v7933, %v8308
        %v8310 = vpop.f32.mrb[0].mxu0
        %v8311 = vadd.f32 %v7937, %v8310
        %8312 = vmatprep.mubr.bf16.mxu0 %v7841
        %8313 = vmatmul.mubr.bf16.gmra.mrb[0].mxu0 %v7840
        %v8314 = vpop.f32.mrb[0].mxu0
        %v8315 = vadd.f32 %v7933, %v8314
        %v8316 = vpop.f32.mrb[0].mxu0
        %v8317 = vadd.f32 %v7937, %v8316
        %v8318 = vpop.f32.mrb[0].mxu0
        %v8319 = vadd.f32 %v7933, %v8318
        %v8320 = vpop.f32.mrb[0].mxu0
        %v8321 = vadd.f32 %v7937, %v8320
        %8322 = vmatprep.mubr.bf16.mxu0 %v7845
        %8323 = vmatmul.mubr.bf16.gmra.mrb[0].mxu0 %v7844
        %v8324 = vpop.f32.mrb[0].mxu0
        %v8325 = vadd.f32 %v7933, %v8324
        %v8326 = vpop.f32.mrb[0].mxu0
        %v8327 = vadd.f32 %v7937, %v8326
        %v8328 = vpop.f32.mrb[0].mxu0
        %v8329 = vadd.f32 %v7933, %v8328
        %v8330 = vpop.f32.mrb[0].mxu0
        %v8331 = vadd.f32 %v7937, %v8330
        %8332 = vmatprep.mubr.bf16.mxu0 %v7849
        %8333 = vmatmul.mubr.bf16.gmra.mrb[0].mxu0 %v7848
        %v8334 = vpop.f32.mrb[0].mxu0
        %v8335 = vadd.f32 %v7933, %v8334
        %v8336 = vpop.f32.mrb[0].mxu0
        %v8337 = vadd.f32 %v7937, %v8336
        %v8338 = vpop.f32.mrb[0].mxu0
        %v8339 = vadd.f32 %v7933, %v8338
        %v8340 = vpop.f32.mrb[0].mxu0
        %v8341 = vadd.f32 %v7937, %v8340
        %8342 = vmatprep.mubr.bf16.mxu0 %v7853
        %8343 = vmatmul.mubr.bf16.gmra.mrb[0].mxu0 %v7852
        %v8344 = vpop.f32.mrb[0].mxu0
        %v8345 = vadd.f32 %v7933, %v8344
        %v8346 = vpop.f32.mrb[0].mxu0
        %v8347 = vadd.f32 %v7937, %v8346
        %v8348 = vpop.f32.mrb[0].mxu0
        %v8349 = vadd.f32 %v7933, %v8348
        %v8350 = vpop.f32.mrb[0].mxu0
        %v8351 = vadd.f32 %v7937, %v8350
        %8352 = vmatprep.mubr.bf16.mxu0 %v7857
        %8353 = vmatmul.mubr.bf16.gmra.mrb[0].mxu0 %v7856
        %v8354 = vpop.f32.mrb[0].mxu0
        %v8355 = vadd.f32 %v7933, %v8354
        %v8356 = vpop.f32.mrb[0].mxu0
        %v8357 = vadd.f32 %v7937, %v8356
        %v8358 = vpop.f32.mrb[0].mxu0
        %v8359 = vadd.f32 %v7933, %v8358
        %v8360 = vpop.f32.mrb[0].mxu0
        %v8361 = vadd.f32 %v7937, %v8360
        %8362 = vmatprep.mubr.bf16.mxu0 %v7861
        %8363 = vmatmul.mubr.bf16.gmra.mrb[0].mxu0 %v7860
        %v8364 = vpop.f32.mrb[0].mxu0
        %v8365 = vadd.f32 %v7933, %v8364
        %v8366 = vpop.f32.mrb[0].mxu0
        %v8367 = vadd.f32 %v7937, %v8366
        %v8368 = vpop.f32.mrb[0].mxu0
        %v8369 = vadd.f32 %v7933, %v8368
        %v8370 = vpop.f32.mrb[0].mxu0
        %v8371 = vadd.f32 %v7937, %v8370
        %8372 = vdwg.mxu0
        %8373 = vmatprep.subr.bf16.mxu0 %v8165
        %8374 = vmatpush1.bf16.msra.mxu0 %v8164
        %8375 = vmatprep.subr.bf16.mxu0 %v8167
        %8376 = vmatpush1.bf16.msra.mxu0 %v8166
        %8377 = vmatprep.subr.bf16.mxu0 %v8169
        %8378 = vmatpush1.bf16.msra.mxu0 %v8168
        %8379 = vmatprep.subr.bf16.mxu0 %v8171
        %8380 = vmatpush1.bf16.msra.mxu0 %v8170
        %8381 = vmatprep.subr.bf16.mxu0 %v8173
        %8382 = vmatpush1.bf16.msra.mxu0 %v8172
        %8383 = vmatprep.subr.bf16.mxu0 %v8175
        %8384 = vmatpush1.bf16.msra.mxu0 %v8174
        %8385 = vmatprep.subr.bf16.mxu0 %v8177
        %8386 = vmatpush1.bf16.msra.mxu0 %v8176
        %8387 = vmatprep.subr.bf16.mxu0 %v8179
        %8388 = vmatpush1.bf16.msra.mxu0 %v8178
        %8389 = vmatprep.subr.bf16.mxu0 %v8181
        %8390 = vmatpush1.bf16.msra.mxu0 %v8180
        %8391 = vmatprep.subr.bf16.mxu0 %v8183
        %8392 = vmatpush1.bf16.msra.mxu0 %v8182
        %8393 = vmatprep.subr.bf16.mxu0 %v8185
        %8394 = vmatpush1.bf16.msra.mxu0 %v8184
        %8395 = vmatprep.subr.bf16.mxu0 %v8187
        %8396 = vmatpush1.bf16.msra.mxu0 %v8186
        %8397 = vmatprep.subr.bf16.mxu0 %v8189
        %8398 = vmatpush1.bf16.msra.mxu0 %v8188
        %8399 = vmatprep.subr.bf16.mxu0 %v8191
        %8400 = vmatpush1.bf16.msra.mxu0 %v8190
        %8401 = vmatprep.subr.bf16.mxu0 %v8193
        %8402 = vmatpush1.bf16.msra.mxu0 %v8192
        %8403 = vmatprep.subr.bf16.mxu0 %v8195
        %8404 = vmatpush1.bf16.msra.mxu0 %v8194
        %8405 = vmatprep.mubr.bf16.mxu0 %v7835
        %8406 = vmatmul.mubr.bf16.gmra.mrb[0].mxu0 %v7834
        %v8407 = vpop.f32.mrb[0].mxu0
        %v8408 = vadd.f32 %v8295, %v8407
        %v8409 = vpop.f32.mrb[0].mxu0
        %v8410 = vadd.f32 %v8297, %v8409
        %v8411 = vpop.f32.mrb[0].mxu0
        %v8412 = vadd.f32 %v8299, %v8411
        %v8413 = vpop.f32.mrb[0].mxu0
        %v8414 = vadd.f32 %v8301, %v8413
        %8415 = vmatprep.mubr.bf16.mxu0 %v7839
        %8416 = vmatmul.mubr.bf16.gmra.mrb[0].mxu0 %v7838
        %v8417 = vpop.f32.mrb[0].mxu0
        %v8418 = vadd.f32 %v8305, %v8417
        %v8419 = vpop.f32.mrb[0].mxu0
        %v8420 = vadd.f32 %v8307, %v8419
        %v8421 = vpop.f32.mrb[0].mxu0
        %v8422 = vadd.f32 %v8309, %v8421
        %v8423 = vpop.f32.mrb[0].mxu0
        %v8424 = vadd.f32 %v8311, %v8423
        %8425 = vmatprep.mubr.bf16.mxu0 %v7843
        %8426 = vmatmul.mubr.bf16.gmra.mrb[0].mxu0 %v7842
        %v8427 = vpop.f32.mrb[0].mxu0
        %v8428 = vadd.f32 %v8315, %v8427
        %v8429 = vpop.f32.mrb[0].mxu0
        %v8430 = vadd.f32 %v8317, %v8429
        %v8431 = vpop.f32.mrb[0].mxu0
        %v8432 = vadd.f32 %v8319, %v8431
        %v8433 = vpop.f32.mrb[0].mxu0
        %v8434 = vadd.f32 %v8321, %v8433
        %8435 = vmatprep.mubr.bf16.mxu0 %v7847
        %8436 = vmatmul.mubr.bf16.gmra.mrb[0].mxu0 %v7846
        %v8437 = vpop.f32.mrb[0].mxu0
        %v8438 = vadd.f32 %v8325, %v8437
        %v8439 = vpop.f32.mrb[0].mxu0
        %v8440 = vadd.f32 %v8327, %v8439
        %v8441 = vpop.f32.mrb[0].mxu0
        %v8442 = vadd.f32 %v8329, %v8441
        %v8443 = vpop.f32.mrb[0].mxu0
        %v8444 = vadd.f32 %v8331, %v8443
        %8445 = vmatprep.mubr.bf16.mxu0 %v7851
        %8446 = vmatmul.mubr.bf16.gmra.mrb[0].mxu0 %v7850
        %v8447 = vpop.f32.mrb[0].mxu0
        %v8448 = vadd.f32 %v8335, %v8447
        %v8449 = vpop.f32.mrb[0].mxu0
        %v8450 = vadd.f32 %v8337, %v8449
        %v8451 = vpop.f32.mrb[0].mxu0
        %v8452 = vadd.f32 %v8339, %v8451
        %v8453 = vpop.f32.mrb[0].mxu0
        %v8454 = vadd.f32 %v8341, %v8453
        %8455 = vmatprep.mubr.bf16.mxu0 %v7855
        %8456 = vmatmul.mubr.bf16.gmra.mrb[0].mxu0 %v7854
        %v8457 = vpop.f32.mrb[0].mxu0
        %v8458 = vadd.f32 %v8345, %v8457
        %v8459 = vpop.f32.mrb[0].mxu0
        %v8460 = vadd.f32 %v8347, %v8459
        %v8461 = vpop.f32.mrb[0].mxu0
        %v8462 = vadd.f32 %v8349, %v8461
        %v8463 = vpop.f32.mrb[0].mxu0
        %v8464 = vadd.f32 %v8351, %v8463
        %8465 = vmatprep.mubr.bf16.mxu0 %v7859
        %8466 = vmatmul.mubr.bf16.gmra.mrb[0].mxu0 %v7858
        %v8467 = vpop.f32.mrb[0].mxu0
        %v8468 = vadd.f32 %v8355, %v8467
        %v8469 = vpop.f32.mrb[0].mxu0
        %v8470 = vadd.f32 %v8357, %v8469
        %v8471 = vpop.f32.mrb[0].mxu0
        %v8472 = vadd.f32 %v8359, %v8471
        %v8473 = vpop.f32.mrb[0].mxu0
        %v8474 = vadd.f32 %v8361, %v8473
        %8475 = vmatprep.mubr.bf16.mxu0 %v7863
        %8476 = vmatmul.mubr.bf16.gmra.mrb[0].mxu0 %v7862
        %v8477 = vpop.f32.mrb[0].mxu0
        %v8478 = vadd.f32 %v8365, %v8477
        %v8479 = vpop.f32.mrb[0].mxu0
        %v8480 = vadd.f32 %v8367, %v8479
        %v8481 = vpop.f32.mrb[0].mxu0
        %v8482 = vadd.f32 %v8369, %v8481
        %v8483 = vpop.f32.mrb[0].mxu0
        %v8484 = vadd.f32 %v8371, %v8483
        %8485 = vdwg.mxu0
        %v8486 = vadd.f32 %v6616, %v8408
        %v8487 = vadd.f32 %v6617, %v8410
        %v8488 = vadd.f32 %v6618, %v8412
        %v8489 = vadd.f32 %v6619, %v8414
        %v8490 = vadd.f32 %v6620, %v8418
        %v8491 = vadd.f32 %v6621, %v8420
        %v8492 = vadd.f32 %v6622, %v8422
        %v8493 = vadd.f32 %v6623, %v8424
        %v8494 = vadd.f32 %v6624, %v8428
        %v8495 = vadd.f32 %v6625, %v8430
        %v8496 = vadd.f32 %v6626, %v8432
        %v8497 = vadd.f32 %v6627, %v8434
        %v8498 = vadd.f32 %v6628, %v8438
        %v8499 = vadd.f32 %v6629, %v8440
        %v8500 = vadd.f32 %v6630, %v8442
        %v8501 = vadd.f32 %v6631, %v8444
        %v8502 = vadd.f32 %v6632, %v8448
        %v8503 = vadd.f32 %v6633, %v8450
        %v8504 = vadd.f32 %v6634, %v8452
        %v8505 = vadd.f32 %v6635, %v8454
        %v8506 = vadd.f32 %v6636, %v8458
        %v8507 = vadd.f32 %v6637, %v8460
        %v8508 = vadd.f32 %v6638, %v8462
        %v8509 = vadd.f32 %v6639, %v8464
        %v8510 = vadd.f32 %v6640, %v8468
        %v8511 = vadd.f32 %v6641, %v8470
        %v8512 = vadd.f32 %v6642, %v8472
        %v8513 = vadd.f32 %v6643, %v8474
        %v8514 = vadd.f32 %v6644, %v8478
        %v8515 = vadd.f32 %v6645, %v8480
        %v8516 = vadd.f32 %v6646, %v8482
        %v8517 = vadd.f32 %v6647, %v8484
        %8518 = vst [vmem:[%s786] sm:$0xff] %v8486
        %8519 = vst [vmem:[%s786 + $0x8] sm:$0xff] %v8487
        %8520 = vst [vmem:[%s786 + $0x10] sm:$0xff] %v8488
        %8521 = vst [vmem:[%s786 + $0x18] sm:$0xff] %v8489
        %8522 = vst [vmem:[%s786 + $0x20] sm:$0xff] %v8490
        %8523 = vst [vmem:[%s786 + $0x28] sm:$0xff] %v8491
        %8524 = vst [vmem:[%s786 + $0x30] sm:$0xff] %v8492
        %8525 = vst [vmem:[%s786 + $0x38] sm:$0xff] %v8493
        %8526 = vst [vmem:[%s786 + $0x40] sm:$0xff] %v8494
        %8527 = vst [vmem:[%s786 + $0x48] sm:$0xff] %v8495
        %8528 = vst [vmem:[%s786 + $0x50] sm:$0xff] %v8496
        %8529 = vst [vmem:[%s786 + $0x58] sm:$0xff] %v8497
        %8530 = vst [vmem:[%s786 + $0x60] sm:$0xff] %v8498
        %8531 = vst [vmem:[%s786 + $0x68] sm:$0xff] %v8499
        %8532 = vst [vmem:[%s786 + $0x70] sm:$0xff] %v8500
        %8533 = vst [vmem:[%s786 + $0x78] sm:$0xff] %v8501
        %8534 = vst [vmem:[%s786 + $0x80] sm:$0xff] %v8502
        %8535 = vst [vmem:[%s786 + $0x88] sm:$0xff] %v8503
        %8536 = vst [vmem:[%s786 + $0x90] sm:$0xff] %v8504
        %8537 = vst [vmem:[%s786 + $0x98] sm:$0xff] %v8505
        %8538 = vst [vmem:[%s786 + $0xa0] sm:$0xff] %v8506
        %8539 = vst [vmem:[%s786 + $0xa8] sm:$0xff] %v8507
        %8540 = vst [vmem:[%s786 + $0xb0] sm:$0xff] %v8508
        %8541 = vst [vmem:[%s786 + $0xb8] sm:$0xff] %v8509
        %8542 = vst [vmem:[%s786 + $0xc0] sm:$0xff] %v8510
        %8543 = vst [vmem:[%s786 + $0xc8] sm:$0xff] %v8511
        %8544 = vst [vmem:[%s786 + $0xd0] sm:$0xff] %v8512
        %8545 = vst [vmem:[%s786 + $0xd8] sm:$0xff] %v8513
        %8546 = vst [vmem:[%s786 + $0xe0] sm:$0xff] %v8514
        %8547 = vst [vmem:[%s786 + $0xe8] sm:$0xff] %v8515
        %8548 = vst [vmem:[%s786 + $0xf0] sm:$0xff] %v8516
        %8549 = vst [vmem:[%s786 + $0xf8] sm:$0xff] %v8517
        %s8550 = sand.u32 %s495, 1
        %s8551 = scalar_lea.sflag [#allocation6], %s8550
        %s8552 = sand.u32 %s495, 1
        %s8553 = smul.addr %s8552, 256
        %s8554 = scalar_lea.vmem [#allocation18], %s8553
        // Predicated region
        $region137: #{tpu_custom_call.1} parent=99 // pred_check
          %p8555 = pneg %p505
        $region138: #{tpu_custom_call.1} parent=99 // pred_check_branch
          %8557 = sbr.rel (%p8555) target = $region140
        $region139: #{tpu_custom_call.1} parent=99 // pred_region
          %s8558 = smul.u32 16, %s48
          %s8560 = ssub.s32 4096, 4096
          %8561 = vsyncadd %s8551, %s8560
          %s8562 = smul.addr %s8558, 2
          %s8563 = smul.addr %s47, 64
          %s8564 = sadd.s32 %s8562, %s8563
          %s8565 = smul.addr %s8564, 128
          %s8566 = scalar_lea.hbm %s20, %s8565
          %s8567 = sshll.u32 %s8554, 4
          %s8568 = int_to_ptr.vmem [resolvable:$true] %s8567
          %8573 = dma.vmem_to_hbm [thread:$0]  %s8568, 4096, %s8566, %s8551, 256, 256, 16
        $region140: #{tpu_custom_call.1} parent=99 // pred_fallthru
          _
      $region100: #{tpu_custom_call.1} parent=5 // pred_fallthru
        _
      %p8574 = scmp.le.s32.totalorder 2, %s38
      // Predicated region
      $region141: #{tpu_custom_call.1} parent=5 // pred_check
        %p8575 = pneg %p8574
      $region142: #{tpu_custom_call.1} parent=5 // pred_check_branch
        %8577 = sbr.rel (%p8575) target = $region144
      $region143: #{tpu_custom_call.1} parent=5 // pred_region
        %s8578 = ssub.s32 %s38, 2
        // Predicated region
        $region145: #{tpu_custom_call.1} parent=143 // pred_check
          %p8579 = pneg %p511
        $region146: #{tpu_custom_call.1} parent=143 // pred_check_branch
          %8581 = sbr.rel (%p8579) target = $region148
        $region147: #{tpu_custom_call.1} parent=143 // pred_region
          %s8582 = sand.u32 %s496, 1
          %s8583 = scalar_lea.sflag [#allocation6], %s8582
          %s8584 = sand.u32 %s496, 1
          %s8585 = smul.addr %s8584, 256
          %s8586 = scalar_lea.vmem [#allocation18], %s8585
          %8587 = dma.done %s8583, 4096
        $region148: #{tpu_custom_call.1} parent=143 // pred_fallthru
          _
      $region144: #{tpu_custom_call.1} parent=5 // pred_fallthru
        _
    $region6: #{tpu_custom_call.1} parent=1 // loop_footer
      %s42 = sadd.s32 1, %s38
    $region7: #{tpu_custom_call.1} parent=1 // loop_footer_branch
      %37 = sbr.rel target = $region3
    $region8: #{tpu_custom_call.1} parent=1 // loop_exit
      _
    %8588 = vsyncpa [#allocation5], 1
    %s8589 = scalar_lea.sflag [#allocation5], 1
    %8590 = vsyncpa %s8589, 1
    %8591 = vsyncpa [#allocation8], 1
    %s8592 = scalar_lea.sflag [#allocation8], 1
    %8593 = vsyncpa %s8592, 1
    %8594 = vsyncpa [#allocation11], 1
    %8595 = vsyncpa [#allocation14], 1
    %8596 = vsyncpa [#allocation17], 1
    %8597 = vsyncpa [#allocation6], 1
    %s8598 = scalar_lea.sflag [#allocation6], 1
    %8599 = vsyncpa %s8598, 1

</llo_original>
